<compile_context>
chip_gen: v5e
topology: v5e:2x2
jax: 0.10.0
libtpu: 0.0.40
codegen_flags: <defaults>
</compile_context>

<pallas_src>
import functools

import jax
import jax.numpy as jnp
from jax.experimental import pallas as pl
from jax.experimental.pallas import tpu as pltpu

VMEM_LIMIT = 32 * 1024 * 1024   # explicit scoped-VMEM budget (fits v7x's 64 MiB)


def _round_up(x, m):
    return (x + m - 1) // m * m


def _pick_row_tile(ho, wo, cout, cap):
    """Largest divisor of `ho` that keeps the f32 acc tile around <=128 KiB."""
    budget_rows = max(1, (128 * 1024) // max(1, wo * cout * 4))
    cap = max(1, min(cap, budget_rows))
    for d in range(min(ho, cap), 0, -1):
        if ho % d == 0:
            return d
    return 1


# ----------------------------------------------------------------------------
# Kernel 1: fused SE(3) transform + depth projection (tiled z-buffer)
# ----------------------------------------------------------------------------
def _proj_kernel(tcl_ref, pcd_ref, depth_ref, *, fx, fy, cx, cy, H, W,
                 TILE_HW, TILE_N, CHUNK):
    hw_i = pl.program_id(1)
    n_i = pl.program_id(2)
    BIG = jnp.float32(1e30)

    @pl.when(n_i == 0)
    def _init():
        depth_ref[...] = jnp.full(depth_ref.shape, BIG, jnp.float32)

    T = tcl_ref[0]                                           # (4, 4)
    hw_iota = jax.lax.broadcasted_iota(jnp.int32, (CHUNK, TILE_HW), 1)

    # Points are processed in small sublane chunks with a running (1, TILE_HW)
    # min so the live set stays a few vregs instead of a (TILE_N, TILE_HW)
    # value.  Each chunk: SE(3) transform + pinhole projection + scatter-min.
    def chunk_body(c, run):
        off = pl.multiple_of(c * CHUNK, CHUNK)
        p = pcd_ref[0, pl.ds(off, CHUNK), :]                 # (CHUNK, 3)

        def xform(row):                                      # cam = R @ p + t
            return (jnp.sum(p * T[row:row + 1, 0:3], axis=1, keepdims=True)
                    + T[row:row + 1, 3:4])                   # (CHUNK, 1)

        x, y, z = xform(0), xform(1), xform(2)
        in_front = z > 1e-6
        zs = jnp.where(in_front, z, 1.0)
        inv_z = pl.reciprocal(zs, approx=True)               # EUP, not VPU div
        u = jnp.floor(fx * x * inv_z + cx + 0.5).astype(jnp.int32)
        v = jnp.floor(fy * y * inv_z + cy + 0.5).astype(jnp.int32)
        valid = in_front & (u >= 0) & (u < W) & (v >= 0) & (v < H)
        # pixel index local to this HW tile (-1 / out-of-tile never matches)
        pix = jnp.where(valid, v * W + u, -1) - hw_i * TILE_HW
        cand = jnp.where(pix == hw_iota,
                         jnp.broadcast_to(z, (CHUNK, TILE_HW)), BIG)
        return jnp.minimum(run, jnp.min(cand, axis=0, keepdims=True))

    run = jax.lax.fori_loop(0, TILE_N // CHUNK, chunk_body,
                            jnp.full((1, TILE_HW), BIG, jnp.float32),
                            unroll=True)
    depth_ref[0] = jnp.minimum(depth_ref[0], run)

    @pl.when(n_i == pl.num_programs(2) - 1)
    def _finalize():
        d = depth_ref[...]
        depth_ref[...] = jnp.where(d < BIG * 0.5, d, 0.0)


def project_depth_fused(Tcl, pcd, camera_info):
    """pcd (B,3,N) + Tcl (B,4,4) -> flat z-buffer depth (B, H*W)."""
    B, _, N = pcd.shape
    H, W = int(camera_info["sensor_h"]), int(camera_info["sensor_w"])
    HW = H * W

    # TODO(synk): pcd could stay (B,3,N) with an in-kernel lane->sublane
    # vxpose; kept as one tiny wrapper transpose for lowering robustness.
    pts = jnp.transpose(pcd, (0, 2, 1))                      # (B, N, 3)

    CHUNK = 32
    TILE_N = min(_round_up(N, CHUNK), 256)
    N_pad = _round_up(N, TILE_N)
    if N_pad != N:                                           # padded pts: z=0 -> invalid
        pts = jnp.pad(pts, ((0, 0), (0, N_pad - N), (0, 0)))
    TILE_HW = min(_round_up(HW, 128), 512)
    HW_pad = _round_up(HW, TILE_HW)
    HWt, Nc = HW_pad // TILE_HW, N_pad // TILE_N

    # TODO(synk): at production sensor sizes use PrefetchScalarGridSpec with
    # per-HW-tile point buckets instead of the dense O(N*HW) test.
    kern = functools.partial(
        _proj_kernel,
        fx=float(camera_info["fx"]), fy=float(camera_info["fy"]),
        cx=float(camera_info["cx"]), cy=float(camera_info["cy"]),
        H=H, W=W, TILE_HW=TILE_HW, TILE_N=TILE_N, CHUNK=CHUNK)

    depth = pl.pallas_call(
        kern,
        out_shape=jax.ShapeDtypeStruct((B, HWt, TILE_HW), jnp.float32),
        grid=(B, HWt, Nc),
        in_specs=[pl.BlockSpec((1, 4, 4), lambda b, h, n: (b, 0, 0)),
                  pl.BlockSpec((1, TILE_N, 3), lambda b, h, n: (b, n, 0))],
        out_specs=pl.BlockSpec((1, 1, TILE_HW), lambda b, h, n: (b, h, 0)),
        compiler_params=pltpu.CompilerParams(
            dimension_semantics=("parallel", "parallel", "arbitrary"),
            vmem_limit_bytes=VMEM_LIMIT),
    )(Tcl, pts)

    depth = depth.reshape(B, HW_pad)
    if HW_pad != HW:
        depth = depth[:, :HW]
    return depth


# ----------------------------------------------------------------------------
# Kernel 2: implicit-GEMM 3x3 stride-2 conv + bias + ReLU (NHWC, row-tiled)
# ----------------------------------------------------------------------------
def _conv_s2_kernel(x_ref, wA_ref, wB_ref, b_ref, o_ref, *, T_HO, Wo, Cin, Cout):
    # x_ref : (1, 1, T_HO+1, 2, Wp2, 2*Cin) bf16  row tile incl. halo phase-row
    # wA_ref: (3, 2*Cin, Cout) bf16  [w(kh,kw=0); w(kh,kw=1)] stacked per kh
    # wB_ref: (3, Cin, Cout)   bf16  w(kh,kw=2)
    # b_ref : (1, Cout) f32          o_ref: (1, T_HO, Wo, Cout) bf16
    M = T_HO * Wo
    acc = jnp.zeros((M, Cout), jnp.float32)
    for kh in range(3):
        r0 = 1 if kh == 2 else 0      # kh=2 reads the next phase-row (halo)
        rp = 0 if kh == 2 else kh     # row phase
        # kw = 0,1 fused into one dot (K = 2*Cin): both width phases at once.
        winA = x_ref[0, 0, r0:r0 + T_HO, rp, 0:Wo, :]
        acc = acc + jnp.dot(winA.reshape(M, 2 * Cin), wA_ref[kh],
                            preferred_element_type=jnp.float32)
        # kw = 2: width-phase 0 at the next width index (K = Cin).
        winB = x_ref[0, 0, r0:r0 + T_HO, rp, 1:1 + Wo, 0:Cin]
        acc = acc + jnp.dot(winB.reshape(M, Cin), wB_ref[kh],
                            preferred_element_type=jnp.float32)
    out = jnp.maximum(acc + b_ref[...], 0.0)          # bias/ReLU stay in f32
    o_ref[0] = out.reshape(T_HO, Wo, Cout).astype(o_ref.dtype)


def conv2d_s2_relu(x_nhwc, wA, wB, bias):
    """3x3 / stride-2 / pad-1 conv + bias + ReLU; bf16 MXU, f32 epilogue."""
    B, H, W, Cin = x_nhwc.shape
    Cout = wA.shape[-1]
    pad = 1
    Ho = (H + 2 * pad - 3) // 2 + 1
    Wo = (W + 2 * pad - 3) // 2 + 1
    Hp = _round_up(H + 2 * pad, 2)
    Wp = _round_up(W + 2 * pad, 2)
    Hp2, Wp2 = Hp // 2, Wp // 2

    T_HO = _pick_row_tile(Ho, Wo, Cout, cap=64)
    nt = Ho // T_HO

    # pad + free phase split: stride-2 windows become unit-stride slices.
    xp = jnp.pad(x_nhwc.astype(jnp.bfloat16),
                 ((0, 0), (pad, Hp - H - pad), (pad, Wp - W - pad), (0, 0)))
    x_ph = xp.reshape(B, Hp2, 2, Wp2, 2 * Cin)

    # Row tiles with a one-phase-row halo (for the kh=2 tap), materialised once
    # so BlockSpec blocks are disjoint and in-kernel slices stay contiguous.
    need = nt * T_HO + 1
    if need > Hp2:
        x_ph = jnp.pad(x_ph, ((0, 0), (0, need - Hp2), (0, 0), (0, 0), (0, 0)))
    row_idx = jnp.arange(nt)[:, None] * T_HO + jnp.arange(T_HO + 1)[None, :]
    x_tiles = x_ph[:, row_idx]                # (B, nt, T_HO+1, 2, Wp2, 2*Cin)

    kern = functools.partial(_conv_s2_kernel, T_HO=T_HO, Wo=Wo,
                             Cin=Cin, Cout=Cout)
    out = pl.pallas_call(
        kern,
        out_shape=jax.ShapeDtypeStruct((B, nt * T_HO, Wo, Cout), jnp.bfloat16),
        grid=(B, nt),
        in_specs=[
            pl.BlockSpec((1, 1, T_HO + 1, 2, Wp2, 2 * Cin),
                         lambda bi, hi: (bi, hi, 0, 0, 0, 0)),
            pl.BlockSpec((3, 2 * Cin, Cout), lambda bi, hi: (0, 0, 0)),
            pl.BlockSpec((3, Cin, Cout), lambda bi, hi: (0, 0, 0)),
            pl.BlockSpec((1, Cout), lambda bi, hi: (0, 0)),
        ],
        out_specs=pl.BlockSpec((1, T_HO, Wo, Cout),
                               lambda bi, hi: (bi, hi, 0, 0)),
        compiler_params=pltpu.CompilerParams(
            dimension_semantics=("parallel", "parallel"),
            vmem_limit_bytes=VMEM_LIMIT),
    )(x_tiles, wA, wB, bias)
    return out                                 # (B, Ho, Wo, Cout), bf16


# ----------------------------------------------------------------------------
# Kernel 3: fused tail = fuse-conv (3x3, s=1, p=1) + ReLU + avg-pool + heads
# ----------------------------------------------------------------------------
def _tail_kernel(x_ref, w_ref, b_ref, wh_ref, bh_ref, o_ref, sum_ref,
                 *, T_HO, Wo, C, inv_count):
    hi = pl.program_id(1)

    @pl.when(hi == 0)
    def _init():
        sum_ref[...] = jnp.zeros_like(sum_ref)

    M = T_HO * Wo
    acc = jnp.zeros((M, C), jnp.float32)
    for kh in range(3):
        for kw in range(3):
            win = x_ref[0, 0, kh:kh + T_HO, kw:kw + Wo, :]      # (T_HO, Wo, C)
            acc = acc + jnp.dot(win.reshape(M, C), w_ref[kh, kw],
                                preferred_element_type=jnp.float32)
    feat = jnp.maximum(acc + b_ref[...], 0.0)
    sum_ref[...] = sum_ref[...] + jnp.sum(feat, axis=0, keepdims=True)

    @pl.when(hi == pl.num_programs(1) - 1)
    def _fin():
        pooled = sum_ref[...] * inv_count                       # (1, C)
        o_ref[0] = (jnp.dot(pooled, wh_ref[...],
                            preferred_element_type=jnp.float32) + bh_ref[...])


def tail_fused(x_nhwc, w3, b3, wh, bh):
    B, H, W, C = x_nhwc.shape
    HOUT = wh.shape[1]
    Ho, Wo = H, W                       # 3x3 / stride 1 / pad 1
    Wp = W + 2
    T_HO = _pick_row_tile(Ho, Wo, C, cap=32)
    nt = Ho // T_HO

    xp = jnp.pad(x_nhwc.astype(jnp.bfloat16),
                 ((0, 0), (1, 1), (1, 1), (0, 0)))
    row_idx = jnp.arange(nt)[:, None] * T_HO + jnp.arange(T_HO + 2)[None, :]
    x_tiles = xp[:, row_idx]                      # (B, nt, T_HO+2, Wp, C)

    kern = functools.partial(_tail_kernel, T_HO=T_HO, Wo=Wo, C=C,
                             inv_count=1.0 / float(Ho * Wo))
    out = pl.pallas_call(
        kern,
        out_shape=jax.ShapeDtypeStruct((B, 1, HOUT), jnp.float32),
        grid=(B, nt),
        in_specs=[
            pl.BlockSpec((1, 1, T_HO + 2, Wp, C),
                         lambda bi, hi: (bi, hi, 0, 0, 0)),
            pl.BlockSpec((3, 3, C, C), lambda bi, hi: (0, 0, 0, 0)),
            pl.BlockSpec((1, C), lambda bi, hi: (0, 0)),
            pl.BlockSpec((C, HOUT), lambda bi, hi: (0, 0)),
            pl.BlockSpec((1, HOUT), lambda bi, hi: (0, 0)),
        ],
        out_specs=pl.BlockSpec((1, 1, HOUT), lambda bi, hi: (bi, 0, 0)),
        scratch_shapes=[pltpu.VMEM((1, C), jnp.float32)],
        compiler_params=pltpu.CompilerParams(
            dimension_semantics=("parallel", "arbitrary"),
            vmem_limit_bytes=VMEM_LIMIT),
    )(x_tiles, w3, b3, wh, bh)
    return out.reshape(B, HOUT)


# ----------------------------------------------------------------------------
# Parameters: rgb / depth branches fused via block-diagonal weights at REAL
# channel counts (16 / 32), kw-paired and pre-cast to bf16 for the MXU.
# ----------------------------------------------------------------------------
def init_params(key):
    ks = jax.random.split(key, 7)
    s = 0.1

    def conv_p(k, cout, cin):
        k1, k2 = jax.random.split(k)
        return (s * jax.random.normal(k1, (cout, cin, 3, 3), jnp.float32),
                s * jax.random.normal(k2, (cout,), jnp.float32))

    def fc_p(k, cin, cout):
        k1, k2 = jax.random.split(k)
        return (s * jax.random.normal(k1, (cin, cout), jnp.float32),
                s * jax.random.normal(k2, (1, cout), jnp.float32))

    # TODO(synk): original VanillaCalibNet uses a pretrained ResNet-18 backbone
    # (source / weights not provided); replaced by a small deterministic conv
    # encoder with the same interface (rgb + depth branches -> rot/trans).
    rgb1_w, rgb1_b = conv_p(ks[0], 8, 3)
    rgb2_w, rgb2_b = conv_p(ks[1], 16, 8)
    dep1_w, dep1_b = conv_p(ks[2], 8, 1)
    dep2_w, dep2_b = conv_p(ks[3], 16, 8)
    fuse_w, fuse_b = conv_p(ks[4], 32, 32)
    rot_w, rot_b = fc_p(ks[5], 32, 3)
    tr_w, tr_b = fc_p(ks[6], 32, 3)

    def to_khwc(w):   # torch (Cout,Cin,kh,kw) -> (kh,kw,Cin,Cout)
        return jnp.transpose(w, (2, 3, 1, 0))

    # layer 1: Cin = 4 [rgb3|depth1] -> Cout = 16 [rgb8|dep8] (block-diagonal)
    w1 = jnp.zeros((3, 3, 4, 16), jnp.float32)
    w1 = w1.at[:, :, 0:3, 0:8].set(to_khwc(rgb1_w))
    w1 = w1.at[:, :, 3:4, 8:16].set(to_khwc(dep1_w))
    b1 = jnp.zeros((1, 16), jnp.float32).at[0, 0:8].set(rgb1_b).at[0, 8:16].set(dep1_b)

    # layer 2: Cin = 16 -> Cout = 32 [rgb16|dep16]
    w2 = jnp.zeros((3, 3, 16, 32), jnp.float32)
    w2 = w2.at[:, :, 0:8, 0:16].set(to_khwc(rgb2_w))
    w2 = w2.at[:, :, 8:16, 16:32].set(to_khwc(dep2_w))
    b2 = jnp.zeros((1, 32), jnp.float32).at[0, 0:16].set(rgb2_b).at[0, 16:32].set(dep2_b)

    # layer 3 (fuse conv), real 32 channels
    w3 = to_khwc(fuse_w)                         # (3, 3, 32, 32)
    b3 = fuse_b.reshape(1, 32)

    # heads: single (C, 6) matrix = [rot | trans]
    wh = jnp.concatenate([rot_w, tr_w], axis=1)  # (32, 6)
    bh = jnp.concatenate([rot_b, tr_b], axis=1)  # (1, 6)

    def pair(w):
        # (3,3,Cin,Cout) -> wA (3, 2*Cin, Cout) = [kw0 ; kw1], wB (3, Cin, Cout) = kw2
        wA = jnp.concatenate([w[:, 0], w[:, 1]], axis=1)
        wB = w[:, 2]
        return wA.astype(jnp.bfloat16), wB.astype(jnp.bfloat16)

    w1A, w1B = pair(w1)
    w2A, w2B = pair(w2)
    return {"w1A": w1A, "w1B": w1B, "b1": b1,
            "w2A": w2A, "w2B": w2B, "b2": b2,
            "w3": w3.astype(jnp.bfloat16), "b3": b3,
            "wh": wh, "bh": bh}


# ----------------------------------------------------------------------------
# CalibNet forward
# ----------------------------------------------------------------------------
def calibnet_forward(params, img, pcd, Tcl, camera_info):
    B = img.shape[0]
    H, W = int(camera_info["sensor_h"]), int(camera_info["sensor_w"])

    # 1)+2) fused: pcd_tf = se3.transform(Tcl, pcd); depth = project(pcd_tf)
    depth_flat = project_depth_fused(Tcl, pcd, camera_info)   # (B, H*W)
    depth_nhwc = depth_flat.reshape(B, H, W, 1)               # free reshape

    # 3) encoder: NHWC throughout, NCHW->NHWC only once at the API boundary.
    # The concat fuses with the first conv's pad/gather pass (single HBM pass).
    img_nhwc = jnp.transpose(img, (0, 2, 3, 1))
    x = jnp.concatenate([img_nhwc, depth_nhwc], axis=3)       # (B, H, W, 4)

    p = params
    x = conv2d_s2_relu(x, p["w1A"], p["w1B"], p["b1"])        # (B, H/2, W/2, 16)
    x = conv2d_s2_relu(x, p["w2A"], p["w2B"], p["b2"])        # (B, H/4, W/4, 32)
    out = tail_fused(x, p["w3"], p["b3"], p["wh"], p["bh"])   # (B, 6)
    return out[:, 0:3], out[:, 3:6]                           # rot, trans


# ----------------------------------------------------------------------------
# Demo
# ----------------------------------------------------------------------------
if __name__ == "__main__":
    key = jax.random.PRNGKey(0)
    k_img, k_pcd, k_par = jax.random.split(key, 3)

    B, H, W, N = 2, 16, 16, 256
    img = jax.random.normal(k_img, (B, 3, H, W), jnp.float32)

    # points in front of the camera
    kx, ky, kz = jax.random.split(k_pcd, 3)
    px = jax.random.uniform(kx, (B, 1, N), minval=-1.0, maxval=1.0)
    py = jax.random.uniform(ky, (B, 1, N), minval=-1.0, maxval=1.0)
    pz = jax.random.uniform(kz, (B, 1, N), minval=1.0, maxval=3.0)
    pcd = jnp.concatenate([px, py, pz], axis=1).astype(jnp.float32)

    Tcl = jnp.tile(jnp.eye(4, dtype=jnp.float32), (B, 1, 1))
    Tcl = Tcl.at[:, 0, 3].set(0.1).at[:, 1, 3].set(-0.05).at[:, 2, 3].set(0.2)

    camera_info = {"fx": 8.0, "fy": 8.0, "cx": 8.0, "cy": 8.0,
                   "sensor_h": H, "sensor_w": W}

    params = init_params(k_par)

    fwd = jax.jit(
        lambda p_, i_, c_, t_: calibnet_forward(p_, i_, c_, t_, camera_info))
    rot, trans = fwd(params, img, pcd, Tcl)
    jax.block_until_ready((rot, trans))
    assert rot.shape == (B, 3) and trans.shape == (B, 3)
    print("KERNEL_OK")
</pallas_src>

<mosaic_0001>
module attributes {stable_mosaic.version = 11 : i64} {
  func.func @_proj_kernel(%arg0: i32, %arg1: i32, %arg2: i32, %arg3: memref<1x4x4xf32, #tpu.memory_space<vmem>>, %arg4: memref<1x256x3xf32, #tpu.memory_space<vmem>>, %arg5: memref<1x1x256xf32, #tpu.memory_space<vmem>>) attributes {dimension_semantics = [#tpu.dimension_semantics<parallel>, #tpu.dimension_semantics<parallel>, #tpu.dimension_semantics<arbitrary>], iteration_bounds = array<i64: 2, 1, 1>, scalar_prefetch = 0 : i64, scratch_operands = 0 : i64, tpu.core_type = #tpu.core_type<tc>, window_params = [{transform_indices = @transform_0, window_bounds = array<i64: 1, 4, 4>}, {transform_indices = @transform_1, window_bounds = array<i64: 1, 256, 3>}, {transform_indices = @transform_2, window_bounds = array<i64: 1, 1, 256>}]} {
    %c0_i32 = arith.constant 0 : i32
    %0 = arith.cmpi eq, %arg2, %c0_i32 : i32
    %1 = arith.extui %0 : i1 to i32
    %cst = arith.constant 1.000000e+30 : f32
    %c0_i32_0 = arith.constant 0 : i32
    %2 = arith.cmpi ne, %1, %c0_i32_0 : i32
    scf.if %2 {
      %664 = vector.broadcast %cst : f32 to vector<1x1x256xf32>
      %c0_187 = arith.constant 0 : index
      %c0_188 = arith.constant 0 : index
      %c0_189 = arith.constant 0 : index
      %665 = vector.load %arg5[%c0_187, %c0_188, %c0_189] : memref<1x1x256xf32, #tpu.memory_space<vmem>>, vector<1x1x256xf32>
      tpu.vector_store %arg5[%c0_187, %c0_188, %c0_189], %664 {strides = array<i32>} : memref<1x1x256xf32, #tpu.memory_space<vmem>>, vector<1x1x256xf32>,
    } else {
    }
    %c0 = arith.constant 0 : index
    %c0_1 = arith.constant 0 : index
    %c0_2 = arith.constant 0 : index
    %3 = vector.load %arg3[%c0, %c0_1, %c0_2] : memref<1x4x4xf32, #tpu.memory_space<vmem>>, vector<1x4x4xf32>
    %4 = vector.shape_cast %3 : vector<1x4x4xf32> to vector<4x4xf32>
    %5 = tpu.iota {dimensions = array<i32: 1>} : vector<32x256xi32>
    %cst_3 = arith.constant 1.000000e+30 : f32
    %6 = vector.broadcast %cst_3 : f32 to vector<1x256xf32>
    %cst_4 = arith.constant 1.000000e+30 : f32
    %c0_i32_5 = arith.constant 0 : i32
    %c32_i32 = arith.constant 32 : i32
    %7 = arith.muli %c0_i32_5, %c32_i32 : i32
    %8 = tpu.assume_multiple %7, 32 : i32
    %c0_6 = arith.constant 0 : index
    %9 = arith.index_cast %8 : i32 to index
    %c0_7 = arith.constant 0 : index
    %10 = vector.load %arg4[%c0_6, %9, %c0_7] : memref<1x256x3xf32, #tpu.memory_space<vmem>>, vector<1x32x3xf32>
    %11 = vector.shape_cast %10 : vector<1x32x3xf32> to vector<32x3xf32>
    %12 = vector.extract_strided_slice %4 {offsets = [0, 0], sizes = [1, 3], strides = [1, 1]} : vector<4x4xf32> to vector<1x3xf32>
    %13 = vector.broadcast %12 : vector<1x3xf32> to vector<32x3xf32>
    %14 = arith.mulf %11, %13 : vector<32x3xf32>
    %cst_8 = arith.constant dense<0.000000e+00> : vector<32xf32>
    %15 = vector.multi_reduction <add>, %14, %cst_8 [1] : vector<32x3xf32> to vector<32xf32>
    %16 = vector.shape_cast %15 : vector<32xf32> to vector<32x1xf32>
    %17 = vector.extract_strided_slice %4 {offsets = [0, 3], sizes = [1, 1], strides = [1, 1]} : vector<4x4xf32> to vector<1x1xf32>
    %18 = vector.broadcast %17 : vector<1x1xf32> to vector<32x1xf32>
    %19 = arith.addf %16, %18 : vector<32x1xf32>
    %20 = vector.extract_strided_slice %4 {offsets = [1, 0], sizes = [1, 3], strides = [1, 1]} : vector<4x4xf32> to vector<1x3xf32>
    %21 = vector.broadcast %20 : vector<1x3xf32> to vector<32x3xf32>
    %22 = arith.mulf %11, %21 : vector<32x3xf32>
    %cst_9 = arith.constant dense<0.000000e+00> : vector<32xf32>
    %23 = vector.multi_reduction <add>, %22, %cst_9 [1] : vector<32x3xf32> to vector<32xf32>
    %24 = vector.shape_cast %23 : vector<32xf32> to vector<32x1xf32>
    %25 = vector.extract_strided_slice %4 {offsets = [1, 3], sizes = [1, 1], strides = [1, 1]} : vector<4x4xf32> to vector<1x1xf32>
    %26 = vector.broadcast %25 : vector<1x1xf32> to vector<32x1xf32>
    %27 = arith.addf %24, %26 : vector<32x1xf32>
    %28 = vector.extract_strided_slice %4 {offsets = [2, 0], sizes = [1, 3], strides = [1, 1]} : vector<4x4xf32> to vector<1x3xf32>
    %29 = vector.broadcast %28 : vector<1x3xf32> to vector<32x3xf32>
    %30 = arith.mulf %11, %29 : vector<32x3xf32>
    %cst_10 = arith.constant dense<0.000000e+00> : vector<32xf32>
    %31 = vector.multi_reduction <add>, %30, %cst_10 [1] : vector<32x3xf32> to vector<32xf32>
    %32 = vector.shape_cast %31 : vector<32xf32> to vector<32x1xf32>
    %33 = vector.extract_strided_slice %4 {offsets = [2, 3], sizes = [1, 1], strides = [1, 1]} : vector<4x4xf32> to vector<1x1xf32>
    %34 = vector.broadcast %33 : vector<1x1xf32> to vector<32x1xf32>
    %35 = arith.addf %32, %34 : vector<32x1xf32>
    %cst_11 = arith.constant 9.99999997E-7 : f32
    %36 = vector.broadcast %cst_11 : f32 to vector<32x1xf32>
    %37 = arith.cmpf ogt, %35, %36 : vector<32x1xf32>
    %cst_12 = arith.constant 1.000000e+00 : f32
    %38 = vector.broadcast %cst_12 : f32 to vector<32x1xf32>
    %39 = arith.select %37, %35, %38 : vector<32x1xi1>, vector<32x1xf32>
    %40 = tpu.reciprocal %39 {approx = true} : vector<32x1xf32> -> vector<32x1xf32>
    %cst_13 = arith.constant 8.000000e+00 : f32
    %41 = vector.broadcast %cst_13 : f32 to vector<32x1xf32>
    %42 = arith.mulf %41, %19 : vector<32x1xf32>
    %43 = arith.mulf %42, %40 : vector<32x1xf32>
    %cst_14 = arith.constant 8.000000e+00 : f32
    %44 = vector.broadcast %cst_14 : f32 to vector<32x1xf32>
    %45 = arith.addf %43, %44 : vector<32x1xf32>
    %cst_15 = arith.constant 5.000000e-01 : f32
    %46 = vector.broadcast %cst_15 : f32 to vector<32x1xf32>
    %47 = arith.addf %45, %46 : vector<32x1xf32>
    %48 = math.floor %47 : vector<32x1xf32>
    %49 = arith.fptosi %48 : vector<32x1xf32> to vector<32x1xi32>
    %cst_16 = arith.constant 8.000000e+00 : f32
    %50 = vector.broadcast %cst_16 : f32 to vector<32x1xf32>
    %51 = arith.mulf %50, %27 : vector<32x1xf32>
    %52 = arith.mulf %51, %40 : vector<32x1xf32>
    %cst_17 = arith.constant 8.000000e+00 : f32
    %53 = vector.broadcast %cst_17 : f32 to vector<32x1xf32>
    %54 = arith.addf %52, %53 : vector<32x1xf32>
    %cst_18 = arith.constant 5.000000e-01 : f32
    %55 = vector.broadcast %cst_18 : f32 to vector<32x1xf32>
    %56 = arith.addf %54, %55 : vector<32x1xf32>
    %57 = math.floor %56 : vector<32x1xf32>
    %58 = arith.fptosi %57 : vector<32x1xf32> to vector<32x1xi32>
    %c0_i32_19 = arith.constant 0 : i32
    %59 = vector.broadcast %c0_i32_19 : i32 to vector<32x1xi32>
    %60 = arith.cmpi sge, %49, %59 : vector<32x1xi32>
    %61 = arith.andi %37, %60 : vector<32x1xi1>
    %c16_i32 = arith.constant 16 : i32
    %62 = vector.broadcast %c16_i32 : i32 to vector<32x1xi32>
    %63 = arith.cmpi slt, %49, %62 : vector<32x1xi32>
    %64 = arith.andi %61, %63 : vector<32x1xi1>
    %c0_i32_20 = arith.constant 0 : i32
    %65 = vector.broadcast %c0_i32_20 : i32 to vector<32x1xi32>
    %66 = arith.cmpi sge, %58, %65 : vector<32x1xi32>
    %67 = arith.andi %64, %66 : vector<32x1xi1>
    %c16_i32_21 = arith.constant 16 : i32
    %68 = vector.broadcast %c16_i32_21 : i32 to vector<32x1xi32>
    %69 = arith.cmpi slt, %58, %68 : vector<32x1xi32>
    %70 = arith.andi %67, %69 : vector<32x1xi1>
    %c16_i32_22 = arith.constant 16 : i32
    %71 = vector.broadcast %c16_i32_22 : i32 to vector<32x1xi32>
    %72 = arith.muli %58, %71 : vector<32x1xi32>
    %73 = arith.addi %72, %49 : vector<32x1xi32>
    %c-1_i32 = arith.constant -1 : i32
    %74 = vector.broadcast %c-1_i32 : i32 to vector<32x1xi32>
    %75 = arith.select %70, %73, %74 : vector<32x1xi1>, vector<32x1xi32>
    %c256_i32 = arith.constant 256 : i32
    %76 = arith.muli %arg1, %c256_i32 : i32
    %77 = vector.broadcast %76 : i32 to vector<32x1xi32>
    %78 = arith.subi %75, %77 : vector<32x1xi32>
    %79 = vector.broadcast %78 : vector<32x1xi32> to vector<32x256xi32>
    %80 = arith.cmpi eq, %79, %5 : vector<32x256xi32>
    %81 = vector.shape_cast %35 : vector<32x1xf32> to vector<32x1xf32>
    %82 = vector.broadcast %81 : vector<32x1xf32> to vector<32x256xf32>
    %83 = vector.broadcast %cst_4 : f32 to vector<32x256xf32>
    %84 = arith.select %80, %82, %83 : vector<32x256xi1>, vector<32x256xf32>
    %cst_23 = arith.constant dense<0x7F800000> : vector<256xf32>
    %85 = vector.multi_reduction <minimumf>, %84, %cst_23 [0] : vector<32x256xf32> to vector<256xf32>
    %86 = vector.shape_cast %85 : vector<256xf32> to vector<1x256xf32>
    %87 = arith.minimumf %6, %86 : vector<1x256xf32>
    %c1_i32 = arith.constant 1 : i32
    %c32_i32_24 = arith.constant 32 : i32
    %88 = arith.muli %c1_i32, %c32_i32_24 : i32
    %89 = tpu.assume_multiple %88, 32 : i32
    %c0_25 = arith.constant 0 : index
    %90 = arith.index_cast %89 : i32 to index
    %c0_26 = arith.constant 0 : index
    %91 = vector.load %arg4[%c0_25, %90, %c0_26] : memref<1x256x3xf32, #tpu.memory_space<vmem>>, vector<1x32x3xf32>
    %92 = vector.shape_cast %91 : vector<1x32x3xf32> to vector<32x3xf32>
    %93 = vector.extract_strided_slice %4 {offsets = [0, 0], sizes = [1, 3], strides = [1, 1]} : vector<4x4xf32> to vector<1x3xf32>
    %94 = vector.broadcast %93 : vector<1x3xf32> to vector<32x3xf32>
    %95 = arith.mulf %92, %94 : vector<32x3xf32>
    %cst_27 = arith.constant dense<0.000000e+00> : vector<32xf32>
    %96 = vector.multi_reduction <add>, %95, %cst_27 [1] : vector<32x3xf32> to vector<32xf32>
    %97 = vector.shape_cast %96 : vector<32xf32> to vector<32x1xf32>
    %98 = vector.extract_strided_slice %4 {offsets = [0, 3], sizes = [1, 1], strides = [1, 1]} : vector<4x4xf32> to vector<1x1xf32>
    %99 = vector.broadcast %98 : vector<1x1xf32> to vector<32x1xf32>
    %100 = arith.addf %97, %99 : vector<32x1xf32>
    %101 = vector.extract_strided_slice %4 {offsets = [1, 0], sizes = [1, 3], strides = [1, 1]} : vector<4x4xf32> to vector<1x3xf32>
    %102 = vector.broadcast %101 : vector<1x3xf32> to vector<32x3xf32>
    %103 = arith.mulf %92, %102 : vector<32x3xf32>
    %cst_28 = arith.constant dense<0.000000e+00> : vector<32xf32>
    %104 = vector.multi_reduction <add>, %103, %cst_28 [1] : vector<32x3xf32> to vector<32xf32>
    %105 = vector.shape_cast %104 : vector<32xf32> to vector<32x1xf32>
    %106 = vector.extract_strided_slice %4 {offsets = [1, 3], sizes = [1, 1], strides = [1, 1]} : vector<4x4xf32> to vector<1x1xf32>
    %107 = vector.broadcast %106 : vector<1x1xf32> to vector<32x1xf32>
    %108 = arith.addf %105, %107 : vector<32x1xf32>
    %109 = vector.extract_strided_slice %4 {offsets = [2, 0], sizes = [1, 3], strides = [1, 1]} : vector<4x4xf32> to vector<1x3xf32>
    %110 = vector.broadcast %109 : vector<1x3xf32> to vector<32x3xf32>
    %111 = arith.mulf %92, %110 : vector<32x3xf32>
    %cst_29 = arith.constant dense<0.000000e+00> : vector<32xf32>
    %112 = vector.multi_reduction <add>, %111, %cst_29 [1] : vector<32x3xf32> to vector<32xf32>
    %113 = vector.shape_cast %112 : vector<32xf32> to vector<32x1xf32>
    %114 = vector.extract_strided_slice %4 {offsets = [2, 3], sizes = [1, 1], strides = [1, 1]} : vector<4x4xf32> to vector<1x1xf32>
    %115 = vector.broadcast %114 : vector<1x1xf32> to vector<32x1xf32>
    %116 = arith.addf %113, %115 : vector<32x1xf32>
    %cst_30 = arith.constant 9.99999997E-7 : f32
    %117 = vector.broadcast %cst_30 : f32 to vector<32x1xf32>
    %118 = arith.cmpf ogt, %116, %117 : vector<32x1xf32>
    %cst_31 = arith.constant 1.000000e+00 : f32
    %119 = vector.broadcast %cst_31 : f32 to vector<32x1xf32>
    %120 = arith.select %118, %116, %119 : vector<32x1xi1>, vector<32x1xf32>
    %121 = tpu.reciprocal %120 {approx = true} : vector<32x1xf32> -> vector<32x1xf32>
    %cst_32 = arith.constant 8.000000e+00 : f32
    %122 = vector.broadcast %cst_32 : f32 to vector<32x1xf32>
    %123 = arith.mulf %122, %100 : vector<32x1xf32>
    %124 = arith.mulf %123, %121 : vector<32x1xf32>
    %cst_33 = arith.constant 8.000000e+00 : f32
    %125 = vector.broadcast %cst_33 : f32 to vector<32x1xf32>
    %126 = arith.addf %124, %125 : vector<32x1xf32>
    %cst_34 = arith.constant 5.000000e-01 : f32
    %127 = vector.broadcast %cst_34 : f32 to vector<32x1xf32>
    %128 = arith.addf %126, %127 : vector<32x1xf32>
    %129 = math.floor %128 : vector<32x1xf32>
    %130 = arith.fptosi %129 : vector<32x1xf32> to vector<32x1xi32>
    %cst_35 = arith.constant 8.000000e+00 : f32
    %131 = vector.broadcast %cst_35 : f32 to vector<32x1xf32>
    %132 = arith.mulf %131, %108 : vector<32x1xf32>
    %133 = arith.mulf %132, %121 : vector<32x1xf32>
    %cst_36 = arith.constant 8.000000e+00 : f32
    %134 = vector.broadcast %cst_36 : f32 to vector<32x1xf32>
    %135 = arith.addf %133, %134 : vector<32x1xf32>
    %cst_37 = arith.constant 5.000000e-01 : f32
    %136 = vector.broadcast %cst_37 : f32 to vector<32x1xf32>
    %137 = arith.addf %135, %136 : vector<32x1xf32>
    %138 = math.floor %137 : vector<32x1xf32>
    %139 = arith.fptosi %138 : vector<32x1xf32> to vector<32x1xi32>
    %c0_i32_38 = arith.constant 0 : i32
    %140 = vector.broadcast %c0_i32_38 : i32 to vector<32x1xi32>
    %141 = arith.cmpi sge, %130, %140 : vector<32x1xi32>
    %142 = arith.andi %118, %141 : vector<32x1xi1>
    %c16_i32_39 = arith.constant 16 : i32
    %143 = vector.broadcast %c16_i32_39 : i32 to vector<32x1xi32>
    %144 = arith.cmpi slt, %130, %143 : vector<32x1xi32>
    %145 = arith.andi %142, %144 : vector<32x1xi1>
    %c0_i32_40 = arith.constant 0 : i32
    %146 = vector.broadcast %c0_i32_40 : i32 to vector<32x1xi32>
    %147 = arith.cmpi sge, %139, %146 : vector<32x1xi32>
    %148 = arith.andi %145, %147 : vector<32x1xi1>
    %c16_i32_41 = arith.constant 16 : i32
    %149 = vector.broadcast %c16_i32_41 : i32 to vector<32x1xi32>
    %150 = arith.cmpi slt, %139, %149 : vector<32x1xi32>
    %151 = arith.andi %148, %150 : vector<32x1xi1>
    %c16_i32_42 = arith.constant 16 : i32
    %152 = vector.broadcast %c16_i32_42 : i32 to vector<32x1xi32>
    %153 = arith.muli %139, %152 : vector<32x1xi32>
    %154 = arith.addi %153, %130 : vector<32x1xi32>
    %c-1_i32_43 = arith.constant -1 : i32
    %155 = vector.broadcast %c-1_i32_43 : i32 to vector<32x1xi32>
    %156 = arith.select %151, %154, %155 : vector<32x1xi1>, vector<32x1xi32>
    %c256_i32_44 = arith.constant 256 : i32
    %157 = arith.muli %arg1, %c256_i32_44 : i32
    %158 = vector.broadcast %157 : i32 to vector<32x1xi32>
    %159 = arith.subi %156, %158 : vector<32x1xi32>
    %160 = vector.broadcast %159 : vector<32x1xi32> to vector<32x256xi32>
    %161 = arith.cmpi eq, %160, %5 : vector<32x256xi32>
    %162 = vector.shape_cast %116 : vector<32x1xf32> to vector<32x1xf32>
    %163 = vector.broadcast %162 : vector<32x1xf32> to vector<32x256xf32>
    %164 = vector.broadcast %cst_4 : f32 to vector<32x256xf32>
    %165 = arith.select %161, %163, %164 : vector<32x256xi1>, vector<32x256xf32>
    %cst_45 = arith.constant dense<0x7F800000> : vector<256xf32>
    %166 = vector.multi_reduction <minimumf>, %165, %cst_45 [0] : vector<32x256xf32> to vector<256xf32>
    %167 = vector.shape_cast %166 : vector<256xf32> to vector<1x256xf32>
    %168 = arith.minimumf %87, %167 : vector<1x256xf32>
    %c2_i32 = arith.constant 2 : i32
    %c32_i32_46 = arith.constant 32 : i32
    %169 = arith.muli %c2_i32, %c32_i32_46 : i32
    %170 = tpu.assume_multiple %169, 32 : i32
    %c0_47 = arith.constant 0 : index
    %171 = arith.index_cast %170 : i32 to index
    %c0_48 = arith.constant 0 : index
    %172 = vector.load %arg4[%c0_47, %171, %c0_48] : memref<1x256x3xf32, #tpu.memory_space<vmem>>, vector<1x32x3xf32>
    %173 = vector.shape_cast %172 : vector<1x32x3xf32> to vector<32x3xf32>
    %174 = vector.extract_strided_slice %4 {offsets = [0, 0], sizes = [1, 3], strides = [1, 1]} : vector<4x4xf32> to vector<1x3xf32>
    %175 = vector.broadcast %174 : vector<1x3xf32> to vector<32x3xf32>
    %176 = arith.mulf %173, %175 : vector<32x3xf32>
    %cst_49 = arith.constant dense<0.000000e+00> : vector<32xf32>
    %177 = vector.multi_reduction <add>, %176, %cst_49 [1] : vector<32x3xf32> to vector<32xf32>
    %178 = vector.shape_cast %177 : vector<32xf32> to vector<32x1xf32>
    %179 = vector.extract_strided_slice %4 {offsets = [0, 3], sizes = [1, 1], strides = [1, 1]} : vector<4x4xf32> to vector<1x1xf32>
    %180 = vector.broadcast %179 : vector<1x1xf32> to vector<32x1xf32>
    %181 = arith.addf %178, %180 : vector<32x1xf32>
    %182 = vector.extract_strided_slice %4 {offsets = [1, 0], sizes = [1, 3], strides = [1, 1]} : vector<4x4xf32> to vector<1x3xf32>
    %183 = vector.broadcast %182 : vector<1x3xf32> to vector<32x3xf32>
    %184 = arith.mulf %173, %183 : vector<32x3xf32>
    %cst_50 = arith.constant dense<0.000000e+00> : vector<32xf32>
    %185 = vector.multi_reduction <add>, %184, %cst_50 [1] : vector<32x3xf32> to vector<32xf32>
    %186 = vector.shape_cast %185 : vector<32xf32> to vector<32x1xf32>
    %187 = vector.extract_strided_slice %4 {offsets = [1, 3], sizes = [1, 1], strides = [1, 1]} : vector<4x4xf32> to vector<1x1xf32>
    %188 = vector.broadcast %187 : vector<1x1xf32> to vector<32x1xf32>
    %189 = arith.addf %186, %188 : vector<32x1xf32>
    %190 = vector.extract_strided_slice %4 {offsets = [2, 0], sizes = [1, 3], strides = [1, 1]} : vector<4x4xf32> to vector<1x3xf32>
    %191 = vector.broadcast %190 : vector<1x3xf32> to vector<32x3xf32>
    %192 = arith.mulf %173, %191 : vector<32x3xf32>
    %cst_51 = arith.constant dense<0.000000e+00> : vector<32xf32>
    %193 = vector.multi_reduction <add>, %192, %cst_51 [1] : vector<32x3xf32> to vector<32xf32>
    %194 = vector.shape_cast %193 : vector<32xf32> to vector<32x1xf32>
    %195 = vector.extract_strided_slice %4 {offsets = [2, 3], sizes = [1, 1], strides = [1, 1]} : vector<4x4xf32> to vector<1x1xf32>
    %196 = vector.broadcast %195 : vector<1x1xf32> to vector<32x1xf32>
    %197 = arith.addf %194, %196 : vector<32x1xf32>
    %cst_52 = arith.constant 9.99999997E-7 : f32
    %198 = vector.broadcast %cst_52 : f32 to vector<32x1xf32>
    %199 = arith.cmpf ogt, %197, %198 : vector<32x1xf32>
    %cst_53 = arith.constant 1.000000e+00 : f32
    %200 = vector.broadcast %cst_53 : f32 to vector<32x1xf32>
    %201 = arith.select %199, %197, %200 : vector<32x1xi1>, vector<32x1xf32>
    %202 = tpu.reciprocal %201 {approx = true} : vector<32x1xf32> -> vector<32x1xf32>
    %cst_54 = arith.constant 8.000000e+00 : f32
    %203 = vector.broadcast %cst_54 : f32 to vector<32x1xf32>
    %204 = arith.mulf %203, %181 : vector<32x1xf32>
    %205 = arith.mulf %204, %202 : vector<32x1xf32>
    %cst_55 = arith.constant 8.000000e+00 : f32
    %206 = vector.broadcast %cst_55 : f32 to vector<32x1xf32>
    %207 = arith.addf %205, %206 : vector<32x1xf32>
    %cst_56 = arith.constant 5.000000e-01 : f32
    %208 = vector.broadcast %cst_56 : f32 to vector<32x1xf32>
    %209 = arith.addf %207, %208 : vector<32x1xf32>
    %210 = math.floor %209 : vector<32x1xf32>
    %211 = arith.fptosi %210 : vector<32x1xf32> to vector<32x1xi32>
    %cst_57 = arith.constant 8.000000e+00 : f32
    %212 = vector.broadcast %cst_57 : f32 to vector<32x1xf32>
    %213 = arith.mulf %212, %189 : vector<32x1xf32>
    %214 = arith.mulf %213, %202 : vector<32x1xf32>
    %cst_58 = arith.constant 8.000000e+00 : f32
    %215 = vector.broadcast %cst_58 : f32 to vector<32x1xf32>
    %216 = arith.addf %214, %215 : vector<32x1xf32>
    %cst_59 = arith.constant 5.000000e-01 : f32
    %217 = vector.broadcast %cst_59 : f32 to vector<32x1xf32>
    %218 = arith.addf %216, %217 : vector<32x1xf32>
    %219 = math.floor %218 : vector<32x1xf32>
    %220 = arith.fptosi %219 : vector<32x1xf32> to vector<32x1xi32>
    %c0_i32_60 = arith.constant 0 : i32
    %221 = vector.broadcast %c0_i32_60 : i32 to vector<32x1xi32>
    %222 = arith.cmpi sge, %211, %221 : vector<32x1xi32>
    %223 = arith.andi %199, %222 : vector<32x1xi1>
    %c16_i32_61 = arith.constant 16 : i32
    %224 = vector.broadcast %c16_i32_61 : i32 to vector<32x1xi32>
    %225 = arith.cmpi slt, %211, %224 : vector<32x1xi32>
    %226 = arith.andi %223, %225 : vector<32x1xi1>
    %c0_i32_62 = arith.constant 0 : i32
    %227 = vector.broadcast %c0_i32_62 : i32 to vector<32x1xi32>
    %228 = arith.cmpi sge, %220, %227 : vector<32x1xi32>
    %229 = arith.andi %226, %228 : vector<32x1xi1>
    %c16_i32_63 = arith.constant 16 : i32
    %230 = vector.broadcast %c16_i32_63 : i32 to vector<32x1xi32>
    %231 = arith.cmpi slt, %220, %230 : vector<32x1xi32>
    %232 = arith.andi %229, %231 : vector<32x1xi1>
    %c16_i32_64 = arith.constant 16 : i32
    %233 = vector.broadcast %c16_i32_64 : i32 to vector<32x1xi32>
    %234 = arith.muli %220, %233 : vector<32x1xi32>
    %235 = arith.addi %234, %211 : vector<32x1xi32>
    %c-1_i32_65 = arith.constant -1 : i32
    %236 = vector.broadcast %c-1_i32_65 : i32 to vector<32x1xi32>
    %237 = arith.select %232, %235, %236 : vector<32x1xi1>, vector<32x1xi32>
    %c256_i32_66 = arith.constant 256 : i32
    %238 = arith.muli %arg1, %c256_i32_66 : i32
    %239 = vector.broadcast %238 : i32 to vector<32x1xi32>
    %240 = arith.subi %237, %239 : vector<32x1xi32>
    %241 = vector.broadcast %240 : vector<32x1xi32> to vector<32x256xi32>
    %242 = arith.cmpi eq, %241, %5 : vector<32x256xi32>
    %243 = vector.shape_cast %197 : vector<32x1xf32> to vector<32x1xf32>
    %244 = vector.broadcast %243 : vector<32x1xf32> to vector<32x256xf32>
    %245 = vector.broadcast %cst_4 : f32 to vector<32x256xf32>
    %246 = arith.select %242, %244, %245 : vector<32x256xi1>, vector<32x256xf32>
    %cst_67 = arith.constant dense<0x7F800000> : vector<256xf32>
    %247 = vector.multi_reduction <minimumf>, %246, %cst_67 [0] : vector<32x256xf32> to vector<256xf32>
    %248 = vector.shape_cast %247 : vector<256xf32> to vector<1x256xf32>
    %249 = arith.minimumf %168, %248 : vector<1x256xf32>
    %c3_i32 = arith.constant 3 : i32
    %c32_i32_68 = arith.constant 32 : i32
    %250 = arith.muli %c3_i32, %c32_i32_68 : i32
    %251 = tpu.assume_multiple %250, 32 : i32
    %c0_69 = arith.constant 0 : index
    %252 = arith.index_cast %251 : i32 to index
    %c0_70 = arith.constant 0 : index
    %253 = vector.load %arg4[%c0_69, %252, %c0_70] : memref<1x256x3xf32, #tpu.memory_space<vmem>>, vector<1x32x3xf32>
    %254 = vector.shape_cast %253 : vector<1x32x3xf32> to vector<32x3xf32>
    %255 = vector.extract_strided_slice %4 {offsets = [0, 0], sizes = [1, 3], strides = [1, 1]} : vector<4x4xf32> to vector<1x3xf32>
    %256 = vector.broadcast %255 : vector<1x3xf32> to vector<32x3xf32>
    %257 = arith.mulf %254, %256 : vector<32x3xf32>
    %cst_71 = arith.constant dense<0.000000e+00> : vector<32xf32>
    %258 = vector.multi_reduction <add>, %257, %cst_71 [1] : vector<32x3xf32> to vector<32xf32>
    %259 = vector.shape_cast %258 : vector<32xf32> to vector<32x1xf32>
    %260 = vector.extract_strided_slice %4 {offsets = [0, 3], sizes = [1, 1], strides = [1, 1]} : vector<4x4xf32> to vector<1x1xf32>
    %261 = vector.broadcast %260 : vector<1x1xf32> to vector<32x1xf32>
    %262 = arith.addf %259, %261 : vector<32x1xf32>
    %263 = vector.extract_strided_slice %4 {offsets = [1, 0], sizes = [1, 3], strides = [1, 1]} : vector<4x4xf32> to vector<1x3xf32>
    %264 = vector.broadcast %263 : vector<1x3xf32> to vector<32x3xf32>
    %265 = arith.mulf %254, %264 : vector<32x3xf32>
    %cst_72 = arith.constant dense<0.000000e+00> : vector<32xf32>
    %266 = vector.multi_reduction <add>, %265, %cst_72 [1] : vector<32x3xf32> to vector<32xf32>
    %267 = vector.shape_cast %266 : vector<32xf32> to vector<32x1xf32>
    %268 = vector.extract_strided_slice %4 {offsets = [1, 3], sizes = [1, 1], strides = [1, 1]} : vector<4x4xf32> to vector<1x1xf32>
    %269 = vector.broadcast %268 : vector<1x1xf32> to vector<32x1xf32>
    %270 = arith.addf %267, %269 : vector<32x1xf32>
    %271 = vector.extract_strided_slice %4 {offsets = [2, 0], sizes = [1, 3], strides = [1, 1]} : vector<4x4xf32> to vector<1x3xf32>
    %272 = vector.broadcast %271 : vector<1x3xf32> to vector<32x3xf32>
    %273 = arith.mulf %254, %272 : vector<32x3xf32>
    %cst_73 = arith.constant dense<0.000000e+00> : vector<32xf32>
    %274 = vector.multi_reduction <add>, %273, %cst_73 [1] : vector<32x3xf32> to vector<32xf32>
    %275 = vector.shape_cast %274 : vector<32xf32> to vector<32x1xf32>
    %276 = vector.extract_strided_slice %4 {offsets = [2, 3], sizes = [1, 1], strides = [1, 1]} : vector<4x4xf32> to vector<1x1xf32>
    %277 = vector.broadcast %276 : vector<1x1xf32> to vector<32x1xf32>
    %278 = arith.addf %275, %277 : vector<32x1xf32>
    %cst_74 = arith.constant 9.99999997E-7 : f32
    %279 = vector.broadcast %cst_74 : f32 to vector<32x1xf32>
    %280 = arith.cmpf ogt, %278, %279 : vector<32x1xf32>
    %cst_75 = arith.constant 1.000000e+00 : f32
    %281 = vector.broadcast %cst_75 : f32 to vector<32x1xf32>
    %282 = arith.select %280, %278, %281 : vector<32x1xi1>, vector<32x1xf32>
    %283 = tpu.reciprocal %282 {approx = true} : vector<32x1xf32> -> vector<32x1xf32>
    %cst_76 = arith.constant 8.000000e+00 : f32
    %284 = vector.broadcast %cst_76 : f32 to vector<32x1xf32>
    %285 = arith.mulf %284, %262 : vector<32x1xf32>
    %286 = arith.mulf %285, %283 : vector<32x1xf32>
    %cst_77 = arith.constant 8.000000e+00 : f32
    %287 = vector.broadcast %cst_77 : f32 to vector<32x1xf32>
    %288 = arith.addf %286, %287 : vector<32x1xf32>
    %cst_78 = arith.constant 5.000000e-01 : f32
    %289 = vector.broadcast %cst_78 : f32 to vector<32x1xf32>
    %290 = arith.addf %288, %289 : vector<32x1xf32>
    %291 = math.floor %290 : vector<32x1xf32>
    %292 = arith.fptosi %291 : vector<32x1xf32> to vector<32x1xi32>
    %cst_79 = arith.constant 8.000000e+00 : f32
    %293 = vector.broadcast %cst_79 : f32 to vector<32x1xf32>
    %294 = arith.mulf %293, %270 : vector<32x1xf32>
    %295 = arith.mulf %294, %283 : vector<32x1xf32>
    %cst_80 = arith.constant 8.000000e+00 : f32
    %296 = vector.broadcast %cst_80 : f32 to vector<32x1xf32>
    %297 = arith.addf %295, %296 : vector<32x1xf32>
    %cst_81 = arith.constant 5.000000e-01 : f32
    %298 = vector.broadcast %cst_81 : f32 to vector<32x1xf32>
    %299 = arith.addf %297, %298 : vector<32x1xf32>
    %300 = math.floor %299 : vector<32x1xf32>
    %301 = arith.fptosi %300 : vector<32x1xf32> to vector<32x1xi32>
    %c0_i32_82 = arith.constant 0 : i32
    %302 = vector.broadcast %c0_i32_82 : i32 to vector<32x1xi32>
    %303 = arith.cmpi sge, %292, %302 : vector<32x1xi32>
    %304 = arith.andi %280, %303 : vector<32x1xi1>
    %c16_i32_83 = arith.constant 16 : i32
    %305 = vector.broadcast %c16_i32_83 : i32 to vector<32x1xi32>
    %306 = arith.cmpi slt, %292, %305 : vector<32x1xi32>
    %307 = arith.andi %304, %306 : vector<32x1xi1>
    %c0_i32_84 = arith.constant 0 : i32
    %308 = vector.broadcast %c0_i32_84 : i32 to vector<32x1xi32>
    %309 = arith.cmpi sge, %301, %308 : vector<32x1xi32>
    %310 = arith.andi %307, %309 : vector<32x1xi1>
    %c16_i32_85 = arith.constant 16 : i32
    %311 = vector.broadcast %c16_i32_85 : i32 to vector<32x1xi32>
    %312 = arith.cmpi slt, %301, %311 : vector<32x1xi32>
    %313 = arith.andi %310, %312 : vector<32x1xi1>
    %c16_i32_86 = arith.constant 16 : i32
    %314 = vector.broadcast %c16_i32_86 : i32 to vector<32x1xi32>
    %315 = arith.muli %301, %314 : vector<32x1xi32>
    %316 = arith.addi %315, %292 : vector<32x1xi32>
    %c-1_i32_87 = arith.constant -1 : i32
    %317 = vector.broadcast %c-1_i32_87 : i32 to vector<32x1xi32>
    %318 = arith.select %313, %316, %317 : vector<32x1xi1>, vector<32x1xi32>
    %c256_i32_88 = arith.constant 256 : i32
    %319 = arith.muli %arg1, %c256_i32_88 : i32
    %320 = vector.broadcast %319 : i32 to vector<32x1xi32>
    %321 = arith.subi %318, %320 : vector<32x1xi32>
    %322 = vector.broadcast %321 : vector<32x1xi32> to vector<32x256xi32>
    %323 = arith.cmpi eq, %322, %5 : vector<32x256xi32>
    %324 = vector.shape_cast %278 : vector<32x1xf32> to vector<32x1xf32>
    %325 = vector.broadcast %324 : vector<32x1xf32> to vector<32x256xf32>
    %326 = vector.broadcast %cst_4 : f32 to vector<32x256xf32>
    %327 = arith.select %323, %325, %326 : vector<32x256xi1>, vector<32x256xf32>
    %cst_89 = arith.constant dense<0x7F800000> : vector<256xf32>
    %328 = vector.multi_reduction <minimumf>, %327, %cst_89 [0] : vector<32x256xf32> to vector<256xf32>
    %329 = vector.shape_cast %328 : vector<256xf32> to vector<1x256xf32>
    %330 = arith.minimumf %249, %329 : vector<1x256xf32>
    %c4_i32 = arith.constant 4 : i32
    %c32_i32_90 = arith.constant 32 : i32
    %331 = arith.muli %c4_i32, %c32_i32_90 : i32
    %332 = tpu.assume_multiple %331, 32 : i32
    %c0_91 = arith.constant 0 : index
    %333 = arith.index_cast %332 : i32 to index
    %c0_92 = arith.constant 0 : index
    %334 = vector.load %arg4[%c0_91, %333, %c0_92] : memref<1x256x3xf32, #tpu.memory_space<vmem>>, vector<1x32x3xf32>
    %335 = vector.shape_cast %334 : vector<1x32x3xf32> to vector<32x3xf32>
    %336 = vector.extract_strided_slice %4 {offsets = [0, 0], sizes = [1, 3], strides = [1, 1]} : vector<4x4xf32> to vector<1x3xf32>
    %337 = vector.broadcast %336 : vector<1x3xf32> to vector<32x3xf32>
    %338 = arith.mulf %335, %337 : vector<32x3xf32>
    %cst_93 = arith.constant dense<0.000000e+00> : vector<32xf32>
    %339 = vector.multi_reduction <add>, %338, %cst_93 [1] : vector<32x3xf32> to vector<32xf32>
    %340 = vector.shape_cast %339 : vector<32xf32> to vector<32x1xf32>
    %341 = vector.extract_strided_slice %4 {offsets = [0, 3], sizes = [1, 1], strides = [1, 1]} : vector<4x4xf32> to vector<1x1xf32>
    %342 = vector.broadcast %341 : vector<1x1xf32> to vector<32x1xf32>
    %343 = arith.addf %340, %342 : vector<32x1xf32>
    %344 = vector.extract_strided_slice %4 {offsets = [1, 0], sizes = [1, 3], strides = [1, 1]} : vector<4x4xf32> to vector<1x3xf32>
    %345 = vector.broadcast %344 : vector<1x3xf32> to vector<32x3xf32>
    %346 = arith.mulf %335, %345 : vector<32x3xf32>
    %cst_94 = arith.constant dense<0.000000e+00> : vector<32xf32>
    %347 = vector.multi_reduction <add>, %346, %cst_94 [1] : vector<32x3xf32> to vector<32xf32>
    %348 = vector.shape_cast %347 : vector<32xf32> to vector<32x1xf32>
    %349 = vector.extract_strided_slice %4 {offsets = [1, 3], sizes = [1, 1], strides = [1, 1]} : vector<4x4xf32> to vector<1x1xf32>
    %350 = vector.broadcast %349 : vector<1x1xf32> to vector<32x1xf32>
    %351 = arith.addf %348, %350 : vector<32x1xf32>
    %352 = vector.extract_strided_slice %4 {offsets = [2, 0], sizes = [1, 3], strides = [1, 1]} : vector<4x4xf32> to vector<1x3xf32>
    %353 = vector.broadcast %352 : vector<1x3xf32> to vector<32x3xf32>
    %354 = arith.mulf %335, %353 : vector<32x3xf32>
    %cst_95 = arith.constant dense<0.000000e+00> : vector<32xf32>
    %355 = vector.multi_reduction <add>, %354, %cst_95 [1] : vector<32x3xf32> to vector<32xf32>
    %356 = vector.shape_cast %355 : vector<32xf32> to vector<32x1xf32>
    %357 = vector.extract_strided_slice %4 {offsets = [2, 3], sizes = [1, 1], strides = [1, 1]} : vector<4x4xf32> to vector<1x1xf32>
    %358 = vector.broadcast %357 : vector<1x1xf32> to vector<32x1xf32>
    %359 = arith.addf %356, %358 : vector<32x1xf32>
    %cst_96 = arith.constant 9.99999997E-7 : f32
    %360 = vector.broadcast %cst_96 : f32 to vector<32x1xf32>
    %361 = arith.cmpf ogt, %359, %360 : vector<32x1xf32>
    %cst_97 = arith.constant 1.000000e+00 : f32
    %362 = vector.broadcast %cst_97 : f32 to vector<32x1xf32>
    %363 = arith.select %361, %359, %362 : vector<32x1xi1>, vector<32x1xf32>
    %364 = tpu.reciprocal %363 {approx = true} : vector<32x1xf32> -> vector<32x1xf32>
    %cst_98 = arith.constant 8.000000e+00 : f32
    %365 = vector.broadcast %cst_98 : f32 to vector<32x1xf32>
    %366 = arith.mulf %365, %343 : vector<32x1xf32>
    %367 = arith.mulf %366, %364 : vector<32x1xf32>
    %cst_99 = arith.constant 8.000000e+00 : f32
    %368 = vector.broadcast %cst_99 : f32 to vector<32x1xf32>
    %369 = arith.addf %367, %368 : vector<32x1xf32>
    %cst_100 = arith.constant 5.000000e-01 : f32
    %370 = vector.broadcast %cst_100 : f32 to vector<32x1xf32>
    %371 = arith.addf %369, %370 : vector<32x1xf32>
    %372 = math.floor %371 : vector<32x1xf32>
    %373 = arith.fptosi %372 : vector<32x1xf32> to vector<32x1xi32>
    %cst_101 = arith.constant 8.000000e+00 : f32
    %374 = vector.broadcast %cst_101 : f32 to vector<32x1xf32>
    %375 = arith.mulf %374, %351 : vector<32x1xf32>
    %376 = arith.mulf %375, %364 : vector<32x1xf32>
    %cst_102 = arith.constant 8.000000e+00 : f32
    %377 = vector.broadcast %cst_102 : f32 to vector<32x1xf32>
    %378 = arith.addf %376, %377 : vector<32x1xf32>
    %cst_103 = arith.constant 5.000000e-01 : f32
    %379 = vector.broadcast %cst_103 : f32 to vector<32x1xf32>
    %380 = arith.addf %378, %379 : vector<32x1xf32>
    %381 = math.floor %380 : vector<32x1xf32>
    %382 = arith.fptosi %381 : vector<32x1xf32> to vector<32x1xi32>
    %c0_i32_104 = arith.constant 0 : i32
    %383 = vector.broadcast %c0_i32_104 : i32 to vector<32x1xi32>
    %384 = arith.cmpi sge, %373, %383 : vector<32x1xi32>
    %385 = arith.andi %361, %384 : vector<32x1xi1>
    %c16_i32_105 = arith.constant 16 : i32
    %386 = vector.broadcast %c16_i32_105 : i32 to vector<32x1xi32>
    %387 = arith.cmpi slt, %373, %386 : vector<32x1xi32>
    %388 = arith.andi %385, %387 : vector<32x1xi1>
    %c0_i32_106 = arith.constant 0 : i32
    %389 = vector.broadcast %c0_i32_106 : i32 to vector<32x1xi32>
    %390 = arith.cmpi sge, %382, %389 : vector<32x1xi32>
    %391 = arith.andi %388, %390 : vector<32x1xi1>
    %c16_i32_107 = arith.constant 16 : i32
    %392 = vector.broadcast %c16_i32_107 : i32 to vector<32x1xi32>
    %393 = arith.cmpi slt, %382, %392 : vector<32x1xi32>
    %394 = arith.andi %391, %393 : vector<32x1xi1>
    %c16_i32_108 = arith.constant 16 : i32
    %395 = vector.broadcast %c16_i32_108 : i32 to vector<32x1xi32>
    %396 = arith.muli %382, %395 : vector<32x1xi32>
    %397 = arith.addi %396, %373 : vector<32x1xi32>
    %c-1_i32_109 = arith.constant -1 : i32
    %398 = vector.broadcast %c-1_i32_109 : i32 to vector<32x1xi32>
    %399 = arith.select %394, %397, %398 : vector<32x1xi1>, vector<32x1xi32>
    %c256_i32_110 = arith.constant 256 : i32
    %400 = arith.muli %arg1, %c256_i32_110 : i32
    %401 = vector.broadcast %400 : i32 to vector<32x1xi32>
    %402 = arith.subi %399, %401 : vector<32x1xi32>
    %403 = vector.broadcast %402 : vector<32x1xi32> to vector<32x256xi32>
    %404 = arith.cmpi eq, %403, %5 : vector<32x256xi32>
    %405 = vector.shape_cast %359 : vector<32x1xf32> to vector<32x1xf32>
    %406 = vector.broadcast %405 : vector<32x1xf32> to vector<32x256xf32>
    %407 = vector.broadcast %cst_4 : f32 to vector<32x256xf32>
    %408 = arith.select %404, %406, %407 : vector<32x256xi1>, vector<32x256xf32>
    %cst_111 = arith.constant dense<0x7F800000> : vector<256xf32>
    %409 = vector.multi_reduction <minimumf>, %408, %cst_111 [0] : vector<32x256xf32> to vector<256xf32>
    %410 = vector.shape_cast %409 : vector<256xf32> to vector<1x256xf32>
    %411 = arith.minimumf %330, %410 : vector<1x256xf32>
    %c5_i32 = arith.constant 5 : i32
    %c32_i32_112 = arith.constant 32 : i32
    %412 = arith.muli %c5_i32, %c32_i32_112 : i32
    %413 = tpu.assume_multiple %412, 32 : i32
    %c0_113 = arith.constant 0 : index
    %414 = arith.index_cast %413 : i32 to index
    %c0_114 = arith.constant 0 : index
    %415 = vector.load %arg4[%c0_113, %414, %c0_114] : memref<1x256x3xf32, #tpu.memory_space<vmem>>, vector<1x32x3xf32>
    %416 = vector.shape_cast %415 : vector<1x32x3xf32> to vector<32x3xf32>
    %417 = vector.extract_strided_slice %4 {offsets = [0, 0], sizes = [1, 3], strides = [1, 1]} : vector<4x4xf32> to vector<1x3xf32>
    %418 = vector.broadcast %417 : vector<1x3xf32> to vector<32x3xf32>
    %419 = arith.mulf %416, %418 : vector<32x3xf32>
    %cst_115 = arith.constant dense<0.000000e+00> : vector<32xf32>
    %420 = vector.multi_reduction <add>, %419, %cst_115 [1] : vector<32x3xf32> to vector<32xf32>
    %421 = vector.shape_cast %420 : vector<32xf32> to vector<32x1xf32>
    %422 = vector.extract_strided_slice %4 {offsets = [0, 3], sizes = [1, 1], strides = [1, 1]} : vector<4x4xf32> to vector<1x1xf32>
    %423 = vector.broadcast %422 : vector<1x1xf32> to vector<32x1xf32>
    %424 = arith.addf %421, %423 : vector<32x1xf32>
    %425 = vector.extract_strided_slice %4 {offsets = [1, 0], sizes = [1, 3], strides = [1, 1]} : vector<4x4xf32> to vector<1x3xf32>
    %426 = vector.broadcast %425 : vector<1x3xf32> to vector<32x3xf32>
    %427 = arith.mulf %416, %426 : vector<32x3xf32>
    %cst_116 = arith.constant dense<0.000000e+00> : vector<32xf32>
    %428 = vector.multi_reduction <add>, %427, %cst_116 [1] : vector<32x3xf32> to vector<32xf32>
    %429 = vector.shape_cast %428 : vector<32xf32> to vector<32x1xf32>
    %430 = vector.extract_strided_slice %4 {offsets = [1, 3], sizes = [1, 1], strides = [1, 1]} : vector<4x4xf32> to vector<1x1xf32>
    %431 = vector.broadcast %430 : vector<1x1xf32> to vector<32x1xf32>
    %432 = arith.addf %429, %431 : vector<32x1xf32>
    %433 = vector.extract_strided_slice %4 {offsets = [2, 0], sizes = [1, 3], strides = [1, 1]} : vector<4x4xf32> to vector<1x3xf32>
    %434 = vector.broadcast %433 : vector<1x3xf32> to vector<32x3xf32>
    %435 = arith.mulf %416, %434 : vector<32x3xf32>
    %cst_117 = arith.constant dense<0.000000e+00> : vector<32xf32>
    %436 = vector.multi_reduction <add>, %435, %cst_117 [1] : vector<32x3xf32> to vector<32xf32>
    %437 = vector.shape_cast %436 : vector<32xf32> to vector<32x1xf32>
    %438 = vector.extract_strided_slice %4 {offsets = [2, 3], sizes = [1, 1], strides = [1, 1]} : vector<4x4xf32> to vector<1x1xf32>
    %439 = vector.broadcast %438 : vector<1x1xf32> to vector<32x1xf32>
    %440 = arith.addf %437, %439 : vector<32x1xf32>
    %cst_118 = arith.constant 9.99999997E-7 : f32
    %441 = vector.broadcast %cst_118 : f32 to vector<32x1xf32>
    %442 = arith.cmpf ogt, %440, %441 : vector<32x1xf32>
    %cst_119 = arith.constant 1.000000e+00 : f32
    %443 = vector.broadcast %cst_119 : f32 to vector<32x1xf32>
    %444 = arith.select %442, %440, %443 : vector<32x1xi1>, vector<32x1xf32>
    %445 = tpu.reciprocal %444 {approx = true} : vector<32x1xf32> -> vector<32x1xf32>
    %cst_120 = arith.constant 8.000000e+00 : f32
    %446 = vector.broadcast %cst_120 : f32 to vector<32x1xf32>
    %447 = arith.mulf %446, %424 : vector<32x1xf32>
    %448 = arith.mulf %447, %445 : vector<32x1xf32>
    %cst_121 = arith.constant 8.000000e+00 : f32
    %449 = vector.broadcast %cst_121 : f32 to vector<32x1xf32>
    %450 = arith.addf %448, %449 : vector<32x1xf32>
    %cst_122 = arith.constant 5.000000e-01 : f32
    %451 = vector.broadcast %cst_122 : f32 to vector<32x1xf32>
    %452 = arith.addf %450, %451 : vector<32x1xf32>
    %453 = math.floor %452 : vector<32x1xf32>
    %454 = arith.fptosi %453 : vector<32x1xf32> to vector<32x1xi32>
    %cst_123 = arith.constant 8.000000e+00 : f32
    %455 = vector.broadcast %cst_123 : f32 to vector<32x1xf32>
    %456 = arith.mulf %455, %432 : vector<32x1xf32>
    %457 = arith.mulf %456, %445 : vector<32x1xf32>
    %cst_124 = arith.constant 8.000000e+00 : f32
    %458 = vector.broadcast %cst_124 : f32 to vector<32x1xf32>
    %459 = arith.addf %457, %458 : vector<32x1xf32>
    %cst_125 = arith.constant 5.000000e-01 : f32
    %460 = vector.broadcast %cst_125 : f32 to vector<32x1xf32>
    %461 = arith.addf %459, %460 : vector<32x1xf32>
    %462 = math.floor %461 : vector<32x1xf32>
    %463 = arith.fptosi %462 : vector<32x1xf32> to vector<32x1xi32>
    %c0_i32_126 = arith.constant 0 : i32
    %464 = vector.broadcast %c0_i32_126 : i32 to vector<32x1xi32>
    %465 = arith.cmpi sge, %454, %464 : vector<32x1xi32>
    %466 = arith.andi %442, %465 : vector<32x1xi1>
    %c16_i32_127 = arith.constant 16 : i32
    %467 = vector.broadcast %c16_i32_127 : i32 to vector<32x1xi32>
    %468 = arith.cmpi slt, %454, %467 : vector<32x1xi32>
    %469 = arith.andi %466, %468 : vector<32x1xi1>
    %c0_i32_128 = arith.constant 0 : i32
    %470 = vector.broadcast %c0_i32_128 : i32 to vector<32x1xi32>
    %471 = arith.cmpi sge, %463, %470 : vector<32x1xi32>
    %472 = arith.andi %469, %471 : vector<32x1xi1>
    %c16_i32_129 = arith.constant 16 : i32
    %473 = vector.broadcast %c16_i32_129 : i32 to vector<32x1xi32>
    %474 = arith.cmpi slt, %463, %473 : vector<32x1xi32>
    %475 = arith.andi %472, %474 : vector<32x1xi1>
    %c16_i32_130 = arith.constant 16 : i32
    %476 = vector.broadcast %c16_i32_130 : i32 to vector<32x1xi32>
    %477 = arith.muli %463, %476 : vector<32x1xi32>
    %478 = arith.addi %477, %454 : vector<32x1xi32>
    %c-1_i32_131 = arith.constant -1 : i32
    %479 = vector.broadcast %c-1_i32_131 : i32 to vector<32x1xi32>
    %480 = arith.select %475, %478, %479 : vector<32x1xi1>, vector<32x1xi32>
    %c256_i32_132 = arith.constant 256 : i32
    %481 = arith.muli %arg1, %c256_i32_132 : i32
    %482 = vector.broadcast %481 : i32 to vector<32x1xi32>
    %483 = arith.subi %480, %482 : vector<32x1xi32>
    %484 = vector.broadcast %483 : vector<32x1xi32> to vector<32x256xi32>
    %485 = arith.cmpi eq, %484, %5 : vector<32x256xi32>
    %486 = vector.shape_cast %440 : vector<32x1xf32> to vector<32x1xf32>
    %487 = vector.broadcast %486 : vector<32x1xf32> to vector<32x256xf32>
    %488 = vector.broadcast %cst_4 : f32 to vector<32x256xf32>
    %489 = arith.select %485, %487, %488 : vector<32x256xi1>, vector<32x256xf32>
    %cst_133 = arith.constant dense<0x7F800000> : vector<256xf32>
    %490 = vector.multi_reduction <minimumf>, %489, %cst_133 [0] : vector<32x256xf32> to vector<256xf32>
    %491 = vector.shape_cast %490 : vector<256xf32> to vector<1x256xf32>
    %492 = arith.minimumf %411, %491 : vector<1x256xf32>
    %c6_i32 = arith.constant 6 : i32
    %c32_i32_134 = arith.constant 32 : i32
    %493 = arith.muli %c6_i32, %c32_i32_134 : i32
    %494 = tpu.assume_multiple %493, 32 : i32
    %c0_135 = arith.constant 0 : index
    %495 = arith.index_cast %494 : i32 to index
    %c0_136 = arith.constant 0 : index
    %496 = vector.load %arg4[%c0_135, %495, %c0_136] : memref<1x256x3xf32, #tpu.memory_space<vmem>>, vector<1x32x3xf32>
    %497 = vector.shape_cast %496 : vector<1x32x3xf32> to vector<32x3xf32>
    %498 = vector.extract_strided_slice %4 {offsets = [0, 0], sizes = [1, 3], strides = [1, 1]} : vector<4x4xf32> to vector<1x3xf32>
    %499 = vector.broadcast %498 : vector<1x3xf32> to vector<32x3xf32>
    %500 = arith.mulf %497, %499 : vector<32x3xf32>
    %cst_137 = arith.constant dense<0.000000e+00> : vector<32xf32>
    %501 = vector.multi_reduction <add>, %500, %cst_137 [1] : vector<32x3xf32> to vector<32xf32>
    %502 = vector.shape_cast %501 : vector<32xf32> to vector<32x1xf32>
    %503 = vector.extract_strided_slice %4 {offsets = [0, 3], sizes = [1, 1], strides = [1, 1]} : vector<4x4xf32> to vector<1x1xf32>
    %504 = vector.broadcast %503 : vector<1x1xf32> to vector<32x1xf32>
    %505 = arith.addf %502, %504 : vector<32x1xf32>
    %506 = vector.extract_strided_slice %4 {offsets = [1, 0], sizes = [1, 3], strides = [1, 1]} : vector<4x4xf32> to vector<1x3xf32>
    %507 = vector.broadcast %506 : vector<1x3xf32> to vector<32x3xf32>
    %508 = arith.mulf %497, %507 : vector<32x3xf32>
    %cst_138 = arith.constant dense<0.000000e+00> : vector<32xf32>
    %509 = vector.multi_reduction <add>, %508, %cst_138 [1] : vector<32x3xf32> to vector<32xf32>
    %510 = vector.shape_cast %509 : vector<32xf32> to vector<32x1xf32>
    %511 = vector.extract_strided_slice %4 {offsets = [1, 3], sizes = [1, 1], strides = [1, 1]} : vector<4x4xf32> to vector<1x1xf32>
    %512 = vector.broadcast %511 : vector<1x1xf32> to vector<32x1xf32>
    %513 = arith.addf %510, %512 : vector<32x1xf32>
    %514 = vector.extract_strided_slice %4 {offsets = [2, 0], sizes = [1, 3], strides = [1, 1]} : vector<4x4xf32> to vector<1x3xf32>
    %515 = vector.broadcast %514 : vector<1x3xf32> to vector<32x3xf32>
    %516 = arith.mulf %497, %515 : vector<32x3xf32>
    %cst_139 = arith.constant dense<0.000000e+00> : vector<32xf32>
    %517 = vector.multi_reduction <add>, %516, %cst_139 [1] : vector<32x3xf32> to vector<32xf32>
    %518 = vector.shape_cast %517 : vector<32xf32> to vector<32x1xf32>
    %519 = vector.extract_strided_slice %4 {offsets = [2, 3], sizes = [1, 1], strides = [1, 1]} : vector<4x4xf32> to vector<1x1xf32>
    %520 = vector.broadcast %519 : vector<1x1xf32> to vector<32x1xf32>
    %521 = arith.addf %518, %520 : vector<32x1xf32>
    %cst_140 = arith.constant 9.99999997E-7 : f32
    %522 = vector.broadcast %cst_140 : f32 to vector<32x1xf32>
    %523 = arith.cmpf ogt, %521, %522 : vector<32x1xf32>
    %cst_141 = arith.constant 1.000000e+00 : f32
    %524 = vector.broadcast %cst_141 : f32 to vector<32x1xf32>
    %525 = arith.select %523, %521, %524 : vector<32x1xi1>, vector<32x1xf32>
    %526 = tpu.reciprocal %525 {approx = true} : vector<32x1xf32> -> vector<32x1xf32>
    %cst_142 = arith.constant 8.000000e+00 : f32
    %527 = vector.broadcast %cst_142 : f32 to vector<32x1xf32>
    %528 = arith.mulf %527, %505 : vector<32x1xf32>
    %529 = arith.mulf %528, %526 : vector<32x1xf32>
    %cst_143 = arith.constant 8.000000e+00 : f32
    %530 = vector.broadcast %cst_143 : f32 to vector<32x1xf32>
    %531 = arith.addf %529, %530 : vector<32x1xf32>
    %cst_144 = arith.constant 5.000000e-01 : f32
    %532 = vector.broadcast %cst_144 : f32 to vector<32x1xf32>
    %533 = arith.addf %531, %532 : vector<32x1xf32>
    %534 = math.floor %533 : vector<32x1xf32>
    %535 = arith.fptosi %534 : vector<32x1xf32> to vector<32x1xi32>
    %cst_145 = arith.constant 8.000000e+00 : f32
    %536 = vector.broadcast %cst_145 : f32 to vector<32x1xf32>
    %537 = arith.mulf %536, %513 : vector<32x1xf32>
    %538 = arith.mulf %537, %526 : vector<32x1xf32>
    %cst_146 = arith.constant 8.000000e+00 : f32
    %539 = vector.broadcast %cst_146 : f32 to vector<32x1xf32>
    %540 = arith.addf %538, %539 : vector<32x1xf32>
    %cst_147 = arith.constant 5.000000e-01 : f32
    %541 = vector.broadcast %cst_147 : f32 to vector<32x1xf32>
    %542 = arith.addf %540, %541 : vector<32x1xf32>
    %543 = math.floor %542 : vector<32x1xf32>
    %544 = arith.fptosi %543 : vector<32x1xf32> to vector<32x1xi32>
    %c0_i32_148 = arith.constant 0 : i32
    %545 = vector.broadcast %c0_i32_148 : i32 to vector<32x1xi32>
    %546 = arith.cmpi sge, %535, %545 : vector<32x1xi32>
    %547 = arith.andi %523, %546 : vector<32x1xi1>
    %c16_i32_149 = arith.constant 16 : i32
    %548 = vector.broadcast %c16_i32_149 : i32 to vector<32x1xi32>
    %549 = arith.cmpi slt, %535, %548 : vector<32x1xi32>
    %550 = arith.andi %547, %549 : vector<32x1xi1>
    %c0_i32_150 = arith.constant 0 : i32
    %551 = vector.broadcast %c0_i32_150 : i32 to vector<32x1xi32>
    %552 = arith.cmpi sge, %544, %551 : vector<32x1xi32>
    %553 = arith.andi %550, %552 : vector<32x1xi1>
    %c16_i32_151 = arith.constant 16 : i32
    %554 = vector.broadcast %c16_i32_151 : i32 to vector<32x1xi32>
    %555 = arith.cmpi slt, %544, %554 : vector<32x1xi32>
    %556 = arith.andi %553, %555 : vector<32x1xi1>
    %c16_i32_152 = arith.constant 16 : i32
    %557 = vector.broadcast %c16_i32_152 : i32 to vector<32x1xi32>
    %558 = arith.muli %544, %557 : vector<32x1xi32>
    %559 = arith.addi %558, %535 : vector<32x1xi32>
    %c-1_i32_153 = arith.constant -1 : i32
    %560 = vector.broadcast %c-1_i32_153 : i32 to vector<32x1xi32>
    %561 = arith.select %556, %559, %560 : vector<32x1xi1>, vector<32x1xi32>
    %c256_i32_154 = arith.constant 256 : i32
    %562 = arith.muli %arg1, %c256_i32_154 : i32
    %563 = vector.broadcast %562 : i32 to vector<32x1xi32>
    %564 = arith.subi %561, %563 : vector<32x1xi32>
    %565 = vector.broadcast %564 : vector<32x1xi32> to vector<32x256xi32>
    %566 = arith.cmpi eq, %565, %5 : vector<32x256xi32>
    %567 = vector.shape_cast %521 : vector<32x1xf32> to vector<32x1xf32>
    %568 = vector.broadcast %567 : vector<32x1xf32> to vector<32x256xf32>
    %569 = vector.broadcast %cst_4 : f32 to vector<32x256xf32>
    %570 = arith.select %566, %568, %569 : vector<32x256xi1>, vector<32x256xf32>
    %cst_155 = arith.constant dense<0x7F800000> : vector<256xf32>
    %571 = vector.multi_reduction <minimumf>, %570, %cst_155 [0] : vector<32x256xf32> to vector<256xf32>
    %572 = vector.shape_cast %571 : vector<256xf32> to vector<1x256xf32>
    %573 = arith.minimumf %492, %572 : vector<1x256xf32>
    %c7_i32 = arith.constant 7 : i32
    %c32_i32_156 = arith.constant 32 : i32
    %574 = arith.muli %c7_i32, %c32_i32_156 : i32
    %575 = tpu.assume_multiple %574, 32 : i32
    %c0_157 = arith.constant 0 : index
    %576 = arith.index_cast %575 : i32 to index
    %c0_158 = arith.constant 0 : index
    %577 = vector.load %arg4[%c0_157, %576, %c0_158] : memref<1x256x3xf32, #tpu.memory_space<vmem>>, vector<1x32x3xf32>
    %578 = vector.shape_cast %577 : vector<1x32x3xf32> to vector<32x3xf32>
    %579 = vector.extract_strided_slice %4 {offsets = [0, 0], sizes = [1, 3], strides = [1, 1]} : vector<4x4xf32> to vector<1x3xf32>
    %580 = vector.broadcast %579 : vector<1x3xf32> to vector<32x3xf32>
    %581 = arith.mulf %578, %580 : vector<32x3xf32>
    %cst_159 = arith.constant dense<0.000000e+00> : vector<32xf32>
    %582 = vector.multi_reduction <add>, %581, %cst_159 [1] : vector<32x3xf32> to vector<32xf32>
    %583 = vector.shape_cast %582 : vector<32xf32> to vector<32x1xf32>
    %584 = vector.extract_strided_slice %4 {offsets = [0, 3], sizes = [1, 1], strides = [1, 1]} : vector<4x4xf32> to vector<1x1xf32>
    %585 = vector.broadcast %584 : vector<1x1xf32> to vector<32x1xf32>
    %586 = arith.addf %583, %585 : vector<32x1xf32>
    %587 = vector.extract_strided_slice %4 {offsets = [1, 0], sizes = [1, 3], strides = [1, 1]} : vector<4x4xf32> to vector<1x3xf32>
    %588 = vector.broadcast %587 : vector<1x3xf32> to vector<32x3xf32>
    %589 = arith.mulf %578, %588 : vector<32x3xf32>
    %cst_160 = arith.constant dense<0.000000e+00> : vector<32xf32>
    %590 = vector.multi_reduction <add>, %589, %cst_160 [1] : vector<32x3xf32> to vector<32xf32>
    %591 = vector.shape_cast %590 : vector<32xf32> to vector<32x1xf32>
    %592 = vector.extract_strided_slice %4 {offsets = [1, 3], sizes = [1, 1], strides = [1, 1]} : vector<4x4xf32> to vector<1x1xf32>
    %593 = vector.broadcast %592 : vector<1x1xf32> to vector<32x1xf32>
    %594 = arith.addf %591, %593 : vector<32x1xf32>
    %595 = vector.extract_strided_slice %4 {offsets = [2, 0], sizes = [1, 3], strides = [1, 1]} : vector<4x4xf32> to vector<1x3xf32>
    %596 = vector.broadcast %595 : vector<1x3xf32> to vector<32x3xf32>
    %597 = arith.mulf %578, %596 : vector<32x3xf32>
    %cst_161 = arith.constant dense<0.000000e+00> : vector<32xf32>
    %598 = vector.multi_reduction <add>, %597, %cst_161 [1] : vector<32x3xf32> to vector<32xf32>
    %599 = vector.shape_cast %598 : vector<32xf32> to vector<32x1xf32>
    %600 = vector.extract_strided_slice %4 {offsets = [2, 3], sizes = [1, 1], strides = [1, 1]} : vector<4x4xf32> to vector<1x1xf32>
    %601 = vector.broadcast %600 : vector<1x1xf32> to vector<32x1xf32>
    %602 = arith.addf %599, %601 : vector<32x1xf32>
    %cst_162 = arith.constant 9.99999997E-7 : f32
    %603 = vector.broadcast %cst_162 : f32 to vector<32x1xf32>
    %604 = arith.cmpf ogt, %602, %603 : vector<32x1xf32>
    %cst_163 = arith.constant 1.000000e+00 : f32
    %605 = vector.broadcast %cst_163 : f32 to vector<32x1xf32>
    %606 = arith.select %604, %602, %605 : vector<32x1xi1>, vector<32x1xf32>
    %607 = tpu.reciprocal %606 {approx = true} : vector<32x1xf32> -> vector<32x1xf32>
    %cst_164 = arith.constant 8.000000e+00 : f32
    %608 = vector.broadcast %cst_164 : f32 to vector<32x1xf32>
    %609 = arith.mulf %608, %586 : vector<32x1xf32>
    %610 = arith.mulf %609, %607 : vector<32x1xf32>
    %cst_165 = arith.constant 8.000000e+00 : f32
    %611 = vector.broadcast %cst_165 : f32 to vector<32x1xf32>
    %612 = arith.addf %610, %611 : vector<32x1xf32>
    %cst_166 = arith.constant 5.000000e-01 : f32
    %613 = vector.broadcast %cst_166 : f32 to vector<32x1xf32>
    %614 = arith.addf %612, %613 : vector<32x1xf32>
    %615 = math.floor %614 : vector<32x1xf32>
    %616 = arith.fptosi %615 : vector<32x1xf32> to vector<32x1xi32>
    %cst_167 = arith.constant 8.000000e+00 : f32
    %617 = vector.broadcast %cst_167 : f32 to vector<32x1xf32>
    %618 = arith.mulf %617, %594 : vector<32x1xf32>
    %619 = arith.mulf %618, %607 : vector<32x1xf32>
    %cst_168 = arith.constant 8.000000e+00 : f32
    %620 = vector.broadcast %cst_168 : f32 to vector<32x1xf32>
    %621 = arith.addf %619, %620 : vector<32x1xf32>
    %cst_169 = arith.constant 5.000000e-01 : f32
    %622 = vector.broadcast %cst_169 : f32 to vector<32x1xf32>
    %623 = arith.addf %621, %622 : vector<32x1xf32>
    %624 = math.floor %623 : vector<32x1xf32>
    %625 = arith.fptosi %624 : vector<32x1xf32> to vector<32x1xi32>
    %c0_i32_170 = arith.constant 0 : i32
    %626 = vector.broadcast %c0_i32_170 : i32 to vector<32x1xi32>
    %627 = arith.cmpi sge, %616, %626 : vector<32x1xi32>
    %628 = arith.andi %604, %627 : vector<32x1xi1>
    %c16_i32_171 = arith.constant 16 : i32
    %629 = vector.broadcast %c16_i32_171 : i32 to vector<32x1xi32>
    %630 = arith.cmpi slt, %616, %629 : vector<32x1xi32>
    %631 = arith.andi %628, %630 : vector<32x1xi1>
    %c0_i32_172 = arith.constant 0 : i32
    %632 = vector.broadcast %c0_i32_172 : i32 to vector<32x1xi32>
    %633 = arith.cmpi sge, %625, %632 : vector<32x1xi32>
    %634 = arith.andi %631, %633 : vector<32x1xi1>
    %c16_i32_173 = arith.constant 16 : i32
    %635 = vector.broadcast %c16_i32_173 : i32 to vector<32x1xi32>
    %636 = arith.cmpi slt, %625, %635 : vector<32x1xi32>
    %637 = arith.andi %634, %636 : vector<32x1xi1>
    %c16_i32_174 = arith.constant 16 : i32
    %638 = vector.broadcast %c16_i32_174 : i32 to vector<32x1xi32>
    %639 = arith.muli %625, %638 : vector<32x1xi32>
    %640 = arith.addi %639, %616 : vector<32x1xi32>
    %c-1_i32_175 = arith.constant -1 : i32
    %641 = vector.broadcast %c-1_i32_175 : i32 to vector<32x1xi32>
    %642 = arith.select %637, %640, %641 : vector<32x1xi1>, vector<32x1xi32>
    %c256_i32_176 = arith.constant 256 : i32
    %643 = arith.muli %arg1, %c256_i32_176 : i32
    %644 = vector.broadcast %643 : i32 to vector<32x1xi32>
    %645 = arith.subi %642, %644 : vector<32x1xi32>
    %646 = vector.broadcast %645 : vector<32x1xi32> to vector<32x256xi32>
    %647 = arith.cmpi eq, %646, %5 : vector<32x256xi32>
    %648 = vector.shape_cast %602 : vector<32x1xf32> to vector<32x1xf32>
    %649 = vector.broadcast %648 : vector<32x1xf32> to vector<32x256xf32>
    %650 = vector.broadcast %cst_4 : f32 to vector<32x256xf32>
    %651 = arith.select %647, %649, %650 : vector<32x256xi1>, vector<32x256xf32>
    %cst_177 = arith.constant dense<0x7F800000> : vector<256xf32>
    %652 = vector.multi_reduction <minimumf>, %651, %cst_177 [0] : vector<32x256xf32> to vector<256xf32>
    %653 = vector.shape_cast %652 : vector<256xf32> to vector<1x256xf32>
    %654 = arith.minimumf %573, %653 : vector<1x256xf32>
    %c8_i32 = arith.constant 8 : i32
    %c0_178 = arith.constant 0 : index
    %c0_179 = arith.constant 0 : index
    %c0_180 = arith.constant 0 : index
    %655 = vector.load %arg5[%c0_178, %c0_179, %c0_180] : memref<1x1x256xf32, #tpu.memory_space<vmem>>, vector<1x1x256xf32>
    %656 = vector.shape_cast %655 : vector<1x1x256xf32> to vector<1x256xf32>
    %657 = arith.minimumf %656, %654 : vector<1x256xf32>
    %c0_181 = arith.constant 0 : index
    %c0_182 = arith.constant 0 : index
    %c0_183 = arith.constant 0 : index
    %658 = vector.load %arg5[%c0_181, %c0_182, %c0_183] : memref<1x1x256xf32, #tpu.memory_space<vmem>>, vector<1x1x256xf32>
    %659 = vector.shape_cast %658 : vector<1x1x256xf32> to vector<1x256xf32>
    %660 = vector.shape_cast %657 : vector<1x256xf32> to vector<1x1x256xf32>
    tpu.vector_store %arg5[%c0_181, %c0_182, %c0_183], %660 {strides = array<i32>} : memref<1x1x256xf32, #tpu.memory_space<vmem>>, vector<1x1x256xf32>,
    %c0_i32_184 = arith.constant 0 : i32
    %661 = arith.cmpi eq, %arg2, %c0_i32_184 : i32
    %662 = arith.extui %661 : i1 to i32
    %cst_185 = arith.constant 1.000000e+30 : f32
    %c0_i32_186 = arith.constant 0 : i32
    %663 = arith.cmpi ne, %662, %c0_i32_186 : i32
    scf.if %663 {
      %c0_187 = arith.constant 0 : index
      %c0_188 = arith.constant 0 : index
      %c0_189 = arith.constant 0 : index
      %664 = vector.load %arg5[%c0_187, %c0_188, %c0_189] : memref<1x1x256xf32, #tpu.memory_space<vmem>>, vector<1x1x256xf32>
      %cst_190 = arith.constant 5.000000e-01 : f32
      %665 = arith.mulf %cst_185, %cst_190 : f32
      %666 = vector.broadcast %665 : f32 to vector<1x1x256xf32>
      %667 = arith.cmpf olt, %664, %666 : vector<1x1x256xf32>
      %cst_191 = arith.constant 0.000000e+00 : f32
      %668 = vector.broadcast %cst_191 : f32 to vector<1x1x256xf32>
      %669 = arith.select %667, %664, %668 : vector<1x1x256xi1>, vector<1x1x256xf32>
      %c0_192 = arith.constant 0 : index
      %c0_193 = arith.constant 0 : index
      %c0_194 = arith.constant 0 : index
      %670 = vector.load %arg5[%c0_192, %c0_193, %c0_194] : memref<1x1x256xf32, #tpu.memory_space<vmem>>, vector<1x1x256xf32>
      tpu.vector_store %arg5[%c0_192, %c0_193, %c0_194], %669 {strides = array<i32>} : memref<1x1x256xf32, #tpu.memory_space<vmem>>, vector<1x1x256xf32>,
    } else {
    }
    return
  }
  func.func @transform_0(%arg0: i32, %arg1: i32, %arg2: i32) -> (i32, i32, i32) {
    %c0_i32 = arith.constant 0 : i32
    %c0_i32_0 = arith.constant 0 : i32
    %c0_i32_1 = arith.constant 0 : i32
    return %arg0, %c0_i32, %c0_i32_0 : i32, i32, i32
  }
  func.func @transform_1(%arg0: i32, %arg1: i32, %arg2: i32) -> (i32, i32, i32) {
    %c0_i32 = arith.constant 0 : i32
    %c0_i32_0 = arith.constant 0 : i32
    return %arg0, %arg2, %c0_i32 : i32, i32, i32
  }
  func.func @transform_2(%arg0: i32, %arg1: i32, %arg2: i32) -> (i32, i32, i32) {
    %c0_i32 = arith.constant 0 : i32
    %c0_i32_0 = arith.constant 0 : i32
    return %arg0, %arg1, %c0_i32 : i32, i32, i32
  }
}

module attributes {stable_mosaic.version = 11 : i64} {
  func.func @_conv_s2_kernel(%arg0: i32, %arg1: i32, %arg2: memref<1x1x9x2x9x8xbf16, #tpu.memory_space<vmem>>, %arg3: memref<3x8x16xbf16, #tpu.memory_space<vmem>>, %arg4: memref<3x4x16xbf16, #tpu.memory_space<vmem>>, %arg5: memref<1x16xf32, #tpu.memory_space<vmem>>, %arg6: memref<1x8x8x16xbf16, #tpu.memory_space<vmem>>) attributes {dimension_semantics = [#tpu.dimension_semantics<parallel>, #tpu.dimension_semantics<parallel>], iteration_bounds = array<i64: 2, 1>, scalar_prefetch = 0 : i64, scratch_operands = 0 : i64, tpu.core_type = #tpu.core_type<tc>, window_params = [{transform_indices = @transform_0, window_bounds = array<i64: 1, 1, 9, 2, 9, 8>}, {pipeline_mode = #tpu.pipeline_mode<synchronous>, transform_indices = @transform_1, window_bounds = array<i64: 3, 8, 16>}, {pipeline_mode = #tpu.pipeline_mode<synchronous>, transform_indices = @transform_2, window_bounds = array<i64: 3, 4, 16>}, {pipeline_mode = #tpu.pipeline_mode<synchronous>, transform_indices = @transform_3, window_bounds = array<i64: 1, 16>}, {transform_indices = @transform_4, window_bounds = array<i64: 1, 8, 8, 16>}]} {
    %cst = arith.constant 0.000000e+00 : f32
    %0 = vector.broadcast %cst : f32 to vector<64x16xf32>
    %c0 = arith.constant 0 : index
    %c0_0 = arith.constant 0 : index
    %c0_1 = arith.constant 0 : index
    %c0_2 = arith.constant 0 : index
    %c0_3 = arith.constant 0 : index
    %c0_4 = arith.constant 0 : index
    %1 = vector.load %arg2[%c0, %c0_0, %c0_1, %c0_2, %c0_3, %c0_4] : memref<1x1x9x2x9x8xbf16, #tpu.memory_space<vmem>>, vector<1x1x8x1x8x8xbf16>
    %2 = vector.shape_cast %1 : vector<1x1x8x1x8x8xbf16> to vector<8x8x8xbf16>
    %3 = vector.shape_cast %2 : vector<8x8x8xbf16> to vector<64x8xbf16>
    %c0_5 = arith.constant 0 : index
    %c0_6 = arith.constant 0 : index
    %c0_7 = arith.constant 0 : index
    %4 = vector.load %arg3[%c0_5, %c0_6, %c0_7] : memref<3x8x16xbf16, #tpu.memory_space<vmem>>, vector<1x8x16xbf16>
    %5 = vector.shape_cast %4 : vector<1x8x16xbf16> to vector<8x16xbf16>
    %cst_8 = arith.constant dense<0.000000e+00> : vector<64x16xf32>
    %6 = tpu.matmul %3, %5, %cst_8 {dimension_numbers = #tpu.dot_dimension_numbers<[1], [0], [0], [1], [0, 0, 1, 1], [], []>} : vector<64x8xbf16>, vector<8x16xbf16>, vector<64x16xf32> -> vector<64x16xf32>
    %7 = arith.addf %0, %6 : vector<64x16xf32>
    %c0_9 = arith.constant 0 : index
    %c0_10 = arith.constant 0 : index
    %c0_11 = arith.constant 0 : index
    %c0_12 = arith.constant 0 : index
    %c1 = arith.constant 1 : index
    %c0_13 = arith.constant 0 : index
    %8 = vector.load %arg2[%c0_9, %c0_10, %c0_11, %c0_12, %c1, %c0_13] : memref<1x1x9x2x9x8xbf16, #tpu.memory_space<vmem>>, vector<1x1x8x1x8x4xbf16>
    %9 = vector.shape_cast %8 : vector<1x1x8x1x8x4xbf16> to vector<8x8x4xbf16>
    %10 = vector.shape_cast %9 : vector<8x8x4xbf16> to vector<64x4xbf16>
    %c0_14 = arith.constant 0 : index
    %c0_15 = arith.constant 0 : index
    %c0_16 = arith.constant 0 : index
    %11 = vector.load %arg4[%c0_14, %c0_15, %c0_16] : memref<3x4x16xbf16, #tpu.memory_space<vmem>>, vector<1x4x16xbf16>
    %12 = vector.shape_cast %11 : vector<1x4x16xbf16> to vector<4x16xbf16>
    %cst_17 = arith.constant dense<0.000000e+00> : vector<64x16xf32>
    %13 = tpu.matmul %10, %12, %cst_17 {dimension_numbers = #tpu.dot_dimension_numbers<[1], [0], [0], [1], [0, 0, 1, 1], [], []>} : vector<64x4xbf16>, vector<4x16xbf16>, vector<64x16xf32> -> vector<64x16xf32>
    %14 = arith.addf %7, %13 : vector<64x16xf32>
    %c0_18 = arith.constant 0 : index
    %c0_19 = arith.constant 0 : index
    %c0_20 = arith.constant 0 : index
    %c1_21 = arith.constant 1 : index
    %c0_22 = arith.constant 0 : index
    %c0_23 = arith.constant 0 : index
    %15 = vector.load %arg2[%c0_18, %c0_19, %c0_20, %c1_21, %c0_22, %c0_23] : memref<1x1x9x2x9x8xbf16, #tpu.memory_space<vmem>>, vector<1x1x8x1x8x8xbf16>
    %16 = vector.shape_cast %15 : vector<1x1x8x1x8x8xbf16> to vector<8x8x8xbf16>
    %17 = vector.shape_cast %16 : vector<8x8x8xbf16> to vector<64x8xbf16>
    %c1_24 = arith.constant 1 : index
    %c0_25 = arith.constant 0 : index
    %c0_26 = arith.constant 0 : index
    %18 = vector.load %arg3[%c1_24, %c0_25, %c0_26] : memref<3x8x16xbf16, #tpu.memory_space<vmem>>, vector<1x8x16xbf16>
    %19 = vector.shape_cast %18 : vector<1x8x16xbf16> to vector<8x16xbf16>
    %cst_27 = arith.constant dense<0.000000e+00> : vector<64x16xf32>
    %20 = tpu.matmul %17, %19, %cst_27 {dimension_numbers = #tpu.dot_dimension_numbers<[1], [0], [0], [1], [0, 0, 1, 1], [], []>} : vector<64x8xbf16>, vector<8x16xbf16>, vector<64x16xf32> -> vector<64x16xf32>
    %21 = arith.addf %14, %20 : vector<64x16xf32>
    %c0_28 = arith.constant 0 : index
    %c0_29 = arith.constant 0 : index
    %c0_30 = arith.constant 0 : index
    %c1_31 = arith.constant 1 : index
    %c1_32 = arith.constant 1 : index
    %c0_33 = arith.constant 0 : index
    %22 = vector.load %arg2[%c0_28, %c0_29, %c0_30, %c1_31, %c1_32, %c0_33] : memref<1x1x9x2x9x8xbf16, #tpu.memory_space<vmem>>, vector<1x1x8x1x8x4xbf16>
    %23 = vector.shape_cast %22 : vector<1x1x8x1x8x4xbf16> to vector<8x8x4xbf16>
    %24 = vector.shape_cast %23 : vector<8x8x4xbf16> to vector<64x4xbf16>
    %c1_34 = arith.constant 1 : index
    %c0_35 = arith.constant 0 : index
    %c0_36 = arith.constant 0 : index
    %25 = vector.load %arg4[%c1_34, %c0_35, %c0_36] : memref<3x4x16xbf16, #tpu.memory_space<vmem>>, vector<1x4x16xbf16>
    %26 = vector.shape_cast %25 : vector<1x4x16xbf16> to vector<4x16xbf16>
    %cst_37 = arith.constant dense<0.000000e+00> : vector<64x16xf32>
    %27 = tpu.matmul %24, %26, %cst_37 {dimension_numbers = #tpu.dot_dimension_numbers<[1], [0], [0], [1], [0, 0, 1, 1], [], []>} : vector<64x4xbf16>, vector<4x16xbf16>, vector<64x16xf32> -> vector<64x16xf32>
    %28 = arith.addf %21, %27 : vector<64x16xf32>
    %c0_38 = arith.constant 0 : index
    %c0_39 = arith.constant 0 : index
    %c1_40 = arith.constant 1 : index
    %c0_41 = arith.constant 0 : index
    %c0_42 = arith.constant 0 : index
    %c0_43 = arith.constant 0 : index
    %29 = vector.load %arg2[%c0_38, %c0_39, %c1_40, %c0_41, %c0_42, %c0_43] : memref<1x1x9x2x9x8xbf16, #tpu.memory_space<vmem>>, vector<1x1x8x1x8x8xbf16>
    %30 = vector.shape_cast %29 : vector<1x1x8x1x8x8xbf16> to vector<8x8x8xbf16>
    %31 = vector.shape_cast %30 : vector<8x8x8xbf16> to vector<64x8xbf16>
    %c2 = arith.constant 2 : index
    %c0_44 = arith.constant 0 : index
    %c0_45 = arith.constant 0 : index
    %32 = vector.load %arg3[%c2, %c0_44, %c0_45] : memref<3x8x16xbf16, #tpu.memory_space<vmem>>, vector<1x8x16xbf16>
    %33 = vector.shape_cast %32 : vector<1x8x16xbf16> to vector<8x16xbf16>
    %cst_46 = arith.constant dense<0.000000e+00> : vector<64x16xf32>
    %34 = tpu.matmul %31, %33, %cst_46 {dimension_numbers = #tpu.dot_dimension_numbers<[1], [0], [0], [1], [0, 0, 1, 1], [], []>} : vector<64x8xbf16>, vector<8x16xbf16>, vector<64x16xf32> -> vector<64x16xf32>
    %35 = arith.addf %28, %34 : vector<64x16xf32>
    %c0_47 = arith.constant 0 : index
    %c0_48 = arith.constant 0 : index
    %c1_49 = arith.constant 1 : index
    %c0_50 = arith.constant 0 : index
    %c1_51 = arith.constant 1 : index
    %c0_52 = arith.constant 0 : index
    %36 = vector.load %arg2[%c0_47, %c0_48, %c1_49, %c0_50, %c1_51, %c0_52] : memref<1x1x9x2x9x8xbf16, #tpu.memory_space<vmem>>, vector<1x1x8x1x8x4xbf16>
    %37 = vector.shape_cast %36 : vector<1x1x8x1x8x4xbf16> to vector<8x8x4xbf16>
    %38 = vector.shape_cast %37 : vector<8x8x4xbf16> to vector<64x4xbf16>
    %c2_53 = arith.constant 2 : index
    %c0_54 = arith.constant 0 : index
    %c0_55 = arith.constant 0 : index
    %39 = vector.load %arg4[%c2_53, %c0_54, %c0_55] : memref<3x4x16xbf16, #tpu.memory_space<vmem>>, vector<1x4x16xbf16>
    %40 = vector.shape_cast %39 : vector<1x4x16xbf16> to vector<4x16xbf16>
    %cst_56 = arith.constant dense<0.000000e+00> : vector<64x16xf32>
    %41 = tpu.matmul %38, %40, %cst_56 {dimension_numbers = #tpu.dot_dimension_numbers<[1], [0], [0], [1], [0, 0, 1, 1], [], []>} : vector<64x4xbf16>, vector<4x16xbf16>, vector<64x16xf32> -> vector<64x16xf32>
    %42 = arith.addf %35, %41 : vector<64x16xf32>
    %c0_57 = arith.constant 0 : index
    %c0_58 = arith.constant 0 : index
    %43 = vector.load %arg5[%c0_57, %c0_58] : memref<1x16xf32, #tpu.memory_space<vmem>>, vector<1x16xf32>
    %44 = vector.broadcast %43 : vector<1x16xf32> to vector<64x16xf32>
    %45 = arith.addf %42, %44 : vector<64x16xf32>
    %cst_59 = arith.constant 0.000000e+00 : f32
    %46 = vector.broadcast %cst_59 : f32 to vector<64x16xf32>
    %47 = arith.maximumf %45, %46 : vector<64x16xf32>
    %48 = vector.shape_cast %47 : vector<64x16xf32> to vector<8x8x16xf32>
    %49 = arith.truncf %48 : vector<8x8x16xf32> to vector<8x8x16xbf16>
    %c0_60 = arith.constant 0 : index
    %c0_61 = arith.constant 0 : index
    %c0_62 = arith.constant 0 : index
    %c0_63 = arith.constant 0 : index
    %50 = vector.load %arg6[%c0_60, %c0_61, %c0_62, %c0_63] : memref<1x8x8x16xbf16, #tpu.memory_space<vmem>>, vector<1x8x8x16xbf16>
    %51 = vector.shape_cast %50 : vector<1x8x8x16xbf16> to vector<8x8x16xbf16>
    %52 = vector.shape_cast %49 : vector<8x8x16xbf16> to vector<1x8x8x16xbf16>
    tpu.vector_store %arg6[%c0_60, %c0_61, %c0_62, %c0_63], %52 {strides = array<i32>} : memref<1x8x8x16xbf16, #tpu.memory_space<vmem>>, vector<1x8x8x16xbf16>,
    return
  }
  func.func @transform_0(%arg0: i32, %arg1: i32) -> (i32, i32, i32, i32, i32, i32) {
    %c0_i32 = arith.constant 0 : i32
    %c0_i32_0 = arith.constant 0 : i32
    %c0_i32_1 = arith.constant 0 : i32
    %c0_i32_2 = arith.constant 0 : i32
    %c0_i32_3 = arith.constant 0 : i32
    return %arg0, %arg1, %c0_i32, %c0_i32_0, %c0_i32_1, %c0_i32_2 : i32, i32, i32, i32, i32, i32
  }
  func.func @transform_1(%arg0: i32, %arg1: i32) -> (i32, i32, i32) {
    %c0_i32 = arith.constant 0 : i32
    %c0_i32_0 = arith.constant 0 : i32
    %c0_i32_1 = arith.constant 0 : i32
    %c0_i32_2 = arith.constant 0 : i32
    return %c0_i32, %c0_i32_0, %c0_i32_1 : i32, i32, i32
  }
  func.func @transform_2(%arg0: i32, %arg1: i32) -> (i32, i32, i32) {
    %c0_i32 = arith.constant 0 : i32
    %c0_i32_0 = arith.constant 0 : i32
    %c0_i32_1 = arith.constant 0 : i32
    %c0_i32_2 = arith.constant 0 : i32
    return %c0_i32, %c0_i32_0, %c0_i32_1 : i32, i32, i32
  }
  func.func @transform_3(%arg0: i32, %arg1: i32) -> (i32, i32) {
    %c0_i32 = arith.constant 0 : i32
    %c0_i32_0 = arith.constant 0 : i32
    %c0_i32_1 = arith.constant 0 : i32
    return %c0_i32, %c0_i32_0 : i32, i32
  }
  func.func @transform_4(%arg0: i32, %arg1: i32) -> (i32, i32, i32, i32) {
    %c0_i32 = arith.constant 0 : i32
    %c0_i32_0 = arith.constant 0 : i32
    %c0_i32_1 = arith.constant 0 : i32
    return %arg0, %arg1, %c0_i32, %c0_i32_0 : i32, i32, i32, i32
  }
}

module attributes {stable_mosaic.version = 11 : i64} {
  func.func @_conv_s2_kernel(%arg0: i32, %arg1: i32, %arg2: memref<1x1x5x2x5x32xbf16, #tpu.memory_space<vmem>>, %arg3: memref<3x32x32xbf16, #tpu.memory_space<vmem>>, %arg4: memref<3x16x32xbf16, #tpu.memory_space<vmem>>, %arg5: memref<1x32xf32, #tpu.memory_space<vmem>>, %arg6: memref<1x4x4x32xbf16, #tpu.memory_space<vmem>>) attributes {dimension_semantics = [#tpu.dimension_semantics<parallel>, #tpu.dimension_semantics<parallel>], iteration_bounds = array<i64: 2, 1>, scalar_prefetch = 0 : i64, scratch_operands = 0 : i64, tpu.core_type = #tpu.core_type<tc>, window_params = [{transform_indices = @transform_0, window_bounds = array<i64: 1, 1, 5, 2, 5, 32>}, {pipeline_mode = #tpu.pipeline_mode<synchronous>, transform_indices = @transform_1, window_bounds = array<i64: 3, 32, 32>}, {pipeline_mode = #tpu.pipeline_mode<synchronous>, transform_indices = @transform_2, window_bounds = array<i64: 3, 16, 32>}, {pipeline_mode = #tpu.pipeline_mode<synchronous>, transform_indices = @transform_3, window_bounds = array<i64: 1, 32>}, {transform_indices = @transform_4, window_bounds = array<i64: 1, 4, 4, 32>}]} {
    %cst = arith.constant 0.000000e+00 : f32
    %0 = vector.broadcast %cst : f32 to vector<16x32xf32>
    %c0 = arith.constant 0 : index
    %c0_0 = arith.constant 0 : index
    %c0_1 = arith.constant 0 : index
    %c0_2 = arith.constant 0 : index
    %c0_3 = arith.constant 0 : index
    %c0_4 = arith.constant 0 : index
    %1 = vector.load %arg2[%c0, %c0_0, %c0_1, %c0_2, %c0_3, %c0_4] : memref<1x1x5x2x5x32xbf16, #tpu.memory_space<vmem>>, vector<1x1x4x1x4x32xbf16>
    %2 = vector.shape_cast %1 : vector<1x1x4x1x4x32xbf16> to vector<4x4x32xbf16>
    %3 = vector.shape_cast %2 : vector<4x4x32xbf16> to vector<16x32xbf16>
    %c0_5 = arith.constant 0 : index
    %c0_6 = arith.constant 0 : index
    %c0_7 = arith.constant 0 : index
    %4 = vector.load %arg3[%c0_5, %c0_6, %c0_7] : memref<3x32x32xbf16, #tpu.memory_space<vmem>>, vector<1x32x32xbf16>
    %5 = vector.shape_cast %4 : vector<1x32x32xbf16> to vector<32x32xbf16>
    %cst_8 = arith.constant dense<0.000000e+00> : vector<16x32xf32>
    %6 = tpu.matmul %3, %5, %cst_8 {dimension_numbers = #tpu.dot_dimension_numbers<[1], [0], [0], [1], [0, 0, 1, 1], [], []>} : vector<16x32xbf16>, vector<32x32xbf16>, vector<16x32xf32> -> vector<16x32xf32>
    %7 = arith.addf %0, %6 : vector<16x32xf32>
    %c0_9 = arith.constant 0 : index
    %c0_10 = arith.constant 0 : index
    %c0_11 = arith.constant 0 : index
    %c0_12 = arith.constant 0 : index
    %c1 = arith.constant 1 : index
    %c0_13 = arith.constant 0 : index
    %8 = vector.load %arg2[%c0_9, %c0_10, %c0_11, %c0_12, %c1, %c0_13] : memref<1x1x5x2x5x32xbf16, #tpu.memory_space<vmem>>, vector<1x1x4x1x4x16xbf16>
    %9 = vector.shape_cast %8 : vector<1x1x4x1x4x16xbf16> to vector<4x4x16xbf16>
    %10 = vector.shape_cast %9 : vector<4x4x16xbf16> to vector<16x16xbf16>
    %c0_14 = arith.constant 0 : index
    %c0_15 = arith.constant 0 : index
    %c0_16 = arith.constant 0 : index
    %11 = vector.load %arg4[%c0_14, %c0_15, %c0_16] : memref<3x16x32xbf16, #tpu.memory_space<vmem>>, vector<1x16x32xbf16>
    %12 = vector.shape_cast %11 : vector<1x16x32xbf16> to vector<16x32xbf16>
    %cst_17 = arith.constant dense<0.000000e+00> : vector<16x32xf32>
    %13 = tpu.matmul %10, %12, %cst_17 {dimension_numbers = #tpu.dot_dimension_numbers<[1], [0], [0], [1], [0, 0, 1, 1], [], []>} : vector<16x16xbf16>, vector<16x32xbf16>, vector<16x32xf32> -> vector<16x32xf32>
    %14 = arith.addf %7, %13 : vector<16x32xf32>
    %c0_18 = arith.constant 0 : index
    %c0_19 = arith.constant 0 : index
    %c0_20 = arith.constant 0 : index
    %c1_21 = arith.constant 1 : index
    %c0_22 = arith.constant 0 : index
    %c0_23 = arith.constant 0 : index
    %15 = vector.load %arg2[%c0_18, %c0_19, %c0_20, %c1_21, %c0_22, %c0_23] : memref<1x1x5x2x5x32xbf16, #tpu.memory_space<vmem>>, vector<1x1x4x1x4x32xbf16>
    %16 = vector.shape_cast %15 : vector<1x1x4x1x4x32xbf16> to vector<4x4x32xbf16>
    %17 = vector.shape_cast %16 : vector<4x4x32xbf16> to vector<16x32xbf16>
    %c1_24 = arith.constant 1 : index
    %c0_25 = arith.constant 0 : index
    %c0_26 = arith.constant 0 : index
    %18 = vector.load %arg3[%c1_24, %c0_25, %c0_26] : memref<3x32x32xbf16, #tpu.memory_space<vmem>>, vector<1x32x32xbf16>
    %19 = vector.shape_cast %18 : vector<1x32x32xbf16> to vector<32x32xbf16>
    %cst_27 = arith.constant dense<0.000000e+00> : vector<16x32xf32>
    %20 = tpu.matmul %17, %19, %cst_27 {dimension_numbers = #tpu.dot_dimension_numbers<[1], [0], [0], [1], [0, 0, 1, 1], [], []>} : vector<16x32xbf16>, vector<32x32xbf16>, vector<16x32xf32> -> vector<16x32xf32>
    %21 = arith.addf %14, %20 : vector<16x32xf32>
    %c0_28 = arith.constant 0 : index
    %c0_29 = arith.constant 0 : index
    %c0_30 = arith.constant 0 : index
    %c1_31 = arith.constant 1 : index
    %c1_32 = arith.constant 1 : index
    %c0_33 = arith.constant 0 : index
    %22 = vector.load %arg2[%c0_28, %c0_29, %c0_30, %c1_31, %c1_32, %c0_33] : memref<1x1x5x2x5x32xbf16, #tpu.memory_space<vmem>>, vector<1x1x4x1x4x16xbf16>
    %23 = vector.shape_cast %22 : vector<1x1x4x1x4x16xbf16> to vector<4x4x16xbf16>
    %24 = vector.shape_cast %23 : vector<4x4x16xbf16> to vector<16x16xbf16>
    %c1_34 = arith.constant 1 : index
    %c0_35 = arith.constant 0 : index
    %c0_36 = arith.constant 0 : index
    %25 = vector.load %arg4[%c1_34, %c0_35, %c0_36] : memref<3x16x32xbf16, #tpu.memory_space<vmem>>, vector<1x16x32xbf16>
    %26 = vector.shape_cast %25 : vector<1x16x32xbf16> to vector<16x32xbf16>
    %cst_37 = arith.constant dense<0.000000e+00> : vector<16x32xf32>
    %27 = tpu.matmul %24, %26, %cst_37 {dimension_numbers = #tpu.dot_dimension_numbers<[1], [0], [0], [1], [0, 0, 1, 1], [], []>} : vector<16x16xbf16>, vector<16x32xbf16>, vector<16x32xf32> -> vector<16x32xf32>
    %28 = arith.addf %21, %27 : vector<16x32xf32>
    %c0_38 = arith.constant 0 : index
    %c0_39 = arith.constant 0 : index
    %c1_40 = arith.constant 1 : index
    %c0_41 = arith.constant 0 : index
    %c0_42 = arith.constant 0 : index
    %c0_43 = arith.constant 0 : index
    %29 = vector.load %arg2[%c0_38, %c0_39, %c1_40, %c0_41, %c0_42, %c0_43] : memref<1x1x5x2x5x32xbf16, #tpu.memory_space<vmem>>, vector<1x1x4x1x4x32xbf16>
    %30 = vector.shape_cast %29 : vector<1x1x4x1x4x32xbf16> to vector<4x4x32xbf16>
    %31 = vector.shape_cast %30 : vector<4x4x32xbf16> to vector<16x32xbf16>
    %c2 = arith.constant 2 : index
    %c0_44 = arith.constant 0 : index
    %c0_45 = arith.constant 0 : index
    %32 = vector.load %arg3[%c2, %c0_44, %c0_45] : memref<3x32x32xbf16, #tpu.memory_space<vmem>>, vector<1x32x32xbf16>
    %33 = vector.shape_cast %32 : vector<1x32x32xbf16> to vector<32x32xbf16>
    %cst_46 = arith.constant dense<0.000000e+00> : vector<16x32xf32>
    %34 = tpu.matmul %31, %33, %cst_46 {dimension_numbers = #tpu.dot_dimension_numbers<[1], [0], [0], [1], [0, 0, 1, 1], [], []>} : vector<16x32xbf16>, vector<32x32xbf16>, vector<16x32xf32> -> vector<16x32xf32>
    %35 = arith.addf %28, %34 : vector<16x32xf32>
    %c0_47 = arith.constant 0 : index
    %c0_48 = arith.constant 0 : index
    %c1_49 = arith.constant 1 : index
    %c0_50 = arith.constant 0 : index
    %c1_51 = arith.constant 1 : index
    %c0_52 = arith.constant 0 : index
    %36 = vector.load %arg2[%c0_47, %c0_48, %c1_49, %c0_50, %c1_51, %c0_52] : memref<1x1x5x2x5x32xbf16, #tpu.memory_space<vmem>>, vector<1x1x4x1x4x16xbf16>
    %37 = vector.shape_cast %36 : vector<1x1x4x1x4x16xbf16> to vector<4x4x16xbf16>
    %38 = vector.shape_cast %37 : vector<4x4x16xbf16> to vector<16x16xbf16>
    %c2_53 = arith.constant 2 : index
    %c0_54 = arith.constant 0 : index
    %c0_55 = arith.constant 0 : index
    %39 = vector.load %arg4[%c2_53, %c0_54, %c0_55] : memref<3x16x32xbf16, #tpu.memory_space<vmem>>, vector<1x16x32xbf16>
    %40 = vector.shape_cast %39 : vector<1x16x32xbf16> to vector<16x32xbf16>
    %cst_56 = arith.constant dense<0.000000e+00> : vector<16x32xf32>
    %41 = tpu.matmul %38, %40, %cst_56 {dimension_numbers = #tpu.dot_dimension_numbers<[1], [0], [0], [1], [0, 0, 1, 1], [], []>} : vector<16x16xbf16>, vector<16x32xbf16>, vector<16x32xf32> -> vector<16x32xf32>
    %42 = arith.addf %35, %41 : vector<16x32xf32>
    %c0_57 = arith.constant 0 : index
    %c0_58 = arith.constant 0 : index
    %43 = vector.load %arg5[%c0_57, %c0_58] : memref<1x32xf32, #tpu.memory_space<vmem>>, vector<1x32xf32>
    %44 = vector.broadcast %43 : vector<1x32xf32> to vector<16x32xf32>
    %45 = arith.addf %42, %44 : vector<16x32xf32>
    %cst_59 = arith.constant 0.000000e+00 : f32
    %46 = vector.broadcast %cst_59 : f32 to vector<16x32xf32>
    %47 = arith.maximumf %45, %46 : vector<16x32xf32>
    %48 = vector.shape_cast %47 : vector<16x32xf32> to vector<4x4x32xf32>
    %49 = arith.truncf %48 : vector<4x4x32xf32> to vector<4x4x32xbf16>
    %c0_60 = arith.constant 0 : index
    %c0_61 = arith.constant 0 : index
    %c0_62 = arith.constant 0 : index
    %c0_63 = arith.constant 0 : index
    %50 = vector.load %arg6[%c0_60, %c0_61, %c0_62, %c0_63] : memref<1x4x4x32xbf16, #tpu.memory_space<vmem>>, vector<1x4x4x32xbf16>
    %51 = vector.shape_cast %50 : vector<1x4x4x32xbf16> to vector<4x4x32xbf16>
    %52 = vector.shape_cast %49 : vector<4x4x32xbf16> to vector<1x4x4x32xbf16>
    tpu.vector_store %arg6[%c0_60, %c0_61, %c0_62, %c0_63], %52 {strides = array<i32>} : memref<1x4x4x32xbf16, #tpu.memory_space<vmem>>, vector<1x4x4x32xbf16>,
    return
  }
  func.func @transform_0(%arg0: i32, %arg1: i32) -> (i32, i32, i32, i32, i32, i32) {
    %c0_i32 = arith.constant 0 : i32
    %c0_i32_0 = arith.constant 0 : i32
    %c0_i32_1 = arith.constant 0 : i32
    %c0_i32_2 = arith.constant 0 : i32
    %c0_i32_3 = arith.constant 0 : i32
    return %arg0, %arg1, %c0_i32, %c0_i32_0, %c0_i32_1, %c0_i32_2 : i32, i32, i32, i32, i32, i32
  }
  func.func @transform_1(%arg0: i32, %arg1: i32) -> (i32, i32, i32) {
    %c0_i32 = arith.constant 0 : i32
    %c0_i32_0 = arith.constant 0 : i32
    %c0_i32_1 = arith.constant 0 : i32
    %c0_i32_2 = arith.constant 0 : i32
    return %c0_i32, %c0_i32_0, %c0_i32_1 : i32, i32, i32
  }
  func.func @transform_2(%arg0: i32, %arg1: i32) -> (i32, i32, i32) {
    %c0_i32 = arith.constant 0 : i32
    %c0_i32_0 = arith.constant 0 : i32
    %c0_i32_1 = arith.constant 0 : i32
    %c0_i32_2 = arith.constant 0 : i32
    return %c0_i32, %c0_i32_0, %c0_i32_1 : i32, i32, i32
  }
  func.func @transform_3(%arg0: i32, %arg1: i32) -> (i32, i32) {
    %c0_i32 = arith.constant 0 : i32
    %c0_i32_0 = arith.constant 0 : i32
    %c0_i32_1 = arith.constant 0 : i32
    return %c0_i32, %c0_i32_0 : i32, i32
  }
  func.func @transform_4(%arg0: i32, %arg1: i32) -> (i32, i32, i32, i32) {
    %c0_i32 = arith.constant 0 : i32
    %c0_i32_0 = arith.constant 0 : i32
    %c0_i32_1 = arith.constant 0 : i32
    return %arg0, %arg1, %c0_i32, %c0_i32_0 : i32, i32, i32, i32
  }
}

module attributes {stable_mosaic.version = 11 : i64} {
  func.func @_tail_kernel(%arg0: i32, %arg1: i32, %arg2: memref<1x1x6x6x32xbf16, #tpu.memory_space<vmem>>, %arg3: memref<3x3x32x32xbf16, #tpu.memory_space<vmem>>, %arg4: memref<1x32xf32, #tpu.memory_space<vmem>>, %arg5: memref<32x6xf32, #tpu.memory_space<vmem>>, %arg6: memref<1x6xf32, #tpu.memory_space<vmem>>, %arg7: memref<1x1x6xf32, #tpu.memory_space<vmem>>, %arg8: memref<1x32xf32, #tpu.memory_space<vmem>>) attributes {dimension_semantics = [#tpu.dimension_semantics<parallel>, #tpu.dimension_semantics<arbitrary>], iteration_bounds = array<i64: 2, 1>, scalar_prefetch = 0 : i64, scratch_operands = 1 : i64, tpu.core_type = #tpu.core_type<tc>, window_params = [{transform_indices = @transform_0, window_bounds = array<i64: 1, 1, 6, 6, 32>}, {pipeline_mode = #tpu.pipeline_mode<synchronous>, transform_indices = @transform_1, window_bounds = array<i64: 3, 3, 32, 32>}, {pipeline_mode = #tpu.pipeline_mode<synchronous>, transform_indices = @transform_2, window_bounds = array<i64: 1, 32>}, {pipeline_mode = #tpu.pipeline_mode<synchronous>, transform_indices = @transform_3, window_bounds = array<i64: 32, 6>}, {pipeline_mode = #tpu.pipeline_mode<synchronous>, transform_indices = @transform_4, window_bounds = array<i64: 1, 6>}, {transform_indices = @transform_5, window_bounds = array<i64: 1, 1, 6>}]} {
    %c0_i32 = arith.constant 0 : i32
    %0 = arith.cmpi eq, %arg1, %c0_i32 : i32
    %1 = arith.extui %0 : i1 to i32
    %c0_i32_0 = arith.constant 0 : i32
    %2 = arith.cmpi ne, %1, %c0_i32_0 : i32
    scf.if %2 {
      %cst_98 = arith.constant 0.000000e+00 : f32
      %80 = vector.broadcast %cst_98 : f32 to vector<1x32xf32>
      %c0_99 = arith.constant 0 : index
      %c0_100 = arith.constant 0 : index
      %81 = vector.load %arg8[%c0_99, %c0_100] : memref<1x32xf32, #tpu.memory_space<vmem>>, vector<1x32xf32>
      tpu.vector_store %arg8[%c0_99, %c0_100], %80 {strides = array<i32>} : memref<1x32xf32, #tpu.memory_space<vmem>>, vector<1x32xf32>,
    } else {
    }
    %cst = arith.constant 0.000000e+00 : f32
    %3 = vector.broadcast %cst : f32 to vector<16x32xf32>
    %c0 = arith.constant 0 : index
    %c0_1 = arith.constant 0 : index
    %c0_2 = arith.constant 0 : index
    %c0_3 = arith.constant 0 : index
    %c0_4 = arith.constant 0 : index
    %4 = vector.load %arg2[%c0, %c0_1, %c0_2, %c0_3, %c0_4] : memref<1x1x6x6x32xbf16, #tpu.memory_space<vmem>>, vector<1x1x4x4x32xbf16>
    %5 = vector.shape_cast %4 : vector<1x1x4x4x32xbf16> to vector<4x4x32xbf16>
    %6 = vector.shape_cast %5 : vector<4x4x32xbf16> to vector<16x32xbf16>
    %c0_5 = arith.constant 0 : index
    %c0_6 = arith.constant 0 : index
    %c0_7 = arith.constant 0 : index
    %c0_8 = arith.constant 0 : index
    %7 = vector.load %arg3[%c0_5, %c0_6, %c0_7, %c0_8] : memref<3x3x32x32xbf16, #tpu.memory_space<vmem>>, vector<1x1x32x32xbf16>
    %8 = vector.shape_cast %7 : vector<1x1x32x32xbf16> to vector<32x32xbf16>
    %cst_9 = arith.constant dense<0.000000e+00> : vector<16x32xf32>
    %9 = tpu.matmul %6, %8, %cst_9 {dimension_numbers = #tpu.dot_dimension_numbers<[1], [0], [0], [1], [0, 0, 1, 1], [], []>} : vector<16x32xbf16>, vector<32x32xbf16>, vector<16x32xf32> -> vector<16x32xf32>
    %10 = arith.addf %3, %9 : vector<16x32xf32>
    %c0_10 = arith.constant 0 : index
    %c0_11 = arith.constant 0 : index
    %c0_12 = arith.constant 0 : index
    %c1 = arith.constant 1 : index
    %c0_13 = arith.constant 0 : index
    %11 = vector.load %arg2[%c0_10, %c0_11, %c0_12, %c1, %c0_13] : memref<1x1x6x6x32xbf16, #tpu.memory_space<vmem>>, vector<1x1x4x4x32xbf16>
    %12 = vector.shape_cast %11 : vector<1x1x4x4x32xbf16> to vector<4x4x32xbf16>
    %13 = vector.shape_cast %12 : vector<4x4x32xbf16> to vector<16x32xbf16>
    %c0_14 = arith.constant 0 : index
    %c1_15 = arith.constant 1 : index
    %c0_16 = arith.constant 0 : index
    %c0_17 = arith.constant 0 : index
    %14 = vector.load %arg3[%c0_14, %c1_15, %c0_16, %c0_17] : memref<3x3x32x32xbf16, #tpu.memory_space<vmem>>, vector<1x1x32x32xbf16>
    %15 = vector.shape_cast %14 : vector<1x1x32x32xbf16> to vector<32x32xbf16>
    %cst_18 = arith.constant dense<0.000000e+00> : vector<16x32xf32>
    %16 = tpu.matmul %13, %15, %cst_18 {dimension_numbers = #tpu.dot_dimension_numbers<[1], [0], [0], [1], [0, 0, 1, 1], [], []>} : vector<16x32xbf16>, vector<32x32xbf16>, vector<16x32xf32> -> vector<16x32xf32>
    %17 = arith.addf %10, %16 : vector<16x32xf32>
    %c0_19 = arith.constant 0 : index
    %c0_20 = arith.constant 0 : index
    %c0_21 = arith.constant 0 : index
    %c2 = arith.constant 2 : index
    %c0_22 = arith.constant 0 : index
    %18 = vector.load %arg2[%c0_19, %c0_20, %c0_21, %c2, %c0_22] : memref<1x1x6x6x32xbf16, #tpu.memory_space<vmem>>, vector<1x1x4x4x32xbf16>
    %19 = vector.shape_cast %18 : vector<1x1x4x4x32xbf16> to vector<4x4x32xbf16>
    %20 = vector.shape_cast %19 : vector<4x4x32xbf16> to vector<16x32xbf16>
    %c0_23 = arith.constant 0 : index
    %c2_24 = arith.constant 2 : index
    %c0_25 = arith.constant 0 : index
    %c0_26 = arith.constant 0 : index
    %21 = vector.load %arg3[%c0_23, %c2_24, %c0_25, %c0_26] : memref<3x3x32x32xbf16, #tpu.memory_space<vmem>>, vector<1x1x32x32xbf16>
    %22 = vector.shape_cast %21 : vector<1x1x32x32xbf16> to vector<32x32xbf16>
    %cst_27 = arith.constant dense<0.000000e+00> : vector<16x32xf32>
    %23 = tpu.matmul %20, %22, %cst_27 {dimension_numbers = #tpu.dot_dimension_numbers<[1], [0], [0], [1], [0, 0, 1, 1], [], []>} : vector<16x32xbf16>, vector<32x32xbf16>, vector<16x32xf32> -> vector<16x32xf32>
    %24 = arith.addf %17, %23 : vector<16x32xf32>
    %c0_28 = arith.constant 0 : index
    %c0_29 = arith.constant 0 : index
    %c1_30 = arith.constant 1 : index
    %c0_31 = arith.constant 0 : index
    %c0_32 = arith.constant 0 : index
    %25 = vector.load %arg2[%c0_28, %c0_29, %c1_30, %c0_31, %c0_32] : memref<1x1x6x6x32xbf16, #tpu.memory_space<vmem>>, vector<1x1x4x4x32xbf16>
    %26 = vector.shape_cast %25 : vector<1x1x4x4x32xbf16> to vector<4x4x32xbf16>
    %27 = vector.shape_cast %26 : vector<4x4x32xbf16> to vector<16x32xbf16>
    %c1_33 = arith.constant 1 : index
    %c0_34 = arith.constant 0 : index
    %c0_35 = arith.constant 0 : index
    %c0_36 = arith.constant 0 : index
    %28 = vector.load %arg3[%c1_33, %c0_34, %c0_35, %c0_36] : memref<3x3x32x32xbf16, #tpu.memory_space<vmem>>, vector<1x1x32x32xbf16>
    %29 = vector.shape_cast %28 : vector<1x1x32x32xbf16> to vector<32x32xbf16>
    %cst_37 = arith.constant dense<0.000000e+00> : vector<16x32xf32>
    %30 = tpu.matmul %27, %29, %cst_37 {dimension_numbers = #tpu.dot_dimension_numbers<[1], [0], [0], [1], [0, 0, 1, 1], [], []>} : vector<16x32xbf16>, vector<32x32xbf16>, vector<16x32xf32> -> vector<16x32xf32>
    %31 = arith.addf %24, %30 : vector<16x32xf32>
    %c0_38 = arith.constant 0 : index
    %c0_39 = arith.constant 0 : index
    %c1_40 = arith.constant 1 : index
    %c1_41 = arith.constant 1 : index
    %c0_42 = arith.constant 0 : index
    %32 = vector.load %arg2[%c0_38, %c0_39, %c1_40, %c1_41, %c0_42] : memref<1x1x6x6x32xbf16, #tpu.memory_space<vmem>>, vector<1x1x4x4x32xbf16>
    %33 = vector.shape_cast %32 : vector<1x1x4x4x32xbf16> to vector<4x4x32xbf16>
    %34 = vector.shape_cast %33 : vector<4x4x32xbf16> to vector<16x32xbf16>
    %c1_43 = arith.constant 1 : index
    %c1_44 = arith.constant 1 : index
    %c0_45 = arith.constant 0 : index
    %c0_46 = arith.constant 0 : index
    %35 = vector.load %arg3[%c1_43, %c1_44, %c0_45, %c0_46] : memref<3x3x32x32xbf16, #tpu.memory_space<vmem>>, vector<1x1x32x32xbf16>
    %36 = vector.shape_cast %35 : vector<1x1x32x32xbf16> to vector<32x32xbf16>
    %cst_47 = arith.constant dense<0.000000e+00> : vector<16x32xf32>
    %37 = tpu.matmul %34, %36, %cst_47 {dimension_numbers = #tpu.dot_dimension_numbers<[1], [0], [0], [1], [0, 0, 1, 1], [], []>} : vector<16x32xbf16>, vector<32x32xbf16>, vector<16x32xf32> -> vector<16x32xf32>
    %38 = arith.addf %31, %37 : vector<16x32xf32>
    %c0_48 = arith.constant 0 : index
    %c0_49 = arith.constant 0 : index
    %c1_50 = arith.constant 1 : index
    %c2_51 = arith.constant 2 : index
    %c0_52 = arith.constant 0 : index
    %39 = vector.load %arg2[%c0_48, %c0_49, %c1_50, %c2_51, %c0_52] : memref<1x1x6x6x32xbf16, #tpu.memory_space<vmem>>, vector<1x1x4x4x32xbf16>
    %40 = vector.shape_cast %39 : vector<1x1x4x4x32xbf16> to vector<4x4x32xbf16>
    %41 = vector.shape_cast %40 : vector<4x4x32xbf16> to vector<16x32xbf16>
    %c1_53 = arith.constant 1 : index
    %c2_54 = arith.constant 2 : index
    %c0_55 = arith.constant 0 : index
    %c0_56 = arith.constant 0 : index
    %42 = vector.load %arg3[%c1_53, %c2_54, %c0_55, %c0_56] : memref<3x3x32x32xbf16, #tpu.memory_space<vmem>>, vector<1x1x32x32xbf16>
    %43 = vector.shape_cast %42 : vector<1x1x32x32xbf16> to vector<32x32xbf16>
    %cst_57 = arith.constant dense<0.000000e+00> : vector<16x32xf32>
    %44 = tpu.matmul %41, %43, %cst_57 {dimension_numbers = #tpu.dot_dimension_numbers<[1], [0], [0], [1], [0, 0, 1, 1], [], []>} : vector<16x32xbf16>, vector<32x32xbf16>, vector<16x32xf32> -> vector<16x32xf32>
    %45 = arith.addf %38, %44 : vector<16x32xf32>
    %c0_58 = arith.constant 0 : index
    %c0_59 = arith.constant 0 : index
    %c2_60 = arith.constant 2 : index
    %c0_61 = arith.constant 0 : index
    %c0_62 = arith.constant 0 : index
    %46 = vector.load %arg2[%c0_58, %c0_59, %c2_60, %c0_61, %c0_62] : memref<1x1x6x6x32xbf16, #tpu.memory_space<vmem>>, vector<1x1x4x4x32xbf16>
    %47 = vector.shape_cast %46 : vector<1x1x4x4x32xbf16> to vector<4x4x32xbf16>
    %48 = vector.shape_cast %47 : vector<4x4x32xbf16> to vector<16x32xbf16>
    %c2_63 = arith.constant 2 : index
    %c0_64 = arith.constant 0 : index
    %c0_65 = arith.constant 0 : index
    %c0_66 = arith.constant 0 : index
    %49 = vector.load %arg3[%c2_63, %c0_64, %c0_65, %c0_66] : memref<3x3x32x32xbf16, #tpu.memory_space<vmem>>, vector<1x1x32x32xbf16>
    %50 = vector.shape_cast %49 : vector<1x1x32x32xbf16> to vector<32x32xbf16>
    %cst_67 = arith.constant dense<0.000000e+00> : vector<16x32xf32>
    %51 = tpu.matmul %48, %50, %cst_67 {dimension_numbers = #tpu.dot_dimension_numbers<[1], [0], [0], [1], [0, 0, 1, 1], [], []>} : vector<16x32xbf16>, vector<32x32xbf16>, vector<16x32xf32> -> vector<16x32xf32>
    %52 = arith.addf %45, %51 : vector<16x32xf32>
    %c0_68 = arith.constant 0 : index
    %c0_69 = arith.constant 0 : index
    %c2_70 = arith.constant 2 : index
    %c1_71 = arith.constant 1 : index
    %c0_72 = arith.constant 0 : index
    %53 = vector.load %arg2[%c0_68, %c0_69, %c2_70, %c1_71, %c0_72] : memref<1x1x6x6x32xbf16, #tpu.memory_space<vmem>>, vector<1x1x4x4x32xbf16>
    %54 = vector.shape_cast %53 : vector<1x1x4x4x32xbf16> to vector<4x4x32xbf16>
    %55 = vector.shape_cast %54 : vector<4x4x32xbf16> to vector<16x32xbf16>
    %c2_73 = arith.constant 2 : index
    %c1_74 = arith.constant 1 : index
    %c0_75 = arith.constant 0 : index
    %c0_76 = arith.constant 0 : index
    %56 = vector.load %arg3[%c2_73, %c1_74, %c0_75, %c0_76] : memref<3x3x32x32xbf16, #tpu.memory_space<vmem>>, vector<1x1x32x32xbf16>
    %57 = vector.shape_cast %56 : vector<1x1x32x32xbf16> to vector<32x32xbf16>
    %cst_77 = arith.constant dense<0.000000e+00> : vector<16x32xf32>
    %58 = tpu.matmul %55, %57, %cst_77 {dimension_numbers = #tpu.dot_dimension_numbers<[1], [0], [0], [1], [0, 0, 1, 1], [], []>} : vector<16x32xbf16>, vector<32x32xbf16>, vector<16x32xf32> -> vector<16x32xf32>
    %59 = arith.addf %52, %58 : vector<16x32xf32>
    %c0_78 = arith.constant 0 : index
    %c0_79 = arith.constant 0 : index
    %c2_80 = arith.constant 2 : index
    %c2_81 = arith.constant 2 : index
    %c0_82 = arith.constant 0 : index
    %60 = vector.load %arg2[%c0_78, %c0_79, %c2_80, %c2_81, %c0_82] : memref<1x1x6x6x32xbf16, #tpu.memory_space<vmem>>, vector<1x1x4x4x32xbf16>
    %61 = vector.shape_cast %60 : vector<1x1x4x4x32xbf16> to vector<4x4x32xbf16>
    %62 = vector.shape_cast %61 : vector<4x4x32xbf16> to vector<16x32xbf16>
    %c2_83 = arith.constant 2 : index
    %c2_84 = arith.constant 2 : index
    %c0_85 = arith.constant 0 : index
    %c0_86 = arith.constant 0 : index
    %63 = vector.load %arg3[%c2_83, %c2_84, %c0_85, %c0_86] : memref<3x3x32x32xbf16, #tpu.memory_space<vmem>>, vector<1x1x32x32xbf16>
    %64 = vector.shape_cast %63 : vector<1x1x32x32xbf16> to vector<32x32xbf16>
    %cst_87 = arith.constant dense<0.000000e+00> : vector<16x32xf32>
    %65 = tpu.matmul %62, %64, %cst_87 {dimension_numbers = #tpu.dot_dimension_numbers<[1], [0], [0], [1], [0, 0, 1, 1], [], []>} : vector<16x32xbf16>, vector<32x32xbf16>, vector<16x32xf32> -> vector<16x32xf32>
    %66 = arith.addf %59, %65 : vector<16x32xf32>
    %c0_88 = arith.constant 0 : index
    %c0_89 = arith.constant 0 : index
    %67 = vector.load %arg4[%c0_88, %c0_89] : memref<1x32xf32, #tpu.memory_space<vmem>>, vector<1x32xf32>
    %68 = vector.broadcast %67 : vector<1x32xf32> to vector<16x32xf32>
    %69 = arith.addf %66, %68 : vector<16x32xf32>
    %cst_90 = arith.constant 0.000000e+00 : f32
    %70 = vector.broadcast %cst_90 : f32 to vector<16x32xf32>
    %71 = arith.maximumf %69, %70 : vector<16x32xf32>
    %c0_91 = arith.constant 0 : index
    %c0_92 = arith.constant 0 : index
    %72 = vector.load %arg8[%c0_91, %c0_92] : memref<1x32xf32, #tpu.memory_space<vmem>>, vector<1x32xf32>
    %cst_93 = arith.constant dense<0.000000e+00> : vector<32xf32>
    %73 = vector.multi_reduction <add>, %71, %cst_93 [0] : vector<16x32xf32> to vector<32xf32>
    %74 = vector.shape_cast %73 : vector<32xf32> to vector<1x32xf32>
    %75 = arith.addf %72, %74 : vector<1x32xf32>
    %c0_94 = arith.constant 0 : index
    %c0_95 = arith.constant 0 : index
    %76 = vector.load %arg8[%c0_94, %c0_95] : memref<1x32xf32, #tpu.memory_space<vmem>>, vector<1x32xf32>
    tpu.vector_store %arg8[%c0_94, %c0_95], %75 {strides = array<i32>} : memref<1x32xf32, #tpu.memory_space<vmem>>, vector<1x32xf32>,
    %c0_i32_96 = arith.constant 0 : i32
    %77 = arith.cmpi eq, %arg1, %c0_i32_96 : i32
    %78 = arith.extui %77 : i1 to i32
    %c0_i32_97 = arith.constant 0 : i32
    %79 = arith.cmpi ne, %78, %c0_i32_97 : i32
    scf.if %79 {
      %c0_98 = arith.constant 0 : index
      %c0_99 = arith.constant 0 : index
      %80 = vector.load %arg8[%c0_98, %c0_99] : memref<1x32xf32, #tpu.memory_space<vmem>>, vector<1x32xf32>
      %cst_100 = arith.constant 6.250000e-02 : f32
      %81 = vector.broadcast %cst_100 : f32 to vector<1x32xf32>
      %82 = arith.mulf %80, %81 : vector<1x32xf32>
      %c0_101 = arith.constant 0 : index
      %c0_102 = arith.constant 0 : index
      %83 = vector.load %arg5[%c0_101, %c0_102] : memref<32x6xf32, #tpu.memory_space<vmem>>, vector<32x6xf32>
      %cst_103 = arith.constant dense<0.000000e+00> : vector<1x6xf32>
      %84 = tpu.matmul %82, %83, %cst_103 {dimension_numbers = #tpu.dot_dimension_numbers<[1], [0], [0], [1], [0, 0, 1, 1], [], []>} : vector<1x32xf32>, vector<32x6xf32>, vector<1x6xf32> -> vector<1x6xf32>
      %c0_104 = arith.constant 0 : index
      %c0_105 = arith.constant 0 : index
      %85 = vector.load %arg6[%c0_104, %c0_105] : memref<1x6xf32, #tpu.memory_space<vmem>>, vector<1x6xf32>
      %86 = arith.addf %84, %85 : vector<1x6xf32>
      %c0_106 = arith.constant 0 : index
      %c0_107 = arith.constant 0 : index
      %c0_108 = arith.constant 0 : index
      %87 = vector.load %arg7[%c0_106, %c0_107, %c0_108] : memref<1x1x6xf32, #tpu.memory_space<vmem>>, vector<1x1x6xf32>
      %88 = vector.shape_cast %87 : vector<1x1x6xf32> to vector<1x6xf32>
      %89 = vector.shape_cast %86 : vector<1x6xf32> to vector<1x1x6xf32>
      tpu.vector_store %arg7[%c0_106, %c0_107, %c0_108], %89 {strides = array<i32>} : memref<1x1x6xf32, #tpu.memory_space<vmem>>, vector<1x1x6xf32>,
    } else {
    }
    return
  }
  func.func @transform_0(%arg0: i32, %arg1: i32) -> (i32, i32, i32, i32, i32) {
    %c0_i32 = arith.constant 0 : i32
    %c0_i32_0 = arith.constant 0 : i32
    %c0_i32_1 = arith.constant 0 : i32
    %c0_i32_2 = arith.constant 0 : i32
    return %arg0, %arg1, %c0_i32, %c0_i32_0, %c0_i32_1 : i32, i32, i32, i32, i32
  }
  func.func @transform_1(%arg0: i32, %arg1: i32) -> (i32, i32, i32, i32) {
    %c0_i32 = arith.constant 0 : i32
    %c0_i32_0 = arith.constant 0 : i32
    %c0_i32_1 = arith.constant 0 : i32
    %c0_i32_2 = arith.constant 0 : i32
    %c0_i32_3 = arith.constant 0 : i32
    return %c0_i32, %c0_i32_0, %c0_i32_1, %c0_i32_2 : i32, i32, i32, i32
  }
  func.func @transform_2(%arg0: i32, %arg1: i32) -> (i32, i32) {
    %c0_i32 = arith.constant 0 : i32
    %c0_i32_0 = arith.constant 0 : i32
    %c0_i32_1 = arith.constant 0 : i32
    return %c0_i32, %c0_i32_0 : i32, i32
  }
  func.func @transform_3(%arg0: i32, %arg1: i32) -> (i32, i32) {
    %c0_i32 = arith.constant 0 : i32
    %c0_i32_0 = arith.constant 0 : i32
    %c0_i32_1 = arith.constant 0 : i32
    return %c0_i32, %c0_i32_0 : i32, i32
  }
  func.func @transform_4(%arg0: i32, %arg1: i32) -> (i32, i32) {
    %c0_i32 = arith.constant 0 : i32
    %c0_i32_0 = arith.constant 0 : i32
    %c0_i32_1 = arith.constant 0 : i32
    return %c0_i32, %c0_i32_0 : i32, i32
  }
  func.func @transform_5(%arg0: i32, %arg1: i32) -> (i32, i32, i32) {
    %c0_i32 = arith.constant 0 : i32
    %c0_i32_0 = arith.constant 0 : i32
    %c0_i32_1 = arith.constant 0 : i32
    return %arg0, %c0_i32, %c0_i32_0 : i32, i32, i32
  }
}

</mosaic_0001>

<llo_original>
// kernel: _lambda_.4
$region0: #{_lambda_.4}
  #allocation0 [shape = 'u32[]', space=smem, size = 0x4, offset = 0x4, fixed_abs, tag = 'smem constant byte address 0x4 - core index']
  #allocation1 [shape = 'u32[72,128]{1,0:T(1,128)}', space=vmem, size = 0x9000, scoped, tag = 'internal scratch']
  %s0 = inlined_call_operand.vmem [shape: f32[2,4,4], index: 0, kind: input, shape index: {}]
  %s1 = inlined_call_operand.vmem [shape: f32[2,256,3], index: 1, kind: input, shape index: {}]
  %s2 = inlined_call_operand.vmem [shape: f32[2,1,256], index: 2, kind: output, shape index: {}]
  %s3 = sld [smem:[#allocation0]]
  $region49: #{_lambda_.4} parent=0
    _
  %s5 = ssub.s32 1, %s3
  %s6 = scalar_select 0, %s5, %s3
  loop: start=0, step=1, limit=4
  $region2: #{_lambda_.4} parent=0 // loop_pre_header
    _
  $region3: #{_lambda_.4} parent=0 // loop_header
    %s8 = sphi 0, %s12
    %p9 = scmp.ge.s32.totalorder %s8, 4
    %s15 = sphi 0, %s34
    %s16 = sphi 0, %s30
    %s17 = sphi 0, %s26
    %s18 = sphi 0, %s15
    %s19 = sphi 0, %s16
    %s20 = sphi 0, %s17
    %s21 = sphi 0, %s18
    %s22 = sphi 0, %s19
    %s23 = sphi 0, %s20
    %s37 = sphi 0, %s39
    %s40 = sphi 0, %s37
    %s41 = sphi 0, %s40
    %s57 = sphi 0, %s41
    %s65 = sphi 0, %s67
    %s68 = sphi 0, %s65
    %s69 = sphi 0, %s68
    %s85 = sphi 0, %s69
    %s93 = sphi 0, %s95
    %s96 = sphi 0, %s93
    %s97 = sphi 0, %s96
    %s113 = sphi 0, %s97
  $region4: #{_lambda_.4} parent=0 // loop_header_branch
    %11 = sbr.rel (%p9) target = $region8
  $region5: #{_lambda_.4} parent=0 // loop_body
    %s13 = ssub.s32 %s8, 1
    %s14 = ssub.s32 %s8, 2
    %s24 = sadd.s32 1, %s17
    %p25 = scmp.ge.s32.totalorder %s24, 1
    %s26 = scalar_select %p25, 0, %s24
    %s27 = sadd.s32 1, %s16
    %s28 = scalar_select %p25, %s27, %s16
    %p29 = scmp.ge.s32.totalorder %s28, 1
    %s30 = scalar_select %p29, 0, %s28
    %s31 = sadd.s32 1, %s15
    %s32 = scalar_select %p29, %s31, %s15
    %p33 = scmp.ge.s32.totalorder %s32, 2
    %s34 = scalar_select %p33, 0, %s32
    %s35 = ssub.s32 %s15, %s34
    %p36 = scmp.eq.s32.totalorder %s35, 0
    %s38 = sadd.s32 %s37, 1
    %s39 = scalar_select %p36, %s37, %s38
    %p42 = pneg %p36
    %p43 = scmp.eq.s32.totalorder %s8, 1
    %p44 = por %p42, %p43
    %p45 = scmp.ne.s32.totalorder %s37, %s40
    %p46 = scmp.eq.s32.totalorder %s8, 0
    %p47 = por %p45, %p46
    %p48 = scmp.ne.s32.totalorder %s37, %s40
    %p49 = scmp.eq.s32.totalorder %s13, 1
    %p50 = por %p48, %p49
    %p51 = scmp.ne.s32.totalorder %s40, %s41
    %p52 = scmp.eq.s32.totalorder %s13, 0
    %p53 = por %p51, %p52
    %p54 = scmp.ne.s32.totalorder %s40, %s41
    %p55 = scmp.eq.s32.totalorder %s14, 1
    %p56 = por %p54, %p55
    %p58 = scmp.ne.s32.totalorder %s41, %s57
    %p59 = scmp.eq.s32.totalorder %s14, 0
    %p60 = por %p58, %p59
    %s61 = ssub.s32 %s15, %s34
    %s62 = ssub.s32 %s17, %s26
    %s63 = sor.u32 %s61, %s62
    %p64 = scmp.eq.s32.totalorder %s63, 0
    %s66 = sadd.s32 %s65, 1
    %s67 = scalar_select %p64, %s65, %s66
    %p70 = pneg %p64
    %p71 = scmp.eq.s32.totalorder %s8, 1
    %p72 = por %p70, %p71
    %p73 = scmp.ne.s32.totalorder %s65, %s68
    %p74 = scmp.eq.s32.totalorder %s8, 0
    %p75 = por %p73, %p74
    %p76 = scmp.ne.s32.totalorder %s65, %s68
    %p77 = scmp.eq.s32.totalorder %s13, 1
    %p78 = por %p76, %p77
    %p79 = scmp.ne.s32.totalorder %s68, %s69
    %p80 = scmp.eq.s32.totalorder %s13, 0
    %p81 = por %p79, %p80
    %p82 = scmp.ne.s32.totalorder %s68, %s69
    %p83 = scmp.eq.s32.totalorder %s14, 1
    %p84 = por %p82, %p83
    %p86 = scmp.ne.s32.totalorder %s69, %s85
    %p87 = scmp.eq.s32.totalorder %s14, 0
    %p88 = por %p86, %p87
    %s89 = ssub.s32 %s15, %s34
    %s90 = ssub.s32 %s16, %s30
    %s91 = sor.u32 %s89, %s90
    %p92 = scmp.eq.s32.totalorder %s91, 0
    %s94 = sadd.s32 %s93, 1
    %s95 = scalar_select %p92, %s93, %s94
    %p98 = pneg %p92
    %p99 = scmp.eq.s32.totalorder %s8, 1
    %p100 = por %p98, %p99
    %p101 = scmp.ne.s32.totalorder %s93, %s96
    %p102 = scmp.eq.s32.totalorder %s8, 0
    %p103 = por %p101, %p102
    %p104 = scmp.ne.s32.totalorder %s93, %s96
    %p105 = scmp.eq.s32.totalorder %s13, 1
    %p106 = por %p104, %p105
    %p107 = scmp.ne.s32.totalorder %s96, %s97
    %p108 = scmp.eq.s32.totalorder %s13, 0
    %p109 = por %p107, %p108
    %p110 = scmp.ne.s32.totalorder %s96, %s97
    %p111 = scmp.eq.s32.totalorder %s14, 1
    %p112 = por %p110, %p111
    %p114 = scmp.ne.s32.totalorder %s97, %s113
    %p115 = scmp.eq.s32.totalorder %s14, 0
    %p116 = por %p114, %p115
    %p117 = scmp.le.s32.totalorder 1, %s8
    %p118 = scmp.lt.s32.totalorder %s8, 3
    %p119 = pnand %p117, %p118
    %p120 = pneg %p119
    // Predicated region
    $region9: #{_lambda_.4} parent=5 // pred_check
      _
    $region10: #{_lambda_.4} parent=5 // pred_check_branch
      %122 = sbr.rel (%p119) target = $region12
    $region11: #{_lambda_.4} parent=5 // pred_region
      %s123 = ssub.s32 %s8, 1
    $region12: #{_lambda_.4} parent=5 // pred_fallthru
      _
    %p124 = scmp.lt.s32.totalorder %s8, 2
    // Predicated region
    $region13: #{_lambda_.4} parent=5 // pred_check
      %p125 = pneg %p124
    $region14: #{_lambda_.4} parent=5 // pred_check_branch
      %127 = sbr.rel (%p125) target = $region16
    $region15: #{_lambda_.4} parent=5 // pred_region
      // Predicated region
      $region17: #{_lambda_.4} parent=15 // pred_check
        %p128 = pneg %p47
      $region18: #{_lambda_.4} parent=15 // pred_check_branch
        %130 = sbr.rel (%p128) target = $region20
      $region19: #{_lambda_.4} parent=15 // pred_region
        %p131 = scmp.lt.s32.totalorder %s15, 1
        %s132 = scalar_select %p131, %s15, 1
        %s133 = smul.addr %s132, 4
        %s134 = scalar_lea.vmem %s0, %s133
      $region20: #{_lambda_.4} parent=15 // pred_fallthru
        _
      // Predicated region
      $region21: #{_lambda_.4} parent=15 // pred_check
        %p135 = pneg %p75
      $region22: #{_lambda_.4} parent=15 // pred_check_branch
        %137 = sbr.rel (%p135) target = $region24
      $region23: #{_lambda_.4} parent=15 // pred_region
        %s138 = smul.u32 32, %s17
        %p139 = scmp.lt.s32.totalorder %s15, 1
        %s140 = scalar_select %p139, %s15, 1
        %p141 = scmp.lt.s32.totalorder %s138, 31
        %s142 = scalar_select %p141, %s138, 31
        %s143 = smul.addr %s140, 32
        %s144 = sadd.s32 %s142, %s143
        %s145 = smul.addr %s144, 8
        %s146 = scalar_lea.vmem %s1, %s145
        %s147 = smul.u32 32, %s17
      $region24: #{_lambda_.4} parent=15 // pred_fallthru
        _
    $region16: #{_lambda_.4} parent=5 // pred_fallthru
      _
    %p148 = scmp.le.s32.totalorder 1, %s8
    %p149 = scmp.lt.s32.totalorder %s8, 3
    %p150 = pnand %p148, %p149
    %p151 = pneg %p150
    // Predicated region
    $region25: #{_lambda_.4} parent=5 // pred_check
      _
    $region26: #{_lambda_.4} parent=5 // pred_check_branch
      %153 = sbr.rel (%p150) target = $region28
    $region27: #{_lambda_.4} parent=5 // pred_region
      %s154 = ssub.s32 %s8, 1
      %p155 = scmp.lt.s32.totalorder %s18, 1
      %s156 = scalar_select %p155, %s18, 1
      %s157 = smul.addr %s156, 4
      %s158 = scalar_lea.vmem %s0, %s157
      %p159 = pneg %p53
      %p160 = pneg %p50
      %s161 = smul.u32 32, %s20
      %p162 = scmp.lt.s32.totalorder %s18, 1
      %s163 = scalar_select %p162, %s18, 1
      %p164 = scmp.lt.s32.totalorder %s161, 31
      %s165 = scalar_select %p164, %s161, 31
      %s166 = smul.addr %s163, 32
      %s167 = sadd.s32 %s165, %s166
      %s168 = smul.addr %s167, 8
      %s169 = scalar_lea.vmem %s1, %s168
      %p170 = pneg %p81
      %p171 = pneg %p78
      %p172 = pneg %p109
      %p173 = pneg %p106
      %p174 = scmp.lt.s32.totalorder %s18, 1
      %s175 = scalar_select %p174, %s18, 1
      %p176 = scmp.lt.s32.totalorder %s19, 0
      %s177 = scalar_select %p176, %s19, 0
      %s178 = smul.addr %s177, 2
      %s179 = smul.addr %s175, 2
      %s180 = sadd.s32 %s178, %s179
      %s181 = scalar_lea.vmem %s2, %s180
      %p182 = scmp.lt.s32.totalorder %s18, 1
      %s183 = scalar_select %p182, %s18, 1
      %s184 = smul.addr %s183, 4
      %s185 = scalar_lea.vmem %s0, %s184
      %s186 = smul.u32 32, %s20
      %p187 = scmp.lt.s32.totalorder %s18, 1
      %s188 = scalar_select %p187, %s18, 1
      %p189 = scmp.lt.s32.totalorder %s186, 31
      %s190 = scalar_select %p189, %s186, 31
      %s191 = smul.addr %s188, 32
      %s192 = sadd.s32 %s190, %s191
      %s193 = smul.addr %s192, 8
      %s194 = scalar_lea.vmem %s1, %s193
      %s195 = smul.u32 32, %s20
      %p196 = scmp.lt.s32.totalorder %s18, 1
      %s197 = scalar_select %p196, %s18, 1
      %p198 = scmp.lt.s32.totalorder %s19, 0
      %s199 = scalar_select %p198, %s19, 0
      %s200 = smul.addr %s199, 2
      %s201 = smul.addr %s197, 2
      %s202 = sadd.s32 %s200, %s201
      %s203 = scalar_lea.vmem %s2, %s202
      %p204 = scmp.eq.s32.totalorder %s20, 0
      // Predicated region
      $region29: #{_lambda_.4} parent=27 // pred_check
        %p205 = pneg %p204
      $region30: #{_lambda_.4} parent=27 // pred_check_branch
        %207 = sbr.rel (%p205) target = $region32
      $region31: #{_lambda_.4} parent=27 // pred_region
        %v208 = vlaneseq
        %vm209 = vcmp.ge.s32.totalorder %v208, 0
        %vm210 = vcmp.lt.s32.totalorder %v208, 256
        %vm211 = vmand %vm209, %vm210
        %212 = vst.msk [vmem:[%s203] sm:$0x3] %vm211, 1e+30
      $region32: #{_lambda_.4} parent=27 // pred_fallthru
        _
      %v213 = vld [vmem:[%s185] sm:$0xf]
      %v214 = vlaneseq
      %v215 = vand.u32 %v214, 127
      %v216 = vadd.s32 %v215, 128
      %v217 = vld [vmem:[%s194] sm:$0xff]
      %v218 = vld [vmem:[%s194 + $0x8] sm:$0xff]
      %v219 = vld [vmem:[%s194 + $0x10] sm:$0xff]
      %v220 = vld [vmem:[%s194 + $0x18] sm:$0xff]
      %v221 = vperm.slane %v213, 0
      %v222 = vmul.f32 %v217, %v221
      %v223 = vmul.f32 %v218, %v221
      %v224 = vmul.f32 %v219, %v221
      %v225 = vmul.f32 %v220, %v221
      %vm226 = vcmask 23552
      %v227 = vsel %vm226, %v222, 0.0
      %228 = vadd.xlane.f32.xlu0 %v227
      %v229 = vpop.xlane.xlu0 %228
      %v230 = vsel %vm226, %v223, 0.0
      %231 = vadd.xlane.f32.xlu0 %v230
      %v232 = vpop.xlane.xlu0 %231
      %v233 = vsel %vm226, %v224, 0.0
      %234 = vadd.xlane.f32.xlu0 %v233
      %v235 = vpop.xlane.xlu0 %234
      %v236 = vsel %vm226, %v225, 0.0
      %237 = vadd.xlane.f32.xlu0 %v236
      %v238 = vpop.xlane.xlu0 %237
      %v239 = vadd.f32 %v229, %v221
      %v240 = vadd.f32 %v232, %v221
      %v241 = vadd.f32 %v235, %v221
      %v242 = vadd.f32 %v238, %v221
      %v243 = vperm.slane %v213, 1
      %v244 = vmul.f32 %v217, %v243
      %v245 = vmul.f32 %v218, %v243
      %v246 = vmul.f32 %v219, %v243
      %v247 = vmul.f32 %v220, %v243
      %v248 = vsel %vm226, %v244, 0.0
      %249 = vadd.xlane.f32.xlu0 %v248
      %v250 = vpop.xlane.xlu0 %249
      %v251 = vsel %vm226, %v245, 0.0
      %252 = vadd.xlane.f32.xlu0 %v251
      %v253 = vpop.xlane.xlu0 %252
      %v254 = vsel %vm226, %v246, 0.0
      %255 = vadd.xlane.f32.xlu0 %v254
      %v256 = vpop.xlane.xlu0 %255
      %v257 = vsel %vm226, %v247, 0.0
      %258 = vadd.xlane.f32.xlu0 %v257
      %v259 = vpop.xlane.xlu0 %258
      %v260 = vadd.f32 %v250, %v243
      %v261 = vadd.f32 %v253, %v243
      %v262 = vadd.f32 %v256, %v243
      %v263 = vadd.f32 %v259, %v243
      %v264 = vperm.slane %v213, 2
      %v265 = vmul.f32 %v217, %v264
      %v266 = vmul.f32 %v218, %v264
      %v267 = vmul.f32 %v219, %v264
      %v268 = vmul.f32 %v220, %v264
      %v269 = vsel %vm226, %v265, 0.0
      %270 = vadd.xlane.f32.xlu0 %v269
      %v271 = vpop.xlane.xlu0 %270
      %v272 = vsel %vm226, %v266, 0.0
      %273 = vadd.xlane.f32.xlu0 %v272
      %v274 = vpop.xlane.xlu0 %273
      %v275 = vsel %vm226, %v267, 0.0
      %276 = vadd.xlane.f32.xlu0 %v275
      %v277 = vpop.xlane.xlu0 %276
      %v278 = vsel %vm226, %v268, 0.0
      %279 = vadd.xlane.f32.xlu0 %v278
      %v280 = vpop.xlane.xlu0 %279
      %v281 = vadd.f32 %v271, %v264
      %v282 = vadd.f32 %v274, %v264
      %v283 = vadd.f32 %v277, %v264
      %v284 = vadd.f32 %v280, %v264
      %vm285 = vcmp.gt.f32.partialorder %v281, 1e-06
      %vm286 = vcmp.gt.f32.partialorder %v282, 1e-06
      %vm287 = vcmp.gt.f32.partialorder %v283, 1e-06
      %vm288 = vcmp.gt.f32.partialorder %v284, 1e-06
      %v289 = vsel %vm285, %v281, 1.0
      %v290 = vsel %vm286, %v282, 1.0
      %v291 = vsel %vm287, %v283, 1.0
      %v292 = vsel %vm288, %v284, 1.0
      %v293 = vrcp.pop %v289
      %v294 = vrcp.pop %v290
      %v295 = vrcp.pop %v291
      %v296 = vrcp.pop %v292
      %v297 = vmul.f32 %v239, 8.0
      %v298 = vmul.f32 %v240, 8.0
      %v299 = vmul.f32 %v241, 8.0
      %v300 = vmul.f32 %v242, 8.0
      %v301 = vmul.f32 %v297, %v293
      %v302 = vmul.f32 %v298, %v294
      %v303 = vmul.f32 %v299, %v295
      %v304 = vmul.f32 %v300, %v296
      %v305 = vadd.f32 %v301, 8.0
      %v306 = vadd.f32 %v302, 8.0
      %v307 = vadd.f32 %v303, 8.0
      %v308 = vadd.f32 %v304, 8.0
      %v309 = vadd.f32 %v305, 0.5
      %v310 = vadd.f32 %v306, 0.5
      %v311 = vadd.f32 %v307, 0.5
      %v312 = vadd.f32 %v308, 0.5
      %v313 = vfloor.f32 %v309
      %v314 = vfloor.f32 %v310
      %v315 = vfloor.f32 %v311
      %v316 = vfloor.f32 %v312
      %v317 = vcvt.f32.s32.to.zero.pseudo %v313
      %v318 = vcvt.f32.s32.to.zero.pseudo %v314
      %v319 = vcvt.f32.s32.to.zero.pseudo %v315
      %v320 = vcvt.f32.s32.to.zero.pseudo %v316
      %v321 = vmul.f32 %v260, 8.0
      %v322 = vmul.f32 %v261, 8.0
      %v323 = vmul.f32 %v262, 8.0
      %v324 = vmul.f32 %v263, 8.0
      %v325 = vmul.f32 %v321, %v293
      %v326 = vmul.f32 %v322, %v294
      %v327 = vmul.f32 %v323, %v295
      %v328 = vmul.f32 %v324, %v296
      %v329 = vadd.f32 %v325, 8.0
      %v330 = vadd.f32 %v326, 8.0
      %v331 = vadd.f32 %v327, 8.0
      %v332 = vadd.f32 %v328, 8.0
      %v333 = vadd.f32 %v329, 0.5
      %v334 = vadd.f32 %v330, 0.5
      %v335 = vadd.f32 %v331, 0.5
      %v336 = vadd.f32 %v332, 0.5
      %v337 = vfloor.f32 %v333
      %v338 = vfloor.f32 %v334
      %v339 = vfloor.f32 %v335
      %v340 = vfloor.f32 %v336
      %v341 = vcvt.f32.s32.to.zero.pseudo %v337
      %v342 = vcvt.f32.s32.to.zero.pseudo %v338
      %v343 = vcvt.f32.s32.to.zero.pseudo %v339
      %v344 = vcvt.f32.s32.to.zero.pseudo %v340
      %vm345 = vcmp.ge.s32.totalorder %v317, 0
      %vm346 = vcmp.ge.s32.totalorder %v318, 0
      %vm347 = vcmp.ge.s32.totalorder %v319, 0
      %vm348 = vcmp.ge.s32.totalorder %v320, 0
      %vm349 = vmand %vm285, %vm345
      %vm350 = vmand %vm286, %vm346
      %vm351 = vmand %vm287, %vm347
      %vm352 = vmand %vm288, %vm348
      %vm353 = vcmp.lt.s32.totalorder %v317, 16
      %vm354 = vcmp.lt.s32.totalorder %v318, 16
      %vm355 = vcmp.lt.s32.totalorder %v319, 16
      %vm356 = vcmp.lt.s32.totalorder %v320, 16
      %vm357 = vmand %vm349, %vm353
      %vm358 = vmand %vm350, %vm354
      %vm359 = vmand %vm351, %vm355
      %vm360 = vmand %vm352, %vm356
      %vm361 = vcmp.ge.s32.totalorder %v341, 0
      %vm362 = vcmp.ge.s32.totalorder %v342, 0
      %vm363 = vcmp.ge.s32.totalorder %v343, 0
      %vm364 = vcmp.ge.s32.totalorder %v344, 0
      %vm365 = vmand %vm357, %vm361
      %vm366 = vmand %vm358, %vm362
      %vm367 = vmand %vm359, %vm363
      %vm368 = vmand %vm360, %vm364
      %vm369 = vcmp.lt.s32.totalorder %v341, 16
      %vm370 = vcmp.lt.s32.totalorder %v342, 16
      %vm371 = vcmp.lt.s32.totalorder %v343, 16
      %vm372 = vcmp.lt.s32.totalorder %v344, 16
      %vm373 = vmand %vm365, %vm369
      %vm374 = vmand %vm366, %vm370
      %vm375 = vmand %vm367, %vm371
      %vm376 = vmand %vm368, %vm372
      %v377 = vmul.u32 %v341, 16
      %v378 = vmul.u32 %v342, 16
      %v379 = vmul.u32 %v343, 16
      %v380 = vmul.u32 %v344, 16
      %v381 = vadd.s32 %v377, %v317
      %v382 = vadd.s32 %v378, %v318
      %v383 = vadd.s32 %v379, %v319
      %v384 = vadd.s32 %v380, %v320
      %v385 = vsel %vm373, %v381, 4294967295
      %v386 = vsel %vm374, %v382, 4294967295
      %v387 = vsel %vm375, %v383, 4294967295
      %v388 = vsel %vm376, %v384, 4294967295
      %s389 = smul.u32 %s19, 256
      %v390 = vstv %s389
      %v391 = vsub.s32 %v385, %v390
      %v392 = vsub.s32 %v386, %v390
      %v393 = vsub.s32 %v387, %v390
      %v394 = vsub.s32 %v388, %v390
      %395 = vset.pattern.permute.xlu0 3
      %396 = vperm.xlu0 %395, %v391
      %v397 = vpop.permute.xlu0 %396
      %398 = vset.pattern.permute.xlu0 3
      %399 = vperm.xlu0 %398, %v392
      %v400 = vpop.permute.xlu0 %399
      %401 = vset.pattern.permute.xlu0 3
      %402 = vperm.xlu0 %401, %v393
      %v403 = vpop.permute.xlu0 %402
      %404 = vset.pattern.permute.xlu0 3
      %405 = vperm.xlu0 %404, %v394
      %v406 = vpop.permute.xlu0 %405
      %vm407 = vcmp.eq.s32.totalorder %v397, %v215
      %vm408 = vcmp.eq.s32.totalorder %v397, %v216
      %vm409 = vcmp.eq.s32.totalorder %v400, %v215
      %vm410 = vcmp.eq.s32.totalorder %v400, %v216
      %vm411 = vcmp.eq.s32.totalorder %v403, %v215
      %vm412 = vcmp.eq.s32.totalorder %v403, %v216
      %vm413 = vcmp.eq.s32.totalorder %v406, %v215
      %vm414 = vcmp.eq.s32.totalorder %v406, %v216
      %416 = vset.pattern.permute.xlu0 3
      %417 = vperm.xlu0 %416, %v281
      %v418 = vpop.permute.xlu0 %417
      %421 = vset.pattern.permute.xlu0 3
      %422 = vperm.xlu0 %421, %v282
      %v423 = vpop.permute.xlu0 %422
      %426 = vset.pattern.permute.xlu0 3
      %427 = vperm.xlu0 %426, %v283
      %v428 = vpop.permute.xlu0 %427
      %431 = vset.pattern.permute.xlu0 3
      %432 = vperm.xlu0 %431, %v284
      %v433 = vpop.permute.xlu0 %432
      %v435 = vsel %vm407, %v418, 1e+30
      %v436 = vsel %vm408, %v418, 1e+30
      %v437 = vsel %vm409, %v423, 1e+30
      %v438 = vsel %vm410, %v423, 1e+30
      %v439 = vsel %vm411, %v428, 1e+30
      %v440 = vsel %vm412, %v428, 1e+30
      %v441 = vsel %vm413, %v433, 1e+30
      %v442 = vsel %vm414, %v433, 1e+30
      %v443 = vmin.f32 %v435, %v439
      %v444 = vmin.f32 %v437, %v441
      %v445 = vmin.f32 %v443, %v444
      %v446 = vrot.slane %v445, 4
      %v447 = vmin.f32 %v445, %v446
      %v448 = vrot.slane %v447, 2
      %v449 = vmin.f32 %v447, %v448
      %v450 = vrot.slane %v449, 1
      %v451 = vmin.f32 %v449, %v450
      %v452 = vmin.f32 %v436, %v440
      %v453 = vmin.f32 %v438, %v442
      %v454 = vmin.f32 %v452, %v453
      %v455 = vrot.slane %v454, 4
      %v456 = vmin.f32 %v454, %v455
      %v457 = vrot.slane %v456, 2
      %v458 = vmin.f32 %v456, %v457
      %v459 = vrot.slane %v458, 1
      %v460 = vmin.f32 %v458, %v459
      %v461 = vmin.f32 %v451, 1e+30
      %v462 = vmin.f32 %v460, 1e+30
      %s463 = scalar_lea.vmem %s194, 32
      %v464 = vld [vmem:[%s463] sm:$0xff]
      %v465 = vld [vmem:[%s463 + $0x8] sm:$0xff]
      %v466 = vld [vmem:[%s463 + $0x10] sm:$0xff]
      %v467 = vld [vmem:[%s463 + $0x18] sm:$0xff]
      %v468 = vmul.f32 %v464, %v221
      %v469 = vmul.f32 %v465, %v221
      %v470 = vmul.f32 %v466, %v221
      %v471 = vmul.f32 %v467, %v221
      %v472 = vsel %vm226, %v468, 0.0
      %473 = vadd.xlane.f32.xlu0 %v472
      %v474 = vpop.xlane.xlu0 %473
      %v475 = vsel %vm226, %v469, 0.0
      %476 = vadd.xlane.f32.xlu0 %v475
      %v477 = vpop.xlane.xlu0 %476
      %v478 = vsel %vm226, %v470, 0.0
      %479 = vadd.xlane.f32.xlu0 %v478
      %v480 = vpop.xlane.xlu0 %479
      %v481 = vsel %vm226, %v471, 0.0
      %482 = vadd.xlane.f32.xlu0 %v481
      %v483 = vpop.xlane.xlu0 %482
      %v484 = vadd.f32 %v474, %v221
      %v485 = vadd.f32 %v477, %v221
      %v486 = vadd.f32 %v480, %v221
      %v487 = vadd.f32 %v483, %v221
      %v488 = vmul.f32 %v464, %v243
      %v489 = vmul.f32 %v465, %v243
      %v490 = vmul.f32 %v466, %v243
      %v491 = vmul.f32 %v467, %v243
      %v492 = vsel %vm226, %v488, 0.0
      %493 = vadd.xlane.f32.xlu0 %v492
      %v494 = vpop.xlane.xlu0 %493
      %v495 = vsel %vm226, %v489, 0.0
      %496 = vadd.xlane.f32.xlu0 %v495
      %v497 = vpop.xlane.xlu0 %496
      %v498 = vsel %vm226, %v490, 0.0
      %499 = vadd.xlane.f32.xlu0 %v498
      %v500 = vpop.xlane.xlu0 %499
      %v501 = vsel %vm226, %v491, 0.0
      %502 = vadd.xlane.f32.xlu0 %v501
      %v503 = vpop.xlane.xlu0 %502
      %v504 = vadd.f32 %v494, %v243
      %v505 = vadd.f32 %v497, %v243
      %v506 = vadd.f32 %v500, %v243
      %v507 = vadd.f32 %v503, %v243
      %v508 = vmul.f32 %v464, %v264
      %v509 = vmul.f32 %v465, %v264
      %v510 = vmul.f32 %v466, %v264
      %v511 = vmul.f32 %v467, %v264
      %v512 = vsel %vm226, %v508, 0.0
      %513 = vadd.xlane.f32.xlu0 %v512
      %v514 = vpop.xlane.xlu0 %513
      %v515 = vsel %vm226, %v509, 0.0
      %516 = vadd.xlane.f32.xlu0 %v515
      %v517 = vpop.xlane.xlu0 %516
      %v518 = vsel %vm226, %v510, 0.0
      %519 = vadd.xlane.f32.xlu0 %v518
      %v520 = vpop.xlane.xlu0 %519
      %v521 = vsel %vm226, %v511, 0.0
      %522 = vadd.xlane.f32.xlu0 %v521
      %v523 = vpop.xlane.xlu0 %522
      %v524 = vadd.f32 %v514, %v264
      %v525 = vadd.f32 %v517, %v264
      %v526 = vadd.f32 %v520, %v264
      %v527 = vadd.f32 %v523, %v264
      %vm528 = vcmp.gt.f32.partialorder %v524, 1e-06
      %vm529 = vcmp.gt.f32.partialorder %v525, 1e-06
      %vm530 = vcmp.gt.f32.partialorder %v526, 1e-06
      %vm531 = vcmp.gt.f32.partialorder %v527, 1e-06
      %v532 = vsel %vm528, %v524, 1.0
      %v533 = vsel %vm529, %v525, 1.0
      %v534 = vsel %vm530, %v526, 1.0
      %v535 = vsel %vm531, %v527, 1.0
      %v536 = vrcp.pop %v532
      %v537 = vrcp.pop %v533
      %v538 = vrcp.pop %v534
      %v539 = vrcp.pop %v535
      %v540 = vmul.f32 %v484, 8.0
      %v541 = vmul.f32 %v485, 8.0
      %v542 = vmul.f32 %v486, 8.0
      %v543 = vmul.f32 %v487, 8.0
      %v544 = vmul.f32 %v540, %v536
      %v545 = vmul.f32 %v541, %v537
      %v546 = vmul.f32 %v542, %v538
      %v547 = vmul.f32 %v543, %v539
      %v548 = vadd.f32 %v544, 8.0
      %v549 = vadd.f32 %v545, 8.0
      %v550 = vadd.f32 %v546, 8.0
      %v551 = vadd.f32 %v547, 8.0
      %v552 = vadd.f32 %v548, 0.5
      %v553 = vadd.f32 %v549, 0.5
      %v554 = vadd.f32 %v550, 0.5
      %v555 = vadd.f32 %v551, 0.5
      %v556 = vfloor.f32 %v552
      %v557 = vfloor.f32 %v553
      %v558 = vfloor.f32 %v554
      %v559 = vfloor.f32 %v555
      %v560 = vcvt.f32.s32.to.zero.pseudo %v556
      %v561 = vcvt.f32.s32.to.zero.pseudo %v557
      %v562 = vcvt.f32.s32.to.zero.pseudo %v558
      %v563 = vcvt.f32.s32.to.zero.pseudo %v559
      %v564 = vmul.f32 %v504, 8.0
      %v565 = vmul.f32 %v505, 8.0
      %v566 = vmul.f32 %v506, 8.0
      %v567 = vmul.f32 %v507, 8.0
      %v568 = vmul.f32 %v564, %v536
      %v569 = vmul.f32 %v565, %v537
      %v570 = vmul.f32 %v566, %v538
      %v571 = vmul.f32 %v567, %v539
      %v572 = vadd.f32 %v568, 8.0
      %v573 = vadd.f32 %v569, 8.0
      %v574 = vadd.f32 %v570, 8.0
      %v575 = vadd.f32 %v571, 8.0
      %v576 = vadd.f32 %v572, 0.5
      %v577 = vadd.f32 %v573, 0.5
      %v578 = vadd.f32 %v574, 0.5
      %v579 = vadd.f32 %v575, 0.5
      %v580 = vfloor.f32 %v576
      %v581 = vfloor.f32 %v577
      %v582 = vfloor.f32 %v578
      %v583 = vfloor.f32 %v579
      %v584 = vcvt.f32.s32.to.zero.pseudo %v580
      %v585 = vcvt.f32.s32.to.zero.pseudo %v581
      %v586 = vcvt.f32.s32.to.zero.pseudo %v582
      %v587 = vcvt.f32.s32.to.zero.pseudo %v583
      %vm588 = vcmp.ge.s32.totalorder %v560, 0
      %vm589 = vcmp.ge.s32.totalorder %v561, 0
      %vm590 = vcmp.ge.s32.totalorder %v562, 0
      %vm591 = vcmp.ge.s32.totalorder %v563, 0
      %vm592 = vmand %vm528, %vm588
      %vm593 = vmand %vm529, %vm589
      %vm594 = vmand %vm530, %vm590
      %vm595 = vmand %vm531, %vm591
      %vm596 = vcmp.lt.s32.totalorder %v560, 16
      %vm597 = vcmp.lt.s32.totalorder %v561, 16
      %vm598 = vcmp.lt.s32.totalorder %v562, 16
      %vm599 = vcmp.lt.s32.totalorder %v563, 16
      %vm600 = vmand %vm592, %vm596
      %vm601 = vmand %vm593, %vm597
      %vm602 = vmand %vm594, %vm598
      %vm603 = vmand %vm595, %vm599
      %vm604 = vcmp.ge.s32.totalorder %v584, 0
      %vm605 = vcmp.ge.s32.totalorder %v585, 0
      %vm606 = vcmp.ge.s32.totalorder %v586, 0
      %vm607 = vcmp.ge.s32.totalorder %v587, 0
      %vm608 = vmand %vm600, %vm604
      %vm609 = vmand %vm601, %vm605
      %vm610 = vmand %vm602, %vm606
      %vm611 = vmand %vm603, %vm607
      %vm612 = vcmp.lt.s32.totalorder %v584, 16
      %vm613 = vcmp.lt.s32.totalorder %v585, 16
      %vm614 = vcmp.lt.s32.totalorder %v586, 16
      %vm615 = vcmp.lt.s32.totalorder %v587, 16
      %vm616 = vmand %vm608, %vm612
      %vm617 = vmand %vm609, %vm613
      %vm618 = vmand %vm610, %vm614
      %vm619 = vmand %vm611, %vm615
      %v620 = vmul.u32 %v584, 16
      %v621 = vmul.u32 %v585, 16
      %v622 = vmul.u32 %v586, 16
      %v623 = vmul.u32 %v587, 16
      %v624 = vadd.s32 %v620, %v560
      %v625 = vadd.s32 %v621, %v561
      %v626 = vadd.s32 %v622, %v562
      %v627 = vadd.s32 %v623, %v563
      %v628 = vsel %vm616, %v624, 4294967295
      %v629 = vsel %vm617, %v625, 4294967295
      %v630 = vsel %vm618, %v626, 4294967295
      %v631 = vsel %vm619, %v627, 4294967295
      %v632 = vsub.s32 %v628, %v390
      %v633 = vsub.s32 %v629, %v390
      %v634 = vsub.s32 %v630, %v390
      %v635 = vsub.s32 %v631, %v390
      %636 = vset.pattern.permute.xlu0 3
      %637 = vperm.xlu0 %636, %v632
      %v638 = vpop.permute.xlu0 %637
      %639 = vset.pattern.permute.xlu0 3
      %640 = vperm.xlu0 %639, %v633
      %v641 = vpop.permute.xlu0 %640
      %642 = vset.pattern.permute.xlu0 3
      %643 = vperm.xlu0 %642, %v634
      %v644 = vpop.permute.xlu0 %643
      %645 = vset.pattern.permute.xlu0 3
      %646 = vperm.xlu0 %645, %v635
      %v647 = vpop.permute.xlu0 %646
      %vm648 = vcmp.eq.s32.totalorder %v638, %v215
      %vm649 = vcmp.eq.s32.totalorder %v638, %v216
      %vm650 = vcmp.eq.s32.totalorder %v641, %v215
      %vm651 = vcmp.eq.s32.totalorder %v641, %v216
      %vm652 = vcmp.eq.s32.totalorder %v644, %v215
      %vm653 = vcmp.eq.s32.totalorder %v644, %v216
      %vm654 = vcmp.eq.s32.totalorder %v647, %v215
      %vm655 = vcmp.eq.s32.totalorder %v647, %v216
      %657 = vset.pattern.permute.xlu0 3
      %658 = vperm.xlu0 %657, %v524
      %v659 = vpop.permute.xlu0 %658
      %662 = vset.pattern.permute.xlu0 3
      %663 = vperm.xlu0 %662, %v525
      %v664 = vpop.permute.xlu0 %663
      %667 = vset.pattern.permute.xlu0 3
      %668 = vperm.xlu0 %667, %v526
      %v669 = vpop.permute.xlu0 %668
      %672 = vset.pattern.permute.xlu0 3
      %673 = vperm.xlu0 %672, %v527
      %v674 = vpop.permute.xlu0 %673
      %v676 = vsel %vm648, %v659, 1e+30
      %v677 = vsel %vm649, %v659, 1e+30
      %v678 = vsel %vm650, %v664, 1e+30
      %v679 = vsel %vm651, %v664, 1e+30
      %v680 = vsel %vm652, %v669, 1e+30
      %v681 = vsel %vm653, %v669, 1e+30
      %v682 = vsel %vm654, %v674, 1e+30
      %v683 = vsel %vm655, %v674, 1e+30
      %v684 = vmin.f32 %v676, %v680
      %v685 = vmin.f32 %v678, %v682
      %v686 = vmin.f32 %v684, %v685
      %v687 = vrot.slane %v686, 4
      %v688 = vmin.f32 %v686, %v687
      %v689 = vrot.slane %v688, 2
      %v690 = vmin.f32 %v688, %v689
      %v691 = vrot.slane %v690, 1
      %v692 = vmin.f32 %v690, %v691
      %v693 = vmin.f32 %v677, %v681
      %v694 = vmin.f32 %v679, %v683
      %v695 = vmin.f32 %v693, %v694
      %v696 = vrot.slane %v695, 4
      %v697 = vmin.f32 %v695, %v696
      %v698 = vrot.slane %v697, 2
      %v699 = vmin.f32 %v697, %v698
      %v700 = vrot.slane %v699, 1
      %v701 = vmin.f32 %v699, %v700
      %v702 = vmin.f32 %v461, %v692
      %v703 = vmin.f32 %v462, %v701
      %s704 = scalar_lea.vmem %s194, 64
      %v705 = vld [vmem:[%s704] sm:$0xff]
      %v706 = vld [vmem:[%s704 + $0x8] sm:$0xff]
      %v707 = vld [vmem:[%s704 + $0x10] sm:$0xff]
      %v708 = vld [vmem:[%s704 + $0x18] sm:$0xff]
      %v709 = vmul.f32 %v705, %v221
      %v710 = vmul.f32 %v706, %v221
      %v711 = vmul.f32 %v707, %v221
      %v712 = vmul.f32 %v708, %v221
      %v713 = vsel %vm226, %v709, 0.0
      %714 = vadd.xlane.f32.xlu0 %v713
      %v715 = vpop.xlane.xlu0 %714
      %v716 = vsel %vm226, %v710, 0.0
      %717 = vadd.xlane.f32.xlu0 %v716
      %v718 = vpop.xlane.xlu0 %717
      %v719 = vsel %vm226, %v711, 0.0
      %720 = vadd.xlane.f32.xlu0 %v719
      %v721 = vpop.xlane.xlu0 %720
      %v722 = vsel %vm226, %v712, 0.0
      %723 = vadd.xlane.f32.xlu0 %v722
      %v724 = vpop.xlane.xlu0 %723
      %v725 = vadd.f32 %v715, %v221
      %v726 = vadd.f32 %v718, %v221
      %v727 = vadd.f32 %v721, %v221
      %v728 = vadd.f32 %v724, %v221
      %v729 = vmul.f32 %v705, %v243
      %v730 = vmul.f32 %v706, %v243
      %v731 = vmul.f32 %v707, %v243
      %v732 = vmul.f32 %v708, %v243
      %v733 = vsel %vm226, %v729, 0.0
      %734 = vadd.xlane.f32.xlu0 %v733
      %v735 = vpop.xlane.xlu0 %734
      %v736 = vsel %vm226, %v730, 0.0
      %737 = vadd.xlane.f32.xlu0 %v736
      %v738 = vpop.xlane.xlu0 %737
      %v739 = vsel %vm226, %v731, 0.0
      %740 = vadd.xlane.f32.xlu0 %v739
      %v741 = vpop.xlane.xlu0 %740
      %v742 = vsel %vm226, %v732, 0.0
      %743 = vadd.xlane.f32.xlu0 %v742
      %v744 = vpop.xlane.xlu0 %743
      %v745 = vadd.f32 %v735, %v243
      %v746 = vadd.f32 %v738, %v243
      %v747 = vadd.f32 %v741, %v243
      %v748 = vadd.f32 %v744, %v243
      %v749 = vmul.f32 %v705, %v264
      %v750 = vmul.f32 %v706, %v264
      %v751 = vmul.f32 %v707, %v264
      %v752 = vmul.f32 %v708, %v264
      %v753 = vsel %vm226, %v749, 0.0
      %754 = vadd.xlane.f32.xlu0 %v753
      %v755 = vpop.xlane.xlu0 %754
      %v756 = vsel %vm226, %v750, 0.0
      %757 = vadd.xlane.f32.xlu0 %v756
      %v758 = vpop.xlane.xlu0 %757
      %v759 = vsel %vm226, %v751, 0.0
      %760 = vadd.xlane.f32.xlu0 %v759
      %v761 = vpop.xlane.xlu0 %760
      %v762 = vsel %vm226, %v752, 0.0
      %763 = vadd.xlane.f32.xlu0 %v762
      %v764 = vpop.xlane.xlu0 %763
      %v765 = vadd.f32 %v755, %v264
      %v766 = vadd.f32 %v758, %v264
      %v767 = vadd.f32 %v761, %v264
      %v768 = vadd.f32 %v764, %v264
      %vm769 = vcmp.gt.f32.partialorder %v765, 1e-06
      %vm770 = vcmp.gt.f32.partialorder %v766, 1e-06
      %vm771 = vcmp.gt.f32.partialorder %v767, 1e-06
      %vm772 = vcmp.gt.f32.partialorder %v768, 1e-06
      %v773 = vsel %vm769, %v765, 1.0
      %v774 = vsel %vm770, %v766, 1.0
      %v775 = vsel %vm771, %v767, 1.0
      %v776 = vsel %vm772, %v768, 1.0
      %v777 = vrcp.pop %v773
      %v778 = vrcp.pop %v774
      %v779 = vrcp.pop %v775
      %v780 = vrcp.pop %v776
      %v781 = vmul.f32 %v725, 8.0
      %v782 = vmul.f32 %v726, 8.0
      %v783 = vmul.f32 %v727, 8.0
      %v784 = vmul.f32 %v728, 8.0
      %v785 = vmul.f32 %v781, %v777
      %v786 = vmul.f32 %v782, %v778
      %v787 = vmul.f32 %v783, %v779
      %v788 = vmul.f32 %v784, %v780
      %v789 = vadd.f32 %v785, 8.0
      %v790 = vadd.f32 %v786, 8.0
      %v791 = vadd.f32 %v787, 8.0
      %v792 = vadd.f32 %v788, 8.0
      %v793 = vadd.f32 %v789, 0.5
      %v794 = vadd.f32 %v790, 0.5
      %v795 = vadd.f32 %v791, 0.5
      %v796 = vadd.f32 %v792, 0.5
      %v797 = vfloor.f32 %v793
      %v798 = vfloor.f32 %v794
      %v799 = vfloor.f32 %v795
      %v800 = vfloor.f32 %v796
      %v801 = vcvt.f32.s32.to.zero.pseudo %v797
      %v802 = vcvt.f32.s32.to.zero.pseudo %v798
      %v803 = vcvt.f32.s32.to.zero.pseudo %v799
      %v804 = vcvt.f32.s32.to.zero.pseudo %v800
      %v805 = vmul.f32 %v745, 8.0
      %v806 = vmul.f32 %v746, 8.0
      %v807 = vmul.f32 %v747, 8.0
      %v808 = vmul.f32 %v748, 8.0
      %v809 = vmul.f32 %v805, %v777
      %v810 = vmul.f32 %v806, %v778
      %v811 = vmul.f32 %v807, %v779
      %v812 = vmul.f32 %v808, %v780
      %v813 = vadd.f32 %v809, 8.0
      %v814 = vadd.f32 %v810, 8.0
      %v815 = vadd.f32 %v811, 8.0
      %v816 = vadd.f32 %v812, 8.0
      %v817 = vadd.f32 %v813, 0.5
      %v818 = vadd.f32 %v814, 0.5
      %v819 = vadd.f32 %v815, 0.5
      %v820 = vadd.f32 %v816, 0.5
      %v821 = vfloor.f32 %v817
      %v822 = vfloor.f32 %v818
      %v823 = vfloor.f32 %v819
      %v824 = vfloor.f32 %v820
      %v825 = vcvt.f32.s32.to.zero.pseudo %v821
      %v826 = vcvt.f32.s32.to.zero.pseudo %v822
      %v827 = vcvt.f32.s32.to.zero.pseudo %v823
      %v828 = vcvt.f32.s32.to.zero.pseudo %v824
      %vm829 = vcmp.ge.s32.totalorder %v801, 0
      %vm830 = vcmp.ge.s32.totalorder %v802, 0
      %vm831 = vcmp.ge.s32.totalorder %v803, 0
      %vm832 = vcmp.ge.s32.totalorder %v804, 0
      %vm833 = vmand %vm769, %vm829
      %vm834 = vmand %vm770, %vm830
      %vm835 = vmand %vm771, %vm831
      %vm836 = vmand %vm772, %vm832
      %vm837 = vcmp.lt.s32.totalorder %v801, 16
      %vm838 = vcmp.lt.s32.totalorder %v802, 16
      %vm839 = vcmp.lt.s32.totalorder %v803, 16
      %vm840 = vcmp.lt.s32.totalorder %v804, 16
      %vm841 = vmand %vm833, %vm837
      %vm842 = vmand %vm834, %vm838
      %vm843 = vmand %vm835, %vm839
      %vm844 = vmand %vm836, %vm840
      %vm845 = vcmp.ge.s32.totalorder %v825, 0
      %vm846 = vcmp.ge.s32.totalorder %v826, 0
      %vm847 = vcmp.ge.s32.totalorder %v827, 0
      %vm848 = vcmp.ge.s32.totalorder %v828, 0
      %vm849 = vmand %vm841, %vm845
      %vm850 = vmand %vm842, %vm846
      %vm851 = vmand %vm843, %vm847
      %vm852 = vmand %vm844, %vm848
      %vm853 = vcmp.lt.s32.totalorder %v825, 16
      %vm854 = vcmp.lt.s32.totalorder %v826, 16
      %vm855 = vcmp.lt.s32.totalorder %v827, 16
      %vm856 = vcmp.lt.s32.totalorder %v828, 16
      %vm857 = vmand %vm849, %vm853
      %vm858 = vmand %vm850, %vm854
      %vm859 = vmand %vm851, %vm855
      %vm860 = vmand %vm852, %vm856
      %v861 = vmul.u32 %v825, 16
      %v862 = vmul.u32 %v826, 16
      %v863 = vmul.u32 %v827, 16
      %v864 = vmul.u32 %v828, 16
      %v865 = vadd.s32 %v861, %v801
      %v866 = vadd.s32 %v862, %v802
      %v867 = vadd.s32 %v863, %v803
      %v868 = vadd.s32 %v864, %v804
      %v869 = vsel %vm857, %v865, 4294967295
      %v870 = vsel %vm858, %v866, 4294967295
      %v871 = vsel %vm859, %v867, 4294967295
      %v872 = vsel %vm860, %v868, 4294967295
      %v873 = vsub.s32 %v869, %v390
      %v874 = vsub.s32 %v870, %v390
      %v875 = vsub.s32 %v871, %v390
      %v876 = vsub.s32 %v872, %v390
      %877 = vset.pattern.permute.xlu0 3
      %878 = vperm.xlu0 %877, %v873
      %v879 = vpop.permute.xlu0 %878
      %880 = vset.pattern.permute.xlu0 3
      %881 = vperm.xlu0 %880, %v874
      %v882 = vpop.permute.xlu0 %881
      %883 = vset.pattern.permute.xlu0 3
      %884 = vperm.xlu0 %883, %v875
      %v885 = vpop.permute.xlu0 %884
      %886 = vset.pattern.permute.xlu0 3
      %887 = vperm.xlu0 %886, %v876
      %v888 = vpop.permute.xlu0 %887
      %vm889 = vcmp.eq.s32.totalorder %v879, %v215
      %vm890 = vcmp.eq.s32.totalorder %v879, %v216
      %vm891 = vcmp.eq.s32.totalorder %v882, %v215
      %vm892 = vcmp.eq.s32.totalorder %v882, %v216
      %vm893 = vcmp.eq.s32.totalorder %v885, %v215
      %vm894 = vcmp.eq.s32.totalorder %v885, %v216
      %vm895 = vcmp.eq.s32.totalorder %v888, %v215
      %vm896 = vcmp.eq.s32.totalorder %v888, %v216
      %898 = vset.pattern.permute.xlu0 3
      %899 = vperm.xlu0 %898, %v765
      %v900 = vpop.permute.xlu0 %899
      %903 = vset.pattern.permute.xlu0 3
      %904 = vperm.xlu0 %903, %v766
      %v905 = vpop.permute.xlu0 %904
      %908 = vset.pattern.permute.xlu0 3
      %909 = vperm.xlu0 %908, %v767
      %v910 = vpop.permute.xlu0 %909
      %913 = vset.pattern.permute.xlu0 3
      %914 = vperm.xlu0 %913, %v768
      %v915 = vpop.permute.xlu0 %914
      %v917 = vsel %vm889, %v900, 1e+30
      %v918 = vsel %vm890, %v900, 1e+30
      %v919 = vsel %vm891, %v905, 1e+30
      %v920 = vsel %vm892, %v905, 1e+30
      %v921 = vsel %vm893, %v910, 1e+30
      %v922 = vsel %vm894, %v910, 1e+30
      %v923 = vsel %vm895, %v915, 1e+30
      %v924 = vsel %vm896, %v915, 1e+30
      %v925 = vmin.f32 %v917, %v921
      %v926 = vmin.f32 %v919, %v923
      %v927 = vmin.f32 %v925, %v926
      %v928 = vrot.slane %v927, 4
      %v929 = vmin.f32 %v927, %v928
      %v930 = vrot.slane %v929, 2
      %v931 = vmin.f32 %v929, %v930
      %v932 = vrot.slane %v931, 1
      %v933 = vmin.f32 %v931, %v932
      %v934 = vmin.f32 %v918, %v922
      %v935 = vmin.f32 %v920, %v924
      %v936 = vmin.f32 %v934, %v935
      %v937 = vrot.slane %v936, 4
      %v938 = vmin.f32 %v936, %v937
      %v939 = vrot.slane %v938, 2
      %v940 = vmin.f32 %v938, %v939
      %v941 = vrot.slane %v940, 1
      %v942 = vmin.f32 %v940, %v941
      %v943 = vmin.f32 %v702, %v933
      %v944 = vmin.f32 %v703, %v942
      %s945 = scalar_lea.vmem %s194, 96
      %v946 = vld [vmem:[%s945] sm:$0xff]
      %v947 = vld [vmem:[%s945 + $0x8] sm:$0xff]
      %v948 = vld [vmem:[%s945 + $0x10] sm:$0xff]
      %v949 = vld [vmem:[%s945 + $0x18] sm:$0xff]
      %v950 = vmul.f32 %v946, %v221
      %v951 = vmul.f32 %v947, %v221
      %v952 = vmul.f32 %v948, %v221
      %v953 = vmul.f32 %v949, %v221
      %v954 = vsel %vm226, %v950, 0.0
      %955 = vadd.xlane.f32.xlu0 %v954
      %v956 = vpop.xlane.xlu0 %955
      %v957 = vsel %vm226, %v951, 0.0
      %958 = vadd.xlane.f32.xlu0 %v957
      %v959 = vpop.xlane.xlu0 %958
      %v960 = vsel %vm226, %v952, 0.0
      %961 = vadd.xlane.f32.xlu0 %v960
      %v962 = vpop.xlane.xlu0 %961
      %v963 = vsel %vm226, %v953, 0.0
      %964 = vadd.xlane.f32.xlu0 %v963
      %v965 = vpop.xlane.xlu0 %964
      %v966 = vadd.f32 %v956, %v221
      %v967 = vadd.f32 %v959, %v221
      %v968 = vadd.f32 %v962, %v221
      %v969 = vadd.f32 %v965, %v221
      %v970 = vmul.f32 %v946, %v243
      %v971 = vmul.f32 %v947, %v243
      %v972 = vmul.f32 %v948, %v243
      %v973 = vmul.f32 %v949, %v243
      %v974 = vsel %vm226, %v970, 0.0
      %975 = vadd.xlane.f32.xlu0 %v974
      %v976 = vpop.xlane.xlu0 %975
      %v977 = vsel %vm226, %v971, 0.0
      %978 = vadd.xlane.f32.xlu0 %v977
      %v979 = vpop.xlane.xlu0 %978
      %v980 = vsel %vm226, %v972, 0.0
      %981 = vadd.xlane.f32.xlu0 %v980
      %v982 = vpop.xlane.xlu0 %981
      %v983 = vsel %vm226, %v973, 0.0
      %984 = vadd.xlane.f32.xlu0 %v983
      %v985 = vpop.xlane.xlu0 %984
      %v986 = vadd.f32 %v976, %v243
      %v987 = vadd.f32 %v979, %v243
      %v988 = vadd.f32 %v982, %v243
      %v989 = vadd.f32 %v985, %v243
      %v990 = vmul.f32 %v946, %v264
      %v991 = vmul.f32 %v947, %v264
      %v992 = vmul.f32 %v948, %v264
      %v993 = vmul.f32 %v949, %v264
      %v994 = vsel %vm226, %v990, 0.0
      %995 = vadd.xlane.f32.xlu0 %v994
      %v996 = vpop.xlane.xlu0 %995
      %v997 = vsel %vm226, %v991, 0.0
      %998 = vadd.xlane.f32.xlu0 %v997
      %v999 = vpop.xlane.xlu0 %998
      %v1000 = vsel %vm226, %v992, 0.0
      %1001 = vadd.xlane.f32.xlu0 %v1000
      %v1002 = vpop.xlane.xlu0 %1001
      %v1003 = vsel %vm226, %v993, 0.0
      %1004 = vadd.xlane.f32.xlu0 %v1003
      %v1005 = vpop.xlane.xlu0 %1004
      %v1006 = vadd.f32 %v996, %v264
      %v1007 = vadd.f32 %v999, %v264
      %v1008 = vadd.f32 %v1002, %v264
      %v1009 = vadd.f32 %v1005, %v264
      %vm1010 = vcmp.gt.f32.partialorder %v1006, 1e-06
      %vm1011 = vcmp.gt.f32.partialorder %v1007, 1e-06
      %vm1012 = vcmp.gt.f32.partialorder %v1008, 1e-06
      %vm1013 = vcmp.gt.f32.partialorder %v1009, 1e-06
      %v1014 = vsel %vm1010, %v1006, 1.0
      %v1015 = vsel %vm1011, %v1007, 1.0
      %v1016 = vsel %vm1012, %v1008, 1.0
      %v1017 = vsel %vm1013, %v1009, 1.0
      %v1018 = vrcp.pop %v1014
      %v1019 = vrcp.pop %v1015
      %v1020 = vrcp.pop %v1016
      %v1021 = vrcp.pop %v1017
      %v1022 = vmul.f32 %v966, 8.0
      %v1023 = vmul.f32 %v967, 8.0
      %v1024 = vmul.f32 %v968, 8.0
      %v1025 = vmul.f32 %v969, 8.0
      %v1026 = vmul.f32 %v1022, %v1018
      %v1027 = vmul.f32 %v1023, %v1019
      %v1028 = vmul.f32 %v1024, %v1020
      %v1029 = vmul.f32 %v1025, %v1021
      %v1030 = vadd.f32 %v1026, 8.0
      %v1031 = vadd.f32 %v1027, 8.0
      %v1032 = vadd.f32 %v1028, 8.0
      %v1033 = vadd.f32 %v1029, 8.0
      %v1034 = vadd.f32 %v1030, 0.5
      %v1035 = vadd.f32 %v1031, 0.5
      %v1036 = vadd.f32 %v1032, 0.5
      %v1037 = vadd.f32 %v1033, 0.5
      %v1038 = vfloor.f32 %v1034
      %v1039 = vfloor.f32 %v1035
      %v1040 = vfloor.f32 %v1036
      %v1041 = vfloor.f32 %v1037
      %v1042 = vcvt.f32.s32.to.zero.pseudo %v1038
      %v1043 = vcvt.f32.s32.to.zero.pseudo %v1039
      %v1044 = vcvt.f32.s32.to.zero.pseudo %v1040
      %v1045 = vcvt.f32.s32.to.zero.pseudo %v1041
      %v1046 = vmul.f32 %v986, 8.0
      %v1047 = vmul.f32 %v987, 8.0
      %v1048 = vmul.f32 %v988, 8.0
      %v1049 = vmul.f32 %v989, 8.0
      %v1050 = vmul.f32 %v1046, %v1018
      %v1051 = vmul.f32 %v1047, %v1019
      %v1052 = vmul.f32 %v1048, %v1020
      %v1053 = vmul.f32 %v1049, %v1021
      %v1054 = vadd.f32 %v1050, 8.0
      %v1055 = vadd.f32 %v1051, 8.0
      %v1056 = vadd.f32 %v1052, 8.0
      %v1057 = vadd.f32 %v1053, 8.0
      %v1058 = vadd.f32 %v1054, 0.5
      %v1059 = vadd.f32 %v1055, 0.5
      %v1060 = vadd.f32 %v1056, 0.5
      %v1061 = vadd.f32 %v1057, 0.5
      %v1062 = vfloor.f32 %v1058
      %v1063 = vfloor.f32 %v1059
      %v1064 = vfloor.f32 %v1060
      %v1065 = vfloor.f32 %v1061
      %v1066 = vcvt.f32.s32.to.zero.pseudo %v1062
      %v1067 = vcvt.f32.s32.to.zero.pseudo %v1063
      %v1068 = vcvt.f32.s32.to.zero.pseudo %v1064
      %v1069 = vcvt.f32.s32.to.zero.pseudo %v1065
      %vm1070 = vcmp.ge.s32.totalorder %v1042, 0
      %vm1071 = vcmp.ge.s32.totalorder %v1043, 0
      %vm1072 = vcmp.ge.s32.totalorder %v1044, 0
      %vm1073 = vcmp.ge.s32.totalorder %v1045, 0
      %vm1074 = vmand %vm1010, %vm1070
      %vm1075 = vmand %vm1011, %vm1071
      %vm1076 = vmand %vm1012, %vm1072
      %vm1077 = vmand %vm1013, %vm1073
      %vm1078 = vcmp.lt.s32.totalorder %v1042, 16
      %vm1079 = vcmp.lt.s32.totalorder %v1043, 16
      %vm1080 = vcmp.lt.s32.totalorder %v1044, 16
      %vm1081 = vcmp.lt.s32.totalorder %v1045, 16
      %vm1082 = vmand %vm1074, %vm1078
      %vm1083 = vmand %vm1075, %vm1079
      %vm1084 = vmand %vm1076, %vm1080
      %vm1085 = vmand %vm1077, %vm1081
      %vm1086 = vcmp.ge.s32.totalorder %v1066, 0
      %vm1087 = vcmp.ge.s32.totalorder %v1067, 0
      %vm1088 = vcmp.ge.s32.totalorder %v1068, 0
      %vm1089 = vcmp.ge.s32.totalorder %v1069, 0
      %vm1090 = vmand %vm1082, %vm1086
      %vm1091 = vmand %vm1083, %vm1087
      %vm1092 = vmand %vm1084, %vm1088
      %vm1093 = vmand %vm1085, %vm1089
      %vm1094 = vcmp.lt.s32.totalorder %v1066, 16
      %vm1095 = vcmp.lt.s32.totalorder %v1067, 16
      %vm1096 = vcmp.lt.s32.totalorder %v1068, 16
      %vm1097 = vcmp.lt.s32.totalorder %v1069, 16
      %vm1098 = vmand %vm1090, %vm1094
      %vm1099 = vmand %vm1091, %vm1095
      %vm1100 = vmand %vm1092, %vm1096
      %vm1101 = vmand %vm1093, %vm1097
      %v1102 = vmul.u32 %v1066, 16
      %v1103 = vmul.u32 %v1067, 16
      %v1104 = vmul.u32 %v1068, 16
      %v1105 = vmul.u32 %v1069, 16
      %v1106 = vadd.s32 %v1102, %v1042
      %v1107 = vadd.s32 %v1103, %v1043
      %v1108 = vadd.s32 %v1104, %v1044
      %v1109 = vadd.s32 %v1105, %v1045
      %v1110 = vsel %vm1098, %v1106, 4294967295
      %v1111 = vsel %vm1099, %v1107, 4294967295
      %v1112 = vsel %vm1100, %v1108, 4294967295
      %v1113 = vsel %vm1101, %v1109, 4294967295
      %v1114 = vsub.s32 %v1110, %v390
      %v1115 = vsub.s32 %v1111, %v390
      %v1116 = vsub.s32 %v1112, %v390
      %v1117 = vsub.s32 %v1113, %v390
      %1118 = vset.pattern.permute.xlu0 3
      %1119 = vperm.xlu0 %1118, %v1114
      %v1120 = vpop.permute.xlu0 %1119
      %1121 = vset.pattern.permute.xlu0 3
      %1122 = vperm.xlu0 %1121, %v1115
      %v1123 = vpop.permute.xlu0 %1122
      %1124 = vset.pattern.permute.xlu0 3
      %1125 = vperm.xlu0 %1124, %v1116
      %v1126 = vpop.permute.xlu0 %1125
      %1127 = vset.pattern.permute.xlu0 3
      %1128 = vperm.xlu0 %1127, %v1117
      %v1129 = vpop.permute.xlu0 %1128
      %vm1130 = vcmp.eq.s32.totalorder %v1120, %v215
      %vm1131 = vcmp.eq.s32.totalorder %v1120, %v216
      %vm1132 = vcmp.eq.s32.totalorder %v1123, %v215
      %vm1133 = vcmp.eq.s32.totalorder %v1123, %v216
      %vm1134 = vcmp.eq.s32.totalorder %v1126, %v215
      %vm1135 = vcmp.eq.s32.totalorder %v1126, %v216
      %vm1136 = vcmp.eq.s32.totalorder %v1129, %v215
      %vm1137 = vcmp.eq.s32.totalorder %v1129, %v216
      %1139 = vset.pattern.permute.xlu0 3
      %1140 = vperm.xlu0 %1139, %v1006
      %v1141 = vpop.permute.xlu0 %1140
      %1144 = vset.pattern.permute.xlu0 3
      %1145 = vperm.xlu0 %1144, %v1007
      %v1146 = vpop.permute.xlu0 %1145
      %1149 = vset.pattern.permute.xlu0 3
      %1150 = vperm.xlu0 %1149, %v1008
      %v1151 = vpop.permute.xlu0 %1150
      %1154 = vset.pattern.permute.xlu0 3
      %1155 = vperm.xlu0 %1154, %v1009
      %v1156 = vpop.permute.xlu0 %1155
      %v1158 = vsel %vm1130, %v1141, 1e+30
      %v1159 = vsel %vm1131, %v1141, 1e+30
      %v1160 = vsel %vm1132, %v1146, 1e+30
      %v1161 = vsel %vm1133, %v1146, 1e+30
      %v1162 = vsel %vm1134, %v1151, 1e+30
      %v1163 = vsel %vm1135, %v1151, 1e+30
      %v1164 = vsel %vm1136, %v1156, 1e+30
      %v1165 = vsel %vm1137, %v1156, 1e+30
      %v1166 = vmin.f32 %v1158, %v1162
      %v1167 = vmin.f32 %v1160, %v1164
      %v1168 = vmin.f32 %v1166, %v1167
      %v1169 = vrot.slane %v1168, 4
      %v1170 = vmin.f32 %v1168, %v1169
      %v1171 = vrot.slane %v1170, 2
      %v1172 = vmin.f32 %v1170, %v1171
      %v1173 = vrot.slane %v1172, 1
      %v1174 = vmin.f32 %v1172, %v1173
      %v1175 = vmin.f32 %v1159, %v1163
      %v1176 = vmin.f32 %v1161, %v1165
      %v1177 = vmin.f32 %v1175, %v1176
      %v1178 = vrot.slane %v1177, 4
      %v1179 = vmin.f32 %v1177, %v1178
      %v1180 = vrot.slane %v1179, 2
      %v1181 = vmin.f32 %v1179, %v1180
      %v1182 = vrot.slane %v1181, 1
      %v1183 = vmin.f32 %v1181, %v1182
      %v1184 = vmin.f32 %v943, %v1174
      %v1185 = vmin.f32 %v944, %v1183
      %s1186 = scalar_lea.vmem %s194, 128
      %v1187 = vld [vmem:[%s1186] sm:$0xff]
      %v1188 = vld [vmem:[%s1186 + $0x8] sm:$0xff]
      %v1189 = vld [vmem:[%s1186 + $0x10] sm:$0xff]
      %v1190 = vld [vmem:[%s1186 + $0x18] sm:$0xff]
      %v1191 = vmul.f32 %v1187, %v221
      %v1192 = vmul.f32 %v1188, %v221
      %v1193 = vmul.f32 %v1189, %v221
      %v1194 = vmul.f32 %v1190, %v221
      %v1195 = vsel %vm226, %v1191, 0.0
      %1196 = vadd.xlane.f32.xlu0 %v1195
      %v1197 = vpop.xlane.xlu0 %1196
      %v1198 = vsel %vm226, %v1192, 0.0
      %1199 = vadd.xlane.f32.xlu0 %v1198
      %v1200 = vpop.xlane.xlu0 %1199
      %v1201 = vsel %vm226, %v1193, 0.0
      %1202 = vadd.xlane.f32.xlu0 %v1201
      %v1203 = vpop.xlane.xlu0 %1202
      %v1204 = vsel %vm226, %v1194, 0.0
      %1205 = vadd.xlane.f32.xlu0 %v1204
      %v1206 = vpop.xlane.xlu0 %1205
      %v1207 = vadd.f32 %v1197, %v221
      %v1208 = vadd.f32 %v1200, %v221
      %v1209 = vadd.f32 %v1203, %v221
      %v1210 = vadd.f32 %v1206, %v221
      %v1211 = vmul.f32 %v1187, %v243
      %v1212 = vmul.f32 %v1188, %v243
      %v1213 = vmul.f32 %v1189, %v243
      %v1214 = vmul.f32 %v1190, %v243
      %v1215 = vsel %vm226, %v1211, 0.0
      %1216 = vadd.xlane.f32.xlu0 %v1215
      %v1217 = vpop.xlane.xlu0 %1216
      %v1218 = vsel %vm226, %v1212, 0.0
      %1219 = vadd.xlane.f32.xlu0 %v1218
      %v1220 = vpop.xlane.xlu0 %1219
      %v1221 = vsel %vm226, %v1213, 0.0
      %1222 = vadd.xlane.f32.xlu0 %v1221
      %v1223 = vpop.xlane.xlu0 %1222
      %v1224 = vsel %vm226, %v1214, 0.0
      %1225 = vadd.xlane.f32.xlu0 %v1224
      %v1226 = vpop.xlane.xlu0 %1225
      %v1227 = vadd.f32 %v1217, %v243
      %v1228 = vadd.f32 %v1220, %v243
      %v1229 = vadd.f32 %v1223, %v243
      %v1230 = vadd.f32 %v1226, %v243
      %v1231 = vmul.f32 %v1187, %v264
      %v1232 = vmul.f32 %v1188, %v264
      %v1233 = vmul.f32 %v1189, %v264
      %v1234 = vmul.f32 %v1190, %v264
      %v1235 = vsel %vm226, %v1231, 0.0
      %1236 = vadd.xlane.f32.xlu0 %v1235
      %v1237 = vpop.xlane.xlu0 %1236
      %v1238 = vsel %vm226, %v1232, 0.0
      %1239 = vadd.xlane.f32.xlu0 %v1238
      %v1240 = vpop.xlane.xlu0 %1239
      %v1241 = vsel %vm226, %v1233, 0.0
      %1242 = vadd.xlane.f32.xlu0 %v1241
      %v1243 = vpop.xlane.xlu0 %1242
      %v1244 = vsel %vm226, %v1234, 0.0
      %1245 = vadd.xlane.f32.xlu0 %v1244
      %v1246 = vpop.xlane.xlu0 %1245
      %v1247 = vadd.f32 %v1237, %v264
      %v1248 = vadd.f32 %v1240, %v264
      %v1249 = vadd.f32 %v1243, %v264
      %v1250 = vadd.f32 %v1246, %v264
      %vm1251 = vcmp.gt.f32.partialorder %v1247, 1e-06
      %vm1252 = vcmp.gt.f32.partialorder %v1248, 1e-06
      %vm1253 = vcmp.gt.f32.partialorder %v1249, 1e-06
      %vm1254 = vcmp.gt.f32.partialorder %v1250, 1e-06
      %v1255 = vsel %vm1251, %v1247, 1.0
      %v1256 = vsel %vm1252, %v1248, 1.0
      %v1257 = vsel %vm1253, %v1249, 1.0
      %v1258 = vsel %vm1254, %v1250, 1.0
      %v1259 = vrcp.pop %v1255
      %v1260 = vrcp.pop %v1256
      %v1261 = vrcp.pop %v1257
      %v1262 = vrcp.pop %v1258
      %v1263 = vmul.f32 %v1207, 8.0
      %v1264 = vmul.f32 %v1208, 8.0
      %v1265 = vmul.f32 %v1209, 8.0
      %v1266 = vmul.f32 %v1210, 8.0
      %v1267 = vmul.f32 %v1263, %v1259
      %v1268 = vmul.f32 %v1264, %v1260
      %v1269 = vmul.f32 %v1265, %v1261
      %v1270 = vmul.f32 %v1266, %v1262
      %v1271 = vadd.f32 %v1267, 8.0
      %v1272 = vadd.f32 %v1268, 8.0
      %v1273 = vadd.f32 %v1269, 8.0
      %v1274 = vadd.f32 %v1270, 8.0
      %v1275 = vadd.f32 %v1271, 0.5
      %v1276 = vadd.f32 %v1272, 0.5
      %v1277 = vadd.f32 %v1273, 0.5
      %v1278 = vadd.f32 %v1274, 0.5
      %v1279 = vfloor.f32 %v1275
      %v1280 = vfloor.f32 %v1276
      %v1281 = vfloor.f32 %v1277
      %v1282 = vfloor.f32 %v1278
      %v1283 = vcvt.f32.s32.to.zero.pseudo %v1279
      %v1284 = vcvt.f32.s32.to.zero.pseudo %v1280
      %v1285 = vcvt.f32.s32.to.zero.pseudo %v1281
      %v1286 = vcvt.f32.s32.to.zero.pseudo %v1282
      %v1287 = vmul.f32 %v1227, 8.0
      %v1288 = vmul.f32 %v1228, 8.0
      %v1289 = vmul.f32 %v1229, 8.0
      %v1290 = vmul.f32 %v1230, 8.0
      %v1291 = vmul.f32 %v1287, %v1259
      %v1292 = vmul.f32 %v1288, %v1260
      %v1293 = vmul.f32 %v1289, %v1261
      %v1294 = vmul.f32 %v1290, %v1262
      %v1295 = vadd.f32 %v1291, 8.0
      %v1296 = vadd.f32 %v1292, 8.0
      %v1297 = vadd.f32 %v1293, 8.0
      %v1298 = vadd.f32 %v1294, 8.0
      %v1299 = vadd.f32 %v1295, 0.5
      %v1300 = vadd.f32 %v1296, 0.5
      %v1301 = vadd.f32 %v1297, 0.5
      %v1302 = vadd.f32 %v1298, 0.5
      %v1303 = vfloor.f32 %v1299
      %v1304 = vfloor.f32 %v1300
      %v1305 = vfloor.f32 %v1301
      %v1306 = vfloor.f32 %v1302
      %v1307 = vcvt.f32.s32.to.zero.pseudo %v1303
      %v1308 = vcvt.f32.s32.to.zero.pseudo %v1304
      %v1309 = vcvt.f32.s32.to.zero.pseudo %v1305
      %v1310 = vcvt.f32.s32.to.zero.pseudo %v1306
      %vm1311 = vcmp.ge.s32.totalorder %v1283, 0
      %vm1312 = vcmp.ge.s32.totalorder %v1284, 0
      %vm1313 = vcmp.ge.s32.totalorder %v1285, 0
      %vm1314 = vcmp.ge.s32.totalorder %v1286, 0
      %vm1315 = vmand %vm1251, %vm1311
      %vm1316 = vmand %vm1252, %vm1312
      %vm1317 = vmand %vm1253, %vm1313
      %vm1318 = vmand %vm1254, %vm1314
      %vm1319 = vcmp.lt.s32.totalorder %v1283, 16
      %vm1320 = vcmp.lt.s32.totalorder %v1284, 16
      %vm1321 = vcmp.lt.s32.totalorder %v1285, 16
      %vm1322 = vcmp.lt.s32.totalorder %v1286, 16
      %vm1323 = vmand %vm1315, %vm1319
      %vm1324 = vmand %vm1316, %vm1320
      %vm1325 = vmand %vm1317, %vm1321
      %vm1326 = vmand %vm1318, %vm1322
      %vm1327 = vcmp.ge.s32.totalorder %v1307, 0
      %vm1328 = vcmp.ge.s32.totalorder %v1308, 0
      %vm1329 = vcmp.ge.s32.totalorder %v1309, 0
      %vm1330 = vcmp.ge.s32.totalorder %v1310, 0
      %vm1331 = vmand %vm1323, %vm1327
      %vm1332 = vmand %vm1324, %vm1328
      %vm1333 = vmand %vm1325, %vm1329
      %vm1334 = vmand %vm1326, %vm1330
      %vm1335 = vcmp.lt.s32.totalorder %v1307, 16
      %vm1336 = vcmp.lt.s32.totalorder %v1308, 16
      %vm1337 = vcmp.lt.s32.totalorder %v1309, 16
      %vm1338 = vcmp.lt.s32.totalorder %v1310, 16
      %vm1339 = vmand %vm1331, %vm1335
      %vm1340 = vmand %vm1332, %vm1336
      %vm1341 = vmand %vm1333, %vm1337
      %vm1342 = vmand %vm1334, %vm1338
      %v1343 = vmul.u32 %v1307, 16
      %v1344 = vmul.u32 %v1308, 16
      %v1345 = vmul.u32 %v1309, 16
      %v1346 = vmul.u32 %v1310, 16
      %v1347 = vadd.s32 %v1343, %v1283
      %v1348 = vadd.s32 %v1344, %v1284
      %v1349 = vadd.s32 %v1345, %v1285
      %v1350 = vadd.s32 %v1346, %v1286
      %v1351 = vsel %vm1339, %v1347, 4294967295
      %v1352 = vsel %vm1340, %v1348, 4294967295
      %v1353 = vsel %vm1341, %v1349, 4294967295
      %v1354 = vsel %vm1342, %v1350, 4294967295
      %v1355 = vsub.s32 %v1351, %v390
      %v1356 = vsub.s32 %v1352, %v390
      %v1357 = vsub.s32 %v1353, %v390
      %v1358 = vsub.s32 %v1354, %v390
      %1359 = vset.pattern.permute.xlu0 3
      %1360 = vperm.xlu0 %1359, %v1355
      %v1361 = vpop.permute.xlu0 %1360
      %1362 = vset.pattern.permute.xlu0 3
      %1363 = vperm.xlu0 %1362, %v1356
      %v1364 = vpop.permute.xlu0 %1363
      %1365 = vset.pattern.permute.xlu0 3
      %1366 = vperm.xlu0 %1365, %v1357
      %v1367 = vpop.permute.xlu0 %1366
      %1368 = vset.pattern.permute.xlu0 3
      %1369 = vperm.xlu0 %1368, %v1358
      %v1370 = vpop.permute.xlu0 %1369
      %vm1371 = vcmp.eq.s32.totalorder %v1361, %v215
      %vm1372 = vcmp.eq.s32.totalorder %v1361, %v216
      %vm1373 = vcmp.eq.s32.totalorder %v1364, %v215
      %vm1374 = vcmp.eq.s32.totalorder %v1364, %v216
      %vm1375 = vcmp.eq.s32.totalorder %v1367, %v215
      %vm1376 = vcmp.eq.s32.totalorder %v1367, %v216
      %vm1377 = vcmp.eq.s32.totalorder %v1370, %v215
      %vm1378 = vcmp.eq.s32.totalorder %v1370, %v216
      %1380 = vset.pattern.permute.xlu0 3
      %1381 = vperm.xlu0 %1380, %v1247
      %v1382 = vpop.permute.xlu0 %1381
      %1385 = vset.pattern.permute.xlu0 3
      %1386 = vperm.xlu0 %1385, %v1248
      %v1387 = vpop.permute.xlu0 %1386
      %1390 = vset.pattern.permute.xlu0 3
      %1391 = vperm.xlu0 %1390, %v1249
      %v1392 = vpop.permute.xlu0 %1391
      %1395 = vset.pattern.permute.xlu0 3
      %1396 = vperm.xlu0 %1395, %v1250
      %v1397 = vpop.permute.xlu0 %1396
      %v1399 = vsel %vm1371, %v1382, 1e+30
      %v1400 = vsel %vm1372, %v1382, 1e+30
      %v1401 = vsel %vm1373, %v1387, 1e+30
      %v1402 = vsel %vm1374, %v1387, 1e+30
      %v1403 = vsel %vm1375, %v1392, 1e+30
      %v1404 = vsel %vm1376, %v1392, 1e+30
      %v1405 = vsel %vm1377, %v1397, 1e+30
      %v1406 = vsel %vm1378, %v1397, 1e+30
      %v1407 = vmin.f32 %v1399, %v1403
      %v1408 = vmin.f32 %v1401, %v1405
      %v1409 = vmin.f32 %v1407, %v1408
      %v1410 = vrot.slane %v1409, 4
      %v1411 = vmin.f32 %v1409, %v1410
      %v1412 = vrot.slane %v1411, 2
      %v1413 = vmin.f32 %v1411, %v1412
      %v1414 = vrot.slane %v1413, 1
      %v1415 = vmin.f32 %v1413, %v1414
      %v1416 = vmin.f32 %v1400, %v1404
      %v1417 = vmin.f32 %v1402, %v1406
      %v1418 = vmin.f32 %v1416, %v1417
      %v1419 = vrot.slane %v1418, 4
      %v1420 = vmin.f32 %v1418, %v1419
      %v1421 = vrot.slane %v1420, 2
      %v1422 = vmin.f32 %v1420, %v1421
      %v1423 = vrot.slane %v1422, 1
      %v1424 = vmin.f32 %v1422, %v1423
      %v1425 = vmin.f32 %v1184, %v1415
      %v1426 = vmin.f32 %v1185, %v1424
      %s1427 = scalar_lea.vmem %s194, 160
      %v1428 = vld [vmem:[%s1427] sm:$0xff]
      %v1429 = vld [vmem:[%s1427 + $0x8] sm:$0xff]
      %v1430 = vld [vmem:[%s1427 + $0x10] sm:$0xff]
      %v1431 = vld [vmem:[%s1427 + $0x18] sm:$0xff]
      %v1432 = vmul.f32 %v1428, %v221
      %v1433 = vmul.f32 %v1429, %v221
      %v1434 = vmul.f32 %v1430, %v221
      %v1435 = vmul.f32 %v1431, %v221
      %v1436 = vsel %vm226, %v1432, 0.0
      %1437 = vadd.xlane.f32.xlu0 %v1436
      %v1438 = vpop.xlane.xlu0 %1437
      %v1439 = vsel %vm226, %v1433, 0.0
      %1440 = vadd.xlane.f32.xlu0 %v1439
      %v1441 = vpop.xlane.xlu0 %1440
      %v1442 = vsel %vm226, %v1434, 0.0
      %1443 = vadd.xlane.f32.xlu0 %v1442
      %v1444 = vpop.xlane.xlu0 %1443
      %v1445 = vsel %vm226, %v1435, 0.0
      %1446 = vadd.xlane.f32.xlu0 %v1445
      %v1447 = vpop.xlane.xlu0 %1446
      %v1448 = vadd.f32 %v1438, %v221
      %v1449 = vadd.f32 %v1441, %v221
      %v1450 = vadd.f32 %v1444, %v221
      %v1451 = vadd.f32 %v1447, %v221
      %v1452 = vmul.f32 %v1428, %v243
      %v1453 = vmul.f32 %v1429, %v243
      %v1454 = vmul.f32 %v1430, %v243
      %v1455 = vmul.f32 %v1431, %v243
      %v1456 = vsel %vm226, %v1452, 0.0
      %1457 = vadd.xlane.f32.xlu0 %v1456
      %v1458 = vpop.xlane.xlu0 %1457
      %v1459 = vsel %vm226, %v1453, 0.0
      %1460 = vadd.xlane.f32.xlu0 %v1459
      %v1461 = vpop.xlane.xlu0 %1460
      %v1462 = vsel %vm226, %v1454, 0.0
      %1463 = vadd.xlane.f32.xlu0 %v1462
      %v1464 = vpop.xlane.xlu0 %1463
      %v1465 = vsel %vm226, %v1455, 0.0
      %1466 = vadd.xlane.f32.xlu0 %v1465
      %v1467 = vpop.xlane.xlu0 %1466
      %v1468 = vadd.f32 %v1458, %v243
      %v1469 = vadd.f32 %v1461, %v243
      %v1470 = vadd.f32 %v1464, %v243
      %v1471 = vadd.f32 %v1467, %v243
      %v1472 = vmul.f32 %v1428, %v264
      %v1473 = vmul.f32 %v1429, %v264
      %v1474 = vmul.f32 %v1430, %v264
      %v1475 = vmul.f32 %v1431, %v264
      %v1476 = vsel %vm226, %v1472, 0.0
      %1477 = vadd.xlane.f32.xlu0 %v1476
      %v1478 = vpop.xlane.xlu0 %1477
      %v1479 = vsel %vm226, %v1473, 0.0
      %1480 = vadd.xlane.f32.xlu0 %v1479
      %v1481 = vpop.xlane.xlu0 %1480
      %v1482 = vsel %vm226, %v1474, 0.0
      %1483 = vadd.xlane.f32.xlu0 %v1482
      %v1484 = vpop.xlane.xlu0 %1483
      %v1485 = vsel %vm226, %v1475, 0.0
      %1486 = vadd.xlane.f32.xlu0 %v1485
      %v1487 = vpop.xlane.xlu0 %1486
      %v1488 = vadd.f32 %v1478, %v264
      %v1489 = vadd.f32 %v1481, %v264
      %v1490 = vadd.f32 %v1484, %v264
      %v1491 = vadd.f32 %v1487, %v264
      %vm1492 = vcmp.gt.f32.partialorder %v1488, 1e-06
      %vm1493 = vcmp.gt.f32.partialorder %v1489, 1e-06
      %vm1494 = vcmp.gt.f32.partialorder %v1490, 1e-06
      %vm1495 = vcmp.gt.f32.partialorder %v1491, 1e-06
      %v1496 = vsel %vm1492, %v1488, 1.0
      %v1497 = vsel %vm1493, %v1489, 1.0
      %v1498 = vsel %vm1494, %v1490, 1.0
      %v1499 = vsel %vm1495, %v1491, 1.0
      %v1500 = vrcp.pop %v1496
      %v1501 = vrcp.pop %v1497
      %v1502 = vrcp.pop %v1498
      %v1503 = vrcp.pop %v1499
      %v1504 = vmul.f32 %v1448, 8.0
      %v1505 = vmul.f32 %v1449, 8.0
      %v1506 = vmul.f32 %v1450, 8.0
      %v1507 = vmul.f32 %v1451, 8.0
      %v1508 = vmul.f32 %v1504, %v1500
      %v1509 = vmul.f32 %v1505, %v1501
      %v1510 = vmul.f32 %v1506, %v1502
      %v1511 = vmul.f32 %v1507, %v1503
      %v1512 = vadd.f32 %v1508, 8.0
      %v1513 = vadd.f32 %v1509, 8.0
      %v1514 = vadd.f32 %v1510, 8.0
      %v1515 = vadd.f32 %v1511, 8.0
      %v1516 = vadd.f32 %v1512, 0.5
      %v1517 = vadd.f32 %v1513, 0.5
      %v1518 = vadd.f32 %v1514, 0.5
      %v1519 = vadd.f32 %v1515, 0.5
      %v1520 = vfloor.f32 %v1516
      %v1521 = vfloor.f32 %v1517
      %v1522 = vfloor.f32 %v1518
      %v1523 = vfloor.f32 %v1519
      %v1524 = vcvt.f32.s32.to.zero.pseudo %v1520
      %v1525 = vcvt.f32.s32.to.zero.pseudo %v1521
      %v1526 = vcvt.f32.s32.to.zero.pseudo %v1522
      %v1527 = vcvt.f32.s32.to.zero.pseudo %v1523
      %v1528 = vmul.f32 %v1468, 8.0
      %v1529 = vmul.f32 %v1469, 8.0
      %v1530 = vmul.f32 %v1470, 8.0
      %v1531 = vmul.f32 %v1471, 8.0
      %v1532 = vmul.f32 %v1528, %v1500
      %v1533 = vmul.f32 %v1529, %v1501
      %v1534 = vmul.f32 %v1530, %v1502
      %v1535 = vmul.f32 %v1531, %v1503
      %v1536 = vadd.f32 %v1532, 8.0
      %v1537 = vadd.f32 %v1533, 8.0
      %v1538 = vadd.f32 %v1534, 8.0
      %v1539 = vadd.f32 %v1535, 8.0
      %v1540 = vadd.f32 %v1536, 0.5
      %v1541 = vadd.f32 %v1537, 0.5
      %v1542 = vadd.f32 %v1538, 0.5
      %v1543 = vadd.f32 %v1539, 0.5
      %v1544 = vfloor.f32 %v1540
      %v1545 = vfloor.f32 %v1541
      %v1546 = vfloor.f32 %v1542
      %v1547 = vfloor.f32 %v1543
      %v1548 = vcvt.f32.s32.to.zero.pseudo %v1544
      %v1549 = vcvt.f32.s32.to.zero.pseudo %v1545
      %v1550 = vcvt.f32.s32.to.zero.pseudo %v1546
      %v1551 = vcvt.f32.s32.to.zero.pseudo %v1547
      %vm1552 = vcmp.ge.s32.totalorder %v1524, 0
      %vm1553 = vcmp.ge.s32.totalorder %v1525, 0
      %vm1554 = vcmp.ge.s32.totalorder %v1526, 0
      %vm1555 = vcmp.ge.s32.totalorder %v1527, 0
      %vm1556 = vmand %vm1492, %vm1552
      %vm1557 = vmand %vm1493, %vm1553
      %vm1558 = vmand %vm1494, %vm1554
      %vm1559 = vmand %vm1495, %vm1555
      %vm1560 = vcmp.lt.s32.totalorder %v1524, 16
      %vm1561 = vcmp.lt.s32.totalorder %v1525, 16
      %vm1562 = vcmp.lt.s32.totalorder %v1526, 16
      %vm1563 = vcmp.lt.s32.totalorder %v1527, 16
      %vm1564 = vmand %vm1556, %vm1560
      %vm1565 = vmand %vm1557, %vm1561
      %vm1566 = vmand %vm1558, %vm1562
      %vm1567 = vmand %vm1559, %vm1563
      %vm1568 = vcmp.ge.s32.totalorder %v1548, 0
      %vm1569 = vcmp.ge.s32.totalorder %v1549, 0
      %vm1570 = vcmp.ge.s32.totalorder %v1550, 0
      %vm1571 = vcmp.ge.s32.totalorder %v1551, 0
      %vm1572 = vmand %vm1564, %vm1568
      %vm1573 = vmand %vm1565, %vm1569
      %vm1574 = vmand %vm1566, %vm1570
      %vm1575 = vmand %vm1567, %vm1571
      %vm1576 = vcmp.lt.s32.totalorder %v1548, 16
      %vm1577 = vcmp.lt.s32.totalorder %v1549, 16
      %vm1578 = vcmp.lt.s32.totalorder %v1550, 16
      %vm1579 = vcmp.lt.s32.totalorder %v1551, 16
      %vm1580 = vmand %vm1572, %vm1576
      %vm1581 = vmand %vm1573, %vm1577
      %vm1582 = vmand %vm1574, %vm1578
      %vm1583 = vmand %vm1575, %vm1579
      %v1584 = vmul.u32 %v1548, 16
      %v1585 = vmul.u32 %v1549, 16
      %v1586 = vmul.u32 %v1550, 16
      %v1587 = vmul.u32 %v1551, 16
      %v1588 = vadd.s32 %v1584, %v1524
      %v1589 = vadd.s32 %v1585, %v1525
      %v1590 = vadd.s32 %v1586, %v1526
      %v1591 = vadd.s32 %v1587, %v1527
      %v1592 = vsel %vm1580, %v1588, 4294967295
      %v1593 = vsel %vm1581, %v1589, 4294967295
      %v1594 = vsel %vm1582, %v1590, 4294967295
      %v1595 = vsel %vm1583, %v1591, 4294967295
      %v1596 = vsub.s32 %v1592, %v390
      %v1597 = vsub.s32 %v1593, %v390
      %v1598 = vsub.s32 %v1594, %v390
      %v1599 = vsub.s32 %v1595, %v390
      %1600 = vset.pattern.permute.xlu0 3
      %1601 = vperm.xlu0 %1600, %v1596
      %v1602 = vpop.permute.xlu0 %1601
      %1603 = vset.pattern.permute.xlu0 3
      %1604 = vperm.xlu0 %1603, %v1597
      %v1605 = vpop.permute.xlu0 %1604
      %1606 = vset.pattern.permute.xlu0 3
      %1607 = vperm.xlu0 %1606, %v1598
      %v1608 = vpop.permute.xlu0 %1607
      %1609 = vset.pattern.permute.xlu0 3
      %1610 = vperm.xlu0 %1609, %v1599
      %v1611 = vpop.permute.xlu0 %1610
      %vm1612 = vcmp.eq.s32.totalorder %v1602, %v215
      %vm1613 = vcmp.eq.s32.totalorder %v1602, %v216
      %vm1614 = vcmp.eq.s32.totalorder %v1605, %v215
      %vm1615 = vcmp.eq.s32.totalorder %v1605, %v216
      %vm1616 = vcmp.eq.s32.totalorder %v1608, %v215
      %vm1617 = vcmp.eq.s32.totalorder %v1608, %v216
      %vm1618 = vcmp.eq.s32.totalorder %v1611, %v215
      %vm1619 = vcmp.eq.s32.totalorder %v1611, %v216
      %1621 = vset.pattern.permute.xlu0 3
      %1622 = vperm.xlu0 %1621, %v1488
      %v1623 = vpop.permute.xlu0 %1622
      %1626 = vset.pattern.permute.xlu0 3
      %1627 = vperm.xlu0 %1626, %v1489
      %v1628 = vpop.permute.xlu0 %1627
      %1631 = vset.pattern.permute.xlu0 3
      %1632 = vperm.xlu0 %1631, %v1490
      %v1633 = vpop.permute.xlu0 %1632
      %1636 = vset.pattern.permute.xlu0 3
      %1637 = vperm.xlu0 %1636, %v1491
      %v1638 = vpop.permute.xlu0 %1637
      %v1640 = vsel %vm1612, %v1623, 1e+30
      %v1641 = vsel %vm1613, %v1623, 1e+30
      %v1642 = vsel %vm1614, %v1628, 1e+30
      %v1643 = vsel %vm1615, %v1628, 1e+30
      %v1644 = vsel %vm1616, %v1633, 1e+30
      %v1645 = vsel %vm1617, %v1633, 1e+30
      %v1646 = vsel %vm1618, %v1638, 1e+30
      %v1647 = vsel %vm1619, %v1638, 1e+30
      %v1648 = vmin.f32 %v1640, %v1644
      %v1649 = vmin.f32 %v1642, %v1646
      %v1650 = vmin.f32 %v1648, %v1649
      %v1651 = vrot.slane %v1650, 4
      %v1652 = vmin.f32 %v1650, %v1651
      %v1653 = vrot.slane %v1652, 2
      %v1654 = vmin.f32 %v1652, %v1653
      %v1655 = vrot.slane %v1654, 1
      %v1656 = vmin.f32 %v1654, %v1655
      %v1657 = vmin.f32 %v1641, %v1645
      %v1658 = vmin.f32 %v1643, %v1647
      %v1659 = vmin.f32 %v1657, %v1658
      %v1660 = vrot.slane %v1659, 4
      %v1661 = vmin.f32 %v1659, %v1660
      %v1662 = vrot.slane %v1661, 2
      %v1663 = vmin.f32 %v1661, %v1662
      %v1664 = vrot.slane %v1663, 1
      %v1665 = vmin.f32 %v1663, %v1664
      %v1666 = vmin.f32 %v1425, %v1656
      %v1667 = vmin.f32 %v1426, %v1665
      %s1668 = scalar_lea.vmem %s194, 192
      %v1669 = vld [vmem:[%s1668] sm:$0xff]
      %v1670 = vld [vmem:[%s1668 + $0x8] sm:$0xff]
      %v1671 = vld [vmem:[%s1668 + $0x10] sm:$0xff]
      %v1672 = vld [vmem:[%s1668 + $0x18] sm:$0xff]
      %v1673 = vmul.f32 %v1669, %v221
      %v1674 = vmul.f32 %v1670, %v221
      %v1675 = vmul.f32 %v1671, %v221
      %v1676 = vmul.f32 %v1672, %v221
      %v1677 = vsel %vm226, %v1673, 0.0
      %1678 = vadd.xlane.f32.xlu0 %v1677
      %v1679 = vpop.xlane.xlu0 %1678
      %v1680 = vsel %vm226, %v1674, 0.0
      %1681 = vadd.xlane.f32.xlu0 %v1680
      %v1682 = vpop.xlane.xlu0 %1681
      %v1683 = vsel %vm226, %v1675, 0.0
      %1684 = vadd.xlane.f32.xlu0 %v1683
      %v1685 = vpop.xlane.xlu0 %1684
      %v1686 = vsel %vm226, %v1676, 0.0
      %1687 = vadd.xlane.f32.xlu0 %v1686
      %v1688 = vpop.xlane.xlu0 %1687
      %v1689 = vadd.f32 %v1679, %v221
      %v1690 = vadd.f32 %v1682, %v221
      %v1691 = vadd.f32 %v1685, %v221
      %v1692 = vadd.f32 %v1688, %v221
      %v1693 = vmul.f32 %v1669, %v243
      %v1694 = vmul.f32 %v1670, %v243
      %v1695 = vmul.f32 %v1671, %v243
      %v1696 = vmul.f32 %v1672, %v243
      %v1697 = vsel %vm226, %v1693, 0.0
      %1698 = vadd.xlane.f32.xlu0 %v1697
      %v1699 = vpop.xlane.xlu0 %1698
      %v1700 = vsel %vm226, %v1694, 0.0
      %1701 = vadd.xlane.f32.xlu0 %v1700
      %v1702 = vpop.xlane.xlu0 %1701
      %v1703 = vsel %vm226, %v1695, 0.0
      %1704 = vadd.xlane.f32.xlu0 %v1703
      %v1705 = vpop.xlane.xlu0 %1704
      %v1706 = vsel %vm226, %v1696, 0.0
      %1707 = vadd.xlane.f32.xlu0 %v1706
      %v1708 = vpop.xlane.xlu0 %1707
      %v1709 = vadd.f32 %v1699, %v243
      %v1710 = vadd.f32 %v1702, %v243
      %v1711 = vadd.f32 %v1705, %v243
      %v1712 = vadd.f32 %v1708, %v243
      %v1713 = vmul.f32 %v1669, %v264
      %v1714 = vmul.f32 %v1670, %v264
      %v1715 = vmul.f32 %v1671, %v264
      %v1716 = vmul.f32 %v1672, %v264
      %v1717 = vsel %vm226, %v1713, 0.0
      %1718 = vadd.xlane.f32.xlu0 %v1717
      %v1719 = vpop.xlane.xlu0 %1718
      %v1720 = vsel %vm226, %v1714, 0.0
      %1721 = vadd.xlane.f32.xlu0 %v1720
      %v1722 = vpop.xlane.xlu0 %1721
      %v1723 = vsel %vm226, %v1715, 0.0
      %1724 = vadd.xlane.f32.xlu0 %v1723
      %v1725 = vpop.xlane.xlu0 %1724
      %v1726 = vsel %vm226, %v1716, 0.0
      %1727 = vadd.xlane.f32.xlu0 %v1726
      %v1728 = vpop.xlane.xlu0 %1727
      %v1729 = vadd.f32 %v1719, %v264
      %v1730 = vadd.f32 %v1722, %v264
      %v1731 = vadd.f32 %v1725, %v264
      %v1732 = vadd.f32 %v1728, %v264
      %vm1733 = vcmp.gt.f32.partialorder %v1729, 1e-06
      %vm1734 = vcmp.gt.f32.partialorder %v1730, 1e-06
      %vm1735 = vcmp.gt.f32.partialorder %v1731, 1e-06
      %vm1736 = vcmp.gt.f32.partialorder %v1732, 1e-06
      %v1737 = vsel %vm1733, %v1729, 1.0
      %v1738 = vsel %vm1734, %v1730, 1.0
      %v1739 = vsel %vm1735, %v1731, 1.0
      %v1740 = vsel %vm1736, %v1732, 1.0
      %v1741 = vrcp.pop %v1737
      %v1742 = vrcp.pop %v1738
      %v1743 = vrcp.pop %v1739
      %v1744 = vrcp.pop %v1740
      %v1745 = vmul.f32 %v1689, 8.0
      %v1746 = vmul.f32 %v1690, 8.0
      %v1747 = vmul.f32 %v1691, 8.0
      %v1748 = vmul.f32 %v1692, 8.0
      %v1749 = vmul.f32 %v1745, %v1741
      %v1750 = vmul.f32 %v1746, %v1742
      %v1751 = vmul.f32 %v1747, %v1743
      %v1752 = vmul.f32 %v1748, %v1744
      %v1753 = vadd.f32 %v1749, 8.0
      %v1754 = vadd.f32 %v1750, 8.0
      %v1755 = vadd.f32 %v1751, 8.0
      %v1756 = vadd.f32 %v1752, 8.0
      %v1757 = vadd.f32 %v1753, 0.5
      %v1758 = vadd.f32 %v1754, 0.5
      %v1759 = vadd.f32 %v1755, 0.5
      %v1760 = vadd.f32 %v1756, 0.5
      %v1761 = vfloor.f32 %v1757
      %v1762 = vfloor.f32 %v1758
      %v1763 = vfloor.f32 %v1759
      %v1764 = vfloor.f32 %v1760
      %v1765 = vcvt.f32.s32.to.zero.pseudo %v1761
      %v1766 = vcvt.f32.s32.to.zero.pseudo %v1762
      %v1767 = vcvt.f32.s32.to.zero.pseudo %v1763
      %v1768 = vcvt.f32.s32.to.zero.pseudo %v1764
      %v1769 = vmul.f32 %v1709, 8.0
      %v1770 = vmul.f32 %v1710, 8.0
      %v1771 = vmul.f32 %v1711, 8.0
      %v1772 = vmul.f32 %v1712, 8.0
      %v1773 = vmul.f32 %v1769, %v1741
      %v1774 = vmul.f32 %v1770, %v1742
      %v1775 = vmul.f32 %v1771, %v1743
      %v1776 = vmul.f32 %v1772, %v1744
      %v1777 = vadd.f32 %v1773, 8.0
      %v1778 = vadd.f32 %v1774, 8.0
      %v1779 = vadd.f32 %v1775, 8.0
      %v1780 = vadd.f32 %v1776, 8.0
      %v1781 = vadd.f32 %v1777, 0.5
      %v1782 = vadd.f32 %v1778, 0.5
      %v1783 = vadd.f32 %v1779, 0.5
      %v1784 = vadd.f32 %v1780, 0.5
      %v1785 = vfloor.f32 %v1781
      %v1786 = vfloor.f32 %v1782
      %v1787 = vfloor.f32 %v1783
      %v1788 = vfloor.f32 %v1784
      %v1789 = vcvt.f32.s32.to.zero.pseudo %v1785
      %v1790 = vcvt.f32.s32.to.zero.pseudo %v1786
      %v1791 = vcvt.f32.s32.to.zero.pseudo %v1787
      %v1792 = vcvt.f32.s32.to.zero.pseudo %v1788
      %vm1793 = vcmp.ge.s32.totalorder %v1765, 0
      %vm1794 = vcmp.ge.s32.totalorder %v1766, 0
      %vm1795 = vcmp.ge.s32.totalorder %v1767, 0
      %vm1796 = vcmp.ge.s32.totalorder %v1768, 0
      %vm1797 = vmand %vm1733, %vm1793
      %vm1798 = vmand %vm1734, %vm1794
      %vm1799 = vmand %vm1735, %vm1795
      %vm1800 = vmand %vm1736, %vm1796
      %vm1801 = vcmp.lt.s32.totalorder %v1765, 16
      %vm1802 = vcmp.lt.s32.totalorder %v1766, 16
      %vm1803 = vcmp.lt.s32.totalorder %v1767, 16
      %vm1804 = vcmp.lt.s32.totalorder %v1768, 16
      %vm1805 = vmand %vm1797, %vm1801
      %vm1806 = vmand %vm1798, %vm1802
      %vm1807 = vmand %vm1799, %vm1803
      %vm1808 = vmand %vm1800, %vm1804
      %vm1809 = vcmp.ge.s32.totalorder %v1789, 0
      %vm1810 = vcmp.ge.s32.totalorder %v1790, 0
      %vm1811 = vcmp.ge.s32.totalorder %v1791, 0
      %vm1812 = vcmp.ge.s32.totalorder %v1792, 0
      %vm1813 = vmand %vm1805, %vm1809
      %vm1814 = vmand %vm1806, %vm1810
      %vm1815 = vmand %vm1807, %vm1811
      %vm1816 = vmand %vm1808, %vm1812
      %vm1817 = vcmp.lt.s32.totalorder %v1789, 16
      %vm1818 = vcmp.lt.s32.totalorder %v1790, 16
      %vm1819 = vcmp.lt.s32.totalorder %v1791, 16
      %vm1820 = vcmp.lt.s32.totalorder %v1792, 16
      %vm1821 = vmand %vm1813, %vm1817
      %vm1822 = vmand %vm1814, %vm1818
      %vm1823 = vmand %vm1815, %vm1819
      %vm1824 = vmand %vm1816, %vm1820
      %v1825 = vmul.u32 %v1789, 16
      %v1826 = vmul.u32 %v1790, 16
      %v1827 = vmul.u32 %v1791, 16
      %v1828 = vmul.u32 %v1792, 16
      %v1829 = vadd.s32 %v1825, %v1765
      %v1830 = vadd.s32 %v1826, %v1766
      %v1831 = vadd.s32 %v1827, %v1767
      %v1832 = vadd.s32 %v1828, %v1768
      %v1833 = vsel %vm1821, %v1829, 4294967295
      %v1834 = vsel %vm1822, %v1830, 4294967295
      %v1835 = vsel %vm1823, %v1831, 4294967295
      %v1836 = vsel %vm1824, %v1832, 4294967295
      %v1837 = vsub.s32 %v1833, %v390
      %v1838 = vsub.s32 %v1834, %v390
      %v1839 = vsub.s32 %v1835, %v390
      %v1840 = vsub.s32 %v1836, %v390
      %1841 = vset.pattern.permute.xlu0 3
      %1842 = vperm.xlu0 %1841, %v1837
      %v1843 = vpop.permute.xlu0 %1842
      %1844 = vset.pattern.permute.xlu0 3
      %1845 = vperm.xlu0 %1844, %v1838
      %v1846 = vpop.permute.xlu0 %1845
      %1847 = vset.pattern.permute.xlu0 3
      %1848 = vperm.xlu0 %1847, %v1839
      %v1849 = vpop.permute.xlu0 %1848
      %1850 = vset.pattern.permute.xlu0 3
      %1851 = vperm.xlu0 %1850, %v1840
      %v1852 = vpop.permute.xlu0 %1851
      %vm1853 = vcmp.eq.s32.totalorder %v1843, %v215
      %vm1854 = vcmp.eq.s32.totalorder %v1843, %v216
      %vm1855 = vcmp.eq.s32.totalorder %v1846, %v215
      %vm1856 = vcmp.eq.s32.totalorder %v1846, %v216
      %vm1857 = vcmp.eq.s32.totalorder %v1849, %v215
      %vm1858 = vcmp.eq.s32.totalorder %v1849, %v216
      %vm1859 = vcmp.eq.s32.totalorder %v1852, %v215
      %vm1860 = vcmp.eq.s32.totalorder %v1852, %v216
      %1862 = vset.pattern.permute.xlu0 3
      %1863 = vperm.xlu0 %1862, %v1729
      %v1864 = vpop.permute.xlu0 %1863
      %1867 = vset.pattern.permute.xlu0 3
      %1868 = vperm.xlu0 %1867, %v1730
      %v1869 = vpop.permute.xlu0 %1868
      %1872 = vset.pattern.permute.xlu0 3
      %1873 = vperm.xlu0 %1872, %v1731
      %v1874 = vpop.permute.xlu0 %1873
      %1877 = vset.pattern.permute.xlu0 3
      %1878 = vperm.xlu0 %1877, %v1732
      %v1879 = vpop.permute.xlu0 %1878
      %v1881 = vsel %vm1853, %v1864, 1e+30
      %v1882 = vsel %vm1854, %v1864, 1e+30
      %v1883 = vsel %vm1855, %v1869, 1e+30
      %v1884 = vsel %vm1856, %v1869, 1e+30
      %v1885 = vsel %vm1857, %v1874, 1e+30
      %v1886 = vsel %vm1858, %v1874, 1e+30
      %v1887 = vsel %vm1859, %v1879, 1e+30
      %v1888 = vsel %vm1860, %v1879, 1e+30
      %v1889 = vmin.f32 %v1881, %v1885
      %v1890 = vmin.f32 %v1883, %v1887
      %v1891 = vmin.f32 %v1889, %v1890
      %v1892 = vrot.slane %v1891, 4
      %v1893 = vmin.f32 %v1891, %v1892
      %v1894 = vrot.slane %v1893, 2
      %v1895 = vmin.f32 %v1893, %v1894
      %v1896 = vrot.slane %v1895, 1
      %v1897 = vmin.f32 %v1895, %v1896
      %v1898 = vmin.f32 %v1882, %v1886
      %v1899 = vmin.f32 %v1884, %v1888
      %v1900 = vmin.f32 %v1898, %v1899
      %v1901 = vrot.slane %v1900, 4
      %v1902 = vmin.f32 %v1900, %v1901
      %v1903 = vrot.slane %v1902, 2
      %v1904 = vmin.f32 %v1902, %v1903
      %v1905 = vrot.slane %v1904, 1
      %v1906 = vmin.f32 %v1904, %v1905
      %v1907 = vmin.f32 %v1666, %v1897
      %v1908 = vmin.f32 %v1667, %v1906
      %s1909 = scalar_lea.vmem %s194, 224
      %v1910 = vld [vmem:[%s1909] sm:$0xff]
      %v1911 = vld [vmem:[%s1909 + $0x8] sm:$0xff]
      %v1912 = vld [vmem:[%s1909 + $0x10] sm:$0xff]
      %v1913 = vld [vmem:[%s1909 + $0x18] sm:$0xff]
      %v1914 = vmul.f32 %v1910, %v221
      %v1915 = vmul.f32 %v1911, %v221
      %v1916 = vmul.f32 %v1912, %v221
      %v1917 = vmul.f32 %v1913, %v221
      %v1918 = vsel %vm226, %v1914, 0.0
      %1919 = vadd.xlane.f32.xlu0 %v1918
      %v1920 = vpop.xlane.xlu0 %1919
      %v1921 = vsel %vm226, %v1915, 0.0
      %1922 = vadd.xlane.f32.xlu0 %v1921
      %v1923 = vpop.xlane.xlu0 %1922
      %v1924 = vsel %vm226, %v1916, 0.0
      %1925 = vadd.xlane.f32.xlu0 %v1924
      %v1926 = vpop.xlane.xlu0 %1925
      %v1927 = vsel %vm226, %v1917, 0.0
      %1928 = vadd.xlane.f32.xlu0 %v1927
      %v1929 = vpop.xlane.xlu0 %1928
      %v1930 = vadd.f32 %v1920, %v221
      %v1931 = vadd.f32 %v1923, %v221
      %v1932 = vadd.f32 %v1926, %v221
      %v1933 = vadd.f32 %v1929, %v221
      %v1934 = vmul.f32 %v1910, %v243
      %v1935 = vmul.f32 %v1911, %v243
      %v1936 = vmul.f32 %v1912, %v243
      %v1937 = vmul.f32 %v1913, %v243
      %v1938 = vsel %vm226, %v1934, 0.0
      %1939 = vadd.xlane.f32.xlu0 %v1938
      %v1940 = vpop.xlane.xlu0 %1939
      %v1941 = vsel %vm226, %v1935, 0.0
      %1942 = vadd.xlane.f32.xlu0 %v1941
      %v1943 = vpop.xlane.xlu0 %1942
      %v1944 = vsel %vm226, %v1936, 0.0
      %1945 = vadd.xlane.f32.xlu0 %v1944
      %v1946 = vpop.xlane.xlu0 %1945
      %v1947 = vsel %vm226, %v1937, 0.0
      %1948 = vadd.xlane.f32.xlu0 %v1947
      %v1949 = vpop.xlane.xlu0 %1948
      %v1950 = vadd.f32 %v1940, %v243
      %v1951 = vadd.f32 %v1943, %v243
      %v1952 = vadd.f32 %v1946, %v243
      %v1953 = vadd.f32 %v1949, %v243
      %v1954 = vmul.f32 %v1910, %v264
      %v1955 = vmul.f32 %v1911, %v264
      %v1956 = vmul.f32 %v1912, %v264
      %v1957 = vmul.f32 %v1913, %v264
      %v1958 = vsel %vm226, %v1954, 0.0
      %1959 = vadd.xlane.f32.xlu0 %v1958
      %v1960 = vpop.xlane.xlu0 %1959
      %v1961 = vsel %vm226, %v1955, 0.0
      %1962 = vadd.xlane.f32.xlu0 %v1961
      %v1963 = vpop.xlane.xlu0 %1962
      %v1964 = vsel %vm226, %v1956, 0.0
      %1965 = vadd.xlane.f32.xlu0 %v1964
      %v1966 = vpop.xlane.xlu0 %1965
      %v1967 = vsel %vm226, %v1957, 0.0
      %1968 = vadd.xlane.f32.xlu0 %v1967
      %v1969 = vpop.xlane.xlu0 %1968
      %v1970 = vadd.f32 %v1960, %v264
      %v1971 = vadd.f32 %v1963, %v264
      %v1972 = vadd.f32 %v1966, %v264
      %v1973 = vadd.f32 %v1969, %v264
      %vm1974 = vcmp.gt.f32.partialorder %v1970, 1e-06
      %vm1975 = vcmp.gt.f32.partialorder %v1971, 1e-06
      %vm1976 = vcmp.gt.f32.partialorder %v1972, 1e-06
      %vm1977 = vcmp.gt.f32.partialorder %v1973, 1e-06
      %v1978 = vsel %vm1974, %v1970, 1.0
      %v1979 = vsel %vm1975, %v1971, 1.0
      %v1980 = vsel %vm1976, %v1972, 1.0
      %v1981 = vsel %vm1977, %v1973, 1.0
      %v1982 = vrcp.pop %v1978
      %v1983 = vrcp.pop %v1979
      %v1984 = vrcp.pop %v1980
      %v1985 = vrcp.pop %v1981
      %v1986 = vmul.f32 %v1930, 8.0
      %v1987 = vmul.f32 %v1931, 8.0
      %v1988 = vmul.f32 %v1932, 8.0
      %v1989 = vmul.f32 %v1933, 8.0
      %v1990 = vmul.f32 %v1986, %v1982
      %v1991 = vmul.f32 %v1987, %v1983
      %v1992 = vmul.f32 %v1988, %v1984
      %v1993 = vmul.f32 %v1989, %v1985
      %v1994 = vadd.f32 %v1990, 8.0
      %v1995 = vadd.f32 %v1991, 8.0
      %v1996 = vadd.f32 %v1992, 8.0
      %v1997 = vadd.f32 %v1993, 8.0
      %v1998 = vadd.f32 %v1994, 0.5
      %v1999 = vadd.f32 %v1995, 0.5
      %v2000 = vadd.f32 %v1996, 0.5
      %v2001 = vadd.f32 %v1997, 0.5
      %v2002 = vfloor.f32 %v1998
      %v2003 = vfloor.f32 %v1999
      %v2004 = vfloor.f32 %v2000
      %v2005 = vfloor.f32 %v2001
      %v2006 = vcvt.f32.s32.to.zero.pseudo %v2002
      %v2007 = vcvt.f32.s32.to.zero.pseudo %v2003
      %v2008 = vcvt.f32.s32.to.zero.pseudo %v2004
      %v2009 = vcvt.f32.s32.to.zero.pseudo %v2005
      %v2010 = vmul.f32 %v1950, 8.0
      %v2011 = vmul.f32 %v1951, 8.0
      %v2012 = vmul.f32 %v1952, 8.0
      %v2013 = vmul.f32 %v1953, 8.0
      %v2014 = vmul.f32 %v2010, %v1982
      %v2015 = vmul.f32 %v2011, %v1983
      %v2016 = vmul.f32 %v2012, %v1984
      %v2017 = vmul.f32 %v2013, %v1985
      %v2018 = vadd.f32 %v2014, 8.0
      %v2019 = vadd.f32 %v2015, 8.0
      %v2020 = vadd.f32 %v2016, 8.0
      %v2021 = vadd.f32 %v2017, 8.0
      %v2022 = vadd.f32 %v2018, 0.5
      %v2023 = vadd.f32 %v2019, 0.5
      %v2024 = vadd.f32 %v2020, 0.5
      %v2025 = vadd.f32 %v2021, 0.5
      %v2026 = vfloor.f32 %v2022
      %v2027 = vfloor.f32 %v2023
      %v2028 = vfloor.f32 %v2024
      %v2029 = vfloor.f32 %v2025
      %v2030 = vcvt.f32.s32.to.zero.pseudo %v2026
      %v2031 = vcvt.f32.s32.to.zero.pseudo %v2027
      %v2032 = vcvt.f32.s32.to.zero.pseudo %v2028
      %v2033 = vcvt.f32.s32.to.zero.pseudo %v2029
      %vm2034 = vcmp.ge.s32.totalorder %v2006, 0
      %vm2035 = vcmp.ge.s32.totalorder %v2007, 0
      %vm2036 = vcmp.ge.s32.totalorder %v2008, 0
      %vm2037 = vcmp.ge.s32.totalorder %v2009, 0
      %vm2038 = vmand %vm1974, %vm2034
      %vm2039 = vmand %vm1975, %vm2035
      %vm2040 = vmand %vm1976, %vm2036
      %vm2041 = vmand %vm1977, %vm2037
      %vm2042 = vcmp.lt.s32.totalorder %v2006, 16
      %vm2043 = vcmp.lt.s32.totalorder %v2007, 16
      %vm2044 = vcmp.lt.s32.totalorder %v2008, 16
      %vm2045 = vcmp.lt.s32.totalorder %v2009, 16
      %vm2046 = vmand %vm2038, %vm2042
      %vm2047 = vmand %vm2039, %vm2043
      %vm2048 = vmand %vm2040, %vm2044
      %vm2049 = vmand %vm2041, %vm2045
      %vm2050 = vcmp.ge.s32.totalorder %v2030, 0
      %vm2051 = vcmp.ge.s32.totalorder %v2031, 0
      %vm2052 = vcmp.ge.s32.totalorder %v2032, 0
      %vm2053 = vcmp.ge.s32.totalorder %v2033, 0
      %vm2054 = vmand %vm2046, %vm2050
      %vm2055 = vmand %vm2047, %vm2051
      %vm2056 = vmand %vm2048, %vm2052
      %vm2057 = vmand %vm2049, %vm2053
      %vm2058 = vcmp.lt.s32.totalorder %v2030, 16
      %vm2059 = vcmp.lt.s32.totalorder %v2031, 16
      %vm2060 = vcmp.lt.s32.totalorder %v2032, 16
      %vm2061 = vcmp.lt.s32.totalorder %v2033, 16
      %vm2062 = vmand %vm2054, %vm2058
      %vm2063 = vmand %vm2055, %vm2059
      %vm2064 = vmand %vm2056, %vm2060
      %vm2065 = vmand %vm2057, %vm2061
      %v2066 = vmul.u32 %v2030, 16
      %v2067 = vmul.u32 %v2031, 16
      %v2068 = vmul.u32 %v2032, 16
      %v2069 = vmul.u32 %v2033, 16
      %v2070 = vadd.s32 %v2066, %v2006
      %v2071 = vadd.s32 %v2067, %v2007
      %v2072 = vadd.s32 %v2068, %v2008
      %v2073 = vadd.s32 %v2069, %v2009
      %v2074 = vsel %vm2062, %v2070, 4294967295
      %v2075 = vsel %vm2063, %v2071, 4294967295
      %v2076 = vsel %vm2064, %v2072, 4294967295
      %v2077 = vsel %vm2065, %v2073, 4294967295
      %v2078 = vsub.s32 %v2074, %v390
      %v2079 = vsub.s32 %v2075, %v390
      %v2080 = vsub.s32 %v2076, %v390
      %v2081 = vsub.s32 %v2077, %v390
      %2082 = vset.pattern.permute.xlu0 3
      %2083 = vperm.xlu0 %2082, %v2078
      %v2084 = vpop.permute.xlu0 %2083
      %2085 = vset.pattern.permute.xlu0 3
      %2086 = vperm.xlu0 %2085, %v2079
      %v2087 = vpop.permute.xlu0 %2086
      %2088 = vset.pattern.permute.xlu0 3
      %2089 = vperm.xlu0 %2088, %v2080
      %v2090 = vpop.permute.xlu0 %2089
      %2091 = vset.pattern.permute.xlu0 3
      %2092 = vperm.xlu0 %2091, %v2081
      %v2093 = vpop.permute.xlu0 %2092
      %vm2094 = vcmp.eq.s32.totalorder %v2084, %v215
      %vm2095 = vcmp.eq.s32.totalorder %v2084, %v216
      %vm2096 = vcmp.eq.s32.totalorder %v2087, %v215
      %vm2097 = vcmp.eq.s32.totalorder %v2087, %v216
      %vm2098 = vcmp.eq.s32.totalorder %v2090, %v215
      %vm2099 = vcmp.eq.s32.totalorder %v2090, %v216
      %vm2100 = vcmp.eq.s32.totalorder %v2093, %v215
      %vm2101 = vcmp.eq.s32.totalorder %v2093, %v216
      %2103 = vset.pattern.permute.xlu0 3
      %2104 = vperm.xlu0 %2103, %v1970
      %v2105 = vpop.permute.xlu0 %2104
      %2108 = vset.pattern.permute.xlu0 3
      %2109 = vperm.xlu0 %2108, %v1971
      %v2110 = vpop.permute.xlu0 %2109
      %2113 = vset.pattern.permute.xlu0 3
      %2114 = vperm.xlu0 %2113, %v1972
      %v2115 = vpop.permute.xlu0 %2114
      %2118 = vset.pattern.permute.xlu0 3
      %2119 = vperm.xlu0 %2118, %v1973
      %v2120 = vpop.permute.xlu0 %2119
      %v2122 = vsel %vm2094, %v2105, 1e+30
      %v2123 = vsel %vm2095, %v2105, 1e+30
      %v2124 = vsel %vm2096, %v2110, 1e+30
      %v2125 = vsel %vm2097, %v2110, 1e+30
      %v2126 = vsel %vm2098, %v2115, 1e+30
      %v2127 = vsel %vm2099, %v2115, 1e+30
      %v2128 = vsel %vm2100, %v2120, 1e+30
      %v2129 = vsel %vm2101, %v2120, 1e+30
      %v2130 = vmin.f32 %v2122, %v2126
      %v2131 = vmin.f32 %v2124, %v2128
      %v2132 = vmin.f32 %v2130, %v2131
      %v2133 = vrot.slane %v2132, 4
      %v2134 = vmin.f32 %v2132, %v2133
      %v2135 = vrot.slane %v2134, 2
      %v2136 = vmin.f32 %v2134, %v2135
      %v2137 = vrot.slane %v2136, 1
      %v2138 = vmin.f32 %v2136, %v2137
      %v2139 = vmin.f32 %v2123, %v2127
      %v2140 = vmin.f32 %v2125, %v2129
      %v2141 = vmin.f32 %v2139, %v2140
      %v2142 = vrot.slane %v2141, 4
      %v2143 = vmin.f32 %v2141, %v2142
      %v2144 = vrot.slane %v2143, 2
      %v2145 = vmin.f32 %v2143, %v2144
      %v2146 = vrot.slane %v2145, 1
      %v2147 = vmin.f32 %v2145, %v2146
      %v2148 = vmin.f32 %v1907, %v2138
      %v2149 = vmin.f32 %v1908, %v2147
      %v2150 = vld [vmem:[%s203] sm:$0x3]
      %v2153 = vrot.slane %v2149, 7
      %vm2154 = vcmask 1040384
      %v2155 = vsel %vm2154, %v2148, %v2153
      %v2157 = vmin.f32 %v2150, %v2155
      %v2158 = vlaneseq
      %vm2159 = vcmp.ge.s32.totalorder %v2158, 0
      %vm2160 = vcmp.lt.s32.totalorder %v2158, 256
      %vm2161 = vmand %vm2159, %vm2160
      %2162 = vst.msk [vmem:[%s203] sm:$0x3] %vm2161, %v2157
      // Predicated region
      $region33: #{_lambda_.4} parent=27 // pred_check
        %p2163 = pneg %p204
      $region34: #{_lambda_.4} parent=27 // pred_check_branch
        %2165 = sbr.rel (%p2163) target = $region36
      $region35: #{_lambda_.4} parent=27 // pred_region
        %v2166 = vld [vmem:[%s203] sm:$0x3]
        %vm2167 = vcmp.lt.f32.partialorder %v2166, 5e+29
        %v2168 = vsel %vm2167, %v2166, 0.0
        %2169 = vst.msk [vmem:[%s203] sm:$0x3] %vm2161, %v2168
      $region36: #{_lambda_.4} parent=27 // pred_fallthru
        _
      %p2170 = scmp.lt.s32.totalorder %s18, 1
      %s2171 = scalar_select %p2170, %s18, 1
      %p2172 = scmp.lt.s32.totalorder %s19, 0
      %s2173 = scalar_select %p2172, %s19, 0
      %s2174 = smul.addr %s2173, 2
      %s2175 = smul.addr %s2171, 2
      %s2176 = sadd.s32 %s2174, %s2175
      %s2177 = scalar_lea.vmem %s2, %s2176
      // Predicated region
      $region37: #{_lambda_.4} parent=27 // pred_check
        %p2178 = pneg %p106
      $region38: #{_lambda_.4} parent=27 // pred_check_branch
        %2180 = sbr.rel (%p2178) target = $region40
      $region39: #{_lambda_.4} parent=27 // pred_region
        _
      $region40: #{_lambda_.4} parent=27 // pred_fallthru
        _
    $region28: #{_lambda_.4} parent=5 // pred_fallthru
      _
    %p2181 = scmp.le.s32.totalorder 2, %s8
    // Predicated region
    $region41: #{_lambda_.4} parent=5 // pred_check
      %p2182 = pneg %p2181
    $region42: #{_lambda_.4} parent=5 // pred_check_branch
      %2184 = sbr.rel (%p2182) target = $region44
    $region43: #{_lambda_.4} parent=5 // pred_region
      %s2185 = ssub.s32 %s8, 2
      // Predicated region
      $region45: #{_lambda_.4} parent=43 // pred_check
        %p2186 = pneg %p112
      $region46: #{_lambda_.4} parent=43 // pred_check_branch
        %2188 = sbr.rel (%p2186) target = $region48
      $region47: #{_lambda_.4} parent=43 // pred_region
        %p2189 = scmp.lt.s32.totalorder %s21, 1
        %s2190 = scalar_select %p2189, %s21, 1
        %p2191 = scmp.lt.s32.totalorder %s22, 0
        %s2192 = scalar_select %p2191, %s22, 0
        %s2193 = smul.addr %s2192, 2
        %s2194 = smul.addr %s2190, 2
        %s2195 = sadd.s32 %s2193, %s2194
        %s2196 = scalar_lea.vmem %s2, %s2195
      $region48: #{_lambda_.4} parent=43 // pred_fallthru
        _
    $region44: #{_lambda_.4} parent=5 // pred_fallthru
      _
  $region6: #{_lambda_.4} parent=0 // loop_footer
    %s12 = sadd.s32 1, %s8
  $region7: #{_lambda_.4} parent=0 // loop_footer_branch
    %7 = sbr.rel target = $region3
  $region8: #{_lambda_.4} parent=0 // loop_exit
    _

// kernel: _lambda_.5
$region0: #{_lambda_.5}
  #allocation0 [shape = 'u32[]', space=smem, size = 0x4, offset = 0x4, fixed_abs, tag = 'smem constant byte address 0x4 - core index']
  #allocation1 [shape = 'u32[72,128]{1,0:T(1,128)}', space=vmem, size = 0x9000, scoped, tag = 'internal scratch']
  %s0 = inlined_call_operand.vmem [shape: bf16[2,1,9,2,9,8], index: 0, kind: input, shape index: {}]
  %s1 = inlined_call_operand.vmem [shape: bf16[3,8,16], index: 1, kind: input, shape index: {}]
  %s2 = inlined_call_operand.vmem [shape: bf16[3,4,16], index: 2, kind: input, shape index: {}]
  %s3 = inlined_call_operand.vmem [shape: f32[1,16], index: 3, kind: input, shape index: {}]
  %s4 = inlined_call_operand.vmem [shape: bf16[2,8,8,16], index: 4, kind: output, shape index: {}]
  %s5 = sld [smem:[#allocation0]]
  $region49: #{_lambda_.5} parent=0
    _
  %s7 = ssub.s32 1, %s5
  %s8 = scalar_select 0, %s7, %s5
  loop: start=0, step=1, limit=4
  $region2: #{_lambda_.5} parent=0 // loop_pre_header
    _
  $region3: #{_lambda_.5} parent=0 // loop_header
    %s10 = sphi 0, %s14
    %p11 = scmp.ge.s32.totalorder %s10, 4
    %s17 = sphi 0, %s29
    %s18 = sphi 0, %s25
    %s19 = sphi 0, %s17
    %s20 = sphi 0, %s18
    %s21 = sphi 0, %s19
    %s22 = sphi 0, %s20
    %s34 = sphi 0, %s36
    %s37 = sphi 0, %s34
    %s38 = sphi 0, %s37
    %s54 = sphi 0, %s38
    %s58 = sphi 0, %s58
    %s60 = sphi 0, %s58
    %s61 = sphi 0, %s60
    %s75 = sphi 0, %s61
    %s79 = sphi 0, %s79
    %s81 = sphi 0, %s79
    %s82 = sphi 0, %s81
    %s96 = sphi 0, %s82
    %s100 = sphi 0, %s100
    %s102 = sphi 0, %s100
    %s103 = sphi 0, %s102
    %s117 = sphi 0, %s103
    %s125 = sphi 0, %s127
    %s128 = sphi 0, %s125
    %s129 = sphi 0, %s128
    %s145 = sphi 0, %s129
  $region4: #{_lambda_.5} parent=0 // loop_header_branch
    %13 = sbr.rel (%p11) target = $region8
  $region5: #{_lambda_.5} parent=0 // loop_body
    %s15 = ssub.s32 %s10, 1
    %s16 = ssub.s32 %s10, 2
    %s23 = sadd.s32 1, %s18
    %p24 = scmp.ge.s32.totalorder %s23, 1
    %s25 = scalar_select %p24, 0, %s23
    %s26 = sadd.s32 1, %s17
    %s27 = scalar_select %p24, %s26, %s17
    %p28 = scmp.ge.s32.totalorder %s27, 2
    %s29 = scalar_select %p28, 0, %s27
    %s30 = ssub.s32 %s17, %s29
    %s31 = ssub.s32 %s18, %s25
    %s32 = sor.u32 %s30, %s31
    %p33 = scmp.eq.s32.totalorder %s32, 0
    %s35 = sadd.s32 %s34, 1
    %s36 = scalar_select %p33, %s34, %s35
    %p39 = pneg %p33
    %p40 = scmp.eq.s32.totalorder %s10, 1
    %p41 = por %p39, %p40
    %p42 = scmp.ne.s32.totalorder %s34, %s37
    %p43 = scmp.eq.s32.totalorder %s10, 0
    %p44 = por %p42, %p43
    %p45 = scmp.ne.s32.totalorder %s34, %s37
    %p46 = scmp.eq.s32.totalorder %s15, 1
    %p47 = por %p45, %p46
    %p48 = scmp.ne.s32.totalorder %s37, %s38
    %p49 = scmp.eq.s32.totalorder %s15, 0
    %p50 = por %p48, %p49
    %p51 = scmp.ne.s32.totalorder %s37, %s38
    %p52 = scmp.eq.s32.totalorder %s16, 1
    %p53 = por %p51, %p52
    %p55 = scmp.ne.s32.totalorder %s38, %s54
    %p56 = scmp.eq.s32.totalorder %s16, 0
    %p57 = por %p55, %p56
    %s59 = sadd.s32 %s58, 1
    %p62 = scmp.eq.s32.totalorder %s10, 1
    %p63 = scmp.ne.s32.totalorder %s58, %s60
    %p64 = scmp.eq.s32.totalorder %s10, 0
    %p65 = por %p63, %p64
    %p66 = scmp.ne.s32.totalorder %s58, %s60
    %p67 = scmp.eq.s32.totalorder %s15, 1
    %p68 = por %p66, %p67
    %p69 = scmp.ne.s32.totalorder %s60, %s61
    %p70 = scmp.eq.s32.totalorder %s15, 0
    %p71 = por %p69, %p70
    %p72 = scmp.ne.s32.totalorder %s60, %s61
    %p73 = scmp.eq.s32.totalorder %s16, 1
    %p74 = por %p72, %p73
    %p76 = scmp.ne.s32.totalorder %s61, %s75
    %p77 = scmp.eq.s32.totalorder %s16, 0
    %p78 = por %p76, %p77
    %s80 = sadd.s32 %s79, 1
    %p83 = scmp.eq.s32.totalorder %s10, 1
    %p84 = scmp.ne.s32.totalorder %s79, %s81
    %p85 = scmp.eq.s32.totalorder %s10, 0
    %p86 = por %p84, %p85
    %p87 = scmp.ne.s32.totalorder %s79, %s81
    %p88 = scmp.eq.s32.totalorder %s15, 1
    %p89 = por %p87, %p88
    %p90 = scmp.ne.s32.totalorder %s81, %s82
    %p91 = scmp.eq.s32.totalorder %s15, 0
    %p92 = por %p90, %p91
    %p93 = scmp.ne.s32.totalorder %s81, %s82
    %p94 = scmp.eq.s32.totalorder %s16, 1
    %p95 = por %p93, %p94
    %p97 = scmp.ne.s32.totalorder %s82, %s96
    %p98 = scmp.eq.s32.totalorder %s16, 0
    %p99 = por %p97, %p98
    %s101 = sadd.s32 %s100, 1
    %p104 = scmp.eq.s32.totalorder %s10, 1
    %p105 = scmp.ne.s32.totalorder %s100, %s102
    %p106 = scmp.eq.s32.totalorder %s10, 0
    %p107 = por %p105, %p106
    %p108 = scmp.ne.s32.totalorder %s100, %s102
    %p109 = scmp.eq.s32.totalorder %s15, 1
    %p110 = por %p108, %p109
    %p111 = scmp.ne.s32.totalorder %s102, %s103
    %p112 = scmp.eq.s32.totalorder %s15, 0
    %p113 = por %p111, %p112
    %p114 = scmp.ne.s32.totalorder %s102, %s103
    %p115 = scmp.eq.s32.totalorder %s16, 1
    %p116 = por %p114, %p115
    %p118 = scmp.ne.s32.totalorder %s103, %s117
    %p119 = scmp.eq.s32.totalorder %s16, 0
    %p120 = por %p118, %p119
    %s121 = ssub.s32 %s17, %s29
    %s122 = ssub.s32 %s18, %s25
    %s123 = sor.u32 %s121, %s122
    %p124 = scmp.eq.s32.totalorder %s123, 0
    %s126 = sadd.s32 %s125, 1
    %s127 = scalar_select %p124, %s125, %s126
    %p130 = pneg %p124
    %p131 = scmp.eq.s32.totalorder %s10, 1
    %p132 = por %p130, %p131
    %p133 = scmp.ne.s32.totalorder %s125, %s128
    %p134 = scmp.eq.s32.totalorder %s10, 0
    %p135 = por %p133, %p134
    %p136 = scmp.ne.s32.totalorder %s125, %s128
    %p137 = scmp.eq.s32.totalorder %s15, 1
    %p138 = por %p136, %p137
    %p139 = scmp.ne.s32.totalorder %s128, %s129
    %p140 = scmp.eq.s32.totalorder %s15, 0
    %p141 = por %p139, %p140
    %p142 = scmp.ne.s32.totalorder %s128, %s129
    %p143 = scmp.eq.s32.totalorder %s16, 1
    %p144 = por %p142, %p143
    %p146 = scmp.ne.s32.totalorder %s129, %s145
    %p147 = scmp.eq.s32.totalorder %s16, 0
    %p148 = por %p146, %p147
    %p149 = scmp.le.s32.totalorder 1, %s10
    %p150 = scmp.lt.s32.totalorder %s10, 3
    %p151 = pnand %p149, %p150
    %p152 = pneg %p151
    // Predicated region
    $region9: #{_lambda_.5} parent=5 // pred_check
      _
    $region10: #{_lambda_.5} parent=5 // pred_check_branch
      %154 = sbr.rel (%p151) target = $region12
    $region11: #{_lambda_.5} parent=5 // pred_region
      %s155 = ssub.s32 %s10, 1
      // Predicated region
      $region13: #{_lambda_.5} parent=11 // pred_check
        %p156 = pneg %p71
      $region14: #{_lambda_.5} parent=11 // pred_check_branch
        %158 = sbr.rel (%p156) target = $region16
      $region15: #{_lambda_.5} parent=11 // pred_region
        _
      $region16: #{_lambda_.5} parent=11 // pred_fallthru
        _
      // Predicated region
      $region17: #{_lambda_.5} parent=11 // pred_check
        %p159 = pneg %p92
      $region18: #{_lambda_.5} parent=11 // pred_check_branch
        %161 = sbr.rel (%p159) target = $region20
      $region19: #{_lambda_.5} parent=11 // pred_region
        _
      $region20: #{_lambda_.5} parent=11 // pred_fallthru
        _
      // Predicated region
      $region21: #{_lambda_.5} parent=11 // pred_check
        %p162 = pneg %p113
      $region22: #{_lambda_.5} parent=11 // pred_check_branch
        %164 = sbr.rel (%p162) target = $region24
      $region23: #{_lambda_.5} parent=11 // pred_region
        _
      $region24: #{_lambda_.5} parent=11 // pred_fallthru
        _
    $region12: #{_lambda_.5} parent=5 // pred_fallthru
      _
    %p165 = scmp.lt.s32.totalorder %s10, 2
    // Predicated region
    $region25: #{_lambda_.5} parent=5 // pred_check
      %p166 = pneg %p165
    $region26: #{_lambda_.5} parent=5 // pred_check_branch
      %168 = sbr.rel (%p166) target = $region28
    $region27: #{_lambda_.5} parent=5 // pred_region
      // Predicated region
      $region29: #{_lambda_.5} parent=27 // pred_check
        %p169 = pneg %p44
      $region30: #{_lambda_.5} parent=27 // pred_check_branch
        %171 = sbr.rel (%p169) target = $region32
      $region31: #{_lambda_.5} parent=27 // pred_region
        %p172 = scmp.lt.s32.totalorder %s17, 1
        %s173 = scalar_select %p172, %s17, 1
        %p174 = scmp.lt.s32.totalorder %s18, 0
        %s175 = scalar_select %p174, %s18, 0
        %s176 = smul.addr %s175, 36
        %s177 = smul.addr %s173, 36
        %s178 = sadd.s32 %s176, %s177
        %s179 = smul.addr %s178, 4
        %s180 = scalar_lea.vmem %s0, %s179
      $region32: #{_lambda_.5} parent=27 // pred_fallthru
        _
    $region28: #{_lambda_.5} parent=5 // pred_fallthru
      _
    %p181 = scmp.le.s32.totalorder 1, %s10
    %p182 = scmp.lt.s32.totalorder %s10, 3
    %p183 = pnand %p181, %p182
    %p184 = pneg %p183
    // Predicated region
    $region33: #{_lambda_.5} parent=5 // pred_check
      _
    $region34: #{_lambda_.5} parent=5 // pred_check_branch
      %186 = sbr.rel (%p183) target = $region36
    $region35: #{_lambda_.5} parent=5 // pred_region
      %s187 = ssub.s32 %s10, 1
      %p188 = scmp.lt.s32.totalorder %s19, 1
      %s189 = scalar_select %p188, %s19, 1
      %p190 = scmp.lt.s32.totalorder %s20, 0
      %s191 = scalar_select %p190, %s20, 0
      %s192 = smul.addr %s191, 36
      %s193 = smul.addr %s189, 36
      %s194 = sadd.s32 %s192, %s193
      %s195 = smul.addr %s194, 4
      %s196 = scalar_lea.vmem %s0, %s195
      %p197 = pneg %p50
      %p198 = pneg %p47
      %p199 = pneg %p71
      %p200 = pneg %p68
      %p201 = pneg %p92
      %p202 = pneg %p89
      %p203 = pneg %p113
      %p204 = pneg %p110
      %p205 = pneg %p141
      %p206 = pneg %p138
      %s207 = smul.u32 8, %s20
      %p208 = scmp.lt.s32.totalorder %s19, 1
      %s209 = scalar_select %p208, %s19, 1
      %p210 = scmp.lt.s32.totalorder %s207, 7
      %s211 = scalar_select %p210, %s207, 7
      %s212 = smul.addr %s209, 8
      %s213 = sadd.s32 %s211, %s212
      %s214 = smul.addr %s213, 4
      %s215 = scalar_lea.vmem %s4, %s214
      %p216 = scmp.lt.s32.totalorder %s19, 1
      %s217 = scalar_select %p216, %s19, 1
      %p218 = scmp.lt.s32.totalorder %s20, 0
      %s219 = scalar_select %p218, %s20, 0
      %s220 = smul.addr %s219, 36
      %s221 = smul.addr %s217, 36
      %s222 = sadd.s32 %s220, %s221
      %s223 = smul.addr %s222, 4
      %s224 = scalar_lea.vmem %s0, %s223
      %s225 = smul.u32 8, %s20
      %p226 = scmp.lt.s32.totalorder %s19, 1
      %s227 = scalar_select %p226, %s19, 1
      %p228 = scmp.lt.s32.totalorder %s225, 7
      %s229 = scalar_select %p228, %s225, 7
      %s230 = smul.addr %s227, 8
      %s231 = sadd.s32 %s229, %s230
      %s232 = smul.addr %s231, 4
      %s233 = scalar_lea.vmem %s4, %s232
      %s234 = smul.u32 8, %s20
      %v236 = vld [vmem:[%s224] sm:$0xf]
      %v237 = vld [vmem:[%s224 + $0x10] sm:$0xf]
      %v238 = vld [vmem:[%s224 + $0x20] sm:$0xf]
      %v239 = vld [vmem:[%s224 + $0x30] sm:$0xf]
      %v240 = vld [vmem:[%s224 + $0x40] sm:$0xf]
      %v241 = vld [vmem:[%s224 + $0x50] sm:$0xf]
      %v242 = vld [vmem:[%s224 + $0x60] sm:$0xf]
      %v243 = vld [vmem:[%s224 + $0x70] sm:$0xf]
      %v244 = vld [vmem:[%s1] sm:$0xf]
      %v245 = vld [vmem:[%s224 + $0x4] sm:$0x1]
      %v246 = vld [vmem:[%s224 + $0x14] sm:$0x1]
      %v247 = vld [vmem:[%s224 + $0x24] sm:$0x1]
      %v248 = vld [vmem:[%s224 + $0x34] sm:$0x1]
      %v249 = vld [vmem:[%s224 + $0x44] sm:$0x1]
      %v250 = vld [vmem:[%s224 + $0x54] sm:$0x1]
      %v251 = vld [vmem:[%s224 + $0x64] sm:$0x1]
      %v252 = vld [vmem:[%s224 + $0x74] sm:$0x1]
      %vm253 = vsmask.f32 3328
      %vm254 = vsmask.f32 7440
      %vm255 = vmor %vm253, %vm254
      %v257 = vshrl.u32 %v236, 16
      %v259 = vrot.slane %v257, 4
      %v260 = vshll.u32 %v236, 16
      %v262 = vrot.slane %v260, 5
      %v263 = vor.u32 %v259, %v262
      %v264 = vrot.slane %v263, 4
      %v266 = vshll.u32 %v245, 16
      %v268 = vrot.slane %v266, 5
      %v269 = vsel %vm255, %v264, %v268
      %v271 = vshrl.u32 %v237, 16
      %v273 = vrot.slane %v271, 4
      %v274 = vshll.u32 %v237, 16
      %v276 = vrot.slane %v274, 5
      %v277 = vor.u32 %v273, %v276
      %v278 = vrot.slane %v277, 4
      %v280 = vshll.u32 %v246, 16
      %v282 = vrot.slane %v280, 5
      %v283 = vsel %vm255, %v278, %v282
      %v285 = vshrl.u32 %v238, 16
      %v287 = vrot.slane %v285, 4
      %v288 = vshll.u32 %v238, 16
      %v290 = vrot.slane %v288, 5
      %v291 = vor.u32 %v287, %v290
      %v292 = vrot.slane %v291, 4
      %v294 = vshll.u32 %v247, 16
      %v296 = vrot.slane %v294, 5
      %v297 = vsel %vm255, %v292, %v296
      %v299 = vshrl.u32 %v239, 16
      %v301 = vrot.slane %v299, 4
      %v302 = vshll.u32 %v239, 16
      %v304 = vrot.slane %v302, 5
      %v305 = vor.u32 %v301, %v304
      %v306 = vrot.slane %v305, 4
      %v308 = vshll.u32 %v248, 16
      %v310 = vrot.slane %v308, 5
      %v311 = vsel %vm255, %v306, %v310
      %v313 = vshrl.u32 %v240, 16
      %v315 = vrot.slane %v313, 4
      %v316 = vshll.u32 %v240, 16
      %v318 = vrot.slane %v316, 5
      %v319 = vor.u32 %v315, %v318
      %v320 = vrot.slane %v319, 4
      %v322 = vshll.u32 %v249, 16
      %v324 = vrot.slane %v322, 5
      %v325 = vsel %vm255, %v320, %v324
      %v327 = vshrl.u32 %v241, 16
      %v329 = vrot.slane %v327, 4
      %v330 = vshll.u32 %v241, 16
      %v332 = vrot.slane %v330, 5
      %v333 = vor.u32 %v329, %v332
      %v334 = vrot.slane %v333, 4
      %v336 = vshll.u32 %v250, 16
      %v338 = vrot.slane %v336, 5
      %v339 = vsel %vm255, %v334, %v338
      %v341 = vshrl.u32 %v242, 16
      %v343 = vrot.slane %v341, 4
      %v344 = vshll.u32 %v242, 16
      %v346 = vrot.slane %v344, 5
      %v347 = vor.u32 %v343, %v346
      %v348 = vrot.slane %v347, 4
      %v350 = vshll.u32 %v251, 16
      %v352 = vrot.slane %v350, 5
      %v353 = vsel %vm255, %v348, %v352
      %v355 = vshrl.u32 %v243, 16
      %v357 = vrot.slane %v355, 4
      %v358 = vshll.u32 %v243, 16
      %v360 = vrot.slane %v358, 5
      %v361 = vor.u32 %v357, %v360
      %v362 = vrot.slane %v361, 4
      %v364 = vshll.u32 %v252, 16
      %v366 = vrot.slane %v364, 5
      %v367 = vsel %vm255, %v362, %v366
      %v368 = vld [vmem:[%s2] sm:$0x3]
      %v369 = vunpack.c.l.b16 %v269
      %v370 = vunpack.c.l.b16 %v283
      %v371 = vunpack.c.l.b16 %v297
      %v372 = vunpack.c.l.b16 %v311
      %v373 = vunpack.c.l.b16 %v325
      %v374 = vunpack.c.l.b16 %v339
      %v375 = vunpack.c.l.b16 %v353
      %v376 = vunpack.c.l.b16 %v367
      %v377 = vpack.c.b16 %v370, %v369
      %v378 = vpack.c.b16 %v372, %v371
      %v379 = vpack.c.b16 %v374, %v373
      %v380 = vpack.c.b16 %v376, %v375
      %vm381 = vcmask 31744
      %v383 = vsel %vm381, %v377, 0
      %v386 = vsel %vm381, %v378, 0
      %v389 = vsel %vm381, %v379, 0
      %v392 = vsel %vm381, %v380, 0
      %vm394 = vcmask 1041408
      %v396 = vsel %vm394, %v368, 0
      %398 = vmatpush.bf16.msra.mxu0 0
      %399 = vmatpush.bf16.msra.mxu0 0
      %400 = vmatpush.bf16.msra.mxu0 0
      %401 = vmatpush.bf16.msra.mxu0 0
      %402 = vmatpush.bf16.msra.mxu0 0
      %403 = vmatpush.bf16.msra.mxu0 0
      %404 = vmatpush.bf16.msra.mxu0 0
      %405 = vmatpush.bf16.msra.mxu0 %v396
      %406 = vmatmul.bf16.gmra.mxu0 %v383
      %v407 = vpop.f32.mrf.mxu0
      %v408 = vadd.f32 0.0, %v407
      %v409 = vpop.f32.mrf.mxu0
      %v410 = vadd.f32 0.0, %v409
      %411 = vmatmul.bf16.gmra.mxu0 %v386
      %v412 = vpop.f32.mrf.mxu0
      %v413 = vadd.f32 0.0, %v412
      %v414 = vpop.f32.mrf.mxu0
      %v415 = vadd.f32 0.0, %v414
      %416 = vmatmul.bf16.gmra.mxu0 %v389
      %v417 = vpop.f32.mrf.mxu0
      %v418 = vadd.f32 0.0, %v417
      %v419 = vpop.f32.mrf.mxu0
      %v420 = vadd.f32 0.0, %v419
      %421 = vmatmul.bf16.gmra.mxu0 %v392
      %v422 = vpop.f32.mrf.mxu0
      %v423 = vadd.f32 0.0, %v422
      %v424 = vpop.f32.mrf.mxu0
      %v425 = vadd.f32 0.0, %v424
      %426 = vdwg.mxu0
      %v435 = vunpack.c.l.b16 %v236
      %v436 = vunpack.c.l.b16 %v237
      %v437 = vunpack.c.l.b16 %v238
      %v438 = vunpack.c.l.b16 %v239
      %v439 = vunpack.c.l.b16 %v240
      %v440 = vunpack.c.l.b16 %v241
      %v441 = vunpack.c.l.b16 %v242
      %v442 = vunpack.c.l.b16 %v243
      %v443 = vpack.c.b16 %v436, %v435
      %v444 = vpack.c.b16 %v438, %v437
      %v445 = vpack.c.b16 %v440, %v439
      %v446 = vpack.c.b16 %v442, %v441
      %vm447 = vcmask 64512
      %v449 = vsel %vm447, %v443, 0
      %v452 = vsel %vm447, %v444, 0
      %v455 = vsel %vm447, %v445, 0
      %v458 = vsel %vm447, %v446, 0
      %vm460 = vcmask 1043456
      %v462 = vsel %vm460, %v244, 0
      %464 = vmatpush.bf16.msra.mxu0 0
      %465 = vmatpush.bf16.msra.mxu0 0
      %466 = vmatpush.bf16.msra.mxu0 0
      %467 = vmatpush.bf16.msra.mxu0 0
      %468 = vmatpush.bf16.msra.mxu0 0
      %469 = vmatpush.bf16.msra.mxu0 0
      %470 = vmatpush.bf16.msra.mxu0 0
      %471 = vmatpush.bf16.msra.mxu0 %v462
      %472 = vmatmul.bf16.gmra.mxu0 %v449
      %v473 = vpop.f32.mrf.mxu0
      %v474 = vadd.f32 %v408, %v473
      %v475 = vpop.f32.mrf.mxu0
      %v476 = vadd.f32 %v410, %v475
      %477 = vmatmul.bf16.gmra.mxu0 %v452
      %v478 = vpop.f32.mrf.mxu0
      %v479 = vadd.f32 %v413, %v478
      %v480 = vpop.f32.mrf.mxu0
      %v481 = vadd.f32 %v415, %v480
      %482 = vmatmul.bf16.gmra.mxu0 %v455
      %v483 = vpop.f32.mrf.mxu0
      %v484 = vadd.f32 %v418, %v483
      %v485 = vpop.f32.mrf.mxu0
      %v486 = vadd.f32 %v420, %v485
      %487 = vmatmul.bf16.gmra.mxu0 %v458
      %v488 = vpop.f32.mrf.mxu0
      %v489 = vadd.f32 %v423, %v488
      %v490 = vpop.f32.mrf.mxu0
      %v491 = vadd.f32 %v425, %v490
      %492 = vdwg.mxu0
      %s493 = scalar_lea.vmem %s224, 8
      %v494 = vld [vmem:[%s493] sm:$0xf]
      %v495 = vld [vmem:[%s493 + $0x10] sm:$0xf]
      %v496 = vld [vmem:[%s493 + $0x20] sm:$0xf]
      %v497 = vld [vmem:[%s493 + $0x30] sm:$0xf]
      %v498 = vld [vmem:[%s493 + $0x40] sm:$0xf]
      %v499 = vld [vmem:[%s493 + $0x50] sm:$0xf]
      %v500 = vld [vmem:[%s493 + $0x60] sm:$0xf]
      %v501 = vld [vmem:[%s493 + $0x70] sm:$0xf]
      %s502 = scalar_lea.vmem %s1, 4
      %v503 = vld [vmem:[%s502] sm:$0xf]
      %v512 = vunpack.c.l.b16 %v494
      %v513 = vunpack.c.l.b16 %v495
      %v514 = vunpack.c.l.b16 %v496
      %v515 = vunpack.c.l.b16 %v497
      %v516 = vunpack.c.l.b16 %v498
      %v517 = vunpack.c.l.b16 %v499
      %v518 = vunpack.c.l.b16 %v500
      %v519 = vunpack.c.l.b16 %v501
      %v520 = vpack.c.b16 %v513, %v512
      %v521 = vpack.c.b16 %v515, %v514
      %v522 = vpack.c.b16 %v517, %v516
      %v523 = vpack.c.b16 %v519, %v518
      %v525 = vsel %vm447, %v520, 0
      %v528 = vsel %vm447, %v521, 0
      %v531 = vsel %vm447, %v522, 0
      %v534 = vsel %vm447, %v523, 0
      %v537 = vsel %vm460, %v503, 0
      %539 = vmatpush.bf16.msra.mxu0 0
      %540 = vmatpush.bf16.msra.mxu0 0
      %541 = vmatpush.bf16.msra.mxu0 0
      %542 = vmatpush.bf16.msra.mxu0 0
      %543 = vmatpush.bf16.msra.mxu0 0
      %544 = vmatpush.bf16.msra.mxu0 0
      %545 = vmatpush.bf16.msra.mxu0 0
      %546 = vmatpush.bf16.msra.mxu0 %v537
      %547 = vmatmul.bf16.gmra.mxu0 %v525
      %v548 = vpop.f32.mrf.mxu0
      %v549 = vadd.f32 0.0, %v548
      %v550 = vpop.f32.mrf.mxu0
      %v551 = vadd.f32 0.0, %v550
      %552 = vmatmul.bf16.gmra.mxu0 %v528
      %v553 = vpop.f32.mrf.mxu0
      %v554 = vadd.f32 0.0, %v553
      %v555 = vpop.f32.mrf.mxu0
      %v556 = vadd.f32 0.0, %v555
      %557 = vmatmul.bf16.gmra.mxu0 %v531
      %v558 = vpop.f32.mrf.mxu0
      %v559 = vadd.f32 0.0, %v558
      %v560 = vpop.f32.mrf.mxu0
      %v561 = vadd.f32 0.0, %v560
      %562 = vmatmul.bf16.gmra.mxu0 %v534
      %v563 = vpop.f32.mrf.mxu0
      %v564 = vadd.f32 0.0, %v563
      %v565 = vpop.f32.mrf.mxu0
      %v566 = vadd.f32 0.0, %v565
      %567 = vdwg.mxu0
      %v568 = vadd.f32 %v474, %v549
      %v569 = vadd.f32 %v476, %v551
      %v570 = vadd.f32 %v479, %v554
      %v571 = vadd.f32 %v481, %v556
      %v572 = vadd.f32 %v484, %v559
      %v573 = vadd.f32 %v486, %v561
      %v574 = vadd.f32 %v489, %v564
      %v575 = vadd.f32 %v491, %v566
      %v576 = vld [vmem:[%s493] sm:$0xf]
      %v577 = vld [vmem:[%s493 + $0x4] sm:$0x1]
      %v578 = vld [vmem:[%s493 + $0x10] sm:$0xf]
      %v579 = vld [vmem:[%s493 + $0x14] sm:$0x1]
      %v580 = vld [vmem:[%s493 + $0x20] sm:$0xf]
      %v581 = vld [vmem:[%s493 + $0x24] sm:$0x1]
      %v582 = vld [vmem:[%s493 + $0x30] sm:$0xf]
      %v583 = vld [vmem:[%s493 + $0x34] sm:$0x1]
      %v584 = vld [vmem:[%s493 + $0x40] sm:$0xf]
      %v585 = vld [vmem:[%s493 + $0x44] sm:$0x1]
      %v586 = vld [vmem:[%s493 + $0x50] sm:$0xf]
      %v587 = vld [vmem:[%s493 + $0x54] sm:$0x1]
      %v588 = vld [vmem:[%s493 + $0x60] sm:$0xf]
      %v589 = vld [vmem:[%s493 + $0x64] sm:$0x1]
      %v590 = vld [vmem:[%s493 + $0x70] sm:$0xf]
      %v591 = vld [vmem:[%s493 + $0x74] sm:$0x1]
      %v593 = vshrl.u32 %v576, 16
      %v595 = vrot.slane %v593, 4
      %v596 = vshll.u32 %v576, 16
      %v598 = vrot.slane %v596, 5
      %v599 = vor.u32 %v595, %v598
      %v600 = vrot.slane %v599, 4
      %v602 = vshll.u32 %v577, 16
      %v604 = vrot.slane %v602, 5
      %v605 = vsel %vm255, %v600, %v604
      %v607 = vshrl.u32 %v578, 16
      %v609 = vrot.slane %v607, 4
      %v610 = vshll.u32 %v578, 16
      %v612 = vrot.slane %v610, 5
      %v613 = vor.u32 %v609, %v612
      %v614 = vrot.slane %v613, 4
      %v616 = vshll.u32 %v579, 16
      %v618 = vrot.slane %v616, 5
      %v619 = vsel %vm255, %v614, %v618
      %v621 = vshrl.u32 %v580, 16
      %v623 = vrot.slane %v621, 4
      %v624 = vshll.u32 %v580, 16
      %v626 = vrot.slane %v624, 5
      %v627 = vor.u32 %v623, %v626
      %v628 = vrot.slane %v627, 4
      %v630 = vshll.u32 %v581, 16
      %v632 = vrot.slane %v630, 5
      %v633 = vsel %vm255, %v628, %v632
      %v635 = vshrl.u32 %v582, 16
      %v637 = vrot.slane %v635, 4
      %v638 = vshll.u32 %v582, 16
      %v640 = vrot.slane %v638, 5
      %v641 = vor.u32 %v637, %v640
      %v642 = vrot.slane %v641, 4
      %v644 = vshll.u32 %v583, 16
      %v646 = vrot.slane %v644, 5
      %v647 = vsel %vm255, %v642, %v646
      %v649 = vshrl.u32 %v584, 16
      %v651 = vrot.slane %v649, 4
      %v652 = vshll.u32 %v584, 16
      %v654 = vrot.slane %v652, 5
      %v655 = vor.u32 %v651, %v654
      %v656 = vrot.slane %v655, 4
      %v658 = vshll.u32 %v585, 16
      %v660 = vrot.slane %v658, 5
      %v661 = vsel %vm255, %v656, %v660
      %v663 = vshrl.u32 %v586, 16
      %v665 = vrot.slane %v663, 4
      %v666 = vshll.u32 %v586, 16
      %v668 = vrot.slane %v666, 5
      %v669 = vor.u32 %v665, %v668
      %v670 = vrot.slane %v669, 4
      %v672 = vshll.u32 %v587, 16
      %v674 = vrot.slane %v672, 5
      %v675 = vsel %vm255, %v670, %v674
      %v677 = vshrl.u32 %v588, 16
      %v679 = vrot.slane %v677, 4
      %v680 = vshll.u32 %v588, 16
      %v682 = vrot.slane %v680, 5
      %v683 = vor.u32 %v679, %v682
      %v684 = vrot.slane %v683, 4
      %v686 = vshll.u32 %v589, 16
      %v688 = vrot.slane %v686, 5
      %v689 = vsel %vm255, %v684, %v688
      %v691 = vshrl.u32 %v590, 16
      %v693 = vrot.slane %v691, 4
      %v694 = vshll.u32 %v590, 16
      %v696 = vrot.slane %v694, 5
      %v697 = vor.u32 %v693, %v696
      %v698 = vrot.slane %v697, 4
      %v700 = vshll.u32 %v591, 16
      %v702 = vrot.slane %v700, 5
      %v703 = vsel %vm255, %v698, %v702
      %s704 = scalar_lea.vmem %s2, 2
      %v705 = vld [vmem:[%s704] sm:$0x3]
      %v706 = vunpack.c.l.b16 %v605
      %v707 = vunpack.c.l.b16 %v619
      %v708 = vunpack.c.l.b16 %v633
      %v709 = vunpack.c.l.b16 %v647
      %v710 = vunpack.c.l.b16 %v661
      %v711 = vunpack.c.l.b16 %v675
      %v712 = vunpack.c.l.b16 %v689
      %v713 = vunpack.c.l.b16 %v703
      %v714 = vpack.c.b16 %v707, %v706
      %v715 = vpack.c.b16 %v709, %v708
      %v716 = vpack.c.b16 %v711, %v710
      %v717 = vpack.c.b16 %v713, %v712
      %v719 = vsel %vm381, %v714, 0
      %v722 = vsel %vm381, %v715, 0
      %v725 = vsel %vm381, %v716, 0
      %v728 = vsel %vm381, %v717, 0
      %v731 = vsel %vm394, %v705, 0
      %733 = vmatpush.bf16.msra.mxu0 0
      %734 = vmatpush.bf16.msra.mxu0 0
      %735 = vmatpush.bf16.msra.mxu0 0
      %736 = vmatpush.bf16.msra.mxu0 0
      %737 = vmatpush.bf16.msra.mxu0 0
      %738 = vmatpush.bf16.msra.mxu0 0
      %739 = vmatpush.bf16.msra.mxu0 0
      %740 = vmatpush.bf16.msra.mxu0 %v731
      %741 = vmatmul.bf16.gmra.mxu0 %v719
      %v742 = vpop.f32.mrf.mxu0
      %v743 = vadd.f32 0.0, %v742
      %v744 = vpop.f32.mrf.mxu0
      %v745 = vadd.f32 0.0, %v744
      %746 = vmatmul.bf16.gmra.mxu0 %v722
      %v747 = vpop.f32.mrf.mxu0
      %v748 = vadd.f32 0.0, %v747
      %v749 = vpop.f32.mrf.mxu0
      %v750 = vadd.f32 0.0, %v749
      %751 = vmatmul.bf16.gmra.mxu0 %v725
      %v752 = vpop.f32.mrf.mxu0
      %v753 = vadd.f32 0.0, %v752
      %v754 = vpop.f32.mrf.mxu0
      %v755 = vadd.f32 0.0, %v754
      %756 = vmatmul.bf16.gmra.mxu0 %v728
      %v757 = vpop.f32.mrf.mxu0
      %v758 = vadd.f32 0.0, %v757
      %v759 = vpop.f32.mrf.mxu0
      %v760 = vadd.f32 0.0, %v759
      %761 = vdwg.mxu0
      %v762 = vadd.f32 %v568, %v743
      %v763 = vadd.f32 %v569, %v745
      %v764 = vadd.f32 %v570, %v748
      %v765 = vadd.f32 %v571, %v750
      %v766 = vadd.f32 %v572, %v753
      %v767 = vadd.f32 %v573, %v755
      %v768 = vadd.f32 %v574, %v758
      %v769 = vadd.f32 %v575, %v760
      %s770 = scalar_lea.vmem %s224, 16
      %v771 = vld [vmem:[%s770] sm:$0xf]
      %v772 = vld [vmem:[%s770 + $0x10] sm:$0xf]
      %v773 = vld [vmem:[%s770 + $0x20] sm:$0xf]
      %v774 = vld [vmem:[%s770 + $0x30] sm:$0xf]
      %v775 = vld [vmem:[%s770 + $0x40] sm:$0xf]
      %v776 = vld [vmem:[%s770 + $0x50] sm:$0xf]
      %v777 = vld [vmem:[%s770 + $0x60] sm:$0xf]
      %v778 = vld [vmem:[%s770 + $0x70] sm:$0xf]
      %s779 = scalar_lea.vmem %s1, 8
      %v780 = vld [vmem:[%s779] sm:$0xf]
      %v789 = vunpack.c.l.b16 %v771
      %v790 = vunpack.c.l.b16 %v772
      %v791 = vunpack.c.l.b16 %v773
      %v792 = vunpack.c.l.b16 %v774
      %v793 = vunpack.c.l.b16 %v775
      %v794 = vunpack.c.l.b16 %v776
      %v795 = vunpack.c.l.b16 %v777
      %v796 = vunpack.c.l.b16 %v778
      %v797 = vpack.c.b16 %v790, %v789
      %v798 = vpack.c.b16 %v792, %v791
      %v799 = vpack.c.b16 %v794, %v793
      %v800 = vpack.c.b16 %v796, %v795
      %v802 = vsel %vm447, %v797, 0
      %v805 = vsel %vm447, %v798, 0
      %v808 = vsel %vm447, %v799, 0
      %v811 = vsel %vm447, %v800, 0
      %v814 = vsel %vm460, %v780, 0
      %816 = vmatpush.bf16.msra.mxu0 0
      %817 = vmatpush.bf16.msra.mxu0 0
      %818 = vmatpush.bf16.msra.mxu0 0
      %819 = vmatpush.bf16.msra.mxu0 0
      %820 = vmatpush.bf16.msra.mxu0 0
      %821 = vmatpush.bf16.msra.mxu0 0
      %822 = vmatpush.bf16.msra.mxu0 0
      %823 = vmatpush.bf16.msra.mxu0 %v814
      %824 = vmatmul.bf16.gmra.mxu0 %v802
      %v825 = vpop.f32.mrf.mxu0
      %v826 = vadd.f32 0.0, %v825
      %v827 = vpop.f32.mrf.mxu0
      %v828 = vadd.f32 0.0, %v827
      %829 = vmatmul.bf16.gmra.mxu0 %v805
      %v830 = vpop.f32.mrf.mxu0
      %v831 = vadd.f32 0.0, %v830
      %v832 = vpop.f32.mrf.mxu0
      %v833 = vadd.f32 0.0, %v832
      %834 = vmatmul.bf16.gmra.mxu0 %v808
      %v835 = vpop.f32.mrf.mxu0
      %v836 = vadd.f32 0.0, %v835
      %v837 = vpop.f32.mrf.mxu0
      %v838 = vadd.f32 0.0, %v837
      %839 = vmatmul.bf16.gmra.mxu0 %v811
      %v840 = vpop.f32.mrf.mxu0
      %v841 = vadd.f32 0.0, %v840
      %v842 = vpop.f32.mrf.mxu0
      %v843 = vadd.f32 0.0, %v842
      %844 = vdwg.mxu0
      %v845 = vadd.f32 %v762, %v826
      %v846 = vadd.f32 %v763, %v828
      %v847 = vadd.f32 %v764, %v831
      %v848 = vadd.f32 %v765, %v833
      %v849 = vadd.f32 %v766, %v836
      %v850 = vadd.f32 %v767, %v838
      %v851 = vadd.f32 %v768, %v841
      %v852 = vadd.f32 %v769, %v843
      %v853 = vld [vmem:[%s770] sm:$0xf]
      %v854 = vld [vmem:[%s770 + $0x4] sm:$0x1]
      %v855 = vld [vmem:[%s770 + $0x10] sm:$0xf]
      %v856 = vld [vmem:[%s770 + $0x14] sm:$0x1]
      %v857 = vld [vmem:[%s770 + $0x20] sm:$0xf]
      %v858 = vld [vmem:[%s770 + $0x24] sm:$0x1]
      %v859 = vld [vmem:[%s770 + $0x30] sm:$0xf]
      %v860 = vld [vmem:[%s770 + $0x34] sm:$0x1]
      %v861 = vld [vmem:[%s770 + $0x40] sm:$0xf]
      %v862 = vld [vmem:[%s770 + $0x44] sm:$0x1]
      %v863 = vld [vmem:[%s770 + $0x50] sm:$0xf]
      %v864 = vld [vmem:[%s770 + $0x54] sm:$0x1]
      %v865 = vld [vmem:[%s770 + $0x60] sm:$0xf]
      %v866 = vld [vmem:[%s770 + $0x64] sm:$0x1]
      %v867 = vld [vmem:[%s770 + $0x70] sm:$0xf]
      %v868 = vld [vmem:[%s770 + $0x74] sm:$0x1]
      %v870 = vshrl.u32 %v853, 16
      %v872 = vrot.slane %v870, 4
      %v873 = vshll.u32 %v853, 16
      %v875 = vrot.slane %v873, 5
      %v876 = vor.u32 %v872, %v875
      %v877 = vrot.slane %v876, 4
      %v879 = vshll.u32 %v854, 16
      %v881 = vrot.slane %v879, 5
      %v882 = vsel %vm255, %v877, %v881
      %v884 = vshrl.u32 %v855, 16
      %v886 = vrot.slane %v884, 4
      %v887 = vshll.u32 %v855, 16
      %v889 = vrot.slane %v887, 5
      %v890 = vor.u32 %v886, %v889
      %v891 = vrot.slane %v890, 4
      %v893 = vshll.u32 %v856, 16
      %v895 = vrot.slane %v893, 5
      %v896 = vsel %vm255, %v891, %v895
      %v898 = vshrl.u32 %v857, 16
      %v900 = vrot.slane %v898, 4
      %v901 = vshll.u32 %v857, 16
      %v903 = vrot.slane %v901, 5
      %v904 = vor.u32 %v900, %v903
      %v905 = vrot.slane %v904, 4
      %v907 = vshll.u32 %v858, 16
      %v909 = vrot.slane %v907, 5
      %v910 = vsel %vm255, %v905, %v909
      %v912 = vshrl.u32 %v859, 16
      %v914 = vrot.slane %v912, 4
      %v915 = vshll.u32 %v859, 16
      %v917 = vrot.slane %v915, 5
      %v918 = vor.u32 %v914, %v917
      %v919 = vrot.slane %v918, 4
      %v921 = vshll.u32 %v860, 16
      %v923 = vrot.slane %v921, 5
      %v924 = vsel %vm255, %v919, %v923
      %v926 = vshrl.u32 %v861, 16
      %v928 = vrot.slane %v926, 4
      %v929 = vshll.u32 %v861, 16
      %v931 = vrot.slane %v929, 5
      %v932 = vor.u32 %v928, %v931
      %v933 = vrot.slane %v932, 4
      %v935 = vshll.u32 %v862, 16
      %v937 = vrot.slane %v935, 5
      %v938 = vsel %vm255, %v933, %v937
      %v940 = vshrl.u32 %v863, 16
      %v942 = vrot.slane %v940, 4
      %v943 = vshll.u32 %v863, 16
      %v945 = vrot.slane %v943, 5
      %v946 = vor.u32 %v942, %v945
      %v947 = vrot.slane %v946, 4
      %v949 = vshll.u32 %v864, 16
      %v951 = vrot.slane %v949, 5
      %v952 = vsel %vm255, %v947, %v951
      %v954 = vshrl.u32 %v865, 16
      %v956 = vrot.slane %v954, 4
      %v957 = vshll.u32 %v865, 16
      %v959 = vrot.slane %v957, 5
      %v960 = vor.u32 %v956, %v959
      %v961 = vrot.slane %v960, 4
      %v963 = vshll.u32 %v866, 16
      %v965 = vrot.slane %v963, 5
      %v966 = vsel %vm255, %v961, %v965
      %v968 = vshrl.u32 %v867, 16
      %v970 = vrot.slane %v968, 4
      %v971 = vshll.u32 %v867, 16
      %v973 = vrot.slane %v971, 5
      %v974 = vor.u32 %v970, %v973
      %v975 = vrot.slane %v974, 4
      %v977 = vshll.u32 %v868, 16
      %v979 = vrot.slane %v977, 5
      %v980 = vsel %vm255, %v975, %v979
      %s981 = scalar_lea.vmem %s2, 4
      %v982 = vld [vmem:[%s981] sm:$0x3]
      %v983 = vunpack.c.l.b16 %v882
      %v984 = vunpack.c.l.b16 %v896
      %v985 = vunpack.c.l.b16 %v910
      %v986 = vunpack.c.l.b16 %v924
      %v987 = vunpack.c.l.b16 %v938
      %v988 = vunpack.c.l.b16 %v952
      %v989 = vunpack.c.l.b16 %v966
      %v990 = vunpack.c.l.b16 %v980
      %v991 = vpack.c.b16 %v984, %v983
      %v992 = vpack.c.b16 %v986, %v985
      %v993 = vpack.c.b16 %v988, %v987
      %v994 = vpack.c.b16 %v990, %v989
      %v996 = vsel %vm381, %v991, 0
      %v999 = vsel %vm381, %v992, 0
      %v1002 = vsel %vm381, %v993, 0
      %v1005 = vsel %vm381, %v994, 0
      %v1008 = vsel %vm394, %v982, 0
      %1010 = vmatpush.bf16.msra.mxu0 0
      %1011 = vmatpush.bf16.msra.mxu0 0
      %1012 = vmatpush.bf16.msra.mxu0 0
      %1013 = vmatpush.bf16.msra.mxu0 0
      %1014 = vmatpush.bf16.msra.mxu0 0
      %1015 = vmatpush.bf16.msra.mxu0 0
      %1016 = vmatpush.bf16.msra.mxu0 0
      %1017 = vmatpush.bf16.msra.mxu0 %v1008
      %1018 = vmatmul.bf16.gmra.mxu0 %v996
      %v1019 = vpop.f32.mrf.mxu0
      %v1020 = vadd.f32 0.0, %v1019
      %v1021 = vpop.f32.mrf.mxu0
      %v1022 = vadd.f32 0.0, %v1021
      %1023 = vmatmul.bf16.gmra.mxu0 %v999
      %v1024 = vpop.f32.mrf.mxu0
      %v1025 = vadd.f32 0.0, %v1024
      %v1026 = vpop.f32.mrf.mxu0
      %v1027 = vadd.f32 0.0, %v1026
      %1028 = vmatmul.bf16.gmra.mxu0 %v1002
      %v1029 = vpop.f32.mrf.mxu0
      %v1030 = vadd.f32 0.0, %v1029
      %v1031 = vpop.f32.mrf.mxu0
      %v1032 = vadd.f32 0.0, %v1031
      %1033 = vmatmul.bf16.gmra.mxu0 %v1005
      %v1034 = vpop.f32.mrf.mxu0
      %v1035 = vadd.f32 0.0, %v1034
      %v1036 = vpop.f32.mrf.mxu0
      %v1037 = vadd.f32 0.0, %v1036
      %1038 = vdwg.mxu0
      %v1039 = vadd.f32 %v845, %v1020
      %v1040 = vadd.f32 %v846, %v1022
      %v1041 = vadd.f32 %v847, %v1025
      %v1042 = vadd.f32 %v848, %v1027
      %v1043 = vadd.f32 %v849, %v1030
      %v1044 = vadd.f32 %v850, %v1032
      %v1045 = vadd.f32 %v851, %v1035
      %v1046 = vadd.f32 %v852, %v1037
      %v1047 = vld [vmem:[%s3] sm:$0x1]
      %v1049 = vperm.slane %v1047, 0
      %v1051 = vadd.f32 %v1039, %v1049
      %v1052 = vadd.f32 %v1040, %v1049
      %v1053 = vadd.f32 %v1041, %v1049
      %v1054 = vadd.f32 %v1042, %v1049
      %v1055 = vadd.f32 %v1043, %v1049
      %v1056 = vadd.f32 %v1044, %v1049
      %v1057 = vadd.f32 %v1045, %v1049
      %v1058 = vadd.f32 %v1046, %v1049
      %v1059 = vmax.f32 %v1051, 0.0
      %v1060 = vmax.f32 %v1052, 0.0
      %v1061 = vmax.f32 %v1053, 0.0
      %v1062 = vmax.f32 %v1054, 0.0
      %v1063 = vmax.f32 %v1055, 0.0
      %v1064 = vmax.f32 %v1056, 0.0
      %v1065 = vmax.f32 %v1057, 0.0
      %v1066 = vmax.f32 %v1058, 0.0
      %v1067 = vpack.c.bf16 %v1059, %v1059
      %v1068 = vpack.c.bf16 %v1060, %v1060
      %v1069 = vpack.c.bf16 %v1061, %v1061
      %v1070 = vpack.c.bf16 %v1062, %v1062
      %v1071 = vpack.c.bf16 %v1063, %v1063
      %v1072 = vpack.c.bf16 %v1064, %v1064
      %v1073 = vpack.c.bf16 %v1065, %v1065
      %v1074 = vpack.c.bf16 %v1066, %v1066
      %vm1075 = vcmask 125952
      %1076 = vst.msk [vmem:[%s233] sm:$0xf] %vm1075, %v1067
      %1077 = vst.msk [vmem:[%s233 + $0x4] sm:$0xf] %vm1075, %v1068
      %1078 = vst.msk [vmem:[%s233 + $0x8] sm:$0xf] %vm1075, %v1069
      %1079 = vst.msk [vmem:[%s233 + $0xc] sm:$0xf] %vm1075, %v1070
      %1080 = vst.msk [vmem:[%s233 + $0x10] sm:$0xf] %vm1075, %v1071
      %1081 = vst.msk [vmem:[%s233 + $0x14] sm:$0xf] %vm1075, %v1072
      %1082 = vst.msk [vmem:[%s233 + $0x18] sm:$0xf] %vm1075, %v1073
      %1083 = vst.msk [vmem:[%s233 + $0x1c] sm:$0xf] %vm1075, %v1074
      %s1084 = smul.u32 8, %s20
      %p1085 = scmp.lt.s32.totalorder %s19, 1
      %s1086 = scalar_select %p1085, %s19, 1
      %p1087 = scmp.lt.s32.totalorder %s1084, 7
      %s1088 = scalar_select %p1087, %s1084, 7
      %s1089 = smul.addr %s1086, 8
      %s1090 = sadd.s32 %s1088, %s1089
      %s1091 = smul.addr %s1090, 4
      %s1092 = scalar_lea.vmem %s4, %s1091
      // Predicated region
      $region37: #{_lambda_.5} parent=35 // pred_check
        %p1093 = pneg %p138
      $region38: #{_lambda_.5} parent=35 // pred_check_branch
        %1095 = sbr.rel (%p1093) target = $region40
      $region39: #{_lambda_.5} parent=35 // pred_region
        %s1096 = smul.u32 8, %s20
      $region40: #{_lambda_.5} parent=35 // pred_fallthru
        _
    $region36: #{_lambda_.5} parent=5 // pred_fallthru
      _
    %p1097 = scmp.le.s32.totalorder 2, %s10
    // Predicated region
    $region41: #{_lambda_.5} parent=5 // pred_check
      %p1098 = pneg %p1097
    $region42: #{_lambda_.5} parent=5 // pred_check_branch
      %1100 = sbr.rel (%p1098) target = $region44
    $region43: #{_lambda_.5} parent=5 // pred_region
      %s1101 = ssub.s32 %s10, 2
      // Predicated region
      $region45: #{_lambda_.5} parent=43 // pred_check
        %p1102 = pneg %p144
      $region46: #{_lambda_.5} parent=43 // pred_check_branch
        %1104 = sbr.rel (%p1102) target = $region48
      $region47: #{_lambda_.5} parent=43 // pred_region
        %s1105 = smul.u32 8, %s22
        %p1106 = scmp.lt.s32.totalorder %s21, 1
        %s1107 = scalar_select %p1106, %s21, 1
        %p1108 = scmp.lt.s32.totalorder %s1105, 7
        %s1109 = scalar_select %p1108, %s1105, 7
        %s1110 = smul.addr %s1107, 8
        %s1111 = sadd.s32 %s1109, %s1110
        %s1112 = smul.addr %s1111, 4
        %s1113 = scalar_lea.vmem %s4, %s1112
      $region48: #{_lambda_.5} parent=43 // pred_fallthru
        _
    $region44: #{_lambda_.5} parent=5 // pred_fallthru
      _
  $region6: #{_lambda_.5} parent=0 // loop_footer
    %s14 = sadd.s32 1, %s10
  $region7: #{_lambda_.5} parent=0 // loop_footer_branch
    %9 = sbr.rel target = $region3
  $region8: #{_lambda_.5} parent=0 // loop_exit
    _

// kernel: _lambda_.6
$region0: #{_lambda_.6}
  #allocation0 [shape = 'u32[]', space=smem, size = 0x4, offset = 0x4, fixed_abs, tag = 'smem constant byte address 0x4 - core index']
  #allocation1 [shape = 'u32[72,128]{1,0:T(1,128)}', space=vmem, size = 0x9000, scoped, tag = 'internal scratch']
  %s0 = inlined_call_operand.vmem [shape: bf16[2,1,5,2,5,32], index: 0, kind: input, shape index: {}]
  %s1 = inlined_call_operand.vmem [shape: bf16[3,32,32], index: 1, kind: input, shape index: {}]
  %s2 = inlined_call_operand.vmem [shape: bf16[3,16,32], index: 2, kind: input, shape index: {}]
  %s3 = inlined_call_operand.vmem [shape: f32[1,32], index: 3, kind: input, shape index: {}]
  %s4 = inlined_call_operand.vmem [shape: bf16[2,4,4,32], index: 4, kind: output, shape index: {}]
  %s5 = sld [smem:[#allocation0]]
  $region49: #{_lambda_.6} parent=0
    _
  %s7 = ssub.s32 1, %s5
  %s8 = scalar_select 0, %s7, %s5
  loop: start=0, step=1, limit=4
  $region2: #{_lambda_.6} parent=0 // loop_pre_header
    _
  $region3: #{_lambda_.6} parent=0 // loop_header
    %s10 = sphi 0, %s14
    %p11 = scmp.ge.s32.totalorder %s10, 4
    %s17 = sphi 0, %s29
    %s18 = sphi 0, %s25
    %s19 = sphi 0, %s17
    %s20 = sphi 0, %s18
    %s21 = sphi 0, %s19
    %s22 = sphi 0, %s20
    %s34 = sphi 0, %s36
    %s37 = sphi 0, %s34
    %s38 = sphi 0, %s37
    %s54 = sphi 0, %s38
    %s58 = sphi 0, %s58
    %s60 = sphi 0, %s58
    %s61 = sphi 0, %s60
    %s75 = sphi 0, %s61
    %s79 = sphi 0, %s79
    %s81 = sphi 0, %s79
    %s82 = sphi 0, %s81
    %s96 = sphi 0, %s82
    %s100 = sphi 0, %s100
    %s102 = sphi 0, %s100
    %s103 = sphi 0, %s102
    %s117 = sphi 0, %s103
    %s125 = sphi 0, %s127
    %s128 = sphi 0, %s125
    %s129 = sphi 0, %s128
    %s145 = sphi 0, %s129
  $region4: #{_lambda_.6} parent=0 // loop_header_branch
    %13 = sbr.rel (%p11) target = $region8
  $region5: #{_lambda_.6} parent=0 // loop_body
    %s15 = ssub.s32 %s10, 1
    %s16 = ssub.s32 %s10, 2
    %s23 = sadd.s32 1, %s18
    %p24 = scmp.ge.s32.totalorder %s23, 1
    %s25 = scalar_select %p24, 0, %s23
    %s26 = sadd.s32 1, %s17
    %s27 = scalar_select %p24, %s26, %s17
    %p28 = scmp.ge.s32.totalorder %s27, 2
    %s29 = scalar_select %p28, 0, %s27
    %s30 = ssub.s32 %s17, %s29
    %s31 = ssub.s32 %s18, %s25
    %s32 = sor.u32 %s30, %s31
    %p33 = scmp.eq.s32.totalorder %s32, 0
    %s35 = sadd.s32 %s34, 1
    %s36 = scalar_select %p33, %s34, %s35
    %p39 = pneg %p33
    %p40 = scmp.eq.s32.totalorder %s10, 1
    %p41 = por %p39, %p40
    %p42 = scmp.ne.s32.totalorder %s34, %s37
    %p43 = scmp.eq.s32.totalorder %s10, 0
    %p44 = por %p42, %p43
    %p45 = scmp.ne.s32.totalorder %s34, %s37
    %p46 = scmp.eq.s32.totalorder %s15, 1
    %p47 = por %p45, %p46
    %p48 = scmp.ne.s32.totalorder %s37, %s38
    %p49 = scmp.eq.s32.totalorder %s15, 0
    %p50 = por %p48, %p49
    %p51 = scmp.ne.s32.totalorder %s37, %s38
    %p52 = scmp.eq.s32.totalorder %s16, 1
    %p53 = por %p51, %p52
    %p55 = scmp.ne.s32.totalorder %s38, %s54
    %p56 = scmp.eq.s32.totalorder %s16, 0
    %p57 = por %p55, %p56
    %s59 = sadd.s32 %s58, 1
    %p62 = scmp.eq.s32.totalorder %s10, 1
    %p63 = scmp.ne.s32.totalorder %s58, %s60
    %p64 = scmp.eq.s32.totalorder %s10, 0
    %p65 = por %p63, %p64
    %p66 = scmp.ne.s32.totalorder %s58, %s60
    %p67 = scmp.eq.s32.totalorder %s15, 1
    %p68 = por %p66, %p67
    %p69 = scmp.ne.s32.totalorder %s60, %s61
    %p70 = scmp.eq.s32.totalorder %s15, 0
    %p71 = por %p69, %p70
    %p72 = scmp.ne.s32.totalorder %s60, %s61
    %p73 = scmp.eq.s32.totalorder %s16, 1
    %p74 = por %p72, %p73
    %p76 = scmp.ne.s32.totalorder %s61, %s75
    %p77 = scmp.eq.s32.totalorder %s16, 0
    %p78 = por %p76, %p77
    %s80 = sadd.s32 %s79, 1
    %p83 = scmp.eq.s32.totalorder %s10, 1
    %p84 = scmp.ne.s32.totalorder %s79, %s81
    %p85 = scmp.eq.s32.totalorder %s10, 0
    %p86 = por %p84, %p85
    %p87 = scmp.ne.s32.totalorder %s79, %s81
    %p88 = scmp.eq.s32.totalorder %s15, 1
    %p89 = por %p87, %p88
    %p90 = scmp.ne.s32.totalorder %s81, %s82
    %p91 = scmp.eq.s32.totalorder %s15, 0
    %p92 = por %p90, %p91
    %p93 = scmp.ne.s32.totalorder %s81, %s82
    %p94 = scmp.eq.s32.totalorder %s16, 1
    %p95 = por %p93, %p94
    %p97 = scmp.ne.s32.totalorder %s82, %s96
    %p98 = scmp.eq.s32.totalorder %s16, 0
    %p99 = por %p97, %p98
    %s101 = sadd.s32 %s100, 1
    %p104 = scmp.eq.s32.totalorder %s10, 1
    %p105 = scmp.ne.s32.totalorder %s100, %s102
    %p106 = scmp.eq.s32.totalorder %s10, 0
    %p107 = por %p105, %p106
    %p108 = scmp.ne.s32.totalorder %s100, %s102
    %p109 = scmp.eq.s32.totalorder %s15, 1
    %p110 = por %p108, %p109
    %p111 = scmp.ne.s32.totalorder %s102, %s103
    %p112 = scmp.eq.s32.totalorder %s15, 0
    %p113 = por %p111, %p112
    %p114 = scmp.ne.s32.totalorder %s102, %s103
    %p115 = scmp.eq.s32.totalorder %s16, 1
    %p116 = por %p114, %p115
    %p118 = scmp.ne.s32.totalorder %s103, %s117
    %p119 = scmp.eq.s32.totalorder %s16, 0
    %p120 = por %p118, %p119
    %s121 = ssub.s32 %s17, %s29
    %s122 = ssub.s32 %s18, %s25
    %s123 = sor.u32 %s121, %s122
    %p124 = scmp.eq.s32.totalorder %s123, 0
    %s126 = sadd.s32 %s125, 1
    %s127 = scalar_select %p124, %s125, %s126
    %p130 = pneg %p124
    %p131 = scmp.eq.s32.totalorder %s10, 1
    %p132 = por %p130, %p131
    %p133 = scmp.ne.s32.totalorder %s125, %s128
    %p134 = scmp.eq.s32.totalorder %s10, 0
    %p135 = por %p133, %p134
    %p136 = scmp.ne.s32.totalorder %s125, %s128
    %p137 = scmp.eq.s32.totalorder %s15, 1
    %p138 = por %p136, %p137
    %p139 = scmp.ne.s32.totalorder %s128, %s129
    %p140 = scmp.eq.s32.totalorder %s15, 0
    %p141 = por %p139, %p140
    %p142 = scmp.ne.s32.totalorder %s128, %s129
    %p143 = scmp.eq.s32.totalorder %s16, 1
    %p144 = por %p142, %p143
    %p146 = scmp.ne.s32.totalorder %s129, %s145
    %p147 = scmp.eq.s32.totalorder %s16, 0
    %p148 = por %p146, %p147
    %p149 = scmp.le.s32.totalorder 1, %s10
    %p150 = scmp.lt.s32.totalorder %s10, 3
    %p151 = pnand %p149, %p150
    %p152 = pneg %p151
    // Predicated region
    $region9: #{_lambda_.6} parent=5 // pred_check
      _
    $region10: #{_lambda_.6} parent=5 // pred_check_branch
      %154 = sbr.rel (%p151) target = $region12
    $region11: #{_lambda_.6} parent=5 // pred_region
      %s155 = ssub.s32 %s10, 1
      // Predicated region
      $region13: #{_lambda_.6} parent=11 // pred_check
        %p156 = pneg %p71
      $region14: #{_lambda_.6} parent=11 // pred_check_branch
        %158 = sbr.rel (%p156) target = $region16
      $region15: #{_lambda_.6} parent=11 // pred_region
        _
      $region16: #{_lambda_.6} parent=11 // pred_fallthru
        _
      // Predicated region
      $region17: #{_lambda_.6} parent=11 // pred_check
        %p159 = pneg %p92
      $region18: #{_lambda_.6} parent=11 // pred_check_branch
        %161 = sbr.rel (%p159) target = $region20
      $region19: #{_lambda_.6} parent=11 // pred_region
        _
      $region20: #{_lambda_.6} parent=11 // pred_fallthru
        _
      // Predicated region
      $region21: #{_lambda_.6} parent=11 // pred_check
        %p162 = pneg %p113
      $region22: #{_lambda_.6} parent=11 // pred_check_branch
        %164 = sbr.rel (%p162) target = $region24
      $region23: #{_lambda_.6} parent=11 // pred_region
        _
      $region24: #{_lambda_.6} parent=11 // pred_fallthru
        _
    $region12: #{_lambda_.6} parent=5 // pred_fallthru
      _
    %p165 = scmp.lt.s32.totalorder %s10, 2
    // Predicated region
    $region25: #{_lambda_.6} parent=5 // pred_check
      %p166 = pneg %p165
    $region26: #{_lambda_.6} parent=5 // pred_check_branch
      %168 = sbr.rel (%p166) target = $region28
    $region27: #{_lambda_.6} parent=5 // pred_region
      // Predicated region
      $region29: #{_lambda_.6} parent=27 // pred_check
        %p169 = pneg %p44
      $region30: #{_lambda_.6} parent=27 // pred_check_branch
        %171 = sbr.rel (%p169) target = $region32
      $region31: #{_lambda_.6} parent=27 // pred_region
        %p172 = scmp.lt.s32.totalorder %s17, 1
        %s173 = scalar_select %p172, %s17, 1
        %p174 = scmp.lt.s32.totalorder %s18, 0
        %s175 = scalar_select %p174, %s18, 0
        %s176 = smul.addr %s175, 10
        %s177 = smul.addr %s173, 10
        %s178 = sadd.s32 %s176, %s177
        %s179 = smul.addr %s178, 4
        %s180 = scalar_lea.vmem %s0, %s179
      $region32: #{_lambda_.6} parent=27 // pred_fallthru
        _
    $region28: #{_lambda_.6} parent=5 // pred_fallthru
      _
    %p181 = scmp.le.s32.totalorder 1, %s10
    %p182 = scmp.lt.s32.totalorder %s10, 3
    %p183 = pnand %p181, %p182
    %p184 = pneg %p183
    // Predicated region
    $region33: #{_lambda_.6} parent=5 // pred_check
      _
    $region34: #{_lambda_.6} parent=5 // pred_check_branch
      %186 = sbr.rel (%p183) target = $region36
    $region35: #{_lambda_.6} parent=5 // pred_region
      %s187 = ssub.s32 %s10, 1
      %p188 = scmp.lt.s32.totalorder %s19, 1
      %s189 = scalar_select %p188, %s19, 1
      %p190 = scmp.lt.s32.totalorder %s20, 0
      %s191 = scalar_select %p190, %s20, 0
      %s192 = smul.addr %s191, 10
      %s193 = smul.addr %s189, 10
      %s194 = sadd.s32 %s192, %s193
      %s195 = smul.addr %s194, 4
      %s196 = scalar_lea.vmem %s0, %s195
      %p197 = pneg %p50
      %p198 = pneg %p47
      %p199 = pneg %p71
      %p200 = pneg %p68
      %p201 = pneg %p92
      %p202 = pneg %p89
      %p203 = pneg %p113
      %p204 = pneg %p110
      %p205 = pneg %p141
      %p206 = pneg %p138
      %s207 = smul.u32 4, %s20
      %p208 = scmp.lt.s32.totalorder %s19, 1
      %s209 = scalar_select %p208, %s19, 1
      %p210 = scmp.lt.s32.totalorder %s207, 3
      %s211 = scalar_select %p210, %s207, 3
      %s212 = smul.addr %s209, 4
      %s213 = sadd.s32 %s211, %s212
      %s214 = smul.addr %s213, 2
      %s215 = scalar_lea.vmem %s4, %s214
      %p216 = scmp.lt.s32.totalorder %s19, 1
      %s217 = scalar_select %p216, %s19, 1
      %p218 = scmp.lt.s32.totalorder %s20, 0
      %s219 = scalar_select %p218, %s20, 0
      %s220 = smul.addr %s219, 10
      %s221 = smul.addr %s217, 10
      %s222 = sadd.s32 %s220, %s221
      %s223 = smul.addr %s222, 4
      %s224 = scalar_lea.vmem %s0, %s223
      %s225 = smul.u32 4, %s20
      %p226 = scmp.lt.s32.totalorder %s19, 1
      %s227 = scalar_select %p226, %s19, 1
      %p228 = scmp.lt.s32.totalorder %s225, 3
      %s229 = scalar_select %p228, %s225, 3
      %s230 = smul.addr %s227, 4
      %s231 = sadd.s32 %s229, %s230
      %s232 = smul.addr %s231, 2
      %s233 = scalar_lea.vmem %s4, %s232
      %s234 = smul.u32 4, %s20
      %v236 = vld [vmem:[%s224] sm:$0x3]
      %v237 = vld [vmem:[%s224 + $0x8] sm:$0x3]
      %v238 = vld [vmem:[%s224 + $0x10] sm:$0x3]
      %v239 = vld [vmem:[%s224 + $0x18] sm:$0x3]
      %v240 = vld [vmem:[%s1] sm:$0xf]
      %v241 = vld [vmem:[%s1 + $0x4] sm:$0xf]
      %v242 = vld [vmem:[%s1 + $0x8] sm:$0xf]
      %v243 = vld [vmem:[%s1 + $0xc] sm:$0xf]
      %v244 = vld [vmem:[%s224] sm:$0x7]
      %v245 = vld [vmem:[%s224 + $0x8] sm:$0x7]
      %v246 = vld [vmem:[%s224 + $0x10] sm:$0x7]
      %v247 = vld [vmem:[%s224 + $0x18] sm:$0x7]
      %v252 = vrot.slane %v244, 2
      %v253 = vrot.slane %v245, 2
      %v254 = vrot.slane %v246, 2
      %v255 = vrot.slane %v247, 2
      %vm256 = vcmask 1041408
      %v259 = vsel %vm256, %v244, %v252
      %vm260 = vcmask 1043458
      %v261 = vsel %vm260, %v244, %v252
      %v263 = vrot.slane %v261, 2
      %v266 = vsel %vm256, %v245, %v253
      %v267 = vsel %vm260, %v245, %v253
      %v269 = vrot.slane %v267, 2
      %v272 = vsel %vm256, %v246, %v254
      %v273 = vsel %vm260, %v246, %v254
      %v275 = vrot.slane %v273, 2
      %v278 = vsel %vm256, %v247, %v255
      %v279 = vsel %vm260, %v247, %v255
      %v281 = vrot.slane %v279, 2
      %vm282 = vsmask.f32 1280
      %vm283 = vsmask.f32 3336
      %vm284 = vmor %vm282, %vm283
      %vm285 = vsmask.f32 5392
      %vm286 = vmor %vm284, %vm285
      %vm287 = vsmask.f32 7448
      %vm288 = vmor %vm286, %vm287
      %v289 = vshrl.u32 %v259, 16
      %v291 = vrot.slane %v289, 6
      %v292 = vshll.u32 %v259, 16
      %v294 = vrot.slane %v292, 7
      %v295 = vor.u32 %v291, %v294
      %v296 = vrot.slane %v295, 2
      %v298 = vshll.u32 %v263, 16
      %v300 = vrot.slane %v298, 7
      %v301 = vsel %vm288, %v296, %v300
      %v302 = vshrl.u32 %v266, 16
      %v304 = vrot.slane %v302, 6
      %v305 = vshll.u32 %v266, 16
      %v307 = vrot.slane %v305, 7
      %v308 = vor.u32 %v304, %v307
      %v309 = vrot.slane %v308, 2
      %v311 = vshll.u32 %v269, 16
      %v313 = vrot.slane %v311, 7
      %v314 = vsel %vm288, %v309, %v313
      %v315 = vshrl.u32 %v272, 16
      %v317 = vrot.slane %v315, 6
      %v318 = vshll.u32 %v272, 16
      %v320 = vrot.slane %v318, 7
      %v321 = vor.u32 %v317, %v320
      %v322 = vrot.slane %v321, 2
      %v324 = vshll.u32 %v275, 16
      %v326 = vrot.slane %v324, 7
      %v327 = vsel %vm288, %v322, %v326
      %v328 = vshrl.u32 %v278, 16
      %v330 = vrot.slane %v328, 6
      %v331 = vshll.u32 %v278, 16
      %v333 = vrot.slane %v331, 7
      %v334 = vor.u32 %v330, %v333
      %v335 = vrot.slane %v334, 2
      %v337 = vshll.u32 %v281, 16
      %v339 = vrot.slane %v337, 7
      %v340 = vsel %vm288, %v335, %v339
      %v341 = vld [vmem:[%s2] sm:$0xf]
      %v342 = vld [vmem:[%s2 + $0x4] sm:$0xf]
      %344 = vst [vmem:[#allocation1] ss:$4 sm:$0xff] %v301
      %s346 = scalar_lea.vmem [#allocation1], 1
      %347 = vst [vmem:[%s346] ss:$4 sm:$0xff] %v314
      %s349 = scalar_lea.vmem [#allocation1], 2
      %350 = vst [vmem:[%s349] ss:$4 sm:$0xff] %v327
      %s352 = scalar_lea.vmem [#allocation1], 3
      %353 = vst [vmem:[%s352] ss:$4 sm:$0xff] %v340
      %v354 = vld.sshfl [vmem:[#allocation1] sm:$0xff pattern:$0x73625140]
      %v357 = vunpack.c.l.b16 %v341
      %v358 = vunpack.c.l.b16 %v342
      %v359 = vpack.c.b16 %v358, %v357
      %vm361 = vcmask 130048
      %v362 = vsel %vm361, %v354, 0
      %364 = vmatpush.bf16.msra.mxu0 0
      %365 = vmatpush.bf16.msra.mxu0 0
      %366 = vmatpush.bf16.msra.mxu0 0
      %367 = vmatpush.bf16.msra.mxu0 0
      %368 = vmatpush.bf16.msra.mxu0 0
      %369 = vmatpush.bf16.msra.mxu0 0
      %370 = vmatpush.bf16.msra.mxu0 0
      %371 = vmatpush.bf16.msra.mxu0 %v359
      %372 = vmatmul.bf16.gmra.mxu0 %v362
      %v373 = vpop.f32.mrf.mxu0
      %v374 = vadd.f32 0.0, %v373
      %v375 = vpop.f32.mrf.mxu0
      %v376 = vadd.f32 0.0, %v375
      %377 = vdwg.mxu0
      %379 = vst [vmem:[#allocation1] ss:$4 sm:$0xff] %v236
      %s381 = scalar_lea.vmem [#allocation1], 1
      %382 = vst [vmem:[%s381] ss:$4 sm:$0xff] %v237
      %s384 = scalar_lea.vmem [#allocation1], 2
      %385 = vst [vmem:[%s384] ss:$4 sm:$0xff] %v238
      %s387 = scalar_lea.vmem [#allocation1], 3
      %388 = vst [vmem:[%s387] ss:$4 sm:$0xff] %v239
      %v389 = vld.sshfl [vmem:[#allocation1] sm:$0xff pattern:$0x73625140]
      %v394 = vunpack.c.l.b16 %v240
      %v395 = vunpack.c.l.b16 %v241
      %v396 = vunpack.c.l.b16 %v242
      %v397 = vunpack.c.l.b16 %v243
      %v398 = vpack.c.b16 %v395, %v394
      %v399 = vpack.c.b16 %v397, %v396
      %vm402 = vcmask 261120
      %v403 = vsel %vm402, %v389, 0
      %405 = vmatpush.bf16.msra.mxu0 0
      %406 = vmatpush.bf16.msra.mxu0 0
      %407 = vmatpush.bf16.msra.mxu0 0
      %408 = vmatpush.bf16.msra.mxu0 0
      %409 = vmatpush.bf16.msra.mxu0 0
      %410 = vmatpush.bf16.msra.mxu0 0
      %411 = vmatpush.bf16.msra.mxu0 %v399
      %412 = vmatpush.bf16.msra.mxu0 %v398
      %413 = vmatmul.bf16.gmra.mxu0 %v403
      %v414 = vpop.f32.mrf.mxu0
      %v415 = vadd.f32 %v374, %v414
      %v416 = vpop.f32.mrf.mxu0
      %v417 = vadd.f32 %v376, %v416
      %418 = vdwg.mxu0
      %s419 = scalar_lea.vmem %s224, 4
      %v420 = vld [vmem:[%s419] sm:$0x3]
      %v421 = vld [vmem:[%s419 + $0x8] sm:$0x3]
      %v422 = vld [vmem:[%s419 + $0x10] sm:$0x3]
      %v423 = vld [vmem:[%s419 + $0x18] sm:$0x3]
      %s424 = scalar_lea.vmem %s1, 16
      %v425 = vld [vmem:[%s424] sm:$0xf]
      %v426 = vld [vmem:[%s424 + $0x4] sm:$0xf]
      %v427 = vld [vmem:[%s424 + $0x8] sm:$0xf]
      %v428 = vld [vmem:[%s424 + $0xc] sm:$0xf]
      %430 = vst [vmem:[#allocation1] ss:$4 sm:$0xff] %v420
      %s432 = scalar_lea.vmem [#allocation1], 1
      %433 = vst [vmem:[%s432] ss:$4 sm:$0xff] %v421
      %s435 = scalar_lea.vmem [#allocation1], 2
      %436 = vst [vmem:[%s435] ss:$4 sm:$0xff] %v422
      %s438 = scalar_lea.vmem [#allocation1], 3
      %439 = vst [vmem:[%s438] ss:$4 sm:$0xff] %v423
      %v440 = vld.sshfl [vmem:[#allocation1] sm:$0xff pattern:$0x73625140]
      %v445 = vunpack.c.l.b16 %v425
      %v446 = vunpack.c.l.b16 %v426
      %v447 = vunpack.c.l.b16 %v427
      %v448 = vunpack.c.l.b16 %v428
      %v449 = vpack.c.b16 %v446, %v445
      %v450 = vpack.c.b16 %v448, %v447
      %v453 = vsel %vm402, %v440, 0
      %455 = vmatpush.bf16.msra.mxu0 0
      %456 = vmatpush.bf16.msra.mxu0 0
      %457 = vmatpush.bf16.msra.mxu0 0
      %458 = vmatpush.bf16.msra.mxu0 0
      %459 = vmatpush.bf16.msra.mxu0 0
      %460 = vmatpush.bf16.msra.mxu0 0
      %461 = vmatpush.bf16.msra.mxu0 %v450
      %462 = vmatpush.bf16.msra.mxu0 %v449
      %463 = vmatmul.bf16.gmra.mxu0 %v453
      %v464 = vpop.f32.mrf.mxu0
      %v465 = vadd.f32 0.0, %v464
      %v466 = vpop.f32.mrf.mxu0
      %v467 = vadd.f32 0.0, %v466
      %468 = vdwg.mxu0
      %v469 = vadd.f32 %v415, %v465
      %v470 = vadd.f32 %v417, %v467
      %v471 = vld [vmem:[%s419] sm:$0x7]
      %v472 = vld [vmem:[%s419 + $0x8] sm:$0x7]
      %v473 = vld [vmem:[%s419 + $0x10] sm:$0x7]
      %v474 = vld [vmem:[%s419 + $0x18] sm:$0x7]
      %v479 = vrot.slane %v471, 2
      %v480 = vrot.slane %v472, 2
      %v481 = vrot.slane %v473, 2
      %v482 = vrot.slane %v474, 2
      %v485 = vsel %vm256, %v471, %v479
      %v486 = vsel %vm260, %v471, %v479
      %v488 = vrot.slane %v486, 2
      %v491 = vsel %vm256, %v472, %v480
      %v492 = vsel %vm260, %v472, %v480
      %v494 = vrot.slane %v492, 2
      %v497 = vsel %vm256, %v473, %v481
      %v498 = vsel %vm260, %v473, %v481
      %v500 = vrot.slane %v498, 2
      %v503 = vsel %vm256, %v474, %v482
      %v504 = vsel %vm260, %v474, %v482
      %v506 = vrot.slane %v504, 2
      %v507 = vshrl.u32 %v485, 16
      %v509 = vrot.slane %v507, 6
      %v510 = vshll.u32 %v485, 16
      %v512 = vrot.slane %v510, 7
      %v513 = vor.u32 %v509, %v512
      %v514 = vrot.slane %v513, 2
      %v516 = vshll.u32 %v488, 16
      %v518 = vrot.slane %v516, 7
      %v519 = vsel %vm288, %v514, %v518
      %v520 = vshrl.u32 %v491, 16
      %v522 = vrot.slane %v520, 6
      %v523 = vshll.u32 %v491, 16
      %v525 = vrot.slane %v523, 7
      %v526 = vor.u32 %v522, %v525
      %v527 = vrot.slane %v526, 2
      %v529 = vshll.u32 %v494, 16
      %v531 = vrot.slane %v529, 7
      %v532 = vsel %vm288, %v527, %v531
      %v533 = vshrl.u32 %v497, 16
      %v535 = vrot.slane %v533, 6
      %v536 = vshll.u32 %v497, 16
      %v538 = vrot.slane %v536, 7
      %v539 = vor.u32 %v535, %v538
      %v540 = vrot.slane %v539, 2
      %v542 = vshll.u32 %v500, 16
      %v544 = vrot.slane %v542, 7
      %v545 = vsel %vm288, %v540, %v544
      %v546 = vshrl.u32 %v503, 16
      %v548 = vrot.slane %v546, 6
      %v549 = vshll.u32 %v503, 16
      %v551 = vrot.slane %v549, 7
      %v552 = vor.u32 %v548, %v551
      %v553 = vrot.slane %v552, 2
      %v555 = vshll.u32 %v506, 16
      %v557 = vrot.slane %v555, 7
      %v558 = vsel %vm288, %v553, %v557
      %s559 = scalar_lea.vmem %s2, 8
      %v560 = vld [vmem:[%s559] sm:$0xf]
      %v561 = vld [vmem:[%s559 + $0x4] sm:$0xf]
      %563 = vst [vmem:[#allocation1] ss:$4 sm:$0xff] %v519
      %s565 = scalar_lea.vmem [#allocation1], 1
      %566 = vst [vmem:[%s565] ss:$4 sm:$0xff] %v532
      %s568 = scalar_lea.vmem [#allocation1], 2
      %569 = vst [vmem:[%s568] ss:$4 sm:$0xff] %v545
      %s571 = scalar_lea.vmem [#allocation1], 3
      %572 = vst [vmem:[%s571] ss:$4 sm:$0xff] %v558
      %v573 = vld.sshfl [vmem:[#allocation1] sm:$0xff pattern:$0x73625140]
      %v576 = vunpack.c.l.b16 %v560
      %v577 = vunpack.c.l.b16 %v561
      %v578 = vpack.c.b16 %v577, %v576
      %v580 = vsel %vm361, %v573, 0
      %582 = vmatpush.bf16.msra.mxu0 0
      %583 = vmatpush.bf16.msra.mxu0 0
      %584 = vmatpush.bf16.msra.mxu0 0
      %585 = vmatpush.bf16.msra.mxu0 0
      %586 = vmatpush.bf16.msra.mxu0 0
      %587 = vmatpush.bf16.msra.mxu0 0
      %588 = vmatpush.bf16.msra.mxu0 0
      %589 = vmatpush.bf16.msra.mxu0 %v578
      %590 = vmatmul.bf16.gmra.mxu0 %v580
      %v591 = vpop.f32.mrf.mxu0
      %v592 = vadd.f32 0.0, %v591
      %v593 = vpop.f32.mrf.mxu0
      %v594 = vadd.f32 0.0, %v593
      %595 = vdwg.mxu0
      %v596 = vadd.f32 %v469, %v592
      %v597 = vadd.f32 %v470, %v594
      %s598 = scalar_lea.vmem %s224, 8
      %v599 = vld [vmem:[%s598] sm:$0x3]
      %v600 = vld [vmem:[%s598 + $0x8] sm:$0x3]
      %v601 = vld [vmem:[%s598 + $0x10] sm:$0x3]
      %v602 = vld [vmem:[%s598 + $0x18] sm:$0x3]
      %s603 = scalar_lea.vmem %s1, 32
      %v604 = vld [vmem:[%s603] sm:$0xf]
      %v605 = vld [vmem:[%s603 + $0x4] sm:$0xf]
      %v606 = vld [vmem:[%s603 + $0x8] sm:$0xf]
      %v607 = vld [vmem:[%s603 + $0xc] sm:$0xf]
      %609 = vst [vmem:[#allocation1] ss:$4 sm:$0xff] %v599
      %s611 = scalar_lea.vmem [#allocation1], 1
      %612 = vst [vmem:[%s611] ss:$4 sm:$0xff] %v600
      %s614 = scalar_lea.vmem [#allocation1], 2
      %615 = vst [vmem:[%s614] ss:$4 sm:$0xff] %v601
      %s617 = scalar_lea.vmem [#allocation1], 3
      %618 = vst [vmem:[%s617] ss:$4 sm:$0xff] %v602
      %v619 = vld.sshfl [vmem:[#allocation1] sm:$0xff pattern:$0x73625140]
      %v624 = vunpack.c.l.b16 %v604
      %v625 = vunpack.c.l.b16 %v605
      %v626 = vunpack.c.l.b16 %v606
      %v627 = vunpack.c.l.b16 %v607
      %v628 = vpack.c.b16 %v625, %v624
      %v629 = vpack.c.b16 %v627, %v626
      %v632 = vsel %vm402, %v619, 0
      %634 = vmatpush.bf16.msra.mxu0 0
      %635 = vmatpush.bf16.msra.mxu0 0
      %636 = vmatpush.bf16.msra.mxu0 0
      %637 = vmatpush.bf16.msra.mxu0 0
      %638 = vmatpush.bf16.msra.mxu0 0
      %639 = vmatpush.bf16.msra.mxu0 0
      %640 = vmatpush.bf16.msra.mxu0 %v629
      %641 = vmatpush.bf16.msra.mxu0 %v628
      %642 = vmatmul.bf16.gmra.mxu0 %v632
      %v643 = vpop.f32.mrf.mxu0
      %v644 = vadd.f32 0.0, %v643
      %v645 = vpop.f32.mrf.mxu0
      %v646 = vadd.f32 0.0, %v645
      %647 = vdwg.mxu0
      %v648 = vadd.f32 %v596, %v644
      %v649 = vadd.f32 %v597, %v646
      %v650 = vld [vmem:[%s598] sm:$0x7]
      %v651 = vld [vmem:[%s598 + $0x8] sm:$0x7]
      %v652 = vld [vmem:[%s598 + $0x10] sm:$0x7]
      %v653 = vld [vmem:[%s598 + $0x18] sm:$0x7]
      %v658 = vrot.slane %v650, 2
      %v659 = vrot.slane %v651, 2
      %v660 = vrot.slane %v652, 2
      %v661 = vrot.slane %v653, 2
      %v664 = vsel %vm256, %v650, %v658
      %v665 = vsel %vm260, %v650, %v658
      %v667 = vrot.slane %v665, 2
      %v670 = vsel %vm256, %v651, %v659
      %v671 = vsel %vm260, %v651, %v659
      %v673 = vrot.slane %v671, 2
      %v676 = vsel %vm256, %v652, %v660
      %v677 = vsel %vm260, %v652, %v660
      %v679 = vrot.slane %v677, 2
      %v682 = vsel %vm256, %v653, %v661
      %v683 = vsel %vm260, %v653, %v661
      %v685 = vrot.slane %v683, 2
      %v686 = vshrl.u32 %v664, 16
      %v688 = vrot.slane %v686, 6
      %v689 = vshll.u32 %v664, 16
      %v691 = vrot.slane %v689, 7
      %v692 = vor.u32 %v688, %v691
      %v693 = vrot.slane %v692, 2
      %v695 = vshll.u32 %v667, 16
      %v697 = vrot.slane %v695, 7
      %v698 = vsel %vm288, %v693, %v697
      %v699 = vshrl.u32 %v670, 16
      %v701 = vrot.slane %v699, 6
      %v702 = vshll.u32 %v670, 16
      %v704 = vrot.slane %v702, 7
      %v705 = vor.u32 %v701, %v704
      %v706 = vrot.slane %v705, 2
      %v708 = vshll.u32 %v673, 16
      %v710 = vrot.slane %v708, 7
      %v711 = vsel %vm288, %v706, %v710
      %v712 = vshrl.u32 %v676, 16
      %v714 = vrot.slane %v712, 6
      %v715 = vshll.u32 %v676, 16
      %v717 = vrot.slane %v715, 7
      %v718 = vor.u32 %v714, %v717
      %v719 = vrot.slane %v718, 2
      %v721 = vshll.u32 %v679, 16
      %v723 = vrot.slane %v721, 7
      %v724 = vsel %vm288, %v719, %v723
      %v725 = vshrl.u32 %v682, 16
      %v727 = vrot.slane %v725, 6
      %v728 = vshll.u32 %v682, 16
      %v730 = vrot.slane %v728, 7
      %v731 = vor.u32 %v727, %v730
      %v732 = vrot.slane %v731, 2
      %v734 = vshll.u32 %v685, 16
      %v736 = vrot.slane %v734, 7
      %v737 = vsel %vm288, %v732, %v736
      %s738 = scalar_lea.vmem %s2, 16
      %v739 = vld [vmem:[%s738] sm:$0xf]
      %v740 = vld [vmem:[%s738 + $0x4] sm:$0xf]
      %742 = vst [vmem:[#allocation1] ss:$4 sm:$0xff] %v698
      %s744 = scalar_lea.vmem [#allocation1], 1
      %745 = vst [vmem:[%s744] ss:$4 sm:$0xff] %v711
      %s747 = scalar_lea.vmem [#allocation1], 2
      %748 = vst [vmem:[%s747] ss:$4 sm:$0xff] %v724
      %s750 = scalar_lea.vmem [#allocation1], 3
      %751 = vst [vmem:[%s750] ss:$4 sm:$0xff] %v737
      %v752 = vld.sshfl [vmem:[#allocation1] sm:$0xff pattern:$0x73625140]
      %v755 = vunpack.c.l.b16 %v739
      %v756 = vunpack.c.l.b16 %v740
      %v757 = vpack.c.b16 %v756, %v755
      %v759 = vsel %vm361, %v752, 0
      %761 = vmatpush.bf16.msra.mxu0 0
      %762 = vmatpush.bf16.msra.mxu0 0
      %763 = vmatpush.bf16.msra.mxu0 0
      %764 = vmatpush.bf16.msra.mxu0 0
      %765 = vmatpush.bf16.msra.mxu0 0
      %766 = vmatpush.bf16.msra.mxu0 0
      %767 = vmatpush.bf16.msra.mxu0 0
      %768 = vmatpush.bf16.msra.mxu0 %v757
      %769 = vmatmul.bf16.gmra.mxu0 %v759
      %v770 = vpop.f32.mrf.mxu0
      %v771 = vadd.f32 0.0, %v770
      %v772 = vpop.f32.mrf.mxu0
      %v773 = vadd.f32 0.0, %v772
      %774 = vdwg.mxu0
      %v775 = vadd.f32 %v648, %v771
      %v776 = vadd.f32 %v649, %v773
      %v777 = vld [vmem:[%s3] sm:$0x1]
      %v779 = vperm.slane %v777, 0
      %v781 = vadd.f32 %v775, %v779
      %v782 = vadd.f32 %v776, %v779
      %v783 = vmax.f32 %v781, 0.0
      %v784 = vmax.f32 %v782, 0.0
      %v787 = vrot.slane %v783, 4
      %v788 = vrot.slane %v784, 4
      %v791 = vpack.c.bf16 %v783, %v783
      %v792 = vpack.c.bf16 %v787, %v787
      %v793 = vpack.c.bf16 %v784, %v784
      %v794 = vpack.c.bf16 %v788, %v788
      %vm795 = vcmask 254976
      %796 = vst.msk [vmem:[%s233] sm:$0x3] %vm795, %v791
      %797 = vst.msk [vmem:[%s233 + $0x2] sm:$0x3] %vm795, %v792
      %798 = vst.msk [vmem:[%s233 + $0x4] sm:$0x3] %vm795, %v793
      %799 = vst.msk [vmem:[%s233 + $0x6] sm:$0x3] %vm795, %v794
      %s800 = smul.u32 4, %s20
      %p801 = scmp.lt.s32.totalorder %s19, 1
      %s802 = scalar_select %p801, %s19, 1
      %p803 = scmp.lt.s32.totalorder %s800, 3
      %s804 = scalar_select %p803, %s800, 3
      %s805 = smul.addr %s802, 4
      %s806 = sadd.s32 %s804, %s805
      %s807 = smul.addr %s806, 2
      %s808 = scalar_lea.vmem %s4, %s807
      // Predicated region
      $region37: #{_lambda_.6} parent=35 // pred_check
        %p809 = pneg %p138
      $region38: #{_lambda_.6} parent=35 // pred_check_branch
        %811 = sbr.rel (%p809) target = $region40
      $region39: #{_lambda_.6} parent=35 // pred_region
        %s812 = smul.u32 4, %s20
      $region40: #{_lambda_.6} parent=35 // pred_fallthru
        _
    $region36: #{_lambda_.6} parent=5 // pred_fallthru
      _
    %p813 = scmp.le.s32.totalorder 2, %s10
    // Predicated region
    $region41: #{_lambda_.6} parent=5 // pred_check
      %p814 = pneg %p813
    $region42: #{_lambda_.6} parent=5 // pred_check_branch
      %816 = sbr.rel (%p814) target = $region44
    $region43: #{_lambda_.6} parent=5 // pred_region
      %s817 = ssub.s32 %s10, 2
      // Predicated region
      $region45: #{_lambda_.6} parent=43 // pred_check
        %p818 = pneg %p144
      $region46: #{_lambda_.6} parent=43 // pred_check_branch
        %820 = sbr.rel (%p818) target = $region48
      $region47: #{_lambda_.6} parent=43 // pred_region
        %s821 = smul.u32 4, %s22
        %p822 = scmp.lt.s32.totalorder %s21, 1
        %s823 = scalar_select %p822, %s21, 1
        %p824 = scmp.lt.s32.totalorder %s821, 3
        %s825 = scalar_select %p824, %s821, 3
        %s826 = smul.addr %s823, 4
        %s827 = sadd.s32 %s825, %s826
        %s828 = smul.addr %s827, 2
        %s829 = scalar_lea.vmem %s4, %s828
      $region48: #{_lambda_.6} parent=43 // pred_fallthru
        _
    $region44: #{_lambda_.6} parent=5 // pred_fallthru
      _
  $region6: #{_lambda_.6} parent=0 // loop_footer
    %s14 = sadd.s32 1, %s10
  $region7: #{_lambda_.6} parent=0 // loop_footer_branch
    %9 = sbr.rel target = $region3
  $region8: #{_lambda_.6} parent=0 // loop_exit
    _

// kernel: _lambda_.7
$region0: #{_lambda_.7}
  #allocation0 [shape = 'u32[]', space=smem, size = 0x4, offset = 0x4, fixed_abs, tag = 'smem constant byte address 0x4 - core index']
  #allocation1 [shape = 'u32[72,128]{1,0:T(1,128)}', space=vmem, size = 0x9000, scoped, tag = 'internal scratch']
  #allocation2 [shape = 'f32[1,32]{1,0:T(1,128)}', space=vmem, size = 0x200, scoped, tag = 'scratch operand']
  %s0 = inlined_call_operand.vmem [shape: bf16[2,1,6,6,32], index: 0, kind: input, shape index: {}]
  %s1 = inlined_call_operand.vmem [shape: bf16[3,3,32,32], index: 1, kind: input, shape index: {}]
  %s2 = inlined_call_operand.vmem [shape: f32[1,32], index: 2, kind: input, shape index: {}]
  %s3 = inlined_call_operand.vmem [shape: f32[32,6], index: 3, kind: input, shape index: {}]
  %s4 = inlined_call_operand.vmem [shape: f32[1,6], index: 4, kind: input, shape index: {}]
  %s5 = inlined_call_operand.vmem [shape: f32[2,1,6], index: 5, kind: output, shape index: {}]
  %s6 = sld [smem:[#allocation0]]
  $region61: #{_lambda_.7} parent=0
    _
  %s8 = ssub.s32 1, %s6
  %s9 = scalar_select 0, %s8, %s6
  loop: start=0, step=1, limit=4
  $region2: #{_lambda_.7} parent=0 // loop_pre_header
    _
  $region3: #{_lambda_.7} parent=0 // loop_header
    %s11 = sphi 0, %s15
    %p12 = scmp.ge.s32.totalorder %s11, 4
    %s18 = sphi 0, %s30
    %s19 = sphi 0, %s26
    %s20 = sphi 0, %s18
    %s21 = sphi 0, %s19
    %s22 = sphi 0, %s20
    %s23 = sphi 0, %s21
    %s35 = sphi 0, %s37
    %s38 = sphi 0, %s35
    %s39 = sphi 0, %s38
    %s55 = sphi 0, %s39
    %s59 = sphi 0, %s59
    %s61 = sphi 0, %s59
    %s62 = sphi 0, %s61
    %s76 = sphi 0, %s62
    %s80 = sphi 0, %s80
    %s82 = sphi 0, %s80
    %s83 = sphi 0, %s82
    %s97 = sphi 0, %s83
    %s101 = sphi 0, %s101
    %s103 = sphi 0, %s101
    %s104 = sphi 0, %s103
    %s118 = sphi 0, %s104
    %s122 = sphi 0, %s122
    %s124 = sphi 0, %s122
    %s125 = sphi 0, %s124
    %s139 = sphi 0, %s125
    %s145 = sphi 0, %s147
    %s148 = sphi 0, %s145
    %s149 = sphi 0, %s148
    %s165 = sphi 0, %s149
  $region4: #{_lambda_.7} parent=0 // loop_header_branch
    %14 = sbr.rel (%p12) target = $region8
  $region5: #{_lambda_.7} parent=0 // loop_body
    %s16 = ssub.s32 %s11, 1
    %s17 = ssub.s32 %s11, 2
    %s24 = sadd.s32 1, %s19
    %p25 = scmp.ge.s32.totalorder %s24, 1
    %s26 = scalar_select %p25, 0, %s24
    %s27 = sadd.s32 1, %s18
    %s28 = scalar_select %p25, %s27, %s18
    %p29 = scmp.ge.s32.totalorder %s28, 2
    %s30 = scalar_select %p29, 0, %s28
    %s31 = ssub.s32 %s18, %s30
    %s32 = ssub.s32 %s19, %s26
    %s33 = sor.u32 %s31, %s32
    %p34 = scmp.eq.s32.totalorder %s33, 0
    %s36 = sadd.s32 %s35, 1
    %s37 = scalar_select %p34, %s35, %s36
    %p40 = pneg %p34
    %p41 = scmp.eq.s32.totalorder %s11, 1
    %p42 = por %p40, %p41
    %p43 = scmp.ne.s32.totalorder %s35, %s38
    %p44 = scmp.eq.s32.totalorder %s11, 0
    %p45 = por %p43, %p44
    %p46 = scmp.ne.s32.totalorder %s35, %s38
    %p47 = scmp.eq.s32.totalorder %s16, 1
    %p48 = por %p46, %p47
    %p49 = scmp.ne.s32.totalorder %s38, %s39
    %p50 = scmp.eq.s32.totalorder %s16, 0
    %p51 = por %p49, %p50
    %p52 = scmp.ne.s32.totalorder %s38, %s39
    %p53 = scmp.eq.s32.totalorder %s17, 1
    %p54 = por %p52, %p53
    %p56 = scmp.ne.s32.totalorder %s39, %s55
    %p57 = scmp.eq.s32.totalorder %s17, 0
    %p58 = por %p56, %p57
    %s60 = sadd.s32 %s59, 1
    %p63 = scmp.eq.s32.totalorder %s11, 1
    %p64 = scmp.ne.s32.totalorder %s59, %s61
    %p65 = scmp.eq.s32.totalorder %s11, 0
    %p66 = por %p64, %p65
    %p67 = scmp.ne.s32.totalorder %s59, %s61
    %p68 = scmp.eq.s32.totalorder %s16, 1
    %p69 = por %p67, %p68
    %p70 = scmp.ne.s32.totalorder %s61, %s62
    %p71 = scmp.eq.s32.totalorder %s16, 0
    %p72 = por %p70, %p71
    %p73 = scmp.ne.s32.totalorder %s61, %s62
    %p74 = scmp.eq.s32.totalorder %s17, 1
    %p75 = por %p73, %p74
    %p77 = scmp.ne.s32.totalorder %s62, %s76
    %p78 = scmp.eq.s32.totalorder %s17, 0
    %p79 = por %p77, %p78
    %s81 = sadd.s32 %s80, 1
    %p84 = scmp.eq.s32.totalorder %s11, 1
    %p85 = scmp.ne.s32.totalorder %s80, %s82
    %p86 = scmp.eq.s32.totalorder %s11, 0
    %p87 = por %p85, %p86
    %p88 = scmp.ne.s32.totalorder %s80, %s82
    %p89 = scmp.eq.s32.totalorder %s16, 1
    %p90 = por %p88, %p89
    %p91 = scmp.ne.s32.totalorder %s82, %s83
    %p92 = scmp.eq.s32.totalorder %s16, 0
    %p93 = por %p91, %p92
    %p94 = scmp.ne.s32.totalorder %s82, %s83
    %p95 = scmp.eq.s32.totalorder %s17, 1
    %p96 = por %p94, %p95
    %p98 = scmp.ne.s32.totalorder %s83, %s97
    %p99 = scmp.eq.s32.totalorder %s17, 0
    %p100 = por %p98, %p99
    %s102 = sadd.s32 %s101, 1
    %p105 = scmp.eq.s32.totalorder %s11, 1
    %p106 = scmp.ne.s32.totalorder %s101, %s103
    %p107 = scmp.eq.s32.totalorder %s11, 0
    %p108 = por %p106, %p107
    %p109 = scmp.ne.s32.totalorder %s101, %s103
    %p110 = scmp.eq.s32.totalorder %s16, 1
    %p111 = por %p109, %p110
    %p112 = scmp.ne.s32.totalorder %s103, %s104
    %p113 = scmp.eq.s32.totalorder %s16, 0
    %p114 = por %p112, %p113
    %p115 = scmp.ne.s32.totalorder %s103, %s104
    %p116 = scmp.eq.s32.totalorder %s17, 1
    %p117 = por %p115, %p116
    %p119 = scmp.ne.s32.totalorder %s104, %s118
    %p120 = scmp.eq.s32.totalorder %s17, 0
    %p121 = por %p119, %p120
    %s123 = sadd.s32 %s122, 1
    %p126 = scmp.eq.s32.totalorder %s11, 1
    %p127 = scmp.ne.s32.totalorder %s122, %s124
    %p128 = scmp.eq.s32.totalorder %s11, 0
    %p129 = por %p127, %p128
    %p130 = scmp.ne.s32.totalorder %s122, %s124
    %p131 = scmp.eq.s32.totalorder %s16, 1
    %p132 = por %p130, %p131
    %p133 = scmp.ne.s32.totalorder %s124, %s125
    %p134 = scmp.eq.s32.totalorder %s16, 0
    %p135 = por %p133, %p134
    %p136 = scmp.ne.s32.totalorder %s124, %s125
    %p137 = scmp.eq.s32.totalorder %s17, 1
    %p138 = por %p136, %p137
    %p140 = scmp.ne.s32.totalorder %s125, %s139
    %p141 = scmp.eq.s32.totalorder %s17, 0
    %p142 = por %p140, %p141
    %s143 = ssub.s32 %s18, %s30
    %p144 = scmp.eq.s32.totalorder %s143, 0
    %s146 = sadd.s32 %s145, 1
    %s147 = scalar_select %p144, %s145, %s146
    %p150 = pneg %p144
    %p151 = scmp.eq.s32.totalorder %s11, 1
    %p152 = por %p150, %p151
    %p153 = scmp.ne.s32.totalorder %s145, %s148
    %p154 = scmp.eq.s32.totalorder %s11, 0
    %p155 = por %p153, %p154
    %p156 = scmp.ne.s32.totalorder %s145, %s148
    %p157 = scmp.eq.s32.totalorder %s16, 1
    %p158 = por %p156, %p157
    %p159 = scmp.ne.s32.totalorder %s148, %s149
    %p160 = scmp.eq.s32.totalorder %s16, 0
    %p161 = por %p159, %p160
    %p162 = scmp.ne.s32.totalorder %s148, %s149
    %p163 = scmp.eq.s32.totalorder %s17, 1
    %p164 = por %p162, %p163
    %p166 = scmp.ne.s32.totalorder %s149, %s165
    %p167 = scmp.eq.s32.totalorder %s17, 0
    %p168 = por %p166, %p167
    %p169 = scmp.le.s32.totalorder 1, %s11
    %p170 = scmp.lt.s32.totalorder %s11, 3
    %p171 = pnand %p169, %p170
    %p172 = pneg %p171
    // Predicated region
    $region9: #{_lambda_.7} parent=5 // pred_check
      _
    $region10: #{_lambda_.7} parent=5 // pred_check_branch
      %174 = sbr.rel (%p171) target = $region12
    $region11: #{_lambda_.7} parent=5 // pred_region
      %s175 = ssub.s32 %s11, 1
      // Predicated region
      $region13: #{_lambda_.7} parent=11 // pred_check
        %p176 = pneg %p72
      $region14: #{_lambda_.7} parent=11 // pred_check_branch
        %178 = sbr.rel (%p176) target = $region16
      $region15: #{_lambda_.7} parent=11 // pred_region
        _
      $region16: #{_lambda_.7} parent=11 // pred_fallthru
        _
      // Predicated region
      $region17: #{_lambda_.7} parent=11 // pred_check
        %p179 = pneg %p93
      $region18: #{_lambda_.7} parent=11 // pred_check_branch
        %181 = sbr.rel (%p179) target = $region20
      $region19: #{_lambda_.7} parent=11 // pred_region
        _
      $region20: #{_lambda_.7} parent=11 // pred_fallthru
        _
      // Predicated region
      $region21: #{_lambda_.7} parent=11 // pred_check
        %p182 = pneg %p114
      $region22: #{_lambda_.7} parent=11 // pred_check_branch
        %184 = sbr.rel (%p182) target = $region24
      $region23: #{_lambda_.7} parent=11 // pred_region
        _
      $region24: #{_lambda_.7} parent=11 // pred_fallthru
        _
      // Predicated region
      $region25: #{_lambda_.7} parent=11 // pred_check
        %p185 = pneg %p135
      $region26: #{_lambda_.7} parent=11 // pred_check_branch
        %187 = sbr.rel (%p185) target = $region28
      $region27: #{_lambda_.7} parent=11 // pred_region
        _
      $region28: #{_lambda_.7} parent=11 // pred_fallthru
        _
    $region12: #{_lambda_.7} parent=5 // pred_fallthru
      _
    %p188 = scmp.lt.s32.totalorder %s11, 2
    // Predicated region
    $region29: #{_lambda_.7} parent=5 // pred_check
      %p189 = pneg %p188
    $region30: #{_lambda_.7} parent=5 // pred_check_branch
      %191 = sbr.rel (%p189) target = $region32
    $region31: #{_lambda_.7} parent=5 // pred_region
      // Predicated region
      $region33: #{_lambda_.7} parent=31 // pred_check
        %p192 = pneg %p45
      $region34: #{_lambda_.7} parent=31 // pred_check_branch
        %194 = sbr.rel (%p192) target = $region36
      $region35: #{_lambda_.7} parent=31 // pred_region
        %p195 = scmp.lt.s32.totalorder %s18, 1
        %s196 = scalar_select %p195, %s18, 1
        %p197 = scmp.lt.s32.totalorder %s19, 0
        %s198 = scalar_select %p197, %s19, 0
        %s199 = smul.addr %s198, 6
        %s200 = smul.addr %s196, 6
        %s201 = sadd.s32 %s199, %s200
        %s202 = smul.addr %s201, 4
        %s203 = scalar_lea.vmem %s0, %s202
      $region36: #{_lambda_.7} parent=31 // pred_fallthru
        _
    $region32: #{_lambda_.7} parent=5 // pred_fallthru
      _
    %p204 = scmp.le.s32.totalorder 1, %s11
    %p205 = scmp.lt.s32.totalorder %s11, 3
    %p206 = pnand %p204, %p205
    %p207 = pneg %p206
    // Predicated region
    $region37: #{_lambda_.7} parent=5 // pred_check
      _
    $region38: #{_lambda_.7} parent=5 // pred_check_branch
      %209 = sbr.rel (%p206) target = $region40
    $region39: #{_lambda_.7} parent=5 // pred_region
      %s210 = ssub.s32 %s11, 1
      %p211 = scmp.lt.s32.totalorder %s20, 1
      %s212 = scalar_select %p211, %s20, 1
      %p213 = scmp.lt.s32.totalorder %s21, 0
      %s214 = scalar_select %p213, %s21, 0
      %s215 = smul.addr %s214, 6
      %s216 = smul.addr %s212, 6
      %s217 = sadd.s32 %s215, %s216
      %s218 = smul.addr %s217, 4
      %s219 = scalar_lea.vmem %s0, %s218
      %p220 = pneg %p51
      %p221 = pneg %p48
      %p222 = pneg %p72
      %p223 = pneg %p69
      %p224 = pneg %p93
      %p225 = pneg %p90
      %p226 = pneg %p114
      %p227 = pneg %p111
      %p228 = pneg %p135
      %p229 = pneg %p132
      %p230 = pneg %p161
      %p231 = pneg %p158
      %p232 = scmp.lt.s32.totalorder %s20, 1
      %s233 = scalar_select %p232, %s20, 1
      %s234 = scalar_lea.vmem %s5, %s233
      %p235 = scmp.lt.s32.totalorder %s20, 1
      %s236 = scalar_select %p235, %s20, 1
      %p237 = scmp.lt.s32.totalorder %s21, 0
      %s238 = scalar_select %p237, %s21, 0
      %s239 = smul.addr %s238, 6
      %s240 = smul.addr %s236, 6
      %s241 = sadd.s32 %s239, %s240
      %s242 = smul.addr %s241, 4
      %s243 = scalar_lea.vmem %s0, %s242
      %p244 = scmp.lt.s32.totalorder %s20, 1
      %s245 = scalar_select %p244, %s20, 1
      %s246 = scalar_lea.vmem %s5, %s245
      %p248 = scmp.eq.s32.totalorder %s21, 0
      // Predicated region
      $region41: #{_lambda_.7} parent=39 // pred_check
        %p249 = pneg %p248
      $region42: #{_lambda_.7} parent=39 // pred_check_branch
        %251 = sbr.rel (%p249) target = $region44
      $region43: #{_lambda_.7} parent=39 // pred_region
        %vm252 = vcmask 253952
        %253 = vst.msk [vmem:[#allocation2] sm:$0x1] %vm252, 0.0
      $region44: #{_lambda_.7} parent=39 // pred_fallthru
        _
      %v254 = vld [vmem:[%s243] sm:$0x3]
      %v255 = vld [vmem:[%s243 + $0x4] sm:$0x3]
      %v256 = vld [vmem:[%s243 + $0x8] sm:$0x3]
      %v257 = vld [vmem:[%s243 + $0xc] sm:$0x3]
      %v258 = vld [vmem:[%s1] sm:$0xf]
      %v259 = vld [vmem:[%s1 + $0x4] sm:$0xf]
      %v260 = vld [vmem:[%s1 + $0x8] sm:$0xf]
      %v261 = vld [vmem:[%s1 + $0xc] sm:$0xf]
      %v262 = vld [vmem:[%s243] sm:$0x7]
      %v263 = vld [vmem:[%s243 + $0x4] sm:$0x7]
      %v264 = vld [vmem:[%s243 + $0x8] sm:$0x7]
      %v265 = vld [vmem:[%s243 + $0xc] sm:$0x7]
      %v270 = vrot.slane %v262, 2
      %v271 = vrot.slane %v263, 2
      %v272 = vrot.slane %v264, 2
      %v273 = vrot.slane %v265, 2
      %vm274 = vcmask 1041408
      %v277 = vsel %vm274, %v262, %v270
      %vm278 = vcmask 1043458
      %v279 = vsel %vm278, %v262, %v270
      %v281 = vrot.slane %v279, 2
      %v284 = vsel %vm274, %v263, %v271
      %v285 = vsel %vm278, %v263, %v271
      %v287 = vrot.slane %v285, 2
      %v290 = vsel %vm274, %v264, %v272
      %v291 = vsel %vm278, %v264, %v272
      %v293 = vrot.slane %v291, 2
      %v296 = vsel %vm274, %v265, %v273
      %v297 = vsel %vm278, %v265, %v273
      %v299 = vrot.slane %v297, 2
      %vm300 = vsmask.f32 1280
      %vm301 = vsmask.f32 3336
      %vm302 = vmor %vm300, %vm301
      %vm303 = vsmask.f32 5392
      %vm304 = vmor %vm302, %vm303
      %vm305 = vsmask.f32 7448
      %vm306 = vmor %vm304, %vm305
      %v307 = vshrl.u32 %v277, 16
      %v309 = vrot.slane %v307, 6
      %v310 = vshll.u32 %v277, 16
      %v312 = vrot.slane %v310, 7
      %v313 = vor.u32 %v309, %v312
      %v314 = vrot.slane %v313, 2
      %v316 = vshll.u32 %v281, 16
      %v318 = vrot.slane %v316, 7
      %v319 = vsel %vm306, %v314, %v318
      %v320 = vshrl.u32 %v284, 16
      %v322 = vrot.slane %v320, 6
      %v323 = vshll.u32 %v284, 16
      %v325 = vrot.slane %v323, 7
      %v326 = vor.u32 %v322, %v325
      %v327 = vrot.slane %v326, 2
      %v329 = vshll.u32 %v287, 16
      %v331 = vrot.slane %v329, 7
      %v332 = vsel %vm306, %v327, %v331
      %v333 = vshrl.u32 %v290, 16
      %v335 = vrot.slane %v333, 6
      %v336 = vshll.u32 %v290, 16
      %v338 = vrot.slane %v336, 7
      %v339 = vor.u32 %v335, %v338
      %v340 = vrot.slane %v339, 2
      %v342 = vshll.u32 %v293, 16
      %v344 = vrot.slane %v342, 7
      %v345 = vsel %vm306, %v340, %v344
      %v346 = vshrl.u32 %v296, 16
      %v348 = vrot.slane %v346, 6
      %v349 = vshll.u32 %v296, 16
      %v351 = vrot.slane %v349, 7
      %v352 = vor.u32 %v348, %v351
      %v353 = vrot.slane %v352, 2
      %v355 = vshll.u32 %v299, 16
      %v357 = vrot.slane %v355, 7
      %v358 = vsel %vm306, %v353, %v357
      %s359 = scalar_lea.vmem %s1, 16
      %v360 = vld [vmem:[%s359] sm:$0xf]
      %v361 = vld [vmem:[%s359 + $0x4] sm:$0xf]
      %v362 = vld [vmem:[%s359 + $0x8] sm:$0xf]
      %v363 = vld [vmem:[%s359 + $0xc] sm:$0xf]
      %365 = vst [vmem:[#allocation1] ss:$4 sm:$0xff] %v319
      %s367 = scalar_lea.vmem [#allocation1], 1
      %368 = vst [vmem:[%s367] ss:$4 sm:$0xff] %v332
      %s370 = scalar_lea.vmem [#allocation1], 2
      %371 = vst [vmem:[%s370] ss:$4 sm:$0xff] %v345
      %s373 = scalar_lea.vmem [#allocation1], 3
      %374 = vst [vmem:[%s373] ss:$4 sm:$0xff] %v358
      %v375 = vld.sshfl [vmem:[#allocation1] sm:$0xff pattern:$0x73625140]
      %v380 = vunpack.c.l.b16 %v360
      %v381 = vunpack.c.l.b16 %v361
      %v382 = vunpack.c.l.b16 %v362
      %v383 = vunpack.c.l.b16 %v363
      %v384 = vpack.c.b16 %v381, %v380
      %v385 = vpack.c.b16 %v383, %v382
      %vm388 = vcmask 261120
      %v389 = vsel %vm388, %v375, 0
      %391 = vmatpush.bf16.msra.mxu0 0
      %392 = vmatpush.bf16.msra.mxu0 0
      %393 = vmatpush.bf16.msra.mxu0 0
      %394 = vmatpush.bf16.msra.mxu0 0
      %395 = vmatpush.bf16.msra.mxu0 0
      %396 = vmatpush.bf16.msra.mxu0 0
      %397 = vmatpush.bf16.msra.mxu0 %v385
      %398 = vmatpush.bf16.msra.mxu0 %v384
      %399 = vmatmul.bf16.gmra.mxu0 %v389
      %v400 = vpop.f32.mrf.mxu0
      %v401 = vadd.f32 0.0, %v400
      %v402 = vpop.f32.mrf.mxu0
      %v403 = vadd.f32 0.0, %v402
      %404 = vdwg.mxu0
      %406 = vst [vmem:[#allocation1] ss:$4 sm:$0xff] %v254
      %s408 = scalar_lea.vmem [#allocation1], 1
      %409 = vst [vmem:[%s408] ss:$4 sm:$0xff] %v255
      %s411 = scalar_lea.vmem [#allocation1], 2
      %412 = vst [vmem:[%s411] ss:$4 sm:$0xff] %v256
      %s414 = scalar_lea.vmem [#allocation1], 3
      %415 = vst [vmem:[%s414] ss:$4 sm:$0xff] %v257
      %v416 = vld.sshfl [vmem:[#allocation1] sm:$0xff pattern:$0x73625140]
      %v421 = vunpack.c.l.b16 %v258
      %v422 = vunpack.c.l.b16 %v259
      %v423 = vunpack.c.l.b16 %v260
      %v424 = vunpack.c.l.b16 %v261
      %v425 = vpack.c.b16 %v422, %v421
      %v426 = vpack.c.b16 %v424, %v423
      %v429 = vsel %vm388, %v416, 0
      %431 = vmatpush.bf16.msra.mxu0 0
      %432 = vmatpush.bf16.msra.mxu0 0
      %433 = vmatpush.bf16.msra.mxu0 0
      %434 = vmatpush.bf16.msra.mxu0 0
      %435 = vmatpush.bf16.msra.mxu0 0
      %436 = vmatpush.bf16.msra.mxu0 0
      %437 = vmatpush.bf16.msra.mxu0 %v426
      %438 = vmatpush.bf16.msra.mxu0 %v425
      %439 = vmatmul.bf16.gmra.mxu0 %v429
      %v440 = vpop.f32.mrf.mxu0
      %v441 = vadd.f32 %v401, %v440
      %v442 = vpop.f32.mrf.mxu0
      %v443 = vadd.f32 %v403, %v442
      %444 = vdwg.mxu0
      %v445 = vld [vmem:[%s243] sm:$0x6]
      %v446 = vld [vmem:[%s243 + $0x4] sm:$0x6]
      %v447 = vld [vmem:[%s243 + $0x8] sm:$0x6]
      %v448 = vld [vmem:[%s243 + $0xc] sm:$0x6]
      %v453 = vrot.slane %v445, 2
      %v454 = vrot.slane %v446, 2
      %v455 = vrot.slane %v447, 2
      %v456 = vrot.slane %v448, 2
      %v459 = vsel %vm274, %v445, %v453
      %v461 = vsel %vm278, %v445, %v453
      %v463 = vrot.slane %v461, 2
      %v466 = vsel %vm274, %v446, %v454
      %v468 = vsel %vm278, %v446, %v454
      %v470 = vrot.slane %v468, 2
      %v473 = vsel %vm274, %v447, %v455
      %v475 = vsel %vm278, %v447, %v455
      %v477 = vrot.slane %v475, 2
      %v480 = vsel %vm274, %v448, %v456
      %v482 = vsel %vm278, %v448, %v456
      %v484 = vrot.slane %v482, 2
      %vm485 = vcmask 1040384
      %vm486 = vcmask 1042434
      %vm487 = vmor %vm485, %vm486
      %vm488 = vcmask 1044484
      %vm489 = vmor %vm487, %vm488
      %vm490 = vcmask 1046534
      %vm491 = vmor %vm489, %vm490
      %v492 = vrot.slane %v459, 7
      %v493 = vrot.slane %v492, 2
      %v494 = vrot.slane %v463, 7
      %v495 = vsel %vm491, %v493, %v494
      %v496 = vrot.slane %v466, 7
      %v497 = vrot.slane %v496, 2
      %v498 = vrot.slane %v470, 7
      %v499 = vsel %vm491, %v497, %v498
      %v500 = vrot.slane %v473, 7
      %v501 = vrot.slane %v500, 2
      %v502 = vrot.slane %v477, 7
      %v503 = vsel %vm491, %v501, %v502
      %v504 = vrot.slane %v480, 7
      %v505 = vrot.slane %v504, 2
      %v506 = vrot.slane %v484, 7
      %v507 = vsel %vm491, %v505, %v506
      %s508 = scalar_lea.vmem %s1, 32
      %v509 = vld [vmem:[%s508] sm:$0xf]
      %v510 = vld [vmem:[%s508 + $0x4] sm:$0xf]
      %v511 = vld [vmem:[%s508 + $0x8] sm:$0xf]
      %v512 = vld [vmem:[%s508 + $0xc] sm:$0xf]
      %514 = vst [vmem:[#allocation1] ss:$4 sm:$0xff] %v495
      %s516 = scalar_lea.vmem [#allocation1], 1
      %517 = vst [vmem:[%s516] ss:$4 sm:$0xff] %v499
      %s519 = scalar_lea.vmem [#allocation1], 2
      %520 = vst [vmem:[%s519] ss:$4 sm:$0xff] %v503
      %s522 = scalar_lea.vmem [#allocation1], 3
      %523 = vst [vmem:[%s522] ss:$4 sm:$0xff] %v507
      %v524 = vld.sshfl [vmem:[#allocation1] sm:$0xff pattern:$0x73625140]
      %v529 = vunpack.c.l.b16 %v509
      %v530 = vunpack.c.l.b16 %v510
      %v531 = vunpack.c.l.b16 %v511
      %v532 = vunpack.c.l.b16 %v512
      %v533 = vpack.c.b16 %v530, %v529
      %v534 = vpack.c.b16 %v532, %v531
      %v537 = vsel %vm388, %v524, 0
      %539 = vmatpush.bf16.msra.mxu0 0
      %540 = vmatpush.bf16.msra.mxu0 0
      %541 = vmatpush.bf16.msra.mxu0 0
      %542 = vmatpush.bf16.msra.mxu0 0
      %543 = vmatpush.bf16.msra.mxu0 0
      %544 = vmatpush.bf16.msra.mxu0 0
      %545 = vmatpush.bf16.msra.mxu0 %v534
      %546 = vmatpush.bf16.msra.mxu0 %v533
      %547 = vmatmul.bf16.gmra.mxu0 %v537
      %v548 = vpop.f32.mrf.mxu0
      %v549 = vadd.f32 0.0, %v548
      %v550 = vpop.f32.mrf.mxu0
      %v551 = vadd.f32 0.0, %v550
      %552 = vdwg.mxu0
      %v553 = vadd.f32 %v441, %v549
      %v554 = vadd.f32 %v443, %v551
      %s555 = scalar_lea.vmem %s243, 4
      %v556 = vld [vmem:[%s555] sm:$0x3]
      %v557 = vld [vmem:[%s555 + $0x4] sm:$0x3]
      %v558 = vld [vmem:[%s555 + $0x8] sm:$0x3]
      %v559 = vld [vmem:[%s555 + $0xc] sm:$0x3]
      %s560 = scalar_lea.vmem %s1, 48
      %v561 = vld [vmem:[%s560] sm:$0xf]
      %v562 = vld [vmem:[%s560 + $0x4] sm:$0xf]
      %v563 = vld [vmem:[%s560 + $0x8] sm:$0xf]
      %v564 = vld [vmem:[%s560 + $0xc] sm:$0xf]
      %566 = vst [vmem:[#allocation1] ss:$4 sm:$0xff] %v556
      %s568 = scalar_lea.vmem [#allocation1], 1
      %569 = vst [vmem:[%s568] ss:$4 sm:$0xff] %v557
      %s571 = scalar_lea.vmem [#allocation1], 2
      %572 = vst [vmem:[%s571] ss:$4 sm:$0xff] %v558
      %s574 = scalar_lea.vmem [#allocation1], 3
      %575 = vst [vmem:[%s574] ss:$4 sm:$0xff] %v559
      %v576 = vld.sshfl [vmem:[#allocation1] sm:$0xff pattern:$0x73625140]
      %v581 = vunpack.c.l.b16 %v561
      %v582 = vunpack.c.l.b16 %v562
      %v583 = vunpack.c.l.b16 %v563
      %v584 = vunpack.c.l.b16 %v564
      %v585 = vpack.c.b16 %v582, %v581
      %v586 = vpack.c.b16 %v584, %v583
      %v589 = vsel %vm388, %v576, 0
      %591 = vmatpush.bf16.msra.mxu0 0
      %592 = vmatpush.bf16.msra.mxu0 0
      %593 = vmatpush.bf16.msra.mxu0 0
      %594 = vmatpush.bf16.msra.mxu0 0
      %595 = vmatpush.bf16.msra.mxu0 0
      %596 = vmatpush.bf16.msra.mxu0 0
      %597 = vmatpush.bf16.msra.mxu0 %v586
      %598 = vmatpush.bf16.msra.mxu0 %v585
      %599 = vmatmul.bf16.gmra.mxu0 %v589
      %v600 = vpop.f32.mrf.mxu0
      %v601 = vadd.f32 0.0, %v600
      %v602 = vpop.f32.mrf.mxu0
      %v603 = vadd.f32 0.0, %v602
      %604 = vdwg.mxu0
      %v605 = vadd.f32 %v553, %v601
      %v606 = vadd.f32 %v554, %v603
      %v607 = vld [vmem:[%s555] sm:$0x7]
      %v608 = vld [vmem:[%s555 + $0x4] sm:$0x7]
      %v609 = vld [vmem:[%s555 + $0x8] sm:$0x7]
      %v610 = vld [vmem:[%s555 + $0xc] sm:$0x7]
      %v615 = vrot.slane %v607, 2
      %v616 = vrot.slane %v608, 2
      %v617 = vrot.slane %v609, 2
      %v618 = vrot.slane %v610, 2
      %v621 = vsel %vm274, %v607, %v615
      %v622 = vsel %vm278, %v607, %v615
      %v624 = vrot.slane %v622, 2
      %v627 = vsel %vm274, %v608, %v616
      %v628 = vsel %vm278, %v608, %v616
      %v630 = vrot.slane %v628, 2
      %v633 = vsel %vm274, %v609, %v617
      %v634 = vsel %vm278, %v609, %v617
      %v636 = vrot.slane %v634, 2
      %v639 = vsel %vm274, %v610, %v618
      %v640 = vsel %vm278, %v610, %v618
      %v642 = vrot.slane %v640, 2
      %v643 = vshrl.u32 %v621, 16
      %v645 = vrot.slane %v643, 6
      %v646 = vshll.u32 %v621, 16
      %v648 = vrot.slane %v646, 7
      %v649 = vor.u32 %v645, %v648
      %v650 = vrot.slane %v649, 2
      %v652 = vshll.u32 %v624, 16
      %v654 = vrot.slane %v652, 7
      %v655 = vsel %vm306, %v650, %v654
      %v656 = vshrl.u32 %v627, 16
      %v658 = vrot.slane %v656, 6
      %v659 = vshll.u32 %v627, 16
      %v661 = vrot.slane %v659, 7
      %v662 = vor.u32 %v658, %v661
      %v663 = vrot.slane %v662, 2
      %v665 = vshll.u32 %v630, 16
      %v667 = vrot.slane %v665, 7
      %v668 = vsel %vm306, %v663, %v667
      %v669 = vshrl.u32 %v633, 16
      %v671 = vrot.slane %v669, 6
      %v672 = vshll.u32 %v633, 16
      %v674 = vrot.slane %v672, 7
      %v675 = vor.u32 %v671, %v674
      %v676 = vrot.slane %v675, 2
      %v678 = vshll.u32 %v636, 16
      %v680 = vrot.slane %v678, 7
      %v681 = vsel %vm306, %v676, %v680
      %v682 = vshrl.u32 %v639, 16
      %v684 = vrot.slane %v682, 6
      %v685 = vshll.u32 %v639, 16
      %v687 = vrot.slane %v685, 7
      %v688 = vor.u32 %v684, %v687
      %v689 = vrot.slane %v688, 2
      %v691 = vshll.u32 %v642, 16
      %v693 = vrot.slane %v691, 7
      %v694 = vsel %vm306, %v689, %v693
      %s695 = scalar_lea.vmem %s1, 64
      %v696 = vld [vmem:[%s695] sm:$0xf]
      %v697 = vld [vmem:[%s695 + $0x4] sm:$0xf]
      %v698 = vld [vmem:[%s695 + $0x8] sm:$0xf]
      %v699 = vld [vmem:[%s695 + $0xc] sm:$0xf]
      %701 = vst [vmem:[#allocation1] ss:$4 sm:$0xff] %v655
      %s703 = scalar_lea.vmem [#allocation1], 1
      %704 = vst [vmem:[%s703] ss:$4 sm:$0xff] %v668
      %s706 = scalar_lea.vmem [#allocation1], 2
      %707 = vst [vmem:[%s706] ss:$4 sm:$0xff] %v681
      %s709 = scalar_lea.vmem [#allocation1], 3
      %710 = vst [vmem:[%s709] ss:$4 sm:$0xff] %v694
      %v711 = vld.sshfl [vmem:[#allocation1] sm:$0xff pattern:$0x73625140]
      %v716 = vunpack.c.l.b16 %v696
      %v717 = vunpack.c.l.b16 %v697
      %v718 = vunpack.c.l.b16 %v698
      %v719 = vunpack.c.l.b16 %v699
      %v720 = vpack.c.b16 %v717, %v716
      %v721 = vpack.c.b16 %v719, %v718
      %v724 = vsel %vm388, %v711, 0
      %726 = vmatpush.bf16.msra.mxu0 0
      %727 = vmatpush.bf16.msra.mxu0 0
      %728 = vmatpush.bf16.msra.mxu0 0
      %729 = vmatpush.bf16.msra.mxu0 0
      %730 = vmatpush.bf16.msra.mxu0 0
      %731 = vmatpush.bf16.msra.mxu0 0
      %732 = vmatpush.bf16.msra.mxu0 %v721
      %733 = vmatpush.bf16.msra.mxu0 %v720
      %734 = vmatmul.bf16.gmra.mxu0 %v724
      %v735 = vpop.f32.mrf.mxu0
      %v736 = vadd.f32 0.0, %v735
      %v737 = vpop.f32.mrf.mxu0
      %v738 = vadd.f32 0.0, %v737
      %739 = vdwg.mxu0
      %v740 = vadd.f32 %v605, %v736
      %v741 = vadd.f32 %v606, %v738
      %v742 = vld [vmem:[%s555] sm:$0x6]
      %v743 = vld [vmem:[%s555 + $0x4] sm:$0x6]
      %v744 = vld [vmem:[%s555 + $0x8] sm:$0x6]
      %v745 = vld [vmem:[%s555 + $0xc] sm:$0x6]
      %v750 = vrot.slane %v742, 2
      %v751 = vrot.slane %v743, 2
      %v752 = vrot.slane %v744, 2
      %v753 = vrot.slane %v745, 2
      %v756 = vsel %vm274, %v742, %v750
      %v758 = vsel %vm278, %v742, %v750
      %v760 = vrot.slane %v758, 2
      %v763 = vsel %vm274, %v743, %v751
      %v765 = vsel %vm278, %v743, %v751
      %v767 = vrot.slane %v765, 2
      %v770 = vsel %vm274, %v744, %v752
      %v772 = vsel %vm278, %v744, %v752
      %v774 = vrot.slane %v772, 2
      %v777 = vsel %vm274, %v745, %v753
      %v779 = vsel %vm278, %v745, %v753
      %v781 = vrot.slane %v779, 2
      %v782 = vrot.slane %v756, 7
      %v783 = vrot.slane %v782, 2
      %v784 = vrot.slane %v760, 7
      %v785 = vsel %vm491, %v783, %v784
      %v786 = vrot.slane %v763, 7
      %v787 = vrot.slane %v786, 2
      %v788 = vrot.slane %v767, 7
      %v789 = vsel %vm491, %v787, %v788
      %v790 = vrot.slane %v770, 7
      %v791 = vrot.slane %v790, 2
      %v792 = vrot.slane %v774, 7
      %v793 = vsel %vm491, %v791, %v792
      %v794 = vrot.slane %v777, 7
      %v795 = vrot.slane %v794, 2
      %v796 = vrot.slane %v781, 7
      %v797 = vsel %vm491, %v795, %v796
      %s798 = scalar_lea.vmem %s1, 80
      %v799 = vld [vmem:[%s798] sm:$0xf]
      %v800 = vld [vmem:[%s798 + $0x4] sm:$0xf]
      %v801 = vld [vmem:[%s798 + $0x8] sm:$0xf]
      %v802 = vld [vmem:[%s798 + $0xc] sm:$0xf]
      %804 = vst [vmem:[#allocation1] ss:$4 sm:$0xff] %v785
      %s806 = scalar_lea.vmem [#allocation1], 1
      %807 = vst [vmem:[%s806] ss:$4 sm:$0xff] %v789
      %s809 = scalar_lea.vmem [#allocation1], 2
      %810 = vst [vmem:[%s809] ss:$4 sm:$0xff] %v793
      %s812 = scalar_lea.vmem [#allocation1], 3
      %813 = vst [vmem:[%s812] ss:$4 sm:$0xff] %v797
      %v814 = vld.sshfl [vmem:[#allocation1] sm:$0xff pattern:$0x73625140]
      %v819 = vunpack.c.l.b16 %v799
      %v820 = vunpack.c.l.b16 %v800
      %v821 = vunpack.c.l.b16 %v801
      %v822 = vunpack.c.l.b16 %v802
      %v823 = vpack.c.b16 %v820, %v819
      %v824 = vpack.c.b16 %v822, %v821
      %v827 = vsel %vm388, %v814, 0
      %829 = vmatpush.bf16.msra.mxu0 0
      %830 = vmatpush.bf16.msra.mxu0 0
      %831 = vmatpush.bf16.msra.mxu0 0
      %832 = vmatpush.bf16.msra.mxu0 0
      %833 = vmatpush.bf16.msra.mxu0 0
      %834 = vmatpush.bf16.msra.mxu0 0
      %835 = vmatpush.bf16.msra.mxu0 %v824
      %836 = vmatpush.bf16.msra.mxu0 %v823
      %837 = vmatmul.bf16.gmra.mxu0 %v827
      %v838 = vpop.f32.mrf.mxu0
      %v839 = vadd.f32 0.0, %v838
      %v840 = vpop.f32.mrf.mxu0
      %v841 = vadd.f32 0.0, %v840
      %842 = vdwg.mxu0
      %v843 = vadd.f32 %v740, %v839
      %v844 = vadd.f32 %v741, %v841
      %s845 = scalar_lea.vmem %s243, 8
      %v846 = vld [vmem:[%s845] sm:$0x3]
      %v847 = vld [vmem:[%s845 + $0x4] sm:$0x3]
      %v848 = vld [vmem:[%s845 + $0x8] sm:$0x3]
      %v849 = vld [vmem:[%s845 + $0xc] sm:$0x3]
      %s850 = scalar_lea.vmem %s1, 96
      %v851 = vld [vmem:[%s850] sm:$0xf]
      %v852 = vld [vmem:[%s850 + $0x4] sm:$0xf]
      %v853 = vld [vmem:[%s850 + $0x8] sm:$0xf]
      %v854 = vld [vmem:[%s850 + $0xc] sm:$0xf]
      %856 = vst [vmem:[#allocation1] ss:$4 sm:$0xff] %v846
      %s858 = scalar_lea.vmem [#allocation1], 1
      %859 = vst [vmem:[%s858] ss:$4 sm:$0xff] %v847
      %s861 = scalar_lea.vmem [#allocation1], 2
      %862 = vst [vmem:[%s861] ss:$4 sm:$0xff] %v848
      %s864 = scalar_lea.vmem [#allocation1], 3
      %865 = vst [vmem:[%s864] ss:$4 sm:$0xff] %v849
      %v866 = vld.sshfl [vmem:[#allocation1] sm:$0xff pattern:$0x73625140]
      %v871 = vunpack.c.l.b16 %v851
      %v872 = vunpack.c.l.b16 %v852
      %v873 = vunpack.c.l.b16 %v853
      %v874 = vunpack.c.l.b16 %v854
      %v875 = vpack.c.b16 %v872, %v871
      %v876 = vpack.c.b16 %v874, %v873
      %v879 = vsel %vm388, %v866, 0
      %881 = vmatpush.bf16.msra.mxu0 0
      %882 = vmatpush.bf16.msra.mxu0 0
      %883 = vmatpush.bf16.msra.mxu0 0
      %884 = vmatpush.bf16.msra.mxu0 0
      %885 = vmatpush.bf16.msra.mxu0 0
      %886 = vmatpush.bf16.msra.mxu0 0
      %887 = vmatpush.bf16.msra.mxu0 %v876
      %888 = vmatpush.bf16.msra.mxu0 %v875
      %889 = vmatmul.bf16.gmra.mxu0 %v879
      %v890 = vpop.f32.mrf.mxu0
      %v891 = vadd.f32 0.0, %v890
      %v892 = vpop.f32.mrf.mxu0
      %v893 = vadd.f32 0.0, %v892
      %894 = vdwg.mxu0
      %v895 = vadd.f32 %v843, %v891
      %v896 = vadd.f32 %v844, %v893
      %v897 = vld [vmem:[%s845] sm:$0x7]
      %v898 = vld [vmem:[%s845 + $0x4] sm:$0x7]
      %v899 = vld [vmem:[%s845 + $0x8] sm:$0x7]
      %v900 = vld [vmem:[%s845 + $0xc] sm:$0x7]
      %v905 = vrot.slane %v897, 2
      %v906 = vrot.slane %v898, 2
      %v907 = vrot.slane %v899, 2
      %v908 = vrot.slane %v900, 2
      %v911 = vsel %vm274, %v897, %v905
      %v912 = vsel %vm278, %v897, %v905
      %v914 = vrot.slane %v912, 2
      %v917 = vsel %vm274, %v898, %v906
      %v918 = vsel %vm278, %v898, %v906
      %v920 = vrot.slane %v918, 2
      %v923 = vsel %vm274, %v899, %v907
      %v924 = vsel %vm278, %v899, %v907
      %v926 = vrot.slane %v924, 2
      %v929 = vsel %vm274, %v900, %v908
      %v930 = vsel %vm278, %v900, %v908
      %v932 = vrot.slane %v930, 2
      %v933 = vshrl.u32 %v911, 16
      %v935 = vrot.slane %v933, 6
      %v936 = vshll.u32 %v911, 16
      %v938 = vrot.slane %v936, 7
      %v939 = vor.u32 %v935, %v938
      %v940 = vrot.slane %v939, 2
      %v942 = vshll.u32 %v914, 16
      %v944 = vrot.slane %v942, 7
      %v945 = vsel %vm306, %v940, %v944
      %v946 = vshrl.u32 %v917, 16
      %v948 = vrot.slane %v946, 6
      %v949 = vshll.u32 %v917, 16
      %v951 = vrot.slane %v949, 7
      %v952 = vor.u32 %v948, %v951
      %v953 = vrot.slane %v952, 2
      %v955 = vshll.u32 %v920, 16
      %v957 = vrot.slane %v955, 7
      %v958 = vsel %vm306, %v953, %v957
      %v959 = vshrl.u32 %v923, 16
      %v961 = vrot.slane %v959, 6
      %v962 = vshll.u32 %v923, 16
      %v964 = vrot.slane %v962, 7
      %v965 = vor.u32 %v961, %v964
      %v966 = vrot.slane %v965, 2
      %v968 = vshll.u32 %v926, 16
      %v970 = vrot.slane %v968, 7
      %v971 = vsel %vm306, %v966, %v970
      %v972 = vshrl.u32 %v929, 16
      %v974 = vrot.slane %v972, 6
      %v975 = vshll.u32 %v929, 16
      %v977 = vrot.slane %v975, 7
      %v978 = vor.u32 %v974, %v977
      %v979 = vrot.slane %v978, 2
      %v981 = vshll.u32 %v932, 16
      %v983 = vrot.slane %v981, 7
      %v984 = vsel %vm306, %v979, %v983
      %s985 = scalar_lea.vmem %s1, 112
      %v986 = vld [vmem:[%s985] sm:$0xf]
      %v987 = vld [vmem:[%s985 + $0x4] sm:$0xf]
      %v988 = vld [vmem:[%s985 + $0x8] sm:$0xf]
      %v989 = vld [vmem:[%s985 + $0xc] sm:$0xf]
      %991 = vst [vmem:[#allocation1] ss:$4 sm:$0xff] %v945
      %s993 = scalar_lea.vmem [#allocation1], 1
      %994 = vst [vmem:[%s993] ss:$4 sm:$0xff] %v958
      %s996 = scalar_lea.vmem [#allocation1], 2
      %997 = vst [vmem:[%s996] ss:$4 sm:$0xff] %v971
      %s999 = scalar_lea.vmem [#allocation1], 3
      %1000 = vst [vmem:[%s999] ss:$4 sm:$0xff] %v984
      %v1001 = vld.sshfl [vmem:[#allocation1] sm:$0xff pattern:$0x73625140]
      %v1006 = vunpack.c.l.b16 %v986
      %v1007 = vunpack.c.l.b16 %v987
      %v1008 = vunpack.c.l.b16 %v988
      %v1009 = vunpack.c.l.b16 %v989
      %v1010 = vpack.c.b16 %v1007, %v1006
      %v1011 = vpack.c.b16 %v1009, %v1008
      %v1014 = vsel %vm388, %v1001, 0
      %1016 = vmatpush.bf16.msra.mxu0 0
      %1017 = vmatpush.bf16.msra.mxu0 0
      %1018 = vmatpush.bf16.msra.mxu0 0
      %1019 = vmatpush.bf16.msra.mxu0 0
      %1020 = vmatpush.bf16.msra.mxu0 0
      %1021 = vmatpush.bf16.msra.mxu0 0
      %1022 = vmatpush.bf16.msra.mxu0 %v1011
      %1023 = vmatpush.bf16.msra.mxu0 %v1010
      %1024 = vmatmul.bf16.gmra.mxu0 %v1014
      %v1025 = vpop.f32.mrf.mxu0
      %v1026 = vadd.f32 0.0, %v1025
      %v1027 = vpop.f32.mrf.mxu0
      %v1028 = vadd.f32 0.0, %v1027
      %1029 = vdwg.mxu0
      %v1030 = vadd.f32 %v895, %v1026
      %v1031 = vadd.f32 %v896, %v1028
      %v1032 = vld [vmem:[%s845] sm:$0x6]
      %v1033 = vld [vmem:[%s845 + $0x4] sm:$0x6]
      %v1034 = vld [vmem:[%s845 + $0x8] sm:$0x6]
      %v1035 = vld [vmem:[%s845 + $0xc] sm:$0x6]
      %v1040 = vrot.slane %v1032, 2
      %v1041 = vrot.slane %v1033, 2
      %v1042 = vrot.slane %v1034, 2
      %v1043 = vrot.slane %v1035, 2
      %v1046 = vsel %vm274, %v1032, %v1040
      %v1048 = vsel %vm278, %v1032, %v1040
      %v1050 = vrot.slane %v1048, 2
      %v1053 = vsel %vm274, %v1033, %v1041
      %v1055 = vsel %vm278, %v1033, %v1041
      %v1057 = vrot.slane %v1055, 2
      %v1060 = vsel %vm274, %v1034, %v1042
      %v1062 = vsel %vm278, %v1034, %v1042
      %v1064 = vrot.slane %v1062, 2
      %v1067 = vsel %vm274, %v1035, %v1043
      %v1069 = vsel %vm278, %v1035, %v1043
      %v1071 = vrot.slane %v1069, 2
      %v1072 = vrot.slane %v1046, 7
      %v1073 = vrot.slane %v1072, 2
      %v1074 = vrot.slane %v1050, 7
      %v1075 = vsel %vm491, %v1073, %v1074
      %v1076 = vrot.slane %v1053, 7
      %v1077 = vrot.slane %v1076, 2
      %v1078 = vrot.slane %v1057, 7
      %v1079 = vsel %vm491, %v1077, %v1078
      %v1080 = vrot.slane %v1060, 7
      %v1081 = vrot.slane %v1080, 2
      %v1082 = vrot.slane %v1064, 7
      %v1083 = vsel %vm491, %v1081, %v1082
      %v1084 = vrot.slane %v1067, 7
      %v1085 = vrot.slane %v1084, 2
      %v1086 = vrot.slane %v1071, 7
      %v1087 = vsel %vm491, %v1085, %v1086
      %s1088 = scalar_lea.vmem %s1, 128
      %v1089 = vld [vmem:[%s1088] sm:$0xf]
      %v1090 = vld [vmem:[%s1088 + $0x4] sm:$0xf]
      %v1091 = vld [vmem:[%s1088 + $0x8] sm:$0xf]
      %v1092 = vld [vmem:[%s1088 + $0xc] sm:$0xf]
      %1094 = vst [vmem:[#allocation1] ss:$4 sm:$0xff] %v1075
      %s1096 = scalar_lea.vmem [#allocation1], 1
      %1097 = vst [vmem:[%s1096] ss:$4 sm:$0xff] %v1079
      %s1099 = scalar_lea.vmem [#allocation1], 2
      %1100 = vst [vmem:[%s1099] ss:$4 sm:$0xff] %v1083
      %s1102 = scalar_lea.vmem [#allocation1], 3
      %1103 = vst [vmem:[%s1102] ss:$4 sm:$0xff] %v1087
      %v1104 = vld.sshfl [vmem:[#allocation1] sm:$0xff pattern:$0x73625140]
      %v1109 = vunpack.c.l.b16 %v1089
      %v1110 = vunpack.c.l.b16 %v1090
      %v1111 = vunpack.c.l.b16 %v1091
      %v1112 = vunpack.c.l.b16 %v1092
      %v1113 = vpack.c.b16 %v1110, %v1109
      %v1114 = vpack.c.b16 %v1112, %v1111
      %v1117 = vsel %vm388, %v1104, 0
      %1119 = vmatpush.bf16.msra.mxu0 0
      %1120 = vmatpush.bf16.msra.mxu0 0
      %1121 = vmatpush.bf16.msra.mxu0 0
      %1122 = vmatpush.bf16.msra.mxu0 0
      %1123 = vmatpush.bf16.msra.mxu0 0
      %1124 = vmatpush.bf16.msra.mxu0 0
      %1125 = vmatpush.bf16.msra.mxu0 %v1114
      %1126 = vmatpush.bf16.msra.mxu0 %v1113
      %1127 = vmatmul.bf16.gmra.mxu0 %v1117
      %v1128 = vpop.f32.mrf.mxu0
      %v1129 = vadd.f32 0.0, %v1128
      %v1130 = vpop.f32.mrf.mxu0
      %v1131 = vadd.f32 0.0, %v1130
      %1132 = vdwg.mxu0
      %v1133 = vadd.f32 %v1030, %v1129
      %v1134 = vadd.f32 %v1031, %v1131
      %v1135 = vld [vmem:[%s2] sm:$0x1]
      %v1137 = vperm.slane %v1135, 0
      %v1139 = vadd.f32 %v1133, %v1137
      %v1140 = vadd.f32 %v1134, %v1137
      %v1141 = vmax.f32 %v1139, 0.0
      %v1142 = vmax.f32 %v1140, 0.0
      %v1143 = vld [vmem:[#allocation2] sm:$0x1]
      %v1144 = vsel %vm388, %v1141, 0.0
      %v1145 = vsel %vm388, %v1142, 0.0
      %v1146 = vadd.f32 %v1144, %v1145
      %v1147 = vrot.slane %v1146, 4
      %v1148 = vadd.f32 %v1146, %v1147
      %v1149 = vrot.slane %v1148, 2
      %v1150 = vadd.f32 %v1148, %v1149
      %v1151 = vrot.slane %v1150, 1
      %v1152 = vadd.f32 %v1150, %v1151
      %v1153 = vadd.f32 %v1143, %v1152
      %vm1154 = vcmask 253952
      %1155 = vst.msk [vmem:[#allocation2] sm:$0x1] %vm1154, %v1153
      // Predicated region
      $region45: #{_lambda_.7} parent=39 // pred_check
        %p1156 = pneg %p248
      $region46: #{_lambda_.7} parent=39 // pred_check_branch
        %1158 = sbr.rel (%p1156) target = $region48
      $region47: #{_lambda_.7} parent=39 // pred_region
        %v1159 = vld [vmem:[#allocation2] sm:$0x1]
        %v1160 = vmul.f32 %v1159, 0.0625
        %v1161 = vld [vmem:[%s3] sm:$0xff]
        %v1162 = vld [vmem:[%s3 + $0x8] sm:$0xff]
        %v1163 = vld [vmem:[%s3 + $0x10] sm:$0xff]
        %v1164 = vld [vmem:[%s3 + $0x18] sm:$0xff]
        %v1165 = vld [vmem:[%s4] sm:$0x1]
        %v1167 = vsel %vm388, %v1160, 0
        %1169 = vmatpush.msra.mxu0 0.0
        %1170 = vmatpush.msra.mxu0 0.0
        %1171 = vmatpush.msra.mxu0 0.0
        %1172 = vmatpush.msra.mxu0 0.0
        %1173 = vmatpush.msra.mxu0 0.0
        %1174 = vmatpush.msra.mxu0 0.0
        %1175 = vmatpush.msra.mxu0 0.0
        %1176 = vmatpush.msra.mxu0 0.0
        %1177 = vmatpush.msra.mxu0 0.0
        %1178 = vmatpush.msra.mxu0 0.0
        %1179 = vmatpush.msra.mxu0 0.0
        %1180 = vmatpush.msra.mxu0 0.0
        %1181 = vmatpush.msra.mxu0 %v1164
        %1182 = vmatpush.msra.mxu0 %v1163
        %1183 = vmatpush.msra.mxu0 %v1162
        %1184 = vmatpush.msra.mxu0 %v1161
        %1185 = vmatmul.f32.gmra.mxu0 %v1167
        %v1186 = vpop.f32.mrf.mxu0
        %v1187 = vadd.f32 %v1165, %v1186
        %1188 = vdwg.mxu0
        %vm1189 = vcmask 40960
        %1190 = vst.msk [vmem:[%s246] sm:$0x1] %vm1189, %v1187
      $region48: #{_lambda_.7} parent=39 // pred_fallthru
        _
      %p1191 = scmp.lt.s32.totalorder %s20, 1
      %s1192 = scalar_select %p1191, %s20, 1
      %s1193 = scalar_lea.vmem %s5, %s1192
      // Predicated region
      $region49: #{_lambda_.7} parent=39 // pred_check
        %p1194 = pneg %p158
      $region50: #{_lambda_.7} parent=39 // pred_check_branch
        %1196 = sbr.rel (%p1194) target = $region52
      $region51: #{_lambda_.7} parent=39 // pred_region
        _
      $region52: #{_lambda_.7} parent=39 // pred_fallthru
        _
    $region40: #{_lambda_.7} parent=5 // pred_fallthru
      _
    %p1197 = scmp.le.s32.totalorder 2, %s11
    // Predicated region
    $region53: #{_lambda_.7} parent=5 // pred_check
      %p1198 = pneg %p1197
    $region54: #{_lambda_.7} parent=5 // pred_check_branch
      %1200 = sbr.rel (%p1198) target = $region56
    $region55: #{_lambda_.7} parent=5 // pred_region
      %s1201 = ssub.s32 %s11, 2
      // Predicated region
      $region57: #{_lambda_.7} parent=55 // pred_check
        %p1202 = pneg %p164
      $region58: #{_lambda_.7} parent=55 // pred_check_branch
        %1204 = sbr.rel (%p1202) target = $region60
      $region59: #{_lambda_.7} parent=55 // pred_region
        %p1205 = scmp.lt.s32.totalorder %s22, 1
        %s1206 = scalar_select %p1205, %s22, 1
        %s1207 = scalar_lea.vmem %s5, %s1206
      $region60: #{_lambda_.7} parent=55 // pred_fallthru
        _
    $region56: #{_lambda_.7} parent=5 // pred_fallthru
      _
  $region6: #{_lambda_.7} parent=0 // loop_footer
    %s15 = sadd.s32 1, %s11
  $region7: #{_lambda_.7} parent=0 // loop_footer_branch
    %10 = sbr.rel target = $region3
  $region8: #{_lambda_.7} parent=0 // loop_exit
    _

</llo_original>
